<compile_context>
chip_gen: v5e
topology: v5e:2x2
jax: 0.10.0
libtpu: 0.0.40
codegen_flags: <defaults>
</compile_context>

<pallas_src>
import jax
import jax.numpy as jnp
from jax.experimental import pallas as pl
from jax.experimental.pallas import tpu as pltpu

# ----------------------------------------------------------------------------
# Synthetic (scaled-down) EfficientNet-style configuration.
# ----------------------------------------------------------------------------
H_IN, W_IN, C_IN = 16, 16, 3
C_STEM = 8                              # stem output channels
B1_C, B1_SE = 8, 2                      # block 1: expand=1, stride=1, residual
B2_EXP, B2_SE, B2_COUT = 32, 2, 16      # block 2: expand=4, stride=2
FEAT_DIM = 128                          # stands in for _fc.in_features (1280 in b1)
SE_PAD = 8                              # SE hidden dim zero-padded 2 -> 8 (exact)

H1, W1 = H_IN // 2, W_IN // 2           # spatial after stem   (stride 2, 'same')
H2, W2 = H1 // 2, W1 // 2               # spatial after block-2 dw (stride 2, 'same')
WZ1 = 2 * (W1 - 1) + 1                  # stride-1 column positions needed (stem)
WZ2 = 2 * (W2 - 1) + 1                  # stride-1 column positions needed (block-2 dw)
HZ2 = 2 * (H2 - 1) + 1                  # stride-1 row    positions needed (block-2 dw)


# ----------------------------------------------------------------------------
# The fused feature-extractor kernel (one grid step == one image).
# ----------------------------------------------------------------------------
def _feature_kernel(*refs):
    (x_ref, sel1_ref, sel2_ref,
     stem_w, stem_s, stem_b,
     dw1_w, dw1_s, dw1_b,
     se1_w1, se1_b1, se1_w2, se1_b2,
     p1_w, p1_s, p1_b,
     exp_w, exp_s, exp_b,
     dw2_w, dw2_s, dw2_b,
     se2_w1, se2_b1, se2_w2, se2_b2,
     p2_w, p2_s, p2_b,
     head_w, head_s, head_b,
     o_ref,
     ps, a1, pd1, pd2, d2) = refs

    f32 = jnp.float32
    bf16 = jnp.bfloat16

    def silu(v):
        return v * jax.nn.sigmoid(v)

    # Zero the padded conv-input buffers (padding must read as 0; interiors
    # are fully overwritten below).
    ps[...] = jnp.zeros_like(ps)
    pd1[...] = jnp.zeros_like(pd1)
    pd2[...] = jnp.zeros_like(pd2)

    # Input image -> padded stem buffer ('same' pad for k=3, s=2, H=16 is (0, 1)).
    ps[0:H_IN, 0:W_IN, :] = x_ref[0]

    sel1 = sel1_ref[...]          # (W1, WZ1) picks every 2nd column (stride-2)
    sel2 = sel2_ref[...]          # (W2, WZ2)

    # ---- stem: 3x3 stride-2 conv + folded BN + SiLU -------------------------
    # (per output row; channel mixing needs a matmul per tap, and the work is
    #  tiny: 8 rows.  TODO(synk): taps could be lane-concatenated to cut the
    #  matmul count 3x if the stem ever dominates.)
    stem_scale = stem_s[...]
    stem_bias = stem_b[...]
    for ho in range(H1):
        z = jnp.zeros((WZ1, C_STEM), f32)
        for di in range(3):
            for dj in range(3):
                xs = ps[2 * ho + di, dj:dj + WZ1, :]              # (WZ1, C_IN)
                z = z + jnp.dot(xs, stem_w[3 * di + dj],
                                preferred_element_type=f32)
        y = jnp.dot(sel1, z, preferred_element_type=f32)          # (W1, C_STEM)
        y = silu(y * stem_scale + stem_bias)
        a1[ho * W1:(ho + 1) * W1, :] = y                          # flat (residual input)
        pd1[1 + ho, 1:1 + W1, :] = y                              # block-1 dw padded input

    # ---- block 1: depthwise 3x3 stride-1 + BN + SiLU (whole plane) ----------
    acc = jnp.zeros((H1, W1, B1_C), f32)
    for di in range(3):
        for dj in range(3):
            t = 3 * di + dj
            w = dw1_w[t:t + 1, :].reshape(1, 1, B1_C)
            acc = acc + pd1[di:di + H1, dj:dj + W1, :] * w
    t1 = silu(acc * dw1_s[...].reshape(1, 1, B1_C)
              + dw1_b[...].reshape(1, 1, B1_C))
    t1 = t1.reshape(H1 * W1, B1_C)        # layout-trivial: W1 == 8 (sublane tile)

    # Squeeze-and-Excite on the register-resident dw output.
    sq = jnp.mean(t1, axis=0, keepdims=True)                      # (1, B1_C)
    s = silu(jnp.dot(sq, se1_w1[...], preferred_element_type=f32) + se1_b1[...])
    g = jax.nn.sigmoid(jnp.dot(s, se1_w2[...],
                               preferred_element_type=f32) + se1_b2[...])
    t1 = t1 * g

    # 1x1 project conv + BN (no act) + residual with the stem output.
    pr = jnp.dot(t1.astype(bf16), p1_w[...], preferred_element_type=f32)
    a2 = pr * p1_s[...] + p1_b[...] + a1[...]                     # (H1*W1, B1_C)

    # ---- block 2: 1x1 expand conv + BN + SiLU -------------------------------
    e = jnp.dot(a2.astype(bf16), exp_w[...], preferred_element_type=f32)
    e = silu(e * exp_s[...] + exp_b[...])                         # (H1*W1, B2_EXP)

    # One whole-plane write into the padded dw2 buffer ('same' pad = (0, 1)).
    pd2[0:H1, 0:W1, :] = e.reshape(H1, W1, B2_EXP)

    # Depthwise 3x3 stride-2 + BN + SiLU: compute the stride-1 plane with 9
    # whole-plane MACs, then stride-2 select (rows: static slice, cols: MXU
    # selection matmul).
    z2 = jnp.zeros((HZ2, WZ2, B2_EXP), f32)
    for di in range(3):
        for dj in range(3):
            t = 3 * di + dj
            w = dw2_w[t:t + 1, :].reshape(1, 1, B2_EXP)
            z2 = z2 + pd2[di:di + HZ2, dj:dj + WZ2, :] * w
    dw2_scale = dw2_s[...]
    dw2_bias = dw2_b[...]
    for ho in range(H2):
        y = jnp.dot(sel2, z2[2 * ho], preferred_element_type=f32)  # (W2, B2_EXP)
        y = silu(y * dw2_scale + dw2_bias)
        d2[ho * W2:(ho + 1) * W2, :] = y

    # Squeeze-and-Excite.
    t2 = d2[...]                                                  # (H2*W2, B2_EXP)
    sq2 = jnp.mean(t2, axis=0, keepdims=True)
    s2 = silu(jnp.dot(sq2, se2_w1[...], preferred_element_type=f32) + se2_b1[...])
    g2 = jax.nn.sigmoid(jnp.dot(s2, se2_w2[...],
                                preferred_element_type=f32) + se2_b2[...])
    t2 = t2 * g2

    # 1x1 project conv + BN (no act, no residual: stride 2 / channel change).
    p2 = jnp.dot(t2.astype(bf16), p2_w[...], preferred_element_type=f32)
    p2 = p2 * p2_s[...] + p2_b[...]                               # (H2*W2, B2_COUT)

    # ---- head 1x1 conv + BN + SiLU, fused with the global average pool ------
    hd = jnp.dot(p2.astype(bf16), head_w[...], preferred_element_type=f32)
    hd = silu(hd * head_s[...] + head_b[...])                     # (H2*W2, FEAT_DIM)
    o_ref[0] = jnp.mean(hd, axis=0, keepdims=True).astype(o_ref.dtype)


# ----------------------------------------------------------------------------
# Parameters (folded BN) and kernel-operand preparation.
# ----------------------------------------------------------------------------
def _bn_fold(key, c, eps=1e-3):
    k1, k2, k3, k4 = jax.random.split(key, 4)
    gamma = 1.0 + 0.1 * jax.random.normal(k1, (c,), jnp.float32)
    beta = 0.05 * jax.random.normal(k2, (c,), jnp.float32)
    mean = 0.1 * jax.random.normal(k3, (c,), jnp.float32)
    var = 0.5 + jax.random.uniform(k4, (c,), jnp.float32)
    scale = gamma / jnp.sqrt(var + eps)
    bias = beta - mean * scale
    return scale, bias


def _w(key, shape):
    return 0.1 * jax.random.normal(key, shape, jnp.float32)


def make_params(key):
    ks = jax.random.split(key, 24)
    p = {}
    p["stem_w"] = _w(ks[0], (3, 3, C_IN, C_STEM)).reshape(9, C_IN, C_STEM)
    p["stem_bn"] = _bn_fold(ks[1], C_STEM)
    p["b1"] = dict(
        dw_w=_w(ks[2], (9, B1_C)),
        dw_bn=_bn_fold(ks[3], B1_C),
        se_w1=_w(ks[4], (B1_C, B1_SE)), se_b1=_w(ks[5], (B1_SE,)),
        se_w2=_w(ks[6], (B1_SE, B1_C)), se_b2=_w(ks[7], (B1_C,)),
        proj_w=_w(ks[8], (B1_C, B1_C)),
        proj_bn=_bn_fold(ks[9], B1_C),
    )
    p["b2"] = dict(
        exp_w=_w(ks[10], (B1_C, B2_EXP)),
        exp_bn=_bn_fold(ks[11], B2_EXP),
        dw_w=_w(ks[12], (9, B2_EXP)),
        dw_bn=_bn_fold(ks[13], B2_EXP),
        se_w1=_w(ks[14], (B2_EXP, B2_SE)), se_b1=_w(ks[15], (B2_SE,)),
        se_w2=_w(ks[16], (B2_SE, B2_EXP)), se_b2=_w(ks[17], (B2_EXP,)),
        proj_w=_w(ks[18], (B2_EXP, B2_COUT)),
        proj_bn=_bn_fold(ks[19], B2_COUT),
    )
    p["head_w"] = _w(ks[20], (B2_COUT, FEAT_DIM))
    p["head_bn"] = _bn_fold(ks[21], FEAT_DIM)
    return p


def _se_operands(blk, c, se):
    """Zero-pad the SE hidden dim to SE_PAD.  Mathematically exact: padded
    hidden units see zero weights/bias -> SiLU(0)=0 -> no contribution."""
    w1 = jnp.pad(blk["se_w1"], ((0, 0), (0, SE_PAD - se)))
    b1 = jnp.pad(blk["se_b1"], (0, SE_PAD - se)).reshape(1, SE_PAD)
    w2 = jnp.pad(blk["se_w2"], ((0, SE_PAD - se), (0, 0)))
    b2 = blk["se_b2"].reshape(1, c)
    return [w1, b1, w2, b2]


def _kernel_operands(params):
    bf = lambda a: a.astype(jnp.bfloat16)
    r1 = lambda a: a.reshape(1, -1)
    b1, b2 = params["b1"], params["b2"]
    # 0/1 matrices that pick every 2nd column (stride-2 downsample via MXU).
    sel1 = (jnp.arange(WZ1)[None, :] == 2 * jnp.arange(W1)[:, None]).astype(jnp.float32)
    sel2 = (jnp.arange(WZ2)[None, :] == 2 * jnp.arange(W2)[:, None]).astype(jnp.float32)
    ops = [sel1, sel2,
           params["stem_w"], r1(params["stem_bn"][0]), r1(params["stem_bn"][1]),
           b1["dw_w"], r1(b1["dw_bn"][0]), r1(b1["dw_bn"][1])]
    ops += _se_operands(b1, B1_C, B1_SE)
    ops += [bf(b1["proj_w"]), r1(b1["proj_bn"][0]), r1(b1["proj_bn"][1]),
            bf(b2["exp_w"]), r1(b2["exp_bn"][0]), r1(b2["exp_bn"][1]),
            b2["dw_w"], r1(b2["dw_bn"][0]), r1(b2["dw_bn"][1])]
    ops += _se_operands(b2, B2_EXP, B2_SE)
    ops += [bf(b2["proj_w"]), r1(b2["proj_bn"][0]), r1(b2["proj_bn"][1]),
            bf(params["head_w"]), r1(params["head_bn"][0]), r1(params["head_bn"][1])]
    return ops


# ----------------------------------------------------------------------------
# Public wrapper: NCHW input (PyTorch convention) -> (B, FEAT_DIM) features.
# ----------------------------------------------------------------------------
@jax.jit
def rnsa_image_feature_extractor(x_nchw, params):
    """feats = cnn.extract_features(x); return AdaptiveAvgPool2d(1)(feats).view(B, -1)."""
    x = jnp.transpose(x_nchw, (0, 2, 3, 1)).astype(jnp.float32)   # NCHW -> NHWC, once
    B = x.shape[0]
    ops = _kernel_operands(params)

    in_specs = [pl.BlockSpec((1, H_IN, W_IN, C_IN), lambda i: (i, 0, 0, 0))]
    in_specs += [pl.BlockSpec(o.shape, lambda i, n=o.ndim: (0,) * n) for o in ops]

    out = pl.pallas_call(
        _feature_kernel,
        out_shape=jax.ShapeDtypeStruct((B, 1, FEAT_DIM), jnp.float32),
        grid=(B,),
        in_specs=in_specs,
        out_specs=pl.BlockSpec((1, 1, FEAT_DIM), lambda i: (i, 0, 0)),
        scratch_shapes=[
            pltpu.VMEM((H_IN + 1, W_IN + 1, C_IN), jnp.float32),   # padded input (stem)
            pltpu.VMEM((H1 * W1, C_STEM), jnp.float32),            # stem output (flat)
            pltpu.VMEM((H1 + 2, W1 + 2, B1_C), jnp.float32),       # block-1 dw padded input
            pltpu.VMEM((H1 + 1, W1 + 1, B2_EXP), jnp.float32),     # block-2 dw padded input
            pltpu.VMEM((H2 * W2, B2_EXP), jnp.float32),            # block-2 dw output (flat)
        ],
        compiler_params=pltpu.CompilerParams(
            dimension_semantics=("parallel",)),                    # v7x: one image per TC
    )(x, *ops)
    return out.reshape(B, FEAT_DIM)


# ----------------------------------------------------------------------------

if __name__ == "__main__":
    key = jax.random.PRNGKey(0)
    k_param, k_x = jax.random.split(key)
    params = make_params(k_param)
    # PyTorch-convention NCHW input: (batch=2, channels=3, 16, 16)
    x = jax.random.normal(k_x, (2, C_IN, H_IN, W_IN), jnp.float32)

    out = rnsa_image_feature_extractor(x, params)
    jax.block_until_ready(out)
    assert out.shape == (2, FEAT_DIM), out.shape
    assert bool(jnp.all(jnp.isfinite(out)))
    print("KERNEL_OK")
</pallas_src>

<mosaic_0001>
module attributes {stable_mosaic.version = 11 : i64} {
  func.func @_feature_kernel(%arg0: i32, %arg1: memref<1x16x16x3xf32, #tpu.memory_space<vmem>>, %arg2: memref<8x15xf32, #tpu.memory_space<vmem>>, %arg3: memref<4x7xf32, #tpu.memory_space<vmem>>, %arg4: memref<9x3x8xf32, #tpu.memory_space<vmem>>, %arg5: memref<1x8xf32, #tpu.memory_space<vmem>>, %arg6: memref<1x8xf32, #tpu.memory_space<vmem>>, %arg7: memref<9x8xf32, #tpu.memory_space<vmem>>, %arg8: memref<1x8xf32, #tpu.memory_space<vmem>>, %arg9: memref<1x8xf32, #tpu.memory_space<vmem>>, %arg10: memref<8x8xf32, #tpu.memory_space<vmem>>, %arg11: memref<1x8xf32, #tpu.memory_space<vmem>>, %arg12: memref<8x8xf32, #tpu.memory_space<vmem>>, %arg13: memref<1x8xf32, #tpu.memory_space<vmem>>, %arg14: memref<8x8xbf16, #tpu.memory_space<vmem>>, %arg15: memref<1x8xf32, #tpu.memory_space<vmem>>, %arg16: memref<1x8xf32, #tpu.memory_space<vmem>>, %arg17: memref<8x32xbf16, #tpu.memory_space<vmem>>, %arg18: memref<1x32xf32, #tpu.memory_space<vmem>>, %arg19: memref<1x32xf32, #tpu.memory_space<vmem>>, %arg20: memref<9x32xf32, #tpu.memory_space<vmem>>, %arg21: memref<1x32xf32, #tpu.memory_space<vmem>>, %arg22: memref<1x32xf32, #tpu.memory_space<vmem>>, %arg23: memref<32x8xf32, #tpu.memory_space<vmem>>, %arg24: memref<1x8xf32, #tpu.memory_space<vmem>>, %arg25: memref<8x32xf32, #tpu.memory_space<vmem>>, %arg26: memref<1x32xf32, #tpu.memory_space<vmem>>, %arg27: memref<32x16xbf16, #tpu.memory_space<vmem>>, %arg28: memref<1x16xf32, #tpu.memory_space<vmem>>, %arg29: memref<1x16xf32, #tpu.memory_space<vmem>>, %arg30: memref<16x128xbf16, #tpu.memory_space<vmem>>, %arg31: memref<1x128xf32, #tpu.memory_space<vmem>>, %arg32: memref<1x128xf32, #tpu.memory_space<vmem>>, %arg33: memref<1x1x128xf32, #tpu.memory_space<vmem>>, %arg34: memref<17x17x3xf32, #tpu.memory_space<vmem>>, %arg35: memref<64x8xf32, #tpu.memory_space<vmem>>, %arg36: memref<10x10x8xf32, #tpu.memory_space<vmem>>, %arg37: memref<9x9x32xf32, #tpu.memory_space<vmem>>, %arg38: memref<16x32xf32, #tpu.memory_space<vmem>>) attributes {dimension_semantics = [#tpu.dimension_semantics<parallel>], iteration_bounds = array<i64: 2>, scalar_prefetch = 0 : i64, scratch_operands = 5 : i64, tpu.core_type = #tpu.core_type<tc>, window_params = [{transform_indices = @transform_0, window_bounds = array<i64: 1, 16, 16, 3>}, {pipeline_mode = #tpu.pipeline_mode<synchronous>, transform_indices = @transform_1, window_bounds = array<i64: 8, 15>}, {pipeline_mode = #tpu.pipeline_mode<synchronous>, transform_indices = @transform_2, window_bounds = array<i64: 4, 7>}, {pipeline_mode = #tpu.pipeline_mode<synchronous>, transform_indices = @transform_3, window_bounds = array<i64: 9, 3, 8>}, {pipeline_mode = #tpu.pipeline_mode<synchronous>, transform_indices = @transform_4, window_bounds = array<i64: 1, 8>}, {pipeline_mode = #tpu.pipeline_mode<synchronous>, transform_indices = @transform_5, window_bounds = array<i64: 1, 8>}, {pipeline_mode = #tpu.pipeline_mode<synchronous>, transform_indices = @transform_6, window_bounds = array<i64: 9, 8>}, {pipeline_mode = #tpu.pipeline_mode<synchronous>, transform_indices = @transform_7, window_bounds = array<i64: 1, 8>}, {pipeline_mode = #tpu.pipeline_mode<synchronous>, transform_indices = @transform_8, window_bounds = array<i64: 1, 8>}, {pipeline_mode = #tpu.pipeline_mode<synchronous>, transform_indices = @transform_9, window_bounds = array<i64: 8, 8>}, {pipeline_mode = #tpu.pipeline_mode<synchronous>, transform_indices = @transform_10, window_bounds = array<i64: 1, 8>}, {pipeline_mode = #tpu.pipeline_mode<synchronous>, transform_indices = @transform_11, window_bounds = array<i64: 8, 8>}, {pipeline_mode = #tpu.pipeline_mode<synchronous>, transform_indices = @transform_12, window_bounds = array<i64: 1, 8>}, {pipeline_mode = #tpu.pipeline_mode<synchronous>, transform_indices = @transform_13, window_bounds = array<i64: 8, 8>}, {pipeline_mode = #tpu.pipeline_mode<synchronous>, transform_indices = @transform_14, window_bounds = array<i64: 1, 8>}, {pipeline_mode = #tpu.pipeline_mode<synchronous>, transform_indices = @transform_15, window_bounds = array<i64: 1, 8>}, {pipeline_mode = #tpu.pipeline_mode<synchronous>, transform_indices = @transform_16, window_bounds = array<i64: 8, 32>}, {pipeline_mode = #tpu.pipeline_mode<synchronous>, transform_indices = @transform_17, window_bounds = array<i64: 1, 32>}, {pipeline_mode = #tpu.pipeline_mode<synchronous>, transform_indices = @transform_18, window_bounds = array<i64: 1, 32>}, {pipeline_mode = #tpu.pipeline_mode<synchronous>, transform_indices = @transform_19, window_bounds = array<i64: 9, 32>}, {pipeline_mode = #tpu.pipeline_mode<synchronous>, transform_indices = @transform_20, window_bounds = array<i64: 1, 32>}, {pipeline_mode = #tpu.pipeline_mode<synchronous>, transform_indices = @transform_21, window_bounds = array<i64: 1, 32>}, {pipeline_mode = #tpu.pipeline_mode<synchronous>, transform_indices = @transform_22, window_bounds = array<i64: 32, 8>}, {pipeline_mode = #tpu.pipeline_mode<synchronous>, transform_indices = @transform_23, window_bounds = array<i64: 1, 8>}, {pipeline_mode = #tpu.pipeline_mode<synchronous>, transform_indices = @transform_24, window_bounds = array<i64: 8, 32>}, {pipeline_mode = #tpu.pipeline_mode<synchronous>, transform_indices = @transform_25, window_bounds = array<i64: 1, 32>}, {pipeline_mode = #tpu.pipeline_mode<synchronous>, transform_indices = @transform_26, window_bounds = array<i64: 32, 16>}, {pipeline_mode = #tpu.pipeline_mode<synchronous>, transform_indices = @transform_27, window_bounds = array<i64: 1, 16>}, {pipeline_mode = #tpu.pipeline_mode<synchronous>, transform_indices = @transform_28, window_bounds = array<i64: 1, 16>}, {pipeline_mode = #tpu.pipeline_mode<synchronous>, transform_indices = @transform_29, window_bounds = array<i64: 16, 128>}, {pipeline_mode = #tpu.pipeline_mode<synchronous>, transform_indices = @transform_30, window_bounds = array<i64: 1, 128>}, {pipeline_mode = #tpu.pipeline_mode<synchronous>, transform_indices = @transform_31, window_bounds = array<i64: 1, 128>}, {transform_indices = @transform_32, window_bounds = array<i64: 1, 1, 128>}]} {
    %cst = arith.constant 0.000000e+00 : f32
    %0 = vector.broadcast %cst : f32 to vector<17x17x3xf32>
    %c0 = arith.constant 0 : index
    %c0_0 = arith.constant 0 : index
    %c0_1 = arith.constant 0 : index
    %1 = vector.load %arg34[%c0, %c0_0, %c0_1] : memref<17x17x3xf32, #tpu.memory_space<vmem>>, vector<17x17x3xf32>
    tpu.vector_store %arg34[%c0, %c0_0, %c0_1], %0 {strides = array<i32>} : memref<17x17x3xf32, #tpu.memory_space<vmem>>, vector<17x17x3xf32>,
    %cst_2 = arith.constant 0.000000e+00 : f32
    %2 = vector.broadcast %cst_2 : f32 to vector<10x10x8xf32>
    %c0_3 = arith.constant 0 : index
    %c0_4 = arith.constant 0 : index
    %c0_5 = arith.constant 0 : index
    %3 = vector.load %arg36[%c0_3, %c0_4, %c0_5] : memref<10x10x8xf32, #tpu.memory_space<vmem>>, vector<10x10x8xf32>
    tpu.vector_store %arg36[%c0_3, %c0_4, %c0_5], %2 {strides = array<i32>} : memref<10x10x8xf32, #tpu.memory_space<vmem>>, vector<10x10x8xf32>,
    %cst_6 = arith.constant 0.000000e+00 : f32
    %4 = vector.broadcast %cst_6 : f32 to vector<9x9x32xf32>
    %c0_7 = arith.constant 0 : index
    %c0_8 = arith.constant 0 : index
    %c0_9 = arith.constant 0 : index
    %5 = vector.load %arg37[%c0_7, %c0_8, %c0_9] : memref<9x9x32xf32, #tpu.memory_space<vmem>>, vector<9x9x32xf32>
    tpu.vector_store %arg37[%c0_7, %c0_8, %c0_9], %4 {strides = array<i32>} : memref<9x9x32xf32, #tpu.memory_space<vmem>>, vector<9x9x32xf32>,
    %c0_10 = arith.constant 0 : index
    %c0_11 = arith.constant 0 : index
    %c0_12 = arith.constant 0 : index
    %c0_13 = arith.constant 0 : index
    %6 = vector.load %arg1[%c0_10, %c0_11, %c0_12, %c0_13] : memref<1x16x16x3xf32, #tpu.memory_space<vmem>>, vector<1x16x16x3xf32>
    %7 = vector.shape_cast %6 : vector<1x16x16x3xf32> to vector<16x16x3xf32>
    %c0_14 = arith.constant 0 : index
    %c0_15 = arith.constant 0 : index
    %c0_16 = arith.constant 0 : index
    %8 = vector.load %arg34[%c0_14, %c0_15, %c0_16] : memref<17x17x3xf32, #tpu.memory_space<vmem>>, vector<16x16x3xf32>
    tpu.vector_store %arg34[%c0_14, %c0_15, %c0_16], %7 {strides = array<i32>} : memref<17x17x3xf32, #tpu.memory_space<vmem>>, vector<16x16x3xf32>,
    %c0_17 = arith.constant 0 : index
    %c0_18 = arith.constant 0 : index
    %9 = vector.load %arg2[%c0_17, %c0_18] : memref<8x15xf32, #tpu.memory_space<vmem>>, vector<8x15xf32>
    %c0_19 = arith.constant 0 : index
    %c0_20 = arith.constant 0 : index
    %10 = vector.load %arg3[%c0_19, %c0_20] : memref<4x7xf32, #tpu.memory_space<vmem>>, vector<4x7xf32>
    %c0_21 = arith.constant 0 : index
    %c0_22 = arith.constant 0 : index
    %11 = vector.load %arg5[%c0_21, %c0_22] : memref<1x8xf32, #tpu.memory_space<vmem>>, vector<1x8xf32>
    %c0_23 = arith.constant 0 : index
    %c0_24 = arith.constant 0 : index
    %12 = vector.load %arg6[%c0_23, %c0_24] : memref<1x8xf32, #tpu.memory_space<vmem>>, vector<1x8xf32>
    %cst_25 = arith.constant 0.000000e+00 : f32
    %13 = vector.broadcast %cst_25 : f32 to vector<15x8xf32>
    %c0_26 = arith.constant 0 : index
    %c0_27 = arith.constant 0 : index
    %c0_28 = arith.constant 0 : index
    %14 = vector.load %arg34[%c0_26, %c0_27, %c0_28] : memref<17x17x3xf32, #tpu.memory_space<vmem>>, vector<1x15x3xf32>
    %15 = vector.shape_cast %14 : vector<1x15x3xf32> to vector<15x3xf32>
    %c0_29 = arith.constant 0 : index
    %c0_30 = arith.constant 0 : index
    %c0_31 = arith.constant 0 : index
    %16 = vector.load %arg4[%c0_29, %c0_30, %c0_31] : memref<9x3x8xf32, #tpu.memory_space<vmem>>, vector<1x3x8xf32>
    %17 = vector.shape_cast %16 : vector<1x3x8xf32> to vector<3x8xf32>
    %cst_32 = arith.constant dense<0.000000e+00> : vector<15x8xf32>
    %18 = tpu.matmul %15, %17, %cst_32 {dimension_numbers = #tpu.dot_dimension_numbers<[1], [0], [0], [1], [0, 0, 1, 1], [], []>} : vector<15x3xf32>, vector<3x8xf32>, vector<15x8xf32> -> vector<15x8xf32>
    %19 = arith.addf %13, %18 : vector<15x8xf32>
    %c0_33 = arith.constant 0 : index
    %c1 = arith.constant 1 : index
    %c0_34 = arith.constant 0 : index
    %20 = vector.load %arg34[%c0_33, %c1, %c0_34] : memref<17x17x3xf32, #tpu.memory_space<vmem>>, vector<1x15x3xf32>
    %21 = vector.shape_cast %20 : vector<1x15x3xf32> to vector<15x3xf32>
    %c1_35 = arith.constant 1 : index
    %c0_36 = arith.constant 0 : index
    %c0_37 = arith.constant 0 : index
    %22 = vector.load %arg4[%c1_35, %c0_36, %c0_37] : memref<9x3x8xf32, #tpu.memory_space<vmem>>, vector<1x3x8xf32>
    %23 = vector.shape_cast %22 : vector<1x3x8xf32> to vector<3x8xf32>
    %cst_38 = arith.constant dense<0.000000e+00> : vector<15x8xf32>
    %24 = tpu.matmul %21, %23, %cst_38 {dimension_numbers = #tpu.dot_dimension_numbers<[1], [0], [0], [1], [0, 0, 1, 1], [], []>} : vector<15x3xf32>, vector<3x8xf32>, vector<15x8xf32> -> vector<15x8xf32>
    %25 = arith.addf %19, %24 : vector<15x8xf32>
    %c0_39 = arith.constant 0 : index
    %c2 = arith.constant 2 : index
    %c0_40 = arith.constant 0 : index
    %26 = vector.load %arg34[%c0_39, %c2, %c0_40] : memref<17x17x3xf32, #tpu.memory_space<vmem>>, vector<1x15x3xf32>
    %27 = vector.shape_cast %26 : vector<1x15x3xf32> to vector<15x3xf32>
    %c2_41 = arith.constant 2 : index
    %c0_42 = arith.constant 0 : index
    %c0_43 = arith.constant 0 : index
    %28 = vector.load %arg4[%c2_41, %c0_42, %c0_43] : memref<9x3x8xf32, #tpu.memory_space<vmem>>, vector<1x3x8xf32>
    %29 = vector.shape_cast %28 : vector<1x3x8xf32> to vector<3x8xf32>
    %cst_44 = arith.constant dense<0.000000e+00> : vector<15x8xf32>
    %30 = tpu.matmul %27, %29, %cst_44 {dimension_numbers = #tpu.dot_dimension_numbers<[1], [0], [0], [1], [0, 0, 1, 1], [], []>} : vector<15x3xf32>, vector<3x8xf32>, vector<15x8xf32> -> vector<15x8xf32>
    %31 = arith.addf %25, %30 : vector<15x8xf32>
    %c1_45 = arith.constant 1 : index
    %c0_46 = arith.constant 0 : index
    %c0_47 = arith.constant 0 : index
    %32 = vector.load %arg34[%c1_45, %c0_46, %c0_47] : memref<17x17x3xf32, #tpu.memory_space<vmem>>, vector<1x15x3xf32>
    %33 = vector.shape_cast %32 : vector<1x15x3xf32> to vector<15x3xf32>
    %c3 = arith.constant 3 : index
    %c0_48 = arith.constant 0 : index
    %c0_49 = arith.constant 0 : index
    %34 = vector.load %arg4[%c3, %c0_48, %c0_49] : memref<9x3x8xf32, #tpu.memory_space<vmem>>, vector<1x3x8xf32>
    %35 = vector.shape_cast %34 : vector<1x3x8xf32> to vector<3x8xf32>
    %cst_50 = arith.constant dense<0.000000e+00> : vector<15x8xf32>
    %36 = tpu.matmul %33, %35, %cst_50 {dimension_numbers = #tpu.dot_dimension_numbers<[1], [0], [0], [1], [0, 0, 1, 1], [], []>} : vector<15x3xf32>, vector<3x8xf32>, vector<15x8xf32> -> vector<15x8xf32>
    %37 = arith.addf %31, %36 : vector<15x8xf32>
    %c1_51 = arith.constant 1 : index
    %c1_52 = arith.constant 1 : index
    %c0_53 = arith.constant 0 : index
    %38 = vector.load %arg34[%c1_51, %c1_52, %c0_53] : memref<17x17x3xf32, #tpu.memory_space<vmem>>, vector<1x15x3xf32>
    %39 = vector.shape_cast %38 : vector<1x15x3xf32> to vector<15x3xf32>
    %c4 = arith.constant 4 : index
    %c0_54 = arith.constant 0 : index
    %c0_55 = arith.constant 0 : index
    %40 = vector.load %arg4[%c4, %c0_54, %c0_55] : memref<9x3x8xf32, #tpu.memory_space<vmem>>, vector<1x3x8xf32>
    %41 = vector.shape_cast %40 : vector<1x3x8xf32> to vector<3x8xf32>
    %cst_56 = arith.constant dense<0.000000e+00> : vector<15x8xf32>
    %42 = tpu.matmul %39, %41, %cst_56 {dimension_numbers = #tpu.dot_dimension_numbers<[1], [0], [0], [1], [0, 0, 1, 1], [], []>} : vector<15x3xf32>, vector<3x8xf32>, vector<15x8xf32> -> vector<15x8xf32>
    %43 = arith.addf %37, %42 : vector<15x8xf32>
    %c1_57 = arith.constant 1 : index
    %c2_58 = arith.constant 2 : index
    %c0_59 = arith.constant 0 : index
    %44 = vector.load %arg34[%c1_57, %c2_58, %c0_59] : memref<17x17x3xf32, #tpu.memory_space<vmem>>, vector<1x15x3xf32>
    %45 = vector.shape_cast %44 : vector<1x15x3xf32> to vector<15x3xf32>
    %c5 = arith.constant 5 : index
    %c0_60 = arith.constant 0 : index
    %c0_61 = arith.constant 0 : index
    %46 = vector.load %arg4[%c5, %c0_60, %c0_61] : memref<9x3x8xf32, #tpu.memory_space<vmem>>, vector<1x3x8xf32>
    %47 = vector.shape_cast %46 : vector<1x3x8xf32> to vector<3x8xf32>
    %cst_62 = arith.constant dense<0.000000e+00> : vector<15x8xf32>
    %48 = tpu.matmul %45, %47, %cst_62 {dimension_numbers = #tpu.dot_dimension_numbers<[1], [0], [0], [1], [0, 0, 1, 1], [], []>} : vector<15x3xf32>, vector<3x8xf32>, vector<15x8xf32> -> vector<15x8xf32>
    %49 = arith.addf %43, %48 : vector<15x8xf32>
    %c2_63 = arith.constant 2 : index
    %c0_64 = arith.constant 0 : index
    %c0_65 = arith.constant 0 : index
    %50 = vector.load %arg34[%c2_63, %c0_64, %c0_65] : memref<17x17x3xf32, #tpu.memory_space<vmem>>, vector<1x15x3xf32>
    %51 = vector.shape_cast %50 : vector<1x15x3xf32> to vector<15x3xf32>
    %c6 = arith.constant 6 : index
    %c0_66 = arith.constant 0 : index
    %c0_67 = arith.constant 0 : index
    %52 = vector.load %arg4[%c6, %c0_66, %c0_67] : memref<9x3x8xf32, #tpu.memory_space<vmem>>, vector<1x3x8xf32>
    %53 = vector.shape_cast %52 : vector<1x3x8xf32> to vector<3x8xf32>
    %cst_68 = arith.constant dense<0.000000e+00> : vector<15x8xf32>
    %54 = tpu.matmul %51, %53, %cst_68 {dimension_numbers = #tpu.dot_dimension_numbers<[1], [0], [0], [1], [0, 0, 1, 1], [], []>} : vector<15x3xf32>, vector<3x8xf32>, vector<15x8xf32> -> vector<15x8xf32>
    %55 = arith.addf %49, %54 : vector<15x8xf32>
    %c2_69 = arith.constant 2 : index
    %c1_70 = arith.constant 1 : index
    %c0_71 = arith.constant 0 : index
    %56 = vector.load %arg34[%c2_69, %c1_70, %c0_71] : memref<17x17x3xf32, #tpu.memory_space<vmem>>, vector<1x15x3xf32>
    %57 = vector.shape_cast %56 : vector<1x15x3xf32> to vector<15x3xf32>
    %c7 = arith.constant 7 : index
    %c0_72 = arith.constant 0 : index
    %c0_73 = arith.constant 0 : index
    %58 = vector.load %arg4[%c7, %c0_72, %c0_73] : memref<9x3x8xf32, #tpu.memory_space<vmem>>, vector<1x3x8xf32>
    %59 = vector.shape_cast %58 : vector<1x3x8xf32> to vector<3x8xf32>
    %cst_74 = arith.constant dense<0.000000e+00> : vector<15x8xf32>
    %60 = tpu.matmul %57, %59, %cst_74 {dimension_numbers = #tpu.dot_dimension_numbers<[1], [0], [0], [1], [0, 0, 1, 1], [], []>} : vector<15x3xf32>, vector<3x8xf32>, vector<15x8xf32> -> vector<15x8xf32>
    %61 = arith.addf %55, %60 : vector<15x8xf32>
    %c2_75 = arith.constant 2 : index
    %c2_76 = arith.constant 2 : index
    %c0_77 = arith.constant 0 : index
    %62 = vector.load %arg34[%c2_75, %c2_76, %c0_77] : memref<17x17x3xf32, #tpu.memory_space<vmem>>, vector<1x15x3xf32>
    %63 = vector.shape_cast %62 : vector<1x15x3xf32> to vector<15x3xf32>
    %c8 = arith.constant 8 : index
    %c0_78 = arith.constant 0 : index
    %c0_79 = arith.constant 0 : index
    %64 = vector.load %arg4[%c8, %c0_78, %c0_79] : memref<9x3x8xf32, #tpu.memory_space<vmem>>, vector<1x3x8xf32>
    %65 = vector.shape_cast %64 : vector<1x3x8xf32> to vector<3x8xf32>
    %cst_80 = arith.constant dense<0.000000e+00> : vector<15x8xf32>
    %66 = tpu.matmul %63, %65, %cst_80 {dimension_numbers = #tpu.dot_dimension_numbers<[1], [0], [0], [1], [0, 0, 1, 1], [], []>} : vector<15x3xf32>, vector<3x8xf32>, vector<15x8xf32> -> vector<15x8xf32>
    %67 = arith.addf %61, %66 : vector<15x8xf32>
    %cst_81 = arith.constant dense<0.000000e+00> : vector<8x8xf32>
    %68 = tpu.matmul %9, %67, %cst_81 {dimension_numbers = #tpu.dot_dimension_numbers<[1], [0], [0], [1], [0, 0, 1, 1], [], []>} : vector<8x15xf32>, vector<15x8xf32>, vector<8x8xf32> -> vector<8x8xf32>
    %69 = vector.broadcast %11 : vector<1x8xf32> to vector<8x8xf32>
    %70 = arith.mulf %68, %69 : vector<8x8xf32>
    %71 = vector.broadcast %12 : vector<1x8xf32> to vector<8x8xf32>
    %72 = arith.addf %70, %71 : vector<8x8xf32>
    %73 = arith.negf %72 : vector<8x8xf32>
    %74 = math.exp %73 : vector<8x8xf32>
    %cst_82 = arith.constant 1.000000e+00 : f32
    %75 = vector.broadcast %cst_82 : f32 to vector<8x8xf32>
    %76 = arith.addf %75, %74 : vector<8x8xf32>
    %77 = arith.divf %75, %76 : vector<8x8xf32>
    %78 = arith.mulf %72, %77 : vector<8x8xf32>
    %c0_83 = arith.constant 0 : index
    %c0_84 = arith.constant 0 : index
    %79 = vector.load %arg35[%c0_83, %c0_84] : memref<64x8xf32, #tpu.memory_space<vmem>>, vector<8x8xf32>
    tpu.vector_store %arg35[%c0_83, %c0_84], %78 {strides = array<i32>} : memref<64x8xf32, #tpu.memory_space<vmem>>, vector<8x8xf32>,
    %c1_85 = arith.constant 1 : index
    %c1_86 = arith.constant 1 : index
    %c0_87 = arith.constant 0 : index
    %80 = vector.load %arg36[%c1_85, %c1_86, %c0_87] : memref<10x10x8xf32, #tpu.memory_space<vmem>>, vector<1x8x8xf32>
    %81 = vector.shape_cast %80 : vector<1x8x8xf32> to vector<8x8xf32>
    %82 = vector.shape_cast %78 : vector<8x8xf32> to vector<1x8x8xf32>
    tpu.vector_store %arg36[%c1_85, %c1_86, %c0_87], %82 {strides = array<i32>} : memref<10x10x8xf32, #tpu.memory_space<vmem>>, vector<1x8x8xf32>,
    %cst_88 = arith.constant 0.000000e+00 : f32
    %83 = vector.broadcast %cst_88 : f32 to vector<15x8xf32>
    %c2_89 = arith.constant 2 : index
    %c0_90 = arith.constant 0 : index
    %c0_91 = arith.constant 0 : index
    %84 = vector.load %arg34[%c2_89, %c0_90, %c0_91] : memref<17x17x3xf32, #tpu.memory_space<vmem>>, vector<1x15x3xf32>
    %85 = vector.shape_cast %84 : vector<1x15x3xf32> to vector<15x3xf32>
    %c0_92 = arith.constant 0 : index
    %c0_93 = arith.constant 0 : index
    %c0_94 = arith.constant 0 : index
    %86 = vector.load %arg4[%c0_92, %c0_93, %c0_94] : memref<9x3x8xf32, #tpu.memory_space<vmem>>, vector<1x3x8xf32>
    %87 = vector.shape_cast %86 : vector<1x3x8xf32> to vector<3x8xf32>
    %cst_95 = arith.constant dense<0.000000e+00> : vector<15x8xf32>
    %88 = tpu.matmul %85, %87, %cst_95 {dimension_numbers = #tpu.dot_dimension_numbers<[1], [0], [0], [1], [0, 0, 1, 1], [], []>} : vector<15x3xf32>, vector<3x8xf32>, vector<15x8xf32> -> vector<15x8xf32>
    %89 = arith.addf %83, %88 : vector<15x8xf32>
    %c2_96 = arith.constant 2 : index
    %c1_97 = arith.constant 1 : index
    %c0_98 = arith.constant 0 : index
    %90 = vector.load %arg34[%c2_96, %c1_97, %c0_98] : memref<17x17x3xf32, #tpu.memory_space<vmem>>, vector<1x15x3xf32>
    %91 = vector.shape_cast %90 : vector<1x15x3xf32> to vector<15x3xf32>
    %c1_99 = arith.constant 1 : index
    %c0_100 = arith.constant 0 : index
    %c0_101 = arith.constant 0 : index
    %92 = vector.load %arg4[%c1_99, %c0_100, %c0_101] : memref<9x3x8xf32, #tpu.memory_space<vmem>>, vector<1x3x8xf32>
    %93 = vector.shape_cast %92 : vector<1x3x8xf32> to vector<3x8xf32>
    %cst_102 = arith.constant dense<0.000000e+00> : vector<15x8xf32>
    %94 = tpu.matmul %91, %93, %cst_102 {dimension_numbers = #tpu.dot_dimension_numbers<[1], [0], [0], [1], [0, 0, 1, 1], [], []>} : vector<15x3xf32>, vector<3x8xf32>, vector<15x8xf32> -> vector<15x8xf32>
    %95 = arith.addf %89, %94 : vector<15x8xf32>
    %c2_103 = arith.constant 2 : index
    %c2_104 = arith.constant 2 : index
    %c0_105 = arith.constant 0 : index
    %96 = vector.load %arg34[%c2_103, %c2_104, %c0_105] : memref<17x17x3xf32, #tpu.memory_space<vmem>>, vector<1x15x3xf32>
    %97 = vector.shape_cast %96 : vector<1x15x3xf32> to vector<15x3xf32>
    %c2_106 = arith.constant 2 : index
    %c0_107 = arith.constant 0 : index
    %c0_108 = arith.constant 0 : index
    %98 = vector.load %arg4[%c2_106, %c0_107, %c0_108] : memref<9x3x8xf32, #tpu.memory_space<vmem>>, vector<1x3x8xf32>
    %99 = vector.shape_cast %98 : vector<1x3x8xf32> to vector<3x8xf32>
    %cst_109 = arith.constant dense<0.000000e+00> : vector<15x8xf32>
    %100 = tpu.matmul %97, %99, %cst_109 {dimension_numbers = #tpu.dot_dimension_numbers<[1], [0], [0], [1], [0, 0, 1, 1], [], []>} : vector<15x3xf32>, vector<3x8xf32>, vector<15x8xf32> -> vector<15x8xf32>
    %101 = arith.addf %95, %100 : vector<15x8xf32>
    %c3_110 = arith.constant 3 : index
    %c0_111 = arith.constant 0 : index
    %c0_112 = arith.constant 0 : index
    %102 = vector.load %arg34[%c3_110, %c0_111, %c0_112] : memref<17x17x3xf32, #tpu.memory_space<vmem>>, vector<1x15x3xf32>
    %103 = vector.shape_cast %102 : vector<1x15x3xf32> to vector<15x3xf32>
    %c3_113 = arith.constant 3 : index
    %c0_114 = arith.constant 0 : index
    %c0_115 = arith.constant 0 : index
    %104 = vector.load %arg4[%c3_113, %c0_114, %c0_115] : memref<9x3x8xf32, #tpu.memory_space<vmem>>, vector<1x3x8xf32>
    %105 = vector.shape_cast %104 : vector<1x3x8xf32> to vector<3x8xf32>
    %cst_116 = arith.constant dense<0.000000e+00> : vector<15x8xf32>
    %106 = tpu.matmul %103, %105, %cst_116 {dimension_numbers = #tpu.dot_dimension_numbers<[1], [0], [0], [1], [0, 0, 1, 1], [], []>} : vector<15x3xf32>, vector<3x8xf32>, vector<15x8xf32> -> vector<15x8xf32>
    %107 = arith.addf %101, %106 : vector<15x8xf32>
    %c3_117 = arith.constant 3 : index
    %c1_118 = arith.constant 1 : index
    %c0_119 = arith.constant 0 : index
    %108 = vector.load %arg34[%c3_117, %c1_118, %c0_119] : memref<17x17x3xf32, #tpu.memory_space<vmem>>, vector<1x15x3xf32>
    %109 = vector.shape_cast %108 : vector<1x15x3xf32> to vector<15x3xf32>
    %c4_120 = arith.constant 4 : index
    %c0_121 = arith.constant 0 : index
    %c0_122 = arith.constant 0 : index
    %110 = vector.load %arg4[%c4_120, %c0_121, %c0_122] : memref<9x3x8xf32, #tpu.memory_space<vmem>>, vector<1x3x8xf32>
    %111 = vector.shape_cast %110 : vector<1x3x8xf32> to vector<3x8xf32>
    %cst_123 = arith.constant dense<0.000000e+00> : vector<15x8xf32>
    %112 = tpu.matmul %109, %111, %cst_123 {dimension_numbers = #tpu.dot_dimension_numbers<[1], [0], [0], [1], [0, 0, 1, 1], [], []>} : vector<15x3xf32>, vector<3x8xf32>, vector<15x8xf32> -> vector<15x8xf32>
    %113 = arith.addf %107, %112 : vector<15x8xf32>
    %c3_124 = arith.constant 3 : index
    %c2_125 = arith.constant 2 : index
    %c0_126 = arith.constant 0 : index
    %114 = vector.load %arg34[%c3_124, %c2_125, %c0_126] : memref<17x17x3xf32, #tpu.memory_space<vmem>>, vector<1x15x3xf32>
    %115 = vector.shape_cast %114 : vector<1x15x3xf32> to vector<15x3xf32>
    %c5_127 = arith.constant 5 : index
    %c0_128 = arith.constant 0 : index
    %c0_129 = arith.constant 0 : index
    %116 = vector.load %arg4[%c5_127, %c0_128, %c0_129] : memref<9x3x8xf32, #tpu.memory_space<vmem>>, vector<1x3x8xf32>
    %117 = vector.shape_cast %116 : vector<1x3x8xf32> to vector<3x8xf32>
    %cst_130 = arith.constant dense<0.000000e+00> : vector<15x8xf32>
    %118 = tpu.matmul %115, %117, %cst_130 {dimension_numbers = #tpu.dot_dimension_numbers<[1], [0], [0], [1], [0, 0, 1, 1], [], []>} : vector<15x3xf32>, vector<3x8xf32>, vector<15x8xf32> -> vector<15x8xf32>
    %119 = arith.addf %113, %118 : vector<15x8xf32>
    %c4_131 = arith.constant 4 : index
    %c0_132 = arith.constant 0 : index
    %c0_133 = arith.constant 0 : index
    %120 = vector.load %arg34[%c4_131, %c0_132, %c0_133] : memref<17x17x3xf32, #tpu.memory_space<vmem>>, vector<1x15x3xf32>
    %121 = vector.shape_cast %120 : vector<1x15x3xf32> to vector<15x3xf32>
    %c6_134 = arith.constant 6 : index
    %c0_135 = arith.constant 0 : index
    %c0_136 = arith.constant 0 : index
    %122 = vector.load %arg4[%c6_134, %c0_135, %c0_136] : memref<9x3x8xf32, #tpu.memory_space<vmem>>, vector<1x3x8xf32>
    %123 = vector.shape_cast %122 : vector<1x3x8xf32> to vector<3x8xf32>
    %cst_137 = arith.constant dense<0.000000e+00> : vector<15x8xf32>
    %124 = tpu.matmul %121, %123, %cst_137 {dimension_numbers = #tpu.dot_dimension_numbers<[1], [0], [0], [1], [0, 0, 1, 1], [], []>} : vector<15x3xf32>, vector<3x8xf32>, vector<15x8xf32> -> vector<15x8xf32>
    %125 = arith.addf %119, %124 : vector<15x8xf32>
    %c4_138 = arith.constant 4 : index
    %c1_139 = arith.constant 1 : index
    %c0_140 = arith.constant 0 : index
    %126 = vector.load %arg34[%c4_138, %c1_139, %c0_140] : memref<17x17x3xf32, #tpu.memory_space<vmem>>, vector<1x15x3xf32>
    %127 = vector.shape_cast %126 : vector<1x15x3xf32> to vector<15x3xf32>
    %c7_141 = arith.constant 7 : index
    %c0_142 = arith.constant 0 : index
    %c0_143 = arith.constant 0 : index
    %128 = vector.load %arg4[%c7_141, %c0_142, %c0_143] : memref<9x3x8xf32, #tpu.memory_space<vmem>>, vector<1x3x8xf32>
    %129 = vector.shape_cast %128 : vector<1x3x8xf32> to vector<3x8xf32>
    %cst_144 = arith.constant dense<0.000000e+00> : vector<15x8xf32>
    %130 = tpu.matmul %127, %129, %cst_144 {dimension_numbers = #tpu.dot_dimension_numbers<[1], [0], [0], [1], [0, 0, 1, 1], [], []>} : vector<15x3xf32>, vector<3x8xf32>, vector<15x8xf32> -> vector<15x8xf32>
    %131 = arith.addf %125, %130 : vector<15x8xf32>
    %c4_145 = arith.constant 4 : index
    %c2_146 = arith.constant 2 : index
    %c0_147 = arith.constant 0 : index
    %132 = vector.load %arg34[%c4_145, %c2_146, %c0_147] : memref<17x17x3xf32, #tpu.memory_space<vmem>>, vector<1x15x3xf32>
    %133 = vector.shape_cast %132 : vector<1x15x3xf32> to vector<15x3xf32>
    %c8_148 = arith.constant 8 : index
    %c0_149 = arith.constant 0 : index
    %c0_150 = arith.constant 0 : index
    %134 = vector.load %arg4[%c8_148, %c0_149, %c0_150] : memref<9x3x8xf32, #tpu.memory_space<vmem>>, vector<1x3x8xf32>
    %135 = vector.shape_cast %134 : vector<1x3x8xf32> to vector<3x8xf32>
    %cst_151 = arith.constant dense<0.000000e+00> : vector<15x8xf32>
    %136 = tpu.matmul %133, %135, %cst_151 {dimension_numbers = #tpu.dot_dimension_numbers<[1], [0], [0], [1], [0, 0, 1, 1], [], []>} : vector<15x3xf32>, vector<3x8xf32>, vector<15x8xf32> -> vector<15x8xf32>
    %137 = arith.addf %131, %136 : vector<15x8xf32>
    %cst_152 = arith.constant dense<0.000000e+00> : vector<8x8xf32>
    %138 = tpu.matmul %9, %137, %cst_152 {dimension_numbers = #tpu.dot_dimension_numbers<[1], [0], [0], [1], [0, 0, 1, 1], [], []>} : vector<8x15xf32>, vector<15x8xf32>, vector<8x8xf32> -> vector<8x8xf32>
    %139 = vector.broadcast %11 : vector<1x8xf32> to vector<8x8xf32>
    %140 = arith.mulf %138, %139 : vector<8x8xf32>
    %141 = vector.broadcast %12 : vector<1x8xf32> to vector<8x8xf32>
    %142 = arith.addf %140, %141 : vector<8x8xf32>
    %143 = arith.negf %142 : vector<8x8xf32>
    %144 = math.exp %143 : vector<8x8xf32>
    %cst_153 = arith.constant 1.000000e+00 : f32
    %145 = vector.broadcast %cst_153 : f32 to vector<8x8xf32>
    %146 = arith.addf %145, %144 : vector<8x8xf32>
    %147 = arith.divf %145, %146 : vector<8x8xf32>
    %148 = arith.mulf %142, %147 : vector<8x8xf32>
    %c8_154 = arith.constant 8 : index
    %c0_155 = arith.constant 0 : index
    %149 = vector.load %arg35[%c8_154, %c0_155] : memref<64x8xf32, #tpu.memory_space<vmem>>, vector<8x8xf32>
    tpu.vector_store %arg35[%c8_154, %c0_155], %148 {strides = array<i32>} : memref<64x8xf32, #tpu.memory_space<vmem>>, vector<8x8xf32>,
    %c2_156 = arith.constant 2 : index
    %c1_157 = arith.constant 1 : index
    %c0_158 = arith.constant 0 : index
    %150 = vector.load %arg36[%c2_156, %c1_157, %c0_158] : memref<10x10x8xf32, #tpu.memory_space<vmem>>, vector<1x8x8xf32>
    %151 = vector.shape_cast %150 : vector<1x8x8xf32> to vector<8x8xf32>
    %152 = vector.shape_cast %148 : vector<8x8xf32> to vector<1x8x8xf32>
    tpu.vector_store %arg36[%c2_156, %c1_157, %c0_158], %152 {strides = array<i32>} : memref<10x10x8xf32, #tpu.memory_space<vmem>>, vector<1x8x8xf32>,
    %cst_159 = arith.constant 0.000000e+00 : f32
    %153 = vector.broadcast %cst_159 : f32 to vector<15x8xf32>
    %c4_160 = arith.constant 4 : index
    %c0_161 = arith.constant 0 : index
    %c0_162 = arith.constant 0 : index
    %154 = vector.load %arg34[%c4_160, %c0_161, %c0_162] : memref<17x17x3xf32, #tpu.memory_space<vmem>>, vector<1x15x3xf32>
    %155 = vector.shape_cast %154 : vector<1x15x3xf32> to vector<15x3xf32>
    %c0_163 = arith.constant 0 : index
    %c0_164 = arith.constant 0 : index
    %c0_165 = arith.constant 0 : index
    %156 = vector.load %arg4[%c0_163, %c0_164, %c0_165] : memref<9x3x8xf32, #tpu.memory_space<vmem>>, vector<1x3x8xf32>
    %157 = vector.shape_cast %156 : vector<1x3x8xf32> to vector<3x8xf32>
    %cst_166 = arith.constant dense<0.000000e+00> : vector<15x8xf32>
    %158 = tpu.matmul %155, %157, %cst_166 {dimension_numbers = #tpu.dot_dimension_numbers<[1], [0], [0], [1], [0, 0, 1, 1], [], []>} : vector<15x3xf32>, vector<3x8xf32>, vector<15x8xf32> -> vector<15x8xf32>
    %159 = arith.addf %153, %158 : vector<15x8xf32>
    %c4_167 = arith.constant 4 : index
    %c1_168 = arith.constant 1 : index
    %c0_169 = arith.constant 0 : index
    %160 = vector.load %arg34[%c4_167, %c1_168, %c0_169] : memref<17x17x3xf32, #tpu.memory_space<vmem>>, vector<1x15x3xf32>
    %161 = vector.shape_cast %160 : vector<1x15x3xf32> to vector<15x3xf32>
    %c1_170 = arith.constant 1 : index
    %c0_171 = arith.constant 0 : index
    %c0_172 = arith.constant 0 : index
    %162 = vector.load %arg4[%c1_170, %c0_171, %c0_172] : memref<9x3x8xf32, #tpu.memory_space<vmem>>, vector<1x3x8xf32>
    %163 = vector.shape_cast %162 : vector<1x3x8xf32> to vector<3x8xf32>
    %cst_173 = arith.constant dense<0.000000e+00> : vector<15x8xf32>
    %164 = tpu.matmul %161, %163, %cst_173 {dimension_numbers = #tpu.dot_dimension_numbers<[1], [0], [0], [1], [0, 0, 1, 1], [], []>} : vector<15x3xf32>, vector<3x8xf32>, vector<15x8xf32> -> vector<15x8xf32>
    %165 = arith.addf %159, %164 : vector<15x8xf32>
    %c4_174 = arith.constant 4 : index
    %c2_175 = arith.constant 2 : index
    %c0_176 = arith.constant 0 : index
    %166 = vector.load %arg34[%c4_174, %c2_175, %c0_176] : memref<17x17x3xf32, #tpu.memory_space<vmem>>, vector<1x15x3xf32>
    %167 = vector.shape_cast %166 : vector<1x15x3xf32> to vector<15x3xf32>
    %c2_177 = arith.constant 2 : index
    %c0_178 = arith.constant 0 : index
    %c0_179 = arith.constant 0 : index
    %168 = vector.load %arg4[%c2_177, %c0_178, %c0_179] : memref<9x3x8xf32, #tpu.memory_space<vmem>>, vector<1x3x8xf32>
    %169 = vector.shape_cast %168 : vector<1x3x8xf32> to vector<3x8xf32>
    %cst_180 = arith.constant dense<0.000000e+00> : vector<15x8xf32>
    %170 = tpu.matmul %167, %169, %cst_180 {dimension_numbers = #tpu.dot_dimension_numbers<[1], [0], [0], [1], [0, 0, 1, 1], [], []>} : vector<15x3xf32>, vector<3x8xf32>, vector<15x8xf32> -> vector<15x8xf32>
    %171 = arith.addf %165, %170 : vector<15x8xf32>
    %c5_181 = arith.constant 5 : index
    %c0_182 = arith.constant 0 : index
    %c0_183 = arith.constant 0 : index
    %172 = vector.load %arg34[%c5_181, %c0_182, %c0_183] : memref<17x17x3xf32, #tpu.memory_space<vmem>>, vector<1x15x3xf32>
    %173 = vector.shape_cast %172 : vector<1x15x3xf32> to vector<15x3xf32>
    %c3_184 = arith.constant 3 : index
    %c0_185 = arith.constant 0 : index
    %c0_186 = arith.constant 0 : index
    %174 = vector.load %arg4[%c3_184, %c0_185, %c0_186] : memref<9x3x8xf32, #tpu.memory_space<vmem>>, vector<1x3x8xf32>
    %175 = vector.shape_cast %174 : vector<1x3x8xf32> to vector<3x8xf32>
    %cst_187 = arith.constant dense<0.000000e+00> : vector<15x8xf32>
    %176 = tpu.matmul %173, %175, %cst_187 {dimension_numbers = #tpu.dot_dimension_numbers<[1], [0], [0], [1], [0, 0, 1, 1], [], []>} : vector<15x3xf32>, vector<3x8xf32>, vector<15x8xf32> -> vector<15x8xf32>
    %177 = arith.addf %171, %176 : vector<15x8xf32>
    %c5_188 = arith.constant 5 : index
    %c1_189 = arith.constant 1 : index
    %c0_190 = arith.constant 0 : index
    %178 = vector.load %arg34[%c5_188, %c1_189, %c0_190] : memref<17x17x3xf32, #tpu.memory_space<vmem>>, vector<1x15x3xf32>
    %179 = vector.shape_cast %178 : vector<1x15x3xf32> to vector<15x3xf32>
    %c4_191 = arith.constant 4 : index
    %c0_192 = arith.constant 0 : index
    %c0_193 = arith.constant 0 : index
    %180 = vector.load %arg4[%c4_191, %c0_192, %c0_193] : memref<9x3x8xf32, #tpu.memory_space<vmem>>, vector<1x3x8xf32>
    %181 = vector.shape_cast %180 : vector<1x3x8xf32> to vector<3x8xf32>
    %cst_194 = arith.constant dense<0.000000e+00> : vector<15x8xf32>
    %182 = tpu.matmul %179, %181, %cst_194 {dimension_numbers = #tpu.dot_dimension_numbers<[1], [0], [0], [1], [0, 0, 1, 1], [], []>} : vector<15x3xf32>, vector<3x8xf32>, vector<15x8xf32> -> vector<15x8xf32>
    %183 = arith.addf %177, %182 : vector<15x8xf32>
    %c5_195 = arith.constant 5 : index
    %c2_196 = arith.constant 2 : index
    %c0_197 = arith.constant 0 : index
    %184 = vector.load %arg34[%c5_195, %c2_196, %c0_197] : memref<17x17x3xf32, #tpu.memory_space<vmem>>, vector<1x15x3xf32>
    %185 = vector.shape_cast %184 : vector<1x15x3xf32> to vector<15x3xf32>
    %c5_198 = arith.constant 5 : index
    %c0_199 = arith.constant 0 : index
    %c0_200 = arith.constant 0 : index
    %186 = vector.load %arg4[%c5_198, %c0_199, %c0_200] : memref<9x3x8xf32, #tpu.memory_space<vmem>>, vector<1x3x8xf32>
    %187 = vector.shape_cast %186 : vector<1x3x8xf32> to vector<3x8xf32>
    %cst_201 = arith.constant dense<0.000000e+00> : vector<15x8xf32>
    %188 = tpu.matmul %185, %187, %cst_201 {dimension_numbers = #tpu.dot_dimension_numbers<[1], [0], [0], [1], [0, 0, 1, 1], [], []>} : vector<15x3xf32>, vector<3x8xf32>, vector<15x8xf32> -> vector<15x8xf32>
    %189 = arith.addf %183, %188 : vector<15x8xf32>
    %c6_202 = arith.constant 6 : index
    %c0_203 = arith.constant 0 : index
    %c0_204 = arith.constant 0 : index
    %190 = vector.load %arg34[%c6_202, %c0_203, %c0_204] : memref<17x17x3xf32, #tpu.memory_space<vmem>>, vector<1x15x3xf32>
    %191 = vector.shape_cast %190 : vector<1x15x3xf32> to vector<15x3xf32>
    %c6_205 = arith.constant 6 : index
    %c0_206 = arith.constant 0 : index
    %c0_207 = arith.constant 0 : index
    %192 = vector.load %arg4[%c6_205, %c0_206, %c0_207] : memref<9x3x8xf32, #tpu.memory_space<vmem>>, vector<1x3x8xf32>
    %193 = vector.shape_cast %192 : vector<1x3x8xf32> to vector<3x8xf32>
    %cst_208 = arith.constant dense<0.000000e+00> : vector<15x8xf32>
    %194 = tpu.matmul %191, %193, %cst_208 {dimension_numbers = #tpu.dot_dimension_numbers<[1], [0], [0], [1], [0, 0, 1, 1], [], []>} : vector<15x3xf32>, vector<3x8xf32>, vector<15x8xf32> -> vector<15x8xf32>
    %195 = arith.addf %189, %194 : vector<15x8xf32>
    %c6_209 = arith.constant 6 : index
    %c1_210 = arith.constant 1 : index
    %c0_211 = arith.constant 0 : index
    %196 = vector.load %arg34[%c6_209, %c1_210, %c0_211] : memref<17x17x3xf32, #tpu.memory_space<vmem>>, vector<1x15x3xf32>
    %197 = vector.shape_cast %196 : vector<1x15x3xf32> to vector<15x3xf32>
    %c7_212 = arith.constant 7 : index
    %c0_213 = arith.constant 0 : index
    %c0_214 = arith.constant 0 : index
    %198 = vector.load %arg4[%c7_212, %c0_213, %c0_214] : memref<9x3x8xf32, #tpu.memory_space<vmem>>, vector<1x3x8xf32>
    %199 = vector.shape_cast %198 : vector<1x3x8xf32> to vector<3x8xf32>
    %cst_215 = arith.constant dense<0.000000e+00> : vector<15x8xf32>
    %200 = tpu.matmul %197, %199, %cst_215 {dimension_numbers = #tpu.dot_dimension_numbers<[1], [0], [0], [1], [0, 0, 1, 1], [], []>} : vector<15x3xf32>, vector<3x8xf32>, vector<15x8xf32> -> vector<15x8xf32>
    %201 = arith.addf %195, %200 : vector<15x8xf32>
    %c6_216 = arith.constant 6 : index
    %c2_217 = arith.constant 2 : index
    %c0_218 = arith.constant 0 : index
    %202 = vector.load %arg34[%c6_216, %c2_217, %c0_218] : memref<17x17x3xf32, #tpu.memory_space<vmem>>, vector<1x15x3xf32>
    %203 = vector.shape_cast %202 : vector<1x15x3xf32> to vector<15x3xf32>
    %c8_219 = arith.constant 8 : index
    %c0_220 = arith.constant 0 : index
    %c0_221 = arith.constant 0 : index
    %204 = vector.load %arg4[%c8_219, %c0_220, %c0_221] : memref<9x3x8xf32, #tpu.memory_space<vmem>>, vector<1x3x8xf32>
    %205 = vector.shape_cast %204 : vector<1x3x8xf32> to vector<3x8xf32>
    %cst_222 = arith.constant dense<0.000000e+00> : vector<15x8xf32>
    %206 = tpu.matmul %203, %205, %cst_222 {dimension_numbers = #tpu.dot_dimension_numbers<[1], [0], [0], [1], [0, 0, 1, 1], [], []>} : vector<15x3xf32>, vector<3x8xf32>, vector<15x8xf32> -> vector<15x8xf32>
    %207 = arith.addf %201, %206 : vector<15x8xf32>
    %cst_223 = arith.constant dense<0.000000e+00> : vector<8x8xf32>
    %208 = tpu.matmul %9, %207, %cst_223 {dimension_numbers = #tpu.dot_dimension_numbers<[1], [0], [0], [1], [0, 0, 1, 1], [], []>} : vector<8x15xf32>, vector<15x8xf32>, vector<8x8xf32> -> vector<8x8xf32>
    %209 = vector.broadcast %11 : vector<1x8xf32> to vector<8x8xf32>
    %210 = arith.mulf %208, %209 : vector<8x8xf32>
    %211 = vector.broadcast %12 : vector<1x8xf32> to vector<8x8xf32>
    %212 = arith.addf %210, %211 : vector<8x8xf32>
    %213 = arith.negf %212 : vector<8x8xf32>
    %214 = math.exp %213 : vector<8x8xf32>
    %cst_224 = arith.constant 1.000000e+00 : f32
    %215 = vector.broadcast %cst_224 : f32 to vector<8x8xf32>
    %216 = arith.addf %215, %214 : vector<8x8xf32>
    %217 = arith.divf %215, %216 : vector<8x8xf32>
    %218 = arith.mulf %212, %217 : vector<8x8xf32>
    %c16 = arith.constant 16 : index
    %c0_225 = arith.constant 0 : index
    %219 = vector.load %arg35[%c16, %c0_225] : memref<64x8xf32, #tpu.memory_space<vmem>>, vector<8x8xf32>
    tpu.vector_store %arg35[%c16, %c0_225], %218 {strides = array<i32>} : memref<64x8xf32, #tpu.memory_space<vmem>>, vector<8x8xf32>,
    %c3_226 = arith.constant 3 : index
    %c1_227 = arith.constant 1 : index
    %c0_228 = arith.constant 0 : index
    %220 = vector.load %arg36[%c3_226, %c1_227, %c0_228] : memref<10x10x8xf32, #tpu.memory_space<vmem>>, vector<1x8x8xf32>
    %221 = vector.shape_cast %220 : vector<1x8x8xf32> to vector<8x8xf32>
    %222 = vector.shape_cast %218 : vector<8x8xf32> to vector<1x8x8xf32>
    tpu.vector_store %arg36[%c3_226, %c1_227, %c0_228], %222 {strides = array<i32>} : memref<10x10x8xf32, #tpu.memory_space<vmem>>, vector<1x8x8xf32>,
    %cst_229 = arith.constant 0.000000e+00 : f32
    %223 = vector.broadcast %cst_229 : f32 to vector<15x8xf32>
    %c6_230 = arith.constant 6 : index
    %c0_231 = arith.constant 0 : index
    %c0_232 = arith.constant 0 : index
    %224 = vector.load %arg34[%c6_230, %c0_231, %c0_232] : memref<17x17x3xf32, #tpu.memory_space<vmem>>, vector<1x15x3xf32>
    %225 = vector.shape_cast %224 : vector<1x15x3xf32> to vector<15x3xf32>
    %c0_233 = arith.constant 0 : index
    %c0_234 = arith.constant 0 : index
    %c0_235 = arith.constant 0 : index
    %226 = vector.load %arg4[%c0_233, %c0_234, %c0_235] : memref<9x3x8xf32, #tpu.memory_space<vmem>>, vector<1x3x8xf32>
    %227 = vector.shape_cast %226 : vector<1x3x8xf32> to vector<3x8xf32>
    %cst_236 = arith.constant dense<0.000000e+00> : vector<15x8xf32>
    %228 = tpu.matmul %225, %227, %cst_236 {dimension_numbers = #tpu.dot_dimension_numbers<[1], [0], [0], [1], [0, 0, 1, 1], [], []>} : vector<15x3xf32>, vector<3x8xf32>, vector<15x8xf32> -> vector<15x8xf32>
    %229 = arith.addf %223, %228 : vector<15x8xf32>
    %c6_237 = arith.constant 6 : index
    %c1_238 = arith.constant 1 : index
    %c0_239 = arith.constant 0 : index
    %230 = vector.load %arg34[%c6_237, %c1_238, %c0_239] : memref<17x17x3xf32, #tpu.memory_space<vmem>>, vector<1x15x3xf32>
    %231 = vector.shape_cast %230 : vector<1x15x3xf32> to vector<15x3xf32>
    %c1_240 = arith.constant 1 : index
    %c0_241 = arith.constant 0 : index
    %c0_242 = arith.constant 0 : index
    %232 = vector.load %arg4[%c1_240, %c0_241, %c0_242] : memref<9x3x8xf32, #tpu.memory_space<vmem>>, vector<1x3x8xf32>
    %233 = vector.shape_cast %232 : vector<1x3x8xf32> to vector<3x8xf32>
    %cst_243 = arith.constant dense<0.000000e+00> : vector<15x8xf32>
    %234 = tpu.matmul %231, %233, %cst_243 {dimension_numbers = #tpu.dot_dimension_numbers<[1], [0], [0], [1], [0, 0, 1, 1], [], []>} : vector<15x3xf32>, vector<3x8xf32>, vector<15x8xf32> -> vector<15x8xf32>
    %235 = arith.addf %229, %234 : vector<15x8xf32>
    %c6_244 = arith.constant 6 : index
    %c2_245 = arith.constant 2 : index
    %c0_246 = arith.constant 0 : index
    %236 = vector.load %arg34[%c6_244, %c2_245, %c0_246] : memref<17x17x3xf32, #tpu.memory_space<vmem>>, vector<1x15x3xf32>
    %237 = vector.shape_cast %236 : vector<1x15x3xf32> to vector<15x3xf32>
    %c2_247 = arith.constant 2 : index
    %c0_248 = arith.constant 0 : index
    %c0_249 = arith.constant 0 : index
    %238 = vector.load %arg4[%c2_247, %c0_248, %c0_249] : memref<9x3x8xf32, #tpu.memory_space<vmem>>, vector<1x3x8xf32>
    %239 = vector.shape_cast %238 : vector<1x3x8xf32> to vector<3x8xf32>
    %cst_250 = arith.constant dense<0.000000e+00> : vector<15x8xf32>
    %240 = tpu.matmul %237, %239, %cst_250 {dimension_numbers = #tpu.dot_dimension_numbers<[1], [0], [0], [1], [0, 0, 1, 1], [], []>} : vector<15x3xf32>, vector<3x8xf32>, vector<15x8xf32> -> vector<15x8xf32>
    %241 = arith.addf %235, %240 : vector<15x8xf32>
    %c7_251 = arith.constant 7 : index
    %c0_252 = arith.constant 0 : index
    %c0_253 = arith.constant 0 : index
    %242 = vector.load %arg34[%c7_251, %c0_252, %c0_253] : memref<17x17x3xf32, #tpu.memory_space<vmem>>, vector<1x15x3xf32>
    %243 = vector.shape_cast %242 : vector<1x15x3xf32> to vector<15x3xf32>
    %c3_254 = arith.constant 3 : index
    %c0_255 = arith.constant 0 : index
    %c0_256 = arith.constant 0 : index
    %244 = vector.load %arg4[%c3_254, %c0_255, %c0_256] : memref<9x3x8xf32, #tpu.memory_space<vmem>>, vector<1x3x8xf32>
    %245 = vector.shape_cast %244 : vector<1x3x8xf32> to vector<3x8xf32>
    %cst_257 = arith.constant dense<0.000000e+00> : vector<15x8xf32>
    %246 = tpu.matmul %243, %245, %cst_257 {dimension_numbers = #tpu.dot_dimension_numbers<[1], [0], [0], [1], [0, 0, 1, 1], [], []>} : vector<15x3xf32>, vector<3x8xf32>, vector<15x8xf32> -> vector<15x8xf32>
    %247 = arith.addf %241, %246 : vector<15x8xf32>
    %c7_258 = arith.constant 7 : index
    %c1_259 = arith.constant 1 : index
    %c0_260 = arith.constant 0 : index
    %248 = vector.load %arg34[%c7_258, %c1_259, %c0_260] : memref<17x17x3xf32, #tpu.memory_space<vmem>>, vector<1x15x3xf32>
    %249 = vector.shape_cast %248 : vector<1x15x3xf32> to vector<15x3xf32>
    %c4_261 = arith.constant 4 : index
    %c0_262 = arith.constant 0 : index
    %c0_263 = arith.constant 0 : index
    %250 = vector.load %arg4[%c4_261, %c0_262, %c0_263] : memref<9x3x8xf32, #tpu.memory_space<vmem>>, vector<1x3x8xf32>
    %251 = vector.shape_cast %250 : vector<1x3x8xf32> to vector<3x8xf32>
    %cst_264 = arith.constant dense<0.000000e+00> : vector<15x8xf32>
    %252 = tpu.matmul %249, %251, %cst_264 {dimension_numbers = #tpu.dot_dimension_numbers<[1], [0], [0], [1], [0, 0, 1, 1], [], []>} : vector<15x3xf32>, vector<3x8xf32>, vector<15x8xf32> -> vector<15x8xf32>
    %253 = arith.addf %247, %252 : vector<15x8xf32>
    %c7_265 = arith.constant 7 : index
    %c2_266 = arith.constant 2 : index
    %c0_267 = arith.constant 0 : index
    %254 = vector.load %arg34[%c7_265, %c2_266, %c0_267] : memref<17x17x3xf32, #tpu.memory_space<vmem>>, vector<1x15x3xf32>
    %255 = vector.shape_cast %254 : vector<1x15x3xf32> to vector<15x3xf32>
    %c5_268 = arith.constant 5 : index
    %c0_269 = arith.constant 0 : index
    %c0_270 = arith.constant 0 : index
    %256 = vector.load %arg4[%c5_268, %c0_269, %c0_270] : memref<9x3x8xf32, #tpu.memory_space<vmem>>, vector<1x3x8xf32>
    %257 = vector.shape_cast %256 : vector<1x3x8xf32> to vector<3x8xf32>
    %cst_271 = arith.constant dense<0.000000e+00> : vector<15x8xf32>
    %258 = tpu.matmul %255, %257, %cst_271 {dimension_numbers = #tpu.dot_dimension_numbers<[1], [0], [0], [1], [0, 0, 1, 1], [], []>} : vector<15x3xf32>, vector<3x8xf32>, vector<15x8xf32> -> vector<15x8xf32>
    %259 = arith.addf %253, %258 : vector<15x8xf32>
    %c8_272 = arith.constant 8 : index
    %c0_273 = arith.constant 0 : index
    %c0_274 = arith.constant 0 : index
    %260 = vector.load %arg34[%c8_272, %c0_273, %c0_274] : memref<17x17x3xf32, #tpu.memory_space<vmem>>, vector<1x15x3xf32>
    %261 = vector.shape_cast %260 : vector<1x15x3xf32> to vector<15x3xf32>
    %c6_275 = arith.constant 6 : index
    %c0_276 = arith.constant 0 : index
    %c0_277 = arith.constant 0 : index
    %262 = vector.load %arg4[%c6_275, %c0_276, %c0_277] : memref<9x3x8xf32, #tpu.memory_space<vmem>>, vector<1x3x8xf32>
    %263 = vector.shape_cast %262 : vector<1x3x8xf32> to vector<3x8xf32>
    %cst_278 = arith.constant dense<0.000000e+00> : vector<15x8xf32>
    %264 = tpu.matmul %261, %263, %cst_278 {dimension_numbers = #tpu.dot_dimension_numbers<[1], [0], [0], [1], [0, 0, 1, 1], [], []>} : vector<15x3xf32>, vector<3x8xf32>, vector<15x8xf32> -> vector<15x8xf32>
    %265 = arith.addf %259, %264 : vector<15x8xf32>
    %c8_279 = arith.constant 8 : index
    %c1_280 = arith.constant 1 : index
    %c0_281 = arith.constant 0 : index
    %266 = vector.load %arg34[%c8_279, %c1_280, %c0_281] : memref<17x17x3xf32, #tpu.memory_space<vmem>>, vector<1x15x3xf32>
    %267 = vector.shape_cast %266 : vector<1x15x3xf32> to vector<15x3xf32>
    %c7_282 = arith.constant 7 : index
    %c0_283 = arith.constant 0 : index
    %c0_284 = arith.constant 0 : index
    %268 = vector.load %arg4[%c7_282, %c0_283, %c0_284] : memref<9x3x8xf32, #tpu.memory_space<vmem>>, vector<1x3x8xf32>
    %269 = vector.shape_cast %268 : vector<1x3x8xf32> to vector<3x8xf32>
    %cst_285 = arith.constant dense<0.000000e+00> : vector<15x8xf32>
    %270 = tpu.matmul %267, %269, %cst_285 {dimension_numbers = #tpu.dot_dimension_numbers<[1], [0], [0], [1], [0, 0, 1, 1], [], []>} : vector<15x3xf32>, vector<3x8xf32>, vector<15x8xf32> -> vector<15x8xf32>
    %271 = arith.addf %265, %270 : vector<15x8xf32>
    %c8_286 = arith.constant 8 : index
    %c2_287 = arith.constant 2 : index
    %c0_288 = arith.constant 0 : index
    %272 = vector.load %arg34[%c8_286, %c2_287, %c0_288] : memref<17x17x3xf32, #tpu.memory_space<vmem>>, vector<1x15x3xf32>
    %273 = vector.shape_cast %272 : vector<1x15x3xf32> to vector<15x3xf32>
    %c8_289 = arith.constant 8 : index
    %c0_290 = arith.constant 0 : index
    %c0_291 = arith.constant 0 : index
    %274 = vector.load %arg4[%c8_289, %c0_290, %c0_291] : memref<9x3x8xf32, #tpu.memory_space<vmem>>, vector<1x3x8xf32>
    %275 = vector.shape_cast %274 : vector<1x3x8xf32> to vector<3x8xf32>
    %cst_292 = arith.constant dense<0.000000e+00> : vector<15x8xf32>
    %276 = tpu.matmul %273, %275, %cst_292 {dimension_numbers = #tpu.dot_dimension_numbers<[1], [0], [0], [1], [0, 0, 1, 1], [], []>} : vector<15x3xf32>, vector<3x8xf32>, vector<15x8xf32> -> vector<15x8xf32>
    %277 = arith.addf %271, %276 : vector<15x8xf32>
    %cst_293 = arith.constant dense<0.000000e+00> : vector<8x8xf32>
    %278 = tpu.matmul %9, %277, %cst_293 {dimension_numbers = #tpu.dot_dimension_numbers<[1], [0], [0], [1], [0, 0, 1, 1], [], []>} : vector<8x15xf32>, vector<15x8xf32>, vector<8x8xf32> -> vector<8x8xf32>
    %279 = vector.broadcast %11 : vector<1x8xf32> to vector<8x8xf32>
    %280 = arith.mulf %278, %279 : vector<8x8xf32>
    %281 = vector.broadcast %12 : vector<1x8xf32> to vector<8x8xf32>
    %282 = arith.addf %280, %281 : vector<8x8xf32>
    %283 = arith.negf %282 : vector<8x8xf32>
    %284 = math.exp %283 : vector<8x8xf32>
    %cst_294 = arith.constant 1.000000e+00 : f32
    %285 = vector.broadcast %cst_294 : f32 to vector<8x8xf32>
    %286 = arith.addf %285, %284 : vector<8x8xf32>
    %287 = arith.divf %285, %286 : vector<8x8xf32>
    %288 = arith.mulf %282, %287 : vector<8x8xf32>
    %c24 = arith.constant 24 : index
    %c0_295 = arith.constant 0 : index
    %289 = vector.load %arg35[%c24, %c0_295] : memref<64x8xf32, #tpu.memory_space<vmem>>, vector<8x8xf32>
    tpu.vector_store %arg35[%c24, %c0_295], %288 {strides = array<i32>} : memref<64x8xf32, #tpu.memory_space<vmem>>, vector<8x8xf32>,
    %c4_296 = arith.constant 4 : index
    %c1_297 = arith.constant 1 : index
    %c0_298 = arith.constant 0 : index
    %290 = vector.load %arg36[%c4_296, %c1_297, %c0_298] : memref<10x10x8xf32, #tpu.memory_space<vmem>>, vector<1x8x8xf32>
    %291 = vector.shape_cast %290 : vector<1x8x8xf32> to vector<8x8xf32>
    %292 = vector.shape_cast %288 : vector<8x8xf32> to vector<1x8x8xf32>
    tpu.vector_store %arg36[%c4_296, %c1_297, %c0_298], %292 {strides = array<i32>} : memref<10x10x8xf32, #tpu.memory_space<vmem>>, vector<1x8x8xf32>,
    %cst_299 = arith.constant 0.000000e+00 : f32
    %293 = vector.broadcast %cst_299 : f32 to vector<15x8xf32>
    %c8_300 = arith.constant 8 : index
    %c0_301 = arith.constant 0 : index
    %c0_302 = arith.constant 0 : index
    %294 = vector.load %arg34[%c8_300, %c0_301, %c0_302] : memref<17x17x3xf32, #tpu.memory_space<vmem>>, vector<1x15x3xf32>
    %295 = vector.shape_cast %294 : vector<1x15x3xf32> to vector<15x3xf32>
    %c0_303 = arith.constant 0 : index
    %c0_304 = arith.constant 0 : index
    %c0_305 = arith.constant 0 : index
    %296 = vector.load %arg4[%c0_303, %c0_304, %c0_305] : memref<9x3x8xf32, #tpu.memory_space<vmem>>, vector<1x3x8xf32>
    %297 = vector.shape_cast %296 : vector<1x3x8xf32> to vector<3x8xf32>
    %cst_306 = arith.constant dense<0.000000e+00> : vector<15x8xf32>
    %298 = tpu.matmul %295, %297, %cst_306 {dimension_numbers = #tpu.dot_dimension_numbers<[1], [0], [0], [1], [0, 0, 1, 1], [], []>} : vector<15x3xf32>, vector<3x8xf32>, vector<15x8xf32> -> vector<15x8xf32>
    %299 = arith.addf %293, %298 : vector<15x8xf32>
    %c8_307 = arith.constant 8 : index
    %c1_308 = arith.constant 1 : index
    %c0_309 = arith.constant 0 : index
    %300 = vector.load %arg34[%c8_307, %c1_308, %c0_309] : memref<17x17x3xf32, #tpu.memory_space<vmem>>, vector<1x15x3xf32>
    %301 = vector.shape_cast %300 : vector<1x15x3xf32> to vector<15x3xf32>
    %c1_310 = arith.constant 1 : index
    %c0_311 = arith.constant 0 : index
    %c0_312 = arith.constant 0 : index
    %302 = vector.load %arg4[%c1_310, %c0_311, %c0_312] : memref<9x3x8xf32, #tpu.memory_space<vmem>>, vector<1x3x8xf32>
    %303 = vector.shape_cast %302 : vector<1x3x8xf32> to vector<3x8xf32>
    %cst_313 = arith.constant dense<0.000000e+00> : vector<15x8xf32>
    %304 = tpu.matmul %301, %303, %cst_313 {dimension_numbers = #tpu.dot_dimension_numbers<[1], [0], [0], [1], [0, 0, 1, 1], [], []>} : vector<15x3xf32>, vector<3x8xf32>, vector<15x8xf32> -> vector<15x8xf32>
    %305 = arith.addf %299, %304 : vector<15x8xf32>
    %c8_314 = arith.constant 8 : index
    %c2_315 = arith.constant 2 : index
    %c0_316 = arith.constant 0 : index
    %306 = vector.load %arg34[%c8_314, %c2_315, %c0_316] : memref<17x17x3xf32, #tpu.memory_space<vmem>>, vector<1x15x3xf32>
    %307 = vector.shape_cast %306 : vector<1x15x3xf32> to vector<15x3xf32>
    %c2_317 = arith.constant 2 : index
    %c0_318 = arith.constant 0 : index
    %c0_319 = arith.constant 0 : index
    %308 = vector.load %arg4[%c2_317, %c0_318, %c0_319] : memref<9x3x8xf32, #tpu.memory_space<vmem>>, vector<1x3x8xf32>
    %309 = vector.shape_cast %308 : vector<1x3x8xf32> to vector<3x8xf32>
    %cst_320 = arith.constant dense<0.000000e+00> : vector<15x8xf32>
    %310 = tpu.matmul %307, %309, %cst_320 {dimension_numbers = #tpu.dot_dimension_numbers<[1], [0], [0], [1], [0, 0, 1, 1], [], []>} : vector<15x3xf32>, vector<3x8xf32>, vector<15x8xf32> -> vector<15x8xf32>
    %311 = arith.addf %305, %310 : vector<15x8xf32>
    %c9 = arith.constant 9 : index
    %c0_321 = arith.constant 0 : index
    %c0_322 = arith.constant 0 : index
    %312 = vector.load %arg34[%c9, %c0_321, %c0_322] : memref<17x17x3xf32, #tpu.memory_space<vmem>>, vector<1x15x3xf32>
    %313 = vector.shape_cast %312 : vector<1x15x3xf32> to vector<15x3xf32>
    %c3_323 = arith.constant 3 : index
    %c0_324 = arith.constant 0 : index
    %c0_325 = arith.constant 0 : index
    %314 = vector.load %arg4[%c3_323, %c0_324, %c0_325] : memref<9x3x8xf32, #tpu.memory_space<vmem>>, vector<1x3x8xf32>
    %315 = vector.shape_cast %314 : vector<1x3x8xf32> to vector<3x8xf32>
    %cst_326 = arith.constant dense<0.000000e+00> : vector<15x8xf32>
    %316 = tpu.matmul %313, %315, %cst_326 {dimension_numbers = #tpu.dot_dimension_numbers<[1], [0], [0], [1], [0, 0, 1, 1], [], []>} : vector<15x3xf32>, vector<3x8xf32>, vector<15x8xf32> -> vector<15x8xf32>
    %317 = arith.addf %311, %316 : vector<15x8xf32>
    %c9_327 = arith.constant 9 : index
    %c1_328 = arith.constant 1 : index
    %c0_329 = arith.constant 0 : index
    %318 = vector.load %arg34[%c9_327, %c1_328, %c0_329] : memref<17x17x3xf32, #tpu.memory_space<vmem>>, vector<1x15x3xf32>
    %319 = vector.shape_cast %318 : vector<1x15x3xf32> to vector<15x3xf32>
    %c4_330 = arith.constant 4 : index
    %c0_331 = arith.constant 0 : index
    %c0_332 = arith.constant 0 : index
    %320 = vector.load %arg4[%c4_330, %c0_331, %c0_332] : memref<9x3x8xf32, #tpu.memory_space<vmem>>, vector<1x3x8xf32>
    %321 = vector.shape_cast %320 : vector<1x3x8xf32> to vector<3x8xf32>
    %cst_333 = arith.constant dense<0.000000e+00> : vector<15x8xf32>
    %322 = tpu.matmul %319, %321, %cst_333 {dimension_numbers = #tpu.dot_dimension_numbers<[1], [0], [0], [1], [0, 0, 1, 1], [], []>} : vector<15x3xf32>, vector<3x8xf32>, vector<15x8xf32> -> vector<15x8xf32>
    %323 = arith.addf %317, %322 : vector<15x8xf32>
    %c9_334 = arith.constant 9 : index
    %c2_335 = arith.constant 2 : index
    %c0_336 = arith.constant 0 : index
    %324 = vector.load %arg34[%c9_334, %c2_335, %c0_336] : memref<17x17x3xf32, #tpu.memory_space<vmem>>, vector<1x15x3xf32>
    %325 = vector.shape_cast %324 : vector<1x15x3xf32> to vector<15x3xf32>
    %c5_337 = arith.constant 5 : index
    %c0_338 = arith.constant 0 : index
    %c0_339 = arith.constant 0 : index
    %326 = vector.load %arg4[%c5_337, %c0_338, %c0_339] : memref<9x3x8xf32, #tpu.memory_space<vmem>>, vector<1x3x8xf32>
    %327 = vector.shape_cast %326 : vector<1x3x8xf32> to vector<3x8xf32>
    %cst_340 = arith.constant dense<0.000000e+00> : vector<15x8xf32>
    %328 = tpu.matmul %325, %327, %cst_340 {dimension_numbers = #tpu.dot_dimension_numbers<[1], [0], [0], [1], [0, 0, 1, 1], [], []>} : vector<15x3xf32>, vector<3x8xf32>, vector<15x8xf32> -> vector<15x8xf32>
    %329 = arith.addf %323, %328 : vector<15x8xf32>
    %c10 = arith.constant 10 : index
    %c0_341 = arith.constant 0 : index
    %c0_342 = arith.constant 0 : index
    %330 = vector.load %arg34[%c10, %c0_341, %c0_342] : memref<17x17x3xf32, #tpu.memory_space<vmem>>, vector<1x15x3xf32>
    %331 = vector.shape_cast %330 : vector<1x15x3xf32> to vector<15x3xf32>
    %c6_343 = arith.constant 6 : index
    %c0_344 = arith.constant 0 : index
    %c0_345 = arith.constant 0 : index
    %332 = vector.load %arg4[%c6_343, %c0_344, %c0_345] : memref<9x3x8xf32, #tpu.memory_space<vmem>>, vector<1x3x8xf32>
    %333 = vector.shape_cast %332 : vector<1x3x8xf32> to vector<3x8xf32>
    %cst_346 = arith.constant dense<0.000000e+00> : vector<15x8xf32>
    %334 = tpu.matmul %331, %333, %cst_346 {dimension_numbers = #tpu.dot_dimension_numbers<[1], [0], [0], [1], [0, 0, 1, 1], [], []>} : vector<15x3xf32>, vector<3x8xf32>, vector<15x8xf32> -> vector<15x8xf32>
    %335 = arith.addf %329, %334 : vector<15x8xf32>
    %c10_347 = arith.constant 10 : index
    %c1_348 = arith.constant 1 : index
    %c0_349 = arith.constant 0 : index
    %336 = vector.load %arg34[%c10_347, %c1_348, %c0_349] : memref<17x17x3xf32, #tpu.memory_space<vmem>>, vector<1x15x3xf32>
    %337 = vector.shape_cast %336 : vector<1x15x3xf32> to vector<15x3xf32>
    %c7_350 = arith.constant 7 : index
    %c0_351 = arith.constant 0 : index
    %c0_352 = arith.constant 0 : index
    %338 = vector.load %arg4[%c7_350, %c0_351, %c0_352] : memref<9x3x8xf32, #tpu.memory_space<vmem>>, vector<1x3x8xf32>
    %339 = vector.shape_cast %338 : vector<1x3x8xf32> to vector<3x8xf32>
    %cst_353 = arith.constant dense<0.000000e+00> : vector<15x8xf32>
    %340 = tpu.matmul %337, %339, %cst_353 {dimension_numbers = #tpu.dot_dimension_numbers<[1], [0], [0], [1], [0, 0, 1, 1], [], []>} : vector<15x3xf32>, vector<3x8xf32>, vector<15x8xf32> -> vector<15x8xf32>
    %341 = arith.addf %335, %340 : vector<15x8xf32>
    %c10_354 = arith.constant 10 : index
    %c2_355 = arith.constant 2 : index
    %c0_356 = arith.constant 0 : index
    %342 = vector.load %arg34[%c10_354, %c2_355, %c0_356] : memref<17x17x3xf32, #tpu.memory_space<vmem>>, vector<1x15x3xf32>
    %343 = vector.shape_cast %342 : vector<1x15x3xf32> to vector<15x3xf32>
    %c8_357 = arith.constant 8 : index
    %c0_358 = arith.constant 0 : index
    %c0_359 = arith.constant 0 : index
    %344 = vector.load %arg4[%c8_357, %c0_358, %c0_359] : memref<9x3x8xf32, #tpu.memory_space<vmem>>, vector<1x3x8xf32>
    %345 = vector.shape_cast %344 : vector<1x3x8xf32> to vector<3x8xf32>
    %cst_360 = arith.constant dense<0.000000e+00> : vector<15x8xf32>
    %346 = tpu.matmul %343, %345, %cst_360 {dimension_numbers = #tpu.dot_dimension_numbers<[1], [0], [0], [1], [0, 0, 1, 1], [], []>} : vector<15x3xf32>, vector<3x8xf32>, vector<15x8xf32> -> vector<15x8xf32>
    %347 = arith.addf %341, %346 : vector<15x8xf32>
    %cst_361 = arith.constant dense<0.000000e+00> : vector<8x8xf32>
    %348 = tpu.matmul %9, %347, %cst_361 {dimension_numbers = #tpu.dot_dimension_numbers<[1], [0], [0], [1], [0, 0, 1, 1], [], []>} : vector<8x15xf32>, vector<15x8xf32>, vector<8x8xf32> -> vector<8x8xf32>
    %349 = vector.broadcast %11 : vector<1x8xf32> to vector<8x8xf32>
    %350 = arith.mulf %348, %349 : vector<8x8xf32>
    %351 = vector.broadcast %12 : vector<1x8xf32> to vector<8x8xf32>
    %352 = arith.addf %350, %351 : vector<8x8xf32>
    %353 = arith.negf %352 : vector<8x8xf32>
    %354 = math.exp %353 : vector<8x8xf32>
    %cst_362 = arith.constant 1.000000e+00 : f32
    %355 = vector.broadcast %cst_362 : f32 to vector<8x8xf32>
    %356 = arith.addf %355, %354 : vector<8x8xf32>
    %357 = arith.divf %355, %356 : vector<8x8xf32>
    %358 = arith.mulf %352, %357 : vector<8x8xf32>
    %c32 = arith.constant 32 : index
    %c0_363 = arith.constant 0 : index
    %359 = vector.load %arg35[%c32, %c0_363] : memref<64x8xf32, #tpu.memory_space<vmem>>, vector<8x8xf32>
    tpu.vector_store %arg35[%c32, %c0_363], %358 {strides = array<i32>} : memref<64x8xf32, #tpu.memory_space<vmem>>, vector<8x8xf32>,
    %c5_364 = arith.constant 5 : index
    %c1_365 = arith.constant 1 : index
    %c0_366 = arith.constant 0 : index
    %360 = vector.load %arg36[%c5_364, %c1_365, %c0_366] : memref<10x10x8xf32, #tpu.memory_space<vmem>>, vector<1x8x8xf32>
    %361 = vector.shape_cast %360 : vector<1x8x8xf32> to vector<8x8xf32>
    %362 = vector.shape_cast %358 : vector<8x8xf32> to vector<1x8x8xf32>
    tpu.vector_store %arg36[%c5_364, %c1_365, %c0_366], %362 {strides = array<i32>} : memref<10x10x8xf32, #tpu.memory_space<vmem>>, vector<1x8x8xf32>,
    %cst_367 = arith.constant 0.000000e+00 : f32
    %363 = vector.broadcast %cst_367 : f32 to vector<15x8xf32>
    %c10_368 = arith.constant 10 : index
    %c0_369 = arith.constant 0 : index
    %c0_370 = arith.constant 0 : index
    %364 = vector.load %arg34[%c10_368, %c0_369, %c0_370] : memref<17x17x3xf32, #tpu.memory_space<vmem>>, vector<1x15x3xf32>
    %365 = vector.shape_cast %364 : vector<1x15x3xf32> to vector<15x3xf32>
    %c0_371 = arith.constant 0 : index
    %c0_372 = arith.constant 0 : index
    %c0_373 = arith.constant 0 : index
    %366 = vector.load %arg4[%c0_371, %c0_372, %c0_373] : memref<9x3x8xf32, #tpu.memory_space<vmem>>, vector<1x3x8xf32>
    %367 = vector.shape_cast %366 : vector<1x3x8xf32> to vector<3x8xf32>
    %cst_374 = arith.constant dense<0.000000e+00> : vector<15x8xf32>
    %368 = tpu.matmul %365, %367, %cst_374 {dimension_numbers = #tpu.dot_dimension_numbers<[1], [0], [0], [1], [0, 0, 1, 1], [], []>} : vector<15x3xf32>, vector<3x8xf32>, vector<15x8xf32> -> vector<15x8xf32>
    %369 = arith.addf %363, %368 : vector<15x8xf32>
    %c10_375 = arith.constant 10 : index
    %c1_376 = arith.constant 1 : index
    %c0_377 = arith.constant 0 : index
    %370 = vector.load %arg34[%c10_375, %c1_376, %c0_377] : memref<17x17x3xf32, #tpu.memory_space<vmem>>, vector<1x15x3xf32>
    %371 = vector.shape_cast %370 : vector<1x15x3xf32> to vector<15x3xf32>
    %c1_378 = arith.constant 1 : index
    %c0_379 = arith.constant 0 : index
    %c0_380 = arith.constant 0 : index
    %372 = vector.load %arg4[%c1_378, %c0_379, %c0_380] : memref<9x3x8xf32, #tpu.memory_space<vmem>>, vector<1x3x8xf32>
    %373 = vector.shape_cast %372 : vector<1x3x8xf32> to vector<3x8xf32>
    %cst_381 = arith.constant dense<0.000000e+00> : vector<15x8xf32>
    %374 = tpu.matmul %371, %373, %cst_381 {dimension_numbers = #tpu.dot_dimension_numbers<[1], [0], [0], [1], [0, 0, 1, 1], [], []>} : vector<15x3xf32>, vector<3x8xf32>, vector<15x8xf32> -> vector<15x8xf32>
    %375 = arith.addf %369, %374 : vector<15x8xf32>
    %c10_382 = arith.constant 10 : index
    %c2_383 = arith.constant 2 : index
    %c0_384 = arith.constant 0 : index
    %376 = vector.load %arg34[%c10_382, %c2_383, %c0_384] : memref<17x17x3xf32, #tpu.memory_space<vmem>>, vector<1x15x3xf32>
    %377 = vector.shape_cast %376 : vector<1x15x3xf32> to vector<15x3xf32>
    %c2_385 = arith.constant 2 : index
    %c0_386 = arith.constant 0 : index
    %c0_387 = arith.constant 0 : index
    %378 = vector.load %arg4[%c2_385, %c0_386, %c0_387] : memref<9x3x8xf32, #tpu.memory_space<vmem>>, vector<1x3x8xf32>
    %379 = vector.shape_cast %378 : vector<1x3x8xf32> to vector<3x8xf32>
    %cst_388 = arith.constant dense<0.000000e+00> : vector<15x8xf32>
    %380 = tpu.matmul %377, %379, %cst_388 {dimension_numbers = #tpu.dot_dimension_numbers<[1], [0], [0], [1], [0, 0, 1, 1], [], []>} : vector<15x3xf32>, vector<3x8xf32>, vector<15x8xf32> -> vector<15x8xf32>
    %381 = arith.addf %375, %380 : vector<15x8xf32>
    %c11 = arith.constant 11 : index
    %c0_389 = arith.constant 0 : index
    %c0_390 = arith.constant 0 : index
    %382 = vector.load %arg34[%c11, %c0_389, %c0_390] : memref<17x17x3xf32, #tpu.memory_space<vmem>>, vector<1x15x3xf32>
    %383 = vector.shape_cast %382 : vector<1x15x3xf32> to vector<15x3xf32>
    %c3_391 = arith.constant 3 : index
    %c0_392 = arith.constant 0 : index
    %c0_393 = arith.constant 0 : index
    %384 = vector.load %arg4[%c3_391, %c0_392, %c0_393] : memref<9x3x8xf32, #tpu.memory_space<vmem>>, vector<1x3x8xf32>
    %385 = vector.shape_cast %384 : vector<1x3x8xf32> to vector<3x8xf32>
    %cst_394 = arith.constant dense<0.000000e+00> : vector<15x8xf32>
    %386 = tpu.matmul %383, %385, %cst_394 {dimension_numbers = #tpu.dot_dimension_numbers<[1], [0], [0], [1], [0, 0, 1, 1], [], []>} : vector<15x3xf32>, vector<3x8xf32>, vector<15x8xf32> -> vector<15x8xf32>
    %387 = arith.addf %381, %386 : vector<15x8xf32>
    %c11_395 = arith.constant 11 : index
    %c1_396 = arith.constant 1 : index
    %c0_397 = arith.constant 0 : index
    %388 = vector.load %arg34[%c11_395, %c1_396, %c0_397] : memref<17x17x3xf32, #tpu.memory_space<vmem>>, vector<1x15x3xf32>
    %389 = vector.shape_cast %388 : vector<1x15x3xf32> to vector<15x3xf32>
    %c4_398 = arith.constant 4 : index
    %c0_399 = arith.constant 0 : index
    %c0_400 = arith.constant 0 : index
    %390 = vector.load %arg4[%c4_398, %c0_399, %c0_400] : memref<9x3x8xf32, #tpu.memory_space<vmem>>, vector<1x3x8xf32>
    %391 = vector.shape_cast %390 : vector<1x3x8xf32> to vector<3x8xf32>
    %cst_401 = arith.constant dense<0.000000e+00> : vector<15x8xf32>
    %392 = tpu.matmul %389, %391, %cst_401 {dimension_numbers = #tpu.dot_dimension_numbers<[1], [0], [0], [1], [0, 0, 1, 1], [], []>} : vector<15x3xf32>, vector<3x8xf32>, vector<15x8xf32> -> vector<15x8xf32>
    %393 = arith.addf %387, %392 : vector<15x8xf32>
    %c11_402 = arith.constant 11 : index
    %c2_403 = arith.constant 2 : index
    %c0_404 = arith.constant 0 : index
    %394 = vector.load %arg34[%c11_402, %c2_403, %c0_404] : memref<17x17x3xf32, #tpu.memory_space<vmem>>, vector<1x15x3xf32>
    %395 = vector.shape_cast %394 : vector<1x15x3xf32> to vector<15x3xf32>
    %c5_405 = arith.constant 5 : index
    %c0_406 = arith.constant 0 : index
    %c0_407 = arith.constant 0 : index
    %396 = vector.load %arg4[%c5_405, %c0_406, %c0_407] : memref<9x3x8xf32, #tpu.memory_space<vmem>>, vector<1x3x8xf32>
    %397 = vector.shape_cast %396 : vector<1x3x8xf32> to vector<3x8xf32>
    %cst_408 = arith.constant dense<0.000000e+00> : vector<15x8xf32>
    %398 = tpu.matmul %395, %397, %cst_408 {dimension_numbers = #tpu.dot_dimension_numbers<[1], [0], [0], [1], [0, 0, 1, 1], [], []>} : vector<15x3xf32>, vector<3x8xf32>, vector<15x8xf32> -> vector<15x8xf32>
    %399 = arith.addf %393, %398 : vector<15x8xf32>
    %c12 = arith.constant 12 : index
    %c0_409 = arith.constant 0 : index
    %c0_410 = arith.constant 0 : index
    %400 = vector.load %arg34[%c12, %c0_409, %c0_410] : memref<17x17x3xf32, #tpu.memory_space<vmem>>, vector<1x15x3xf32>
    %401 = vector.shape_cast %400 : vector<1x15x3xf32> to vector<15x3xf32>
    %c6_411 = arith.constant 6 : index
    %c0_412 = arith.constant 0 : index
    %c0_413 = arith.constant 0 : index
    %402 = vector.load %arg4[%c6_411, %c0_412, %c0_413] : memref<9x3x8xf32, #tpu.memory_space<vmem>>, vector<1x3x8xf32>
    %403 = vector.shape_cast %402 : vector<1x3x8xf32> to vector<3x8xf32>
    %cst_414 = arith.constant dense<0.000000e+00> : vector<15x8xf32>
    %404 = tpu.matmul %401, %403, %cst_414 {dimension_numbers = #tpu.dot_dimension_numbers<[1], [0], [0], [1], [0, 0, 1, 1], [], []>} : vector<15x3xf32>, vector<3x8xf32>, vector<15x8xf32> -> vector<15x8xf32>
    %405 = arith.addf %399, %404 : vector<15x8xf32>
    %c12_415 = arith.constant 12 : index
    %c1_416 = arith.constant 1 : index
    %c0_417 = arith.constant 0 : index
    %406 = vector.load %arg34[%c12_415, %c1_416, %c0_417] : memref<17x17x3xf32, #tpu.memory_space<vmem>>, vector<1x15x3xf32>
    %407 = vector.shape_cast %406 : vector<1x15x3xf32> to vector<15x3xf32>
    %c7_418 = arith.constant 7 : index
    %c0_419 = arith.constant 0 : index
    %c0_420 = arith.constant 0 : index
    %408 = vector.load %arg4[%c7_418, %c0_419, %c0_420] : memref<9x3x8xf32, #tpu.memory_space<vmem>>, vector<1x3x8xf32>
    %409 = vector.shape_cast %408 : vector<1x3x8xf32> to vector<3x8xf32>
    %cst_421 = arith.constant dense<0.000000e+00> : vector<15x8xf32>
    %410 = tpu.matmul %407, %409, %cst_421 {dimension_numbers = #tpu.dot_dimension_numbers<[1], [0], [0], [1], [0, 0, 1, 1], [], []>} : vector<15x3xf32>, vector<3x8xf32>, vector<15x8xf32> -> vector<15x8xf32>
    %411 = arith.addf %405, %410 : vector<15x8xf32>
    %c12_422 = arith.constant 12 : index
    %c2_423 = arith.constant 2 : index
    %c0_424 = arith.constant 0 : index
    %412 = vector.load %arg34[%c12_422, %c2_423, %c0_424] : memref<17x17x3xf32, #tpu.memory_space<vmem>>, vector<1x15x3xf32>
    %413 = vector.shape_cast %412 : vector<1x15x3xf32> to vector<15x3xf32>
    %c8_425 = arith.constant 8 : index
    %c0_426 = arith.constant 0 : index
    %c0_427 = arith.constant 0 : index
    %414 = vector.load %arg4[%c8_425, %c0_426, %c0_427] : memref<9x3x8xf32, #tpu.memory_space<vmem>>, vector<1x3x8xf32>
    %415 = vector.shape_cast %414 : vector<1x3x8xf32> to vector<3x8xf32>
    %cst_428 = arith.constant dense<0.000000e+00> : vector<15x8xf32>
    %416 = tpu.matmul %413, %415, %cst_428 {dimension_numbers = #tpu.dot_dimension_numbers<[1], [0], [0], [1], [0, 0, 1, 1], [], []>} : vector<15x3xf32>, vector<3x8xf32>, vector<15x8xf32> -> vector<15x8xf32>
    %417 = arith.addf %411, %416 : vector<15x8xf32>
    %cst_429 = arith.constant dense<0.000000e+00> : vector<8x8xf32>
    %418 = tpu.matmul %9, %417, %cst_429 {dimension_numbers = #tpu.dot_dimension_numbers<[1], [0], [0], [1], [0, 0, 1, 1], [], []>} : vector<8x15xf32>, vector<15x8xf32>, vector<8x8xf32> -> vector<8x8xf32>
    %419 = vector.broadcast %11 : vector<1x8xf32> to vector<8x8xf32>
    %420 = arith.mulf %418, %419 : vector<8x8xf32>
    %421 = vector.broadcast %12 : vector<1x8xf32> to vector<8x8xf32>
    %422 = arith.addf %420, %421 : vector<8x8xf32>
    %423 = arith.negf %422 : vector<8x8xf32>
    %424 = math.exp %423 : vector<8x8xf32>
    %cst_430 = arith.constant 1.000000e+00 : f32
    %425 = vector.broadcast %cst_430 : f32 to vector<8x8xf32>
    %426 = arith.addf %425, %424 : vector<8x8xf32>
    %427 = arith.divf %425, %426 : vector<8x8xf32>
    %428 = arith.mulf %422, %427 : vector<8x8xf32>
    %c40 = arith.constant 40 : index
    %c0_431 = arith.constant 0 : index
    %429 = vector.load %arg35[%c40, %c0_431] : memref<64x8xf32, #tpu.memory_space<vmem>>, vector<8x8xf32>
    tpu.vector_store %arg35[%c40, %c0_431], %428 {strides = array<i32>} : memref<64x8xf32, #tpu.memory_space<vmem>>, vector<8x8xf32>,
    %c6_432 = arith.constant 6 : index
    %c1_433 = arith.constant 1 : index
    %c0_434 = arith.constant 0 : index
    %430 = vector.load %arg36[%c6_432, %c1_433, %c0_434] : memref<10x10x8xf32, #tpu.memory_space<vmem>>, vector<1x8x8xf32>
    %431 = vector.shape_cast %430 : vector<1x8x8xf32> to vector<8x8xf32>
    %432 = vector.shape_cast %428 : vector<8x8xf32> to vector<1x8x8xf32>
    tpu.vector_store %arg36[%c6_432, %c1_433, %c0_434], %432 {strides = array<i32>} : memref<10x10x8xf32, #tpu.memory_space<vmem>>, vector<1x8x8xf32>,
    %cst_435 = arith.constant 0.000000e+00 : f32
    %433 = vector.broadcast %cst_435 : f32 to vector<15x8xf32>
    %c12_436 = arith.constant 12 : index
    %c0_437 = arith.constant 0 : index
    %c0_438 = arith.constant 0 : index
    %434 = vector.load %arg34[%c12_436, %c0_437, %c0_438] : memref<17x17x3xf32, #tpu.memory_space<vmem>>, vector<1x15x3xf32>
    %435 = vector.shape_cast %434 : vector<1x15x3xf32> to vector<15x3xf32>
    %c0_439 = arith.constant 0 : index
    %c0_440 = arith.constant 0 : index
    %c0_441 = arith.constant 0 : index
    %436 = vector.load %arg4[%c0_439, %c0_440, %c0_441] : memref<9x3x8xf32, #tpu.memory_space<vmem>>, vector<1x3x8xf32>
    %437 = vector.shape_cast %436 : vector<1x3x8xf32> to vector<3x8xf32>
    %cst_442 = arith.constant dense<0.000000e+00> : vector<15x8xf32>
    %438 = tpu.matmul %435, %437, %cst_442 {dimension_numbers = #tpu.dot_dimension_numbers<[1], [0], [0], [1], [0, 0, 1, 1], [], []>} : vector<15x3xf32>, vector<3x8xf32>, vector<15x8xf32> -> vector<15x8xf32>
    %439 = arith.addf %433, %438 : vector<15x8xf32>
    %c12_443 = arith.constant 12 : index
    %c1_444 = arith.constant 1 : index
    %c0_445 = arith.constant 0 : index
    %440 = vector.load %arg34[%c12_443, %c1_444, %c0_445] : memref<17x17x3xf32, #tpu.memory_space<vmem>>, vector<1x15x3xf32>
    %441 = vector.shape_cast %440 : vector<1x15x3xf32> to vector<15x3xf32>
    %c1_446 = arith.constant 1 : index
    %c0_447 = arith.constant 0 : index
    %c0_448 = arith.constant 0 : index
    %442 = vector.load %arg4[%c1_446, %c0_447, %c0_448] : memref<9x3x8xf32, #tpu.memory_space<vmem>>, vector<1x3x8xf32>
    %443 = vector.shape_cast %442 : vector<1x3x8xf32> to vector<3x8xf32>
    %cst_449 = arith.constant dense<0.000000e+00> : vector<15x8xf32>
    %444 = tpu.matmul %441, %443, %cst_449 {dimension_numbers = #tpu.dot_dimension_numbers<[1], [0], [0], [1], [0, 0, 1, 1], [], []>} : vector<15x3xf32>, vector<3x8xf32>, vector<15x8xf32> -> vector<15x8xf32>
    %445 = arith.addf %439, %444 : vector<15x8xf32>
    %c12_450 = arith.constant 12 : index
    %c2_451 = arith.constant 2 : index
    %c0_452 = arith.constant 0 : index
    %446 = vector.load %arg34[%c12_450, %c2_451, %c0_452] : memref<17x17x3xf32, #tpu.memory_space<vmem>>, vector<1x15x3xf32>
    %447 = vector.shape_cast %446 : vector<1x15x3xf32> to vector<15x3xf32>
    %c2_453 = arith.constant 2 : index
    %c0_454 = arith.constant 0 : index
    %c0_455 = arith.constant 0 : index
    %448 = vector.load %arg4[%c2_453, %c0_454, %c0_455] : memref<9x3x8xf32, #tpu.memory_space<vmem>>, vector<1x3x8xf32>
    %449 = vector.shape_cast %448 : vector<1x3x8xf32> to vector<3x8xf32>
    %cst_456 = arith.constant dense<0.000000e+00> : vector<15x8xf32>
    %450 = tpu.matmul %447, %449, %cst_456 {dimension_numbers = #tpu.dot_dimension_numbers<[1], [0], [0], [1], [0, 0, 1, 1], [], []>} : vector<15x3xf32>, vector<3x8xf32>, vector<15x8xf32> -> vector<15x8xf32>
    %451 = arith.addf %445, %450 : vector<15x8xf32>
    %c13 = arith.constant 13 : index
    %c0_457 = arith.constant 0 : index
    %c0_458 = arith.constant 0 : index
    %452 = vector.load %arg34[%c13, %c0_457, %c0_458] : memref<17x17x3xf32, #tpu.memory_space<vmem>>, vector<1x15x3xf32>
    %453 = vector.shape_cast %452 : vector<1x15x3xf32> to vector<15x3xf32>
    %c3_459 = arith.constant 3 : index
    %c0_460 = arith.constant 0 : index
    %c0_461 = arith.constant 0 : index
    %454 = vector.load %arg4[%c3_459, %c0_460, %c0_461] : memref<9x3x8xf32, #tpu.memory_space<vmem>>, vector<1x3x8xf32>
    %455 = vector.shape_cast %454 : vector<1x3x8xf32> to vector<3x8xf32>
    %cst_462 = arith.constant dense<0.000000e+00> : vector<15x8xf32>
    %456 = tpu.matmul %453, %455, %cst_462 {dimension_numbers = #tpu.dot_dimension_numbers<[1], [0], [0], [1], [0, 0, 1, 1], [], []>} : vector<15x3xf32>, vector<3x8xf32>, vector<15x8xf32> -> vector<15x8xf32>
    %457 = arith.addf %451, %456 : vector<15x8xf32>
    %c13_463 = arith.constant 13 : index
    %c1_464 = arith.constant 1 : index
    %c0_465 = arith.constant 0 : index
    %458 = vector.load %arg34[%c13_463, %c1_464, %c0_465] : memref<17x17x3xf32, #tpu.memory_space<vmem>>, vector<1x15x3xf32>
    %459 = vector.shape_cast %458 : vector<1x15x3xf32> to vector<15x3xf32>
    %c4_466 = arith.constant 4 : index
    %c0_467 = arith.constant 0 : index
    %c0_468 = arith.constant 0 : index
    %460 = vector.load %arg4[%c4_466, %c0_467, %c0_468] : memref<9x3x8xf32, #tpu.memory_space<vmem>>, vector<1x3x8xf32>
    %461 = vector.shape_cast %460 : vector<1x3x8xf32> to vector<3x8xf32>
    %cst_469 = arith.constant dense<0.000000e+00> : vector<15x8xf32>
    %462 = tpu.matmul %459, %461, %cst_469 {dimension_numbers = #tpu.dot_dimension_numbers<[1], [0], [0], [1], [0, 0, 1, 1], [], []>} : vector<15x3xf32>, vector<3x8xf32>, vector<15x8xf32> -> vector<15x8xf32>
    %463 = arith.addf %457, %462 : vector<15x8xf32>
    %c13_470 = arith.constant 13 : index
    %c2_471 = arith.constant 2 : index
    %c0_472 = arith.constant 0 : index
    %464 = vector.load %arg34[%c13_470, %c2_471, %c0_472] : memref<17x17x3xf32, #tpu.memory_space<vmem>>, vector<1x15x3xf32>
    %465 = vector.shape_cast %464 : vector<1x15x3xf32> to vector<15x3xf32>
    %c5_473 = arith.constant 5 : index
    %c0_474 = arith.constant 0 : index
    %c0_475 = arith.constant 0 : index
    %466 = vector.load %arg4[%c5_473, %c0_474, %c0_475] : memref<9x3x8xf32, #tpu.memory_space<vmem>>, vector<1x3x8xf32>
    %467 = vector.shape_cast %466 : vector<1x3x8xf32> to vector<3x8xf32>
    %cst_476 = arith.constant dense<0.000000e+00> : vector<15x8xf32>
    %468 = tpu.matmul %465, %467, %cst_476 {dimension_numbers = #tpu.dot_dimension_numbers<[1], [0], [0], [1], [0, 0, 1, 1], [], []>} : vector<15x3xf32>, vector<3x8xf32>, vector<15x8xf32> -> vector<15x8xf32>
    %469 = arith.addf %463, %468 : vector<15x8xf32>
    %c14 = arith.constant 14 : index
    %c0_477 = arith.constant 0 : index
    %c0_478 = arith.constant 0 : index
    %470 = vector.load %arg34[%c14, %c0_477, %c0_478] : memref<17x17x3xf32, #tpu.memory_space<vmem>>, vector<1x15x3xf32>
    %471 = vector.shape_cast %470 : vector<1x15x3xf32> to vector<15x3xf32>
    %c6_479 = arith.constant 6 : index
    %c0_480 = arith.constant 0 : index
    %c0_481 = arith.constant 0 : index
    %472 = vector.load %arg4[%c6_479, %c0_480, %c0_481] : memref<9x3x8xf32, #tpu.memory_space<vmem>>, vector<1x3x8xf32>
    %473 = vector.shape_cast %472 : vector<1x3x8xf32> to vector<3x8xf32>
    %cst_482 = arith.constant dense<0.000000e+00> : vector<15x8xf32>
    %474 = tpu.matmul %471, %473, %cst_482 {dimension_numbers = #tpu.dot_dimension_numbers<[1], [0], [0], [1], [0, 0, 1, 1], [], []>} : vector<15x3xf32>, vector<3x8xf32>, vector<15x8xf32> -> vector<15x8xf32>
    %475 = arith.addf %469, %474 : vector<15x8xf32>
    %c14_483 = arith.constant 14 : index
    %c1_484 = arith.constant 1 : index
    %c0_485 = arith.constant 0 : index
    %476 = vector.load %arg34[%c14_483, %c1_484, %c0_485] : memref<17x17x3xf32, #tpu.memory_space<vmem>>, vector<1x15x3xf32>
    %477 = vector.shape_cast %476 : vector<1x15x3xf32> to vector<15x3xf32>
    %c7_486 = arith.constant 7 : index
    %c0_487 = arith.constant 0 : index
    %c0_488 = arith.constant 0 : index
    %478 = vector.load %arg4[%c7_486, %c0_487, %c0_488] : memref<9x3x8xf32, #tpu.memory_space<vmem>>, vector<1x3x8xf32>
    %479 = vector.shape_cast %478 : vector<1x3x8xf32> to vector<3x8xf32>
    %cst_489 = arith.constant dense<0.000000e+00> : vector<15x8xf32>
    %480 = tpu.matmul %477, %479, %cst_489 {dimension_numbers = #tpu.dot_dimension_numbers<[1], [0], [0], [1], [0, 0, 1, 1], [], []>} : vector<15x3xf32>, vector<3x8xf32>, vector<15x8xf32> -> vector<15x8xf32>
    %481 = arith.addf %475, %480 : vector<15x8xf32>
    %c14_490 = arith.constant 14 : index
    %c2_491 = arith.constant 2 : index
    %c0_492 = arith.constant 0 : index
    %482 = vector.load %arg34[%c14_490, %c2_491, %c0_492] : memref<17x17x3xf32, #tpu.memory_space<vmem>>, vector<1x15x3xf32>
    %483 = vector.shape_cast %482 : vector<1x15x3xf32> to vector<15x3xf32>
    %c8_493 = arith.constant 8 : index
    %c0_494 = arith.constant 0 : index
    %c0_495 = arith.constant 0 : index
    %484 = vector.load %arg4[%c8_493, %c0_494, %c0_495] : memref<9x3x8xf32, #tpu.memory_space<vmem>>, vector<1x3x8xf32>
    %485 = vector.shape_cast %484 : vector<1x3x8xf32> to vector<3x8xf32>
    %cst_496 = arith.constant dense<0.000000e+00> : vector<15x8xf32>
    %486 = tpu.matmul %483, %485, %cst_496 {dimension_numbers = #tpu.dot_dimension_numbers<[1], [0], [0], [1], [0, 0, 1, 1], [], []>} : vector<15x3xf32>, vector<3x8xf32>, vector<15x8xf32> -> vector<15x8xf32>
    %487 = arith.addf %481, %486 : vector<15x8xf32>
    %cst_497 = arith.constant dense<0.000000e+00> : vector<8x8xf32>
    %488 = tpu.matmul %9, %487, %cst_497 {dimension_numbers = #tpu.dot_dimension_numbers<[1], [0], [0], [1], [0, 0, 1, 1], [], []>} : vector<8x15xf32>, vector<15x8xf32>, vector<8x8xf32> -> vector<8x8xf32>
    %489 = vector.broadcast %11 : vector<1x8xf32> to vector<8x8xf32>
    %490 = arith.mulf %488, %489 : vector<8x8xf32>
    %491 = vector.broadcast %12 : vector<1x8xf32> to vector<8x8xf32>
    %492 = arith.addf %490, %491 : vector<8x8xf32>
    %493 = arith.negf %492 : vector<8x8xf32>
    %494 = math.exp %493 : vector<8x8xf32>
    %cst_498 = arith.constant 1.000000e+00 : f32
    %495 = vector.broadcast %cst_498 : f32 to vector<8x8xf32>
    %496 = arith.addf %495, %494 : vector<8x8xf32>
    %497 = arith.divf %495, %496 : vector<8x8xf32>
    %498 = arith.mulf %492, %497 : vector<8x8xf32>
    %c48 = arith.constant 48 : index
    %c0_499 = arith.constant 0 : index
    %499 = vector.load %arg35[%c48, %c0_499] : memref<64x8xf32, #tpu.memory_space<vmem>>, vector<8x8xf32>
    tpu.vector_store %arg35[%c48, %c0_499], %498 {strides = array<i32>} : memref<64x8xf32, #tpu.memory_space<vmem>>, vector<8x8xf32>,
    %c7_500 = arith.constant 7 : index
    %c1_501 = arith.constant 1 : index
    %c0_502 = arith.constant 0 : index
    %500 = vector.load %arg36[%c7_500, %c1_501, %c0_502] : memref<10x10x8xf32, #tpu.memory_space<vmem>>, vector<1x8x8xf32>
    %501 = vector.shape_cast %500 : vector<1x8x8xf32> to vector<8x8xf32>
    %502 = vector.shape_cast %498 : vector<8x8xf32> to vector<1x8x8xf32>
    tpu.vector_store %arg36[%c7_500, %c1_501, %c0_502], %502 {strides = array<i32>} : memref<10x10x8xf32, #tpu.memory_space<vmem>>, vector<1x8x8xf32>,
    %cst_503 = arith.constant 0.000000e+00 : f32
    %503 = vector.broadcast %cst_503 : f32 to vector<15x8xf32>
    %c14_504 = arith.constant 14 : index
    %c0_505 = arith.constant 0 : index
    %c0_506 = arith.constant 0 : index
    %504 = vector.load %arg34[%c14_504, %c0_505, %c0_506] : memref<17x17x3xf32, #tpu.memory_space<vmem>>, vector<1x15x3xf32>
    %505 = vector.shape_cast %504 : vector<1x15x3xf32> to vector<15x3xf32>
    %c0_507 = arith.constant 0 : index
    %c0_508 = arith.constant 0 : index
    %c0_509 = arith.constant 0 : index
    %506 = vector.load %arg4[%c0_507, %c0_508, %c0_509] : memref<9x3x8xf32, #tpu.memory_space<vmem>>, vector<1x3x8xf32>
    %507 = vector.shape_cast %506 : vector<1x3x8xf32> to vector<3x8xf32>
    %cst_510 = arith.constant dense<0.000000e+00> : vector<15x8xf32>
    %508 = tpu.matmul %505, %507, %cst_510 {dimension_numbers = #tpu.dot_dimension_numbers<[1], [0], [0], [1], [0, 0, 1, 1], [], []>} : vector<15x3xf32>, vector<3x8xf32>, vector<15x8xf32> -> vector<15x8xf32>
    %509 = arith.addf %503, %508 : vector<15x8xf32>
    %c14_511 = arith.constant 14 : index
    %c1_512 = arith.constant 1 : index
    %c0_513 = arith.constant 0 : index
    %510 = vector.load %arg34[%c14_511, %c1_512, %c0_513] : memref<17x17x3xf32, #tpu.memory_space<vmem>>, vector<1x15x3xf32>
    %511 = vector.shape_cast %510 : vector<1x15x3xf32> to vector<15x3xf32>
    %c1_514 = arith.constant 1 : index
    %c0_515 = arith.constant 0 : index
    %c0_516 = arith.constant 0 : index
    %512 = vector.load %arg4[%c1_514, %c0_515, %c0_516] : memref<9x3x8xf32, #tpu.memory_space<vmem>>, vector<1x3x8xf32>
    %513 = vector.shape_cast %512 : vector<1x3x8xf32> to vector<3x8xf32>
    %cst_517 = arith.constant dense<0.000000e+00> : vector<15x8xf32>
    %514 = tpu.matmul %511, %513, %cst_517 {dimension_numbers = #tpu.dot_dimension_numbers<[1], [0], [0], [1], [0, 0, 1, 1], [], []>} : vector<15x3xf32>, vector<3x8xf32>, vector<15x8xf32> -> vector<15x8xf32>
    %515 = arith.addf %509, %514 : vector<15x8xf32>
    %c14_518 = arith.constant 14 : index
    %c2_519 = arith.constant 2 : index
    %c0_520 = arith.constant 0 : index
    %516 = vector.load %arg34[%c14_518, %c2_519, %c0_520] : memref<17x17x3xf32, #tpu.memory_space<vmem>>, vector<1x15x3xf32>
    %517 = vector.shape_cast %516 : vector<1x15x3xf32> to vector<15x3xf32>
    %c2_521 = arith.constant 2 : index
    %c0_522 = arith.constant 0 : index
    %c0_523 = arith.constant 0 : index
    %518 = vector.load %arg4[%c2_521, %c0_522, %c0_523] : memref<9x3x8xf32, #tpu.memory_space<vmem>>, vector<1x3x8xf32>
    %519 = vector.shape_cast %518 : vector<1x3x8xf32> to vector<3x8xf32>
    %cst_524 = arith.constant dense<0.000000e+00> : vector<15x8xf32>
    %520 = tpu.matmul %517, %519, %cst_524 {dimension_numbers = #tpu.dot_dimension_numbers<[1], [0], [0], [1], [0, 0, 1, 1], [], []>} : vector<15x3xf32>, vector<3x8xf32>, vector<15x8xf32> -> vector<15x8xf32>
    %521 = arith.addf %515, %520 : vector<15x8xf32>
    %c15 = arith.constant 15 : index
    %c0_525 = arith.constant 0 : index
    %c0_526 = arith.constant 0 : index
    %522 = vector.load %arg34[%c15, %c0_525, %c0_526] : memref<17x17x3xf32, #tpu.memory_space<vmem>>, vector<1x15x3xf32>
    %523 = vector.shape_cast %522 : vector<1x15x3xf32> to vector<15x3xf32>
    %c3_527 = arith.constant 3 : index
    %c0_528 = arith.constant 0 : index
    %c0_529 = arith.constant 0 : index
    %524 = vector.load %arg4[%c3_527, %c0_528, %c0_529] : memref<9x3x8xf32, #tpu.memory_space<vmem>>, vector<1x3x8xf32>
    %525 = vector.shape_cast %524 : vector<1x3x8xf32> to vector<3x8xf32>
    %cst_530 = arith.constant dense<0.000000e+00> : vector<15x8xf32>
    %526 = tpu.matmul %523, %525, %cst_530 {dimension_numbers = #tpu.dot_dimension_numbers<[1], [0], [0], [1], [0, 0, 1, 1], [], []>} : vector<15x3xf32>, vector<3x8xf32>, vector<15x8xf32> -> vector<15x8xf32>
    %527 = arith.addf %521, %526 : vector<15x8xf32>
    %c15_531 = arith.constant 15 : index
    %c1_532 = arith.constant 1 : index
    %c0_533 = arith.constant 0 : index
    %528 = vector.load %arg34[%c15_531, %c1_532, %c0_533] : memref<17x17x3xf32, #tpu.memory_space<vmem>>, vector<1x15x3xf32>
    %529 = vector.shape_cast %528 : vector<1x15x3xf32> to vector<15x3xf32>
    %c4_534 = arith.constant 4 : index
    %c0_535 = arith.constant 0 : index
    %c0_536 = arith.constant 0 : index
    %530 = vector.load %arg4[%c4_534, %c0_535, %c0_536] : memref<9x3x8xf32, #tpu.memory_space<vmem>>, vector<1x3x8xf32>
    %531 = vector.shape_cast %530 : vector<1x3x8xf32> to vector<3x8xf32>
    %cst_537 = arith.constant dense<0.000000e+00> : vector<15x8xf32>
    %532 = tpu.matmul %529, %531, %cst_537 {dimension_numbers = #tpu.dot_dimension_numbers<[1], [0], [0], [1], [0, 0, 1, 1], [], []>} : vector<15x3xf32>, vector<3x8xf32>, vector<15x8xf32> -> vector<15x8xf32>
    %533 = arith.addf %527, %532 : vector<15x8xf32>
    %c15_538 = arith.constant 15 : index
    %c2_539 = arith.constant 2 : index
    %c0_540 = arith.constant 0 : index
    %534 = vector.load %arg34[%c15_538, %c2_539, %c0_540] : memref<17x17x3xf32, #tpu.memory_space<vmem>>, vector<1x15x3xf32>
    %535 = vector.shape_cast %534 : vector<1x15x3xf32> to vector<15x3xf32>
    %c5_541 = arith.constant 5 : index
    %c0_542 = arith.constant 0 : index
    %c0_543 = arith.constant 0 : index
    %536 = vector.load %arg4[%c5_541, %c0_542, %c0_543] : memref<9x3x8xf32, #tpu.memory_space<vmem>>, vector<1x3x8xf32>
    %537 = vector.shape_cast %536 : vector<1x3x8xf32> to vector<3x8xf32>
    %cst_544 = arith.constant dense<0.000000e+00> : vector<15x8xf32>
    %538 = tpu.matmul %535, %537, %cst_544 {dimension_numbers = #tpu.dot_dimension_numbers<[1], [0], [0], [1], [0, 0, 1, 1], [], []>} : vector<15x3xf32>, vector<3x8xf32>, vector<15x8xf32> -> vector<15x8xf32>
    %539 = arith.addf %533, %538 : vector<15x8xf32>
    %c16_545 = arith.constant 16 : index
    %c0_546 = arith.constant 0 : index
    %c0_547 = arith.constant 0 : index
    %540 = vector.load %arg34[%c16_545, %c0_546, %c0_547] : memref<17x17x3xf32, #tpu.memory_space<vmem>>, vector<1x15x3xf32>
    %541 = vector.shape_cast %540 : vector<1x15x3xf32> to vector<15x3xf32>
    %c6_548 = arith.constant 6 : index
    %c0_549 = arith.constant 0 : index
    %c0_550 = arith.constant 0 : index
    %542 = vector.load %arg4[%c6_548, %c0_549, %c0_550] : memref<9x3x8xf32, #tpu.memory_space<vmem>>, vector<1x3x8xf32>
    %543 = vector.shape_cast %542 : vector<1x3x8xf32> to vector<3x8xf32>
    %cst_551 = arith.constant dense<0.000000e+00> : vector<15x8xf32>
    %544 = tpu.matmul %541, %543, %cst_551 {dimension_numbers = #tpu.dot_dimension_numbers<[1], [0], [0], [1], [0, 0, 1, 1], [], []>} : vector<15x3xf32>, vector<3x8xf32>, vector<15x8xf32> -> vector<15x8xf32>
    %545 = arith.addf %539, %544 : vector<15x8xf32>
    %c16_552 = arith.constant 16 : index
    %c1_553 = arith.constant 1 : index
    %c0_554 = arith.constant 0 : index
    %546 = vector.load %arg34[%c16_552, %c1_553, %c0_554] : memref<17x17x3xf32, #tpu.memory_space<vmem>>, vector<1x15x3xf32>
    %547 = vector.shape_cast %546 : vector<1x15x3xf32> to vector<15x3xf32>
    %c7_555 = arith.constant 7 : index
    %c0_556 = arith.constant 0 : index
    %c0_557 = arith.constant 0 : index
    %548 = vector.load %arg4[%c7_555, %c0_556, %c0_557] : memref<9x3x8xf32, #tpu.memory_space<vmem>>, vector<1x3x8xf32>
    %549 = vector.shape_cast %548 : vector<1x3x8xf32> to vector<3x8xf32>
    %cst_558 = arith.constant dense<0.000000e+00> : vector<15x8xf32>
    %550 = tpu.matmul %547, %549, %cst_558 {dimension_numbers = #tpu.dot_dimension_numbers<[1], [0], [0], [1], [0, 0, 1, 1], [], []>} : vector<15x3xf32>, vector<3x8xf32>, vector<15x8xf32> -> vector<15x8xf32>
    %551 = arith.addf %545, %550 : vector<15x8xf32>
    %c16_559 = arith.constant 16 : index
    %c2_560 = arith.constant 2 : index
    %c0_561 = arith.constant 0 : index
    %552 = vector.load %arg34[%c16_559, %c2_560, %c0_561] : memref<17x17x3xf32, #tpu.memory_space<vmem>>, vector<1x15x3xf32>
    %553 = vector.shape_cast %552 : vector<1x15x3xf32> to vector<15x3xf32>
    %c8_562 = arith.constant 8 : index
    %c0_563 = arith.constant 0 : index
    %c0_564 = arith.constant 0 : index
    %554 = vector.load %arg4[%c8_562, %c0_563, %c0_564] : memref<9x3x8xf32, #tpu.memory_space<vmem>>, vector<1x3x8xf32>
    %555 = vector.shape_cast %554 : vector<1x3x8xf32> to vector<3x8xf32>
    %cst_565 = arith.constant dense<0.000000e+00> : vector<15x8xf32>
    %556 = tpu.matmul %553, %555, %cst_565 {dimension_numbers = #tpu.dot_dimension_numbers<[1], [0], [0], [1], [0, 0, 1, 1], [], []>} : vector<15x3xf32>, vector<3x8xf32>, vector<15x8xf32> -> vector<15x8xf32>
    %557 = arith.addf %551, %556 : vector<15x8xf32>
    %cst_566 = arith.constant dense<0.000000e+00> : vector<8x8xf32>
    %558 = tpu.matmul %9, %557, %cst_566 {dimension_numbers = #tpu.dot_dimension_numbers<[1], [0], [0], [1], [0, 0, 1, 1], [], []>} : vector<8x15xf32>, vector<15x8xf32>, vector<8x8xf32> -> vector<8x8xf32>
    %559 = vector.broadcast %11 : vector<1x8xf32> to vector<8x8xf32>
    %560 = arith.mulf %558, %559 : vector<8x8xf32>
    %561 = vector.broadcast %12 : vector<1x8xf32> to vector<8x8xf32>
    %562 = arith.addf %560, %561 : vector<8x8xf32>
    %563 = arith.negf %562 : vector<8x8xf32>
    %564 = math.exp %563 : vector<8x8xf32>
    %cst_567 = arith.constant 1.000000e+00 : f32
    %565 = vector.broadcast %cst_567 : f32 to vector<8x8xf32>
    %566 = arith.addf %565, %564 : vector<8x8xf32>
    %567 = arith.divf %565, %566 : vector<8x8xf32>
    %568 = arith.mulf %562, %567 : vector<8x8xf32>
    %c56 = arith.constant 56 : index
    %c0_568 = arith.constant 0 : index
    %569 = vector.load %arg35[%c56, %c0_568] : memref<64x8xf32, #tpu.memory_space<vmem>>, vector<8x8xf32>
    tpu.vector_store %arg35[%c56, %c0_568], %568 {strides = array<i32>} : memref<64x8xf32, #tpu.memory_space<vmem>>, vector<8x8xf32>,
    %c8_569 = arith.constant 8 : index
    %c1_570 = arith.constant 1 : index
    %c0_571 = arith.constant 0 : index
    %570 = vector.load %arg36[%c8_569, %c1_570, %c0_571] : memref<10x10x8xf32, #tpu.memory_space<vmem>>, vector<1x8x8xf32>
    %571 = vector.shape_cast %570 : vector<1x8x8xf32> to vector<8x8xf32>
    %572 = vector.shape_cast %568 : vector<8x8xf32> to vector<1x8x8xf32>
    tpu.vector_store %arg36[%c8_569, %c1_570, %c0_571], %572 {strides = array<i32>} : memref<10x10x8xf32, #tpu.memory_space<vmem>>, vector<1x8x8xf32>,
    %cst_572 = arith.constant 0.000000e+00 : f32
    %573 = vector.broadcast %cst_572 : f32 to vector<8x8x8xf32>
    %c0_573 = arith.constant 0 : index
    %c0_574 = arith.constant 0 : index
    %574 = vector.load %arg7[%c0_573, %c0_574] : memref<9x8xf32, #tpu.memory_space<vmem>>, vector<1x8xf32>
    %575 = vector.shape_cast %574 : vector<1x8xf32> to vector<1x1x8xf32>
    %c0_575 = arith.constant 0 : index
    %c0_576 = arith.constant 0 : index
    %c0_577 = arith.constant 0 : index
    %576 = vector.load %arg36[%c0_575, %c0_576, %c0_577] : memref<10x10x8xf32, #tpu.memory_space<vmem>>, vector<8x8x8xf32>
    %577 = vector.broadcast %575 : vector<1x1x8xf32> to vector<8x8x8xf32>
    %578 = arith.mulf %576, %577 : vector<8x8x8xf32>
    %579 = arith.addf %573, %578 : vector<8x8x8xf32>
    %c1_578 = arith.constant 1 : index
    %c0_579 = arith.constant 0 : index
    %580 = vector.load %arg7[%c1_578, %c0_579] : memref<9x8xf32, #tpu.memory_space<vmem>>, vector<1x8xf32>
    %581 = vector.shape_cast %580 : vector<1x8xf32> to vector<1x1x8xf32>
    %c0_580 = arith.constant 0 : index
    %c1_581 = arith.constant 1 : index
    %c0_582 = arith.constant 0 : index
    %582 = vector.load %arg36[%c0_580, %c1_581, %c0_582] : memref<10x10x8xf32, #tpu.memory_space<vmem>>, vector<8x8x8xf32>
    %583 = vector.broadcast %581 : vector<1x1x8xf32> to vector<8x8x8xf32>
    %584 = arith.mulf %582, %583 : vector<8x8x8xf32>
    %585 = arith.addf %579, %584 : vector<8x8x8xf32>
    %c2_583 = arith.constant 2 : index
    %c0_584 = arith.constant 0 : index
    %586 = vector.load %arg7[%c2_583, %c0_584] : memref<9x8xf32, #tpu.memory_space<vmem>>, vector<1x8xf32>
    %587 = vector.shape_cast %586 : vector<1x8xf32> to vector<1x1x8xf32>
    %c0_585 = arith.constant 0 : index
    %c2_586 = arith.constant 2 : index
    %c0_587 = arith.constant 0 : index
    %588 = vector.load %arg36[%c0_585, %c2_586, %c0_587] : memref<10x10x8xf32, #tpu.memory_space<vmem>>, vector<8x8x8xf32>
    %589 = vector.broadcast %587 : vector<1x1x8xf32> to vector<8x8x8xf32>
    %590 = arith.mulf %588, %589 : vector<8x8x8xf32>
    %591 = arith.addf %585, %590 : vector<8x8x8xf32>
    %c3_588 = arith.constant 3 : index
    %c0_589 = arith.constant 0 : index
    %592 = vector.load %arg7[%c3_588, %c0_589] : memref<9x8xf32, #tpu.memory_space<vmem>>, vector<1x8xf32>
    %593 = vector.shape_cast %592 : vector<1x8xf32> to vector<1x1x8xf32>
    %c1_590 = arith.constant 1 : index
    %c0_591 = arith.constant 0 : index
    %c0_592 = arith.constant 0 : index
    %594 = vector.load %arg36[%c1_590, %c0_591, %c0_592] : memref<10x10x8xf32, #tpu.memory_space<vmem>>, vector<8x8x8xf32>
    %595 = vector.broadcast %593 : vector<1x1x8xf32> to vector<8x8x8xf32>
    %596 = arith.mulf %594, %595 : vector<8x8x8xf32>
    %597 = arith.addf %591, %596 : vector<8x8x8xf32>
    %c4_593 = arith.constant 4 : index
    %c0_594 = arith.constant 0 : index
    %598 = vector.load %arg7[%c4_593, %c0_594] : memref<9x8xf32, #tpu.memory_space<vmem>>, vector<1x8xf32>
    %599 = vector.shape_cast %598 : vector<1x8xf32> to vector<1x1x8xf32>
    %c1_595 = arith.constant 1 : index
    %c1_596 = arith.constant 1 : index
    %c0_597 = arith.constant 0 : index
    %600 = vector.load %arg36[%c1_595, %c1_596, %c0_597] : memref<10x10x8xf32, #tpu.memory_space<vmem>>, vector<8x8x8xf32>
    %601 = vector.broadcast %599 : vector<1x1x8xf32> to vector<8x8x8xf32>
    %602 = arith.mulf %600, %601 : vector<8x8x8xf32>
    %603 = arith.addf %597, %602 : vector<8x8x8xf32>
    %c5_598 = arith.constant 5 : index
    %c0_599 = arith.constant 0 : index
    %604 = vector.load %arg7[%c5_598, %c0_599] : memref<9x8xf32, #tpu.memory_space<vmem>>, vector<1x8xf32>
    %605 = vector.shape_cast %604 : vector<1x8xf32> to vector<1x1x8xf32>
    %c1_600 = arith.constant 1 : index
    %c2_601 = arith.constant 2 : index
    %c0_602 = arith.constant 0 : index
    %606 = vector.load %arg36[%c1_600, %c2_601, %c0_602] : memref<10x10x8xf32, #tpu.memory_space<vmem>>, vector<8x8x8xf32>
    %607 = vector.broadcast %605 : vector<1x1x8xf32> to vector<8x8x8xf32>
    %608 = arith.mulf %606, %607 : vector<8x8x8xf32>
    %609 = arith.addf %603, %608 : vector<8x8x8xf32>
    %c6_603 = arith.constant 6 : index
    %c0_604 = arith.constant 0 : index
    %610 = vector.load %arg7[%c6_603, %c0_604] : memref<9x8xf32, #tpu.memory_space<vmem>>, vector<1x8xf32>
    %611 = vector.shape_cast %610 : vector<1x8xf32> to vector<1x1x8xf32>
    %c2_605 = arith.constant 2 : index
    %c0_606 = arith.constant 0 : index
    %c0_607 = arith.constant 0 : index
    %612 = vector.load %arg36[%c2_605, %c0_606, %c0_607] : memref<10x10x8xf32, #tpu.memory_space<vmem>>, vector<8x8x8xf32>
    %613 = vector.broadcast %611 : vector<1x1x8xf32> to vector<8x8x8xf32>
    %614 = arith.mulf %612, %613 : vector<8x8x8xf32>
    %615 = arith.addf %609, %614 : vector<8x8x8xf32>
    %c7_608 = arith.constant 7 : index
    %c0_609 = arith.constant 0 : index
    %616 = vector.load %arg7[%c7_608, %c0_609] : memref<9x8xf32, #tpu.memory_space<vmem>>, vector<1x8xf32>
    %617 = vector.shape_cast %616 : vector<1x8xf32> to vector<1x1x8xf32>
    %c2_610 = arith.constant 2 : index
    %c1_611 = arith.constant 1 : index
    %c0_612 = arith.constant 0 : index
    %618 = vector.load %arg36[%c2_610, %c1_611, %c0_612] : memref<10x10x8xf32, #tpu.memory_space<vmem>>, vector<8x8x8xf32>
    %619 = vector.broadcast %617 : vector<1x1x8xf32> to vector<8x8x8xf32>
    %620 = arith.mulf %618, %619 : vector<8x8x8xf32>
    %621 = arith.addf %615, %620 : vector<8x8x8xf32>
    %c8_613 = arith.constant 8 : index
    %c0_614 = arith.constant 0 : index
    %622 = vector.load %arg7[%c8_613, %c0_614] : memref<9x8xf32, #tpu.memory_space<vmem>>, vector<1x8xf32>
    %623 = vector.shape_cast %622 : vector<1x8xf32> to vector<1x1x8xf32>
    %c2_615 = arith.constant 2 : index
    %c2_616 = arith.constant 2 : index
    %c0_617 = arith.constant 0 : index
    %624 = vector.load %arg36[%c2_615, %c2_616, %c0_617] : memref<10x10x8xf32, #tpu.memory_space<vmem>>, vector<8x8x8xf32>
    %625 = vector.broadcast %623 : vector<1x1x8xf32> to vector<8x8x8xf32>
    %626 = arith.mulf %624, %625 : vector<8x8x8xf32>
    %627 = arith.addf %621, %626 : vector<8x8x8xf32>
    %c0_618 = arith.constant 0 : index
    %c0_619 = arith.constant 0 : index
    %628 = vector.load %arg8[%c0_618, %c0_619] : memref<1x8xf32, #tpu.memory_space<vmem>>, vector<1x8xf32>
    %629 = vector.shape_cast %628 : vector<1x8xf32> to vector<1x1x8xf32>
    %630 = vector.broadcast %629 : vector<1x1x8xf32> to vector<8x8x8xf32>
    %631 = arith.mulf %627, %630 : vector<8x8x8xf32>
    %c0_620 = arith.constant 0 : index
    %c0_621 = arith.constant 0 : index
    %632 = vector.load %arg9[%c0_620, %c0_621] : memref<1x8xf32, #tpu.memory_space<vmem>>, vector<1x8xf32>
    %633 = vector.shape_cast %632 : vector<1x8xf32> to vector<1x1x8xf32>
    %634 = vector.broadcast %633 : vector<1x1x8xf32> to vector<8x8x8xf32>
    %635 = arith.addf %631, %634 : vector<8x8x8xf32>
    %636 = arith.negf %635 : vector<8x8x8xf32>
    %637 = math.exp %636 : vector<8x8x8xf32>
    %cst_622 = arith.constant 1.000000e+00 : f32
    %638 = vector.broadcast %cst_622 : f32 to vector<8x8x8xf32>
    %639 = arith.addf %638, %637 : vector<8x8x8xf32>
    %640 = arith.divf %638, %639 : vector<8x8x8xf32>
    %641 = arith.mulf %635, %640 : vector<8x8x8xf32>
    %642 = vector.shape_cast %641 : vector<8x8x8xf32> to vector<64x8xf32>
    %cst_623 = arith.constant dense<0.000000e+00> : vector<8xf32>
    %643 = vector.multi_reduction <add>, %642, %cst_623 [0] : vector<64x8xf32> to vector<8xf32>
    %644 = vector.shape_cast %643 : vector<8xf32> to vector<1x8xf32>
    %cst_624 = arith.constant 6.400000e+01 : f32
    %645 = vector.broadcast %cst_624 : f32 to vector<1x8xf32>
    %646 = arith.divf %644, %645 : vector<1x8xf32>
    %c0_625 = arith.constant 0 : index
    %c0_626 = arith.constant 0 : index
    %647 = vector.load %arg10[%c0_625, %c0_626] : memref<8x8xf32, #tpu.memory_space<vmem>>, vector<8x8xf32>
    %cst_627 = arith.constant dense<0.000000e+00> : vector<1x8xf32>
    %648 = tpu.matmul %646, %647, %cst_627 {dimension_numbers = #tpu.dot_dimension_numbers<[1], [0], [0], [1], [0, 0, 1, 1], [], []>} : vector<1x8xf32>, vector<8x8xf32>, vector<1x8xf32> -> vector<1x8xf32>
    %c0_628 = arith.constant 0 : index
    %c0_629 = arith.constant 0 : index
    %649 = vector.load %arg11[%c0_628, %c0_629] : memref<1x8xf32, #tpu.memory_space<vmem>>, vector<1x8xf32>
    %650 = arith.addf %648, %649 : vector<1x8xf32>
    %651 = arith.negf %650 : vector<1x8xf32>
    %652 = math.exp %651 : vector<1x8xf32>
    %cst_630 = arith.constant 1.000000e+00 : f32
    %653 = vector.broadcast %cst_630 : f32 to vector<1x8xf32>
    %654 = arith.addf %653, %652 : vector<1x8xf32>
    %655 = arith.divf %653, %654 : vector<1x8xf32>
    %656 = arith.mulf %650, %655 : vector<1x8xf32>
    %c0_631 = arith.constant 0 : index
    %c0_632 = arith.constant 0 : index
    %657 = vector.load %arg12[%c0_631, %c0_632] : memref<8x8xf32, #tpu.memory_space<vmem>>, vector<8x8xf32>
    %cst_633 = arith.constant dense<0.000000e+00> : vector<1x8xf32>
    %658 = tpu.matmul %656, %657, %cst_633 {dimension_numbers = #tpu.dot_dimension_numbers<[1], [0], [0], [1], [0, 0, 1, 1], [], []>} : vector<1x8xf32>, vector<8x8xf32>, vector<1x8xf32> -> vector<1x8xf32>
    %c0_634 = arith.constant 0 : index
    %c0_635 = arith.constant 0 : index
    %659 = vector.load %arg13[%c0_634, %c0_635] : memref<1x8xf32, #tpu.memory_space<vmem>>, vector<1x8xf32>
    %660 = arith.addf %658, %659 : vector<1x8xf32>
    %661 = arith.negf %660 : vector<1x8xf32>
    %662 = math.exp %661 : vector<1x8xf32>
    %cst_636 = arith.constant 1.000000e+00 : f32
    %663 = vector.broadcast %cst_636 : f32 to vector<1x8xf32>
    %664 = arith.addf %663, %662 : vector<1x8xf32>
    %665 = arith.divf %663, %664 : vector<1x8xf32>
    %666 = vector.broadcast %665 : vector<1x8xf32> to vector<64x8xf32>
    %667 = arith.mulf %642, %666 : vector<64x8xf32>
    %668 = arith.truncf %667 : vector<64x8xf32> to vector<64x8xbf16>
    %c0_637 = arith.constant 0 : index
    %c0_638 = arith.constant 0 : index
    %669 = vector.load %arg14[%c0_637, %c0_638] : memref<8x8xbf16, #tpu.memory_space<vmem>>, vector<8x8xbf16>
    %cst_639 = arith.constant dense<0.000000e+00> : vector<64x8xf32>
    %670 = tpu.matmul %668, %669, %cst_639 {dimension_numbers = #tpu.dot_dimension_numbers<[1], [0], [0], [1], [0, 0, 1, 1], [], []>} : vector<64x8xbf16>, vector<8x8xbf16>, vector<64x8xf32> -> vector<64x8xf32>
    %c0_640 = arith.constant 0 : index
    %c0_641 = arith.constant 0 : index
    %671 = vector.load %arg15[%c0_640, %c0_641] : memref<1x8xf32, #tpu.memory_space<vmem>>, vector<1x8xf32>
    %672 = vector.broadcast %671 : vector<1x8xf32> to vector<64x8xf32>
    %673 = arith.mulf %670, %672 : vector<64x8xf32>
    %c0_642 = arith.constant 0 : index
    %c0_643 = arith.constant 0 : index
    %674 = vector.load %arg16[%c0_642, %c0_643] : memref<1x8xf32, #tpu.memory_space<vmem>>, vector<1x8xf32>
    %675 = vector.broadcast %674 : vector<1x8xf32> to vector<64x8xf32>
    %676 = arith.addf %673, %675 : vector<64x8xf32>
    %c0_644 = arith.constant 0 : index
    %c0_645 = arith.constant 0 : index
    %677 = vector.load %arg35[%c0_644, %c0_645] : memref<64x8xf32, #tpu.memory_space<vmem>>, vector<64x8xf32>
    %678 = arith.addf %676, %677 : vector<64x8xf32>
    %679 = arith.truncf %678 : vector<64x8xf32> to vector<64x8xbf16>
    %c0_646 = arith.constant 0 : index
    %c0_647 = arith.constant 0 : index
    %680 = vector.load %arg17[%c0_646, %c0_647] : memref<8x32xbf16, #tpu.memory_space<vmem>>, vector<8x32xbf16>
    %cst_648 = arith.constant dense<0.000000e+00> : vector<64x32xf32>
    %681 = tpu.matmul %679, %680, %cst_648 {dimension_numbers = #tpu.dot_dimension_numbers<[1], [0], [0], [1], [0, 0, 1, 1], [], []>} : vector<64x8xbf16>, vector<8x32xbf16>, vector<64x32xf32> -> vector<64x32xf32>
    %c0_649 = arith.constant 0 : index
    %c0_650 = arith.constant 0 : index
    %682 = vector.load %arg18[%c0_649, %c0_650] : memref<1x32xf32, #tpu.memory_space<vmem>>, vector<1x32xf32>
    %683 = vector.broadcast %682 : vector<1x32xf32> to vector<64x32xf32>
    %684 = arith.mulf %681, %683 : vector<64x32xf32>
    %c0_651 = arith.constant 0 : index
    %c0_652 = arith.constant 0 : index
    %685 = vector.load %arg19[%c0_651, %c0_652] : memref<1x32xf32, #tpu.memory_space<vmem>>, vector<1x32xf32>
    %686 = vector.broadcast %685 : vector<1x32xf32> to vector<64x32xf32>
    %687 = arith.addf %684, %686 : vector<64x32xf32>
    %688 = arith.negf %687 : vector<64x32xf32>
    %689 = math.exp %688 : vector<64x32xf32>
    %cst_653 = arith.constant 1.000000e+00 : f32
    %690 = vector.broadcast %cst_653 : f32 to vector<64x32xf32>
    %691 = arith.addf %690, %689 : vector<64x32xf32>
    %692 = arith.divf %690, %691 : vector<64x32xf32>
    %693 = arith.mulf %687, %692 : vector<64x32xf32>
    %694 = vector.shape_cast %693 : vector<64x32xf32> to vector<8x8x32xf32>
    %c0_654 = arith.constant 0 : index
    %c0_655 = arith.constant 0 : index
    %c0_656 = arith.constant 0 : index
    %695 = vector.load %arg37[%c0_654, %c0_655, %c0_656] : memref<9x9x32xf32, #tpu.memory_space<vmem>>, vector<8x8x32xf32>
    tpu.vector_store %arg37[%c0_654, %c0_655, %c0_656], %694 {strides = array<i32>} : memref<9x9x32xf32, #tpu.memory_space<vmem>>, vector<8x8x32xf32>,
    %cst_657 = arith.constant 0.000000e+00 : f32
    %696 = vector.broadcast %cst_657 : f32 to vector<7x7x32xf32>
    %c0_658 = arith.constant 0 : index
    %c0_659 = arith.constant 0 : index
    %697 = vector.load %arg20[%c0_658, %c0_659] : memref<9x32xf32, #tpu.memory_space<vmem>>, vector<1x32xf32>
    %698 = vector.shape_cast %697 : vector<1x32xf32> to vector<1x1x32xf32>
    %c0_660 = arith.constant 0 : index
    %c0_661 = arith.constant 0 : index
    %c0_662 = arith.constant 0 : index
    %699 = vector.load %arg37[%c0_660, %c0_661, %c0_662] : memref<9x9x32xf32, #tpu.memory_space<vmem>>, vector<7x7x32xf32>
    %700 = vector.broadcast %698 : vector<1x1x32xf32> to vector<7x7x32xf32>
    %701 = arith.mulf %699, %700 : vector<7x7x32xf32>
    %702 = arith.addf %696, %701 : vector<7x7x32xf32>
    %c1_663 = arith.constant 1 : index
    %c0_664 = arith.constant 0 : index
    %703 = vector.load %arg20[%c1_663, %c0_664] : memref<9x32xf32, #tpu.memory_space<vmem>>, vector<1x32xf32>
    %704 = vector.shape_cast %703 : vector<1x32xf32> to vector<1x1x32xf32>
    %c0_665 = arith.constant 0 : index
    %c1_666 = arith.constant 1 : index
    %c0_667 = arith.constant 0 : index
    %705 = vector.load %arg37[%c0_665, %c1_666, %c0_667] : memref<9x9x32xf32, #tpu.memory_space<vmem>>, vector<7x7x32xf32>
    %706 = vector.broadcast %704 : vector<1x1x32xf32> to vector<7x7x32xf32>
    %707 = arith.mulf %705, %706 : vector<7x7x32xf32>
    %708 = arith.addf %702, %707 : vector<7x7x32xf32>
    %c2_668 = arith.constant 2 : index
    %c0_669 = arith.constant 0 : index
    %709 = vector.load %arg20[%c2_668, %c0_669] : memref<9x32xf32, #tpu.memory_space<vmem>>, vector<1x32xf32>
    %710 = vector.shape_cast %709 : vector<1x32xf32> to vector<1x1x32xf32>
    %c0_670 = arith.constant 0 : index
    %c2_671 = arith.constant 2 : index
    %c0_672 = arith.constant 0 : index
    %711 = vector.load %arg37[%c0_670, %c2_671, %c0_672] : memref<9x9x32xf32, #tpu.memory_space<vmem>>, vector<7x7x32xf32>
    %712 = vector.broadcast %710 : vector<1x1x32xf32> to vector<7x7x32xf32>
    %713 = arith.mulf %711, %712 : vector<7x7x32xf32>
    %714 = arith.addf %708, %713 : vector<7x7x32xf32>
    %c3_673 = arith.constant 3 : index
    %c0_674 = arith.constant 0 : index
    %715 = vector.load %arg20[%c3_673, %c0_674] : memref<9x32xf32, #tpu.memory_space<vmem>>, vector<1x32xf32>
    %716 = vector.shape_cast %715 : vector<1x32xf32> to vector<1x1x32xf32>
    %c1_675 = arith.constant 1 : index
    %c0_676 = arith.constant 0 : index
    %c0_677 = arith.constant 0 : index
    %717 = vector.load %arg37[%c1_675, %c0_676, %c0_677] : memref<9x9x32xf32, #tpu.memory_space<vmem>>, vector<7x7x32xf32>
    %718 = vector.broadcast %716 : vector<1x1x32xf32> to vector<7x7x32xf32>
    %719 = arith.mulf %717, %718 : vector<7x7x32xf32>
    %720 = arith.addf %714, %719 : vector<7x7x32xf32>
    %c4_678 = arith.constant 4 : index
    %c0_679 = arith.constant 0 : index
    %721 = vector.load %arg20[%c4_678, %c0_679] : memref<9x32xf32, #tpu.memory_space<vmem>>, vector<1x32xf32>
    %722 = vector.shape_cast %721 : vector<1x32xf32> to vector<1x1x32xf32>
    %c1_680 = arith.constant 1 : index
    %c1_681 = arith.constant 1 : index
    %c0_682 = arith.constant 0 : index
    %723 = vector.load %arg37[%c1_680, %c1_681, %c0_682] : memref<9x9x32xf32, #tpu.memory_space<vmem>>, vector<7x7x32xf32>
    %724 = vector.broadcast %722 : vector<1x1x32xf32> to vector<7x7x32xf32>
    %725 = arith.mulf %723, %724 : vector<7x7x32xf32>
    %726 = arith.addf %720, %725 : vector<7x7x32xf32>
    %c5_683 = arith.constant 5 : index
    %c0_684 = arith.constant 0 : index
    %727 = vector.load %arg20[%c5_683, %c0_684] : memref<9x32xf32, #tpu.memory_space<vmem>>, vector<1x32xf32>
    %728 = vector.shape_cast %727 : vector<1x32xf32> to vector<1x1x32xf32>
    %c1_685 = arith.constant 1 : index
    %c2_686 = arith.constant 2 : index
    %c0_687 = arith.constant 0 : index
    %729 = vector.load %arg37[%c1_685, %c2_686, %c0_687] : memref<9x9x32xf32, #tpu.memory_space<vmem>>, vector<7x7x32xf32>
    %730 = vector.broadcast %728 : vector<1x1x32xf32> to vector<7x7x32xf32>
    %731 = arith.mulf %729, %730 : vector<7x7x32xf32>
    %732 = arith.addf %726, %731 : vector<7x7x32xf32>
    %c6_688 = arith.constant 6 : index
    %c0_689 = arith.constant 0 : index
    %733 = vector.load %arg20[%c6_688, %c0_689] : memref<9x32xf32, #tpu.memory_space<vmem>>, vector<1x32xf32>
    %734 = vector.shape_cast %733 : vector<1x32xf32> to vector<1x1x32xf32>
    %c2_690 = arith.constant 2 : index
    %c0_691 = arith.constant 0 : index
    %c0_692 = arith.constant 0 : index
    %735 = vector.load %arg37[%c2_690, %c0_691, %c0_692] : memref<9x9x32xf32, #tpu.memory_space<vmem>>, vector<7x7x32xf32>
    %736 = vector.broadcast %734 : vector<1x1x32xf32> to vector<7x7x32xf32>
    %737 = arith.mulf %735, %736 : vector<7x7x32xf32>
    %738 = arith.addf %732, %737 : vector<7x7x32xf32>
    %c7_693 = arith.constant 7 : index
    %c0_694 = arith.constant 0 : index
    %739 = vector.load %arg20[%c7_693, %c0_694] : memref<9x32xf32, #tpu.memory_space<vmem>>, vector<1x32xf32>
    %740 = vector.shape_cast %739 : vector<1x32xf32> to vector<1x1x32xf32>
    %c2_695 = arith.constant 2 : index
    %c1_696 = arith.constant 1 : index
    %c0_697 = arith.constant 0 : index
    %741 = vector.load %arg37[%c2_695, %c1_696, %c0_697] : memref<9x9x32xf32, #tpu.memory_space<vmem>>, vector<7x7x32xf32>
    %742 = vector.broadcast %740 : vector<1x1x32xf32> to vector<7x7x32xf32>
    %743 = arith.mulf %741, %742 : vector<7x7x32xf32>
    %744 = arith.addf %738, %743 : vector<7x7x32xf32>
    %c8_698 = arith.constant 8 : index
    %c0_699 = arith.constant 0 : index
    %745 = vector.load %arg20[%c8_698, %c0_699] : memref<9x32xf32, #tpu.memory_space<vmem>>, vector<1x32xf32>
    %746 = vector.shape_cast %745 : vector<1x32xf32> to vector<1x1x32xf32>
    %c2_700 = arith.constant 2 : index
    %c2_701 = arith.constant 2 : index
    %c0_702 = arith.constant 0 : index
    %747 = vector.load %arg37[%c2_700, %c2_701, %c0_702] : memref<9x9x32xf32, #tpu.memory_space<vmem>>, vector<7x7x32xf32>
    %748 = vector.broadcast %746 : vector<1x1x32xf32> to vector<7x7x32xf32>
    %749 = arith.mulf %747, %748 : vector<7x7x32xf32>
    %750 = arith.addf %744, %749 : vector<7x7x32xf32>
    %c0_703 = arith.constant 0 : index
    %c0_704 = arith.constant 0 : index
    %751 = vector.load %arg21[%c0_703, %c0_704] : memref<1x32xf32, #tpu.memory_space<vmem>>, vector<1x32xf32>
    %c0_705 = arith.constant 0 : index
    %c0_706 = arith.constant 0 : index
    %752 = vector.load %arg22[%c0_705, %c0_706] : memref<1x32xf32, #tpu.memory_space<vmem>>, vector<1x32xf32>
    %753 = vector.extract_strided_slice %750 {offsets = [0, 0, 0], sizes = [1, 7, 32], strides = [1, 1, 1]} : vector<7x7x32xf32> to vector<1x7x32xf32>
    %754 = vector.shape_cast %753 : vector<1x7x32xf32> to vector<7x32xf32>
    %cst_707 = arith.constant dense<0.000000e+00> : vector<4x32xf32>
    %755 = tpu.matmul %10, %754, %cst_707 {dimension_numbers = #tpu.dot_dimension_numbers<[1], [0], [0], [1], [0, 0, 1, 1], [], []>} : vector<4x7xf32>, vector<7x32xf32>, vector<4x32xf32> -> vector<4x32xf32>
    %756 = vector.broadcast %751 : vector<1x32xf32> to vector<4x32xf32>
    %757 = arith.mulf %755, %756 : vector<4x32xf32>
    %758 = vector.broadcast %752 : vector<1x32xf32> to vector<4x32xf32>
    %759 = arith.addf %757, %758 : vector<4x32xf32>
    %760 = arith.negf %759 : vector<4x32xf32>
    %761 = math.exp %760 : vector<4x32xf32>
    %cst_708 = arith.constant 1.000000e+00 : f32
    %762 = vector.broadcast %cst_708 : f32 to vector<4x32xf32>
    %763 = arith.addf %762, %761 : vector<4x32xf32>
    %764 = arith.divf %762, %763 : vector<4x32xf32>
    %765 = arith.mulf %759, %764 : vector<4x32xf32>
    %c0_709 = arith.constant 0 : index
    %c0_710 = arith.constant 0 : index
    %766 = vector.load %arg38[%c0_709, %c0_710] : memref<16x32xf32, #tpu.memory_space<vmem>>, vector<4x32xf32>
    tpu.vector_store %arg38[%c0_709, %c0_710], %765 {strides = array<i32>} : memref<16x32xf32, #tpu.memory_space<vmem>>, vector<4x32xf32>,
    %767 = vector.extract_strided_slice %750 {offsets = [2, 0, 0], sizes = [1, 7, 32], strides = [1, 1, 1]} : vector<7x7x32xf32> to vector<1x7x32xf32>
    %768 = vector.shape_cast %767 : vector<1x7x32xf32> to vector<7x32xf32>
    %cst_711 = arith.constant dense<0.000000e+00> : vector<4x32xf32>
    %769 = tpu.matmul %10, %768, %cst_711 {dimension_numbers = #tpu.dot_dimension_numbers<[1], [0], [0], [1], [0, 0, 1, 1], [], []>} : vector<4x7xf32>, vector<7x32xf32>, vector<4x32xf32> -> vector<4x32xf32>
    %770 = vector.broadcast %751 : vector<1x32xf32> to vector<4x32xf32>
    %771 = arith.mulf %769, %770 : vector<4x32xf32>
    %772 = vector.broadcast %752 : vector<1x32xf32> to vector<4x32xf32>
    %773 = arith.addf %771, %772 : vector<4x32xf32>
    %774 = arith.negf %773 : vector<4x32xf32>
    %775 = math.exp %774 : vector<4x32xf32>
    %cst_712 = arith.constant 1.000000e+00 : f32
    %776 = vector.broadcast %cst_712 : f32 to vector<4x32xf32>
    %777 = arith.addf %776, %775 : vector<4x32xf32>
    %778 = arith.divf %776, %777 : vector<4x32xf32>
    %779 = arith.mulf %773, %778 : vector<4x32xf32>
    %c4_713 = arith.constant 4 : index
    %c0_714 = arith.constant 0 : index
    %780 = vector.load %arg38[%c4_713, %c0_714] : memref<16x32xf32, #tpu.memory_space<vmem>>, vector<4x32xf32>
    tpu.vector_store %arg38[%c4_713, %c0_714], %779 {strides = array<i32>} : memref<16x32xf32, #tpu.memory_space<vmem>>, vector<4x32xf32>,
    %781 = vector.extract_strided_slice %750 {offsets = [4, 0, 0], sizes = [1, 7, 32], strides = [1, 1, 1]} : vector<7x7x32xf32> to vector<1x7x32xf32>
    %782 = vector.shape_cast %781 : vector<1x7x32xf32> to vector<7x32xf32>
    %cst_715 = arith.constant dense<0.000000e+00> : vector<4x32xf32>
    %783 = tpu.matmul %10, %782, %cst_715 {dimension_numbers = #tpu.dot_dimension_numbers<[1], [0], [0], [1], [0, 0, 1, 1], [], []>} : vector<4x7xf32>, vector<7x32xf32>, vector<4x32xf32> -> vector<4x32xf32>
    %784 = vector.broadcast %751 : vector<1x32xf32> to vector<4x32xf32>
    %785 = arith.mulf %783, %784 : vector<4x32xf32>
    %786 = vector.broadcast %752 : vector<1x32xf32> to vector<4x32xf32>
    %787 = arith.addf %785, %786 : vector<4x32xf32>
    %788 = arith.negf %787 : vector<4x32xf32>
    %789 = math.exp %788 : vector<4x32xf32>
    %cst_716 = arith.constant 1.000000e+00 : f32
    %790 = vector.broadcast %cst_716 : f32 to vector<4x32xf32>
    %791 = arith.addf %790, %789 : vector<4x32xf32>
    %792 = arith.divf %790, %791 : vector<4x32xf32>
    %793 = arith.mulf %787, %792 : vector<4x32xf32>
    %c8_717 = arith.constant 8 : index
    %c0_718 = arith.constant 0 : index
    %794 = vector.load %arg38[%c8_717, %c0_718] : memref<16x32xf32, #tpu.memory_space<vmem>>, vector<4x32xf32>
    tpu.vector_store %arg38[%c8_717, %c0_718], %793 {strides = array<i32>} : memref<16x32xf32, #tpu.memory_space<vmem>>, vector<4x32xf32>,
    %795 = vector.extract_strided_slice %750 {offsets = [6, 0, 0], sizes = [1, 7, 32], strides = [1, 1, 1]} : vector<7x7x32xf32> to vector<1x7x32xf32>
    %796 = vector.shape_cast %795 : vector<1x7x32xf32> to vector<7x32xf32>
    %cst_719 = arith.constant dense<0.000000e+00> : vector<4x32xf32>
    %797 = tpu.matmul %10, %796, %cst_719 {dimension_numbers = #tpu.dot_dimension_numbers<[1], [0], [0], [1], [0, 0, 1, 1], [], []>} : vector<4x7xf32>, vector<7x32xf32>, vector<4x32xf32> -> vector<4x32xf32>
    %798 = vector.broadcast %751 : vector<1x32xf32> to vector<4x32xf32>
    %799 = arith.mulf %797, %798 : vector<4x32xf32>
    %800 = vector.broadcast %752 : vector<1x32xf32> to vector<4x32xf32>
    %801 = arith.addf %799, %800 : vector<4x32xf32>
    %802 = arith.negf %801 : vector<4x32xf32>
    %803 = math.exp %802 : vector<4x32xf32>
    %cst_720 = arith.constant 1.000000e+00 : f32
    %804 = vector.broadcast %cst_720 : f32 to vector<4x32xf32>
    %805 = arith.addf %804, %803 : vector<4x32xf32>
    %806 = arith.divf %804, %805 : vector<4x32xf32>
    %807 = arith.mulf %801, %806 : vector<4x32xf32>
    %c12_721 = arith.constant 12 : index
    %c0_722 = arith.constant 0 : index
    %808 = vector.load %arg38[%c12_721, %c0_722] : memref<16x32xf32, #tpu.memory_space<vmem>>, vector<4x32xf32>
    tpu.vector_store %arg38[%c12_721, %c0_722], %807 {strides = array<i32>} : memref<16x32xf32, #tpu.memory_space<vmem>>, vector<4x32xf32>,
    %c0_723 = arith.constant 0 : index
    %c0_724 = arith.constant 0 : index
    %809 = vector.load %arg38[%c0_723, %c0_724] : memref<16x32xf32, #tpu.memory_space<vmem>>, vector<16x32xf32>
    %cst_725 = arith.constant dense<0.000000e+00> : vector<32xf32>
    %810 = vector.multi_reduction <add>, %809, %cst_725 [0] : vector<16x32xf32> to vector<32xf32>
    %811 = vector.shape_cast %810 : vector<32xf32> to vector<1x32xf32>
    %cst_726 = arith.constant 1.600000e+01 : f32
    %812 = vector.broadcast %cst_726 : f32 to vector<1x32xf32>
    %813 = arith.divf %811, %812 : vector<1x32xf32>
    %c0_727 = arith.constant 0 : index
    %c0_728 = arith.constant 0 : index
    %814 = vector.load %arg23[%c0_727, %c0_728] : memref<32x8xf32, #tpu.memory_space<vmem>>, vector<32x8xf32>
    %cst_729 = arith.constant dense<0.000000e+00> : vector<1x8xf32>
    %815 = tpu.matmul %813, %814, %cst_729 {dimension_numbers = #tpu.dot_dimension_numbers<[1], [0], [0], [1], [0, 0, 1, 1], [], []>} : vector<1x32xf32>, vector<32x8xf32>, vector<1x8xf32> -> vector<1x8xf32>
    %c0_730 = arith.constant 0 : index
    %c0_731 = arith.constant 0 : index
    %816 = vector.load %arg24[%c0_730, %c0_731] : memref<1x8xf32, #tpu.memory_space<vmem>>, vector<1x8xf32>
    %817 = arith.addf %815, %816 : vector<1x8xf32>
    %818 = arith.negf %817 : vector<1x8xf32>
    %819 = math.exp %818 : vector<1x8xf32>
    %cst_732 = arith.constant 1.000000e+00 : f32
    %820 = vector.broadcast %cst_732 : f32 to vector<1x8xf32>
    %821 = arith.addf %820, %819 : vector<1x8xf32>
    %822 = arith.divf %820, %821 : vector<1x8xf32>
    %823 = arith.mulf %817, %822 : vector<1x8xf32>
    %c0_733 = arith.constant 0 : index
    %c0_734 = arith.constant 0 : index
    %824 = vector.load %arg25[%c0_733, %c0_734] : memref<8x32xf32, #tpu.memory_space<vmem>>, vector<8x32xf32>
    %cst_735 = arith.constant dense<0.000000e+00> : vector<1x32xf32>
    %825 = tpu.matmul %823, %824, %cst_735 {dimension_numbers = #tpu.dot_dimension_numbers<[1], [0], [0], [1], [0, 0, 1, 1], [], []>} : vector<1x8xf32>, vector<8x32xf32>, vector<1x32xf32> -> vector<1x32xf32>
    %c0_736 = arith.constant 0 : index
    %c0_737 = arith.constant 0 : index
    %826 = vector.load %arg26[%c0_736, %c0_737] : memref<1x32xf32, #tpu.memory_space<vmem>>, vector<1x32xf32>
    %827 = arith.addf %825, %826 : vector<1x32xf32>
    %828 = arith.negf %827 : vector<1x32xf32>
    %829 = math.exp %828 : vector<1x32xf32>
    %cst_738 = arith.constant 1.000000e+00 : f32
    %830 = vector.broadcast %cst_738 : f32 to vector<1x32xf32>
    %831 = arith.addf %830, %829 : vector<1x32xf32>
    %832 = arith.divf %830, %831 : vector<1x32xf32>
    %833 = vector.broadcast %832 : vector<1x32xf32> to vector<16x32xf32>
    %834 = arith.mulf %809, %833 : vector<16x32xf32>
    %835 = arith.truncf %834 : vector<16x32xf32> to vector<16x32xbf16>
    %c0_739 = arith.constant 0 : index
    %c0_740 = arith.constant 0 : index
    %836 = vector.load %arg27[%c0_739, %c0_740] : memref<32x16xbf16, #tpu.memory_space<vmem>>, vector<32x16xbf16>
    %cst_741 = arith.constant dense<0.000000e+00> : vector<16x16xf32>
    %837 = tpu.matmul %835, %836, %cst_741 {dimension_numbers = #tpu.dot_dimension_numbers<[1], [0], [0], [1], [0, 0, 1, 1], [], []>} : vector<16x32xbf16>, vector<32x16xbf16>, vector<16x16xf32> -> vector<16x16xf32>
    %c0_742 = arith.constant 0 : index
    %c0_743 = arith.constant 0 : index
    %838 = vector.load %arg28[%c0_742, %c0_743] : memref<1x16xf32, #tpu.memory_space<vmem>>, vector<1x16xf32>
    %839 = vector.broadcast %838 : vector<1x16xf32> to vector<16x16xf32>
    %840 = arith.mulf %837, %839 : vector<16x16xf32>
    %c0_744 = arith.constant 0 : index
    %c0_745 = arith.constant 0 : index
    %841 = vector.load %arg29[%c0_744, %c0_745] : memref<1x16xf32, #tpu.memory_space<vmem>>, vector<1x16xf32>
    %842 = vector.broadcast %841 : vector<1x16xf32> to vector<16x16xf32>
    %843 = arith.addf %840, %842 : vector<16x16xf32>
    %844 = arith.truncf %843 : vector<16x16xf32> to vector<16x16xbf16>
    %c0_746 = arith.constant 0 : index
    %c0_747 = arith.constant 0 : index
    %845 = vector.load %arg30[%c0_746, %c0_747] : memref<16x128xbf16, #tpu.memory_space<vmem>>, vector<16x128xbf16>
    %cst_748 = arith.constant dense<0.000000e+00> : vector<16x128xf32>
    %846 = tpu.matmul %844, %845, %cst_748 {dimension_numbers = #tpu.dot_dimension_numbers<[1], [0], [0], [1], [0, 0, 1, 1], [], []>} : vector<16x16xbf16>, vector<16x128xbf16>, vector<16x128xf32> -> vector<16x128xf32>
    %c0_749 = arith.constant 0 : index
    %c0_750 = arith.constant 0 : index
    %847 = vector.load %arg31[%c0_749, %c0_750] : memref<1x128xf32, #tpu.memory_space<vmem>>, vector<1x128xf32>
    %848 = vector.broadcast %847 : vector<1x128xf32> to vector<16x128xf32>
    %849 = arith.mulf %846, %848 : vector<16x128xf32>
    %c0_751 = arith.constant 0 : index
    %c0_752 = arith.constant 0 : index
    %850 = vector.load %arg32[%c0_751, %c0_752] : memref<1x128xf32, #tpu.memory_space<vmem>>, vector<1x128xf32>
    %851 = vector.broadcast %850 : vector<1x128xf32> to vector<16x128xf32>
    %852 = arith.addf %849, %851 : vector<16x128xf32>
    %853 = arith.negf %852 : vector<16x128xf32>
    %854 = math.exp %853 : vector<16x128xf32>
    %cst_753 = arith.constant 1.000000e+00 : f32
    %855 = vector.broadcast %cst_753 : f32 to vector<16x128xf32>
    %856 = arith.addf %855, %854 : vector<16x128xf32>
    %857 = arith.divf %855, %856 : vector<16x128xf32>
    %858 = arith.mulf %852, %857 : vector<16x128xf32>
    %cst_754 = arith.constant dense<0.000000e+00> : vector<128xf32>
    %859 = vector.multi_reduction <add>, %858, %cst_754 [0] : vector<16x128xf32> to vector<128xf32>
    %860 = vector.shape_cast %859 : vector<128xf32> to vector<1x128xf32>
    %cst_755 = arith.constant 1.600000e+01 : f32
    %861 = vector.broadcast %cst_755 : f32 to vector<1x128xf32>
    %862 = arith.divf %860, %861 : vector<1x128xf32>
    %c0_756 = arith.constant 0 : index
    %c0_757 = arith.constant 0 : index
    %c0_758 = arith.constant 0 : index
    %863 = vector.load %arg33[%c0_756, %c0_757, %c0_758] : memref<1x1x128xf32, #tpu.memory_space<vmem>>, vector<1x1x128xf32>
    %864 = vector.shape_cast %863 : vector<1x1x128xf32> to vector<1x128xf32>
    %865 = vector.shape_cast %862 : vector<1x128xf32> to vector<1x1x128xf32>
    tpu.vector_store %arg33[%c0_756, %c0_757, %c0_758], %865 {strides = array<i32>} : memref<1x1x128xf32, #tpu.memory_space<vmem>>, vector<1x1x128xf32>,
    return
  }
  func.func @transform_0(%arg0: i32) -> (i32, i32, i32, i32) {
    %c0_i32 = arith.constant 0 : i32
    %c0_i32_0 = arith.constant 0 : i32
    %c0_i32_1 = arith.constant 0 : i32
    %c0_i32_2 = arith.constant 0 : i32
    return %arg0, %c0_i32, %c0_i32_0, %c0_i32_1 : i32, i32, i32, i32
  }
  func.func @transform_1(%arg0: i32) -> (i32, i32) {
    %c0_i32 = arith.constant 0 : i32
    %c0_i32_0 = arith.constant 0 : i32
    %c0_i32_1 = arith.constant 0 : i32
    return %c0_i32, %c0_i32_0 : i32, i32
  }
  func.func @transform_2(%arg0: i32) -> (i32, i32) {
    %c0_i32 = arith.constant 0 : i32
    %c0_i32_0 = arith.constant 0 : i32
    %c0_i32_1 = arith.constant 0 : i32
    return %c0_i32, %c0_i32_0 : i32, i32
  }
  func.func @transform_3(%arg0: i32) -> (i32, i32, i32) {
    %c0_i32 = arith.constant 0 : i32
    %c0_i32_0 = arith.constant 0 : i32
    %c0_i32_1 = arith.constant 0 : i32
    %c0_i32_2 = arith.constant 0 : i32
    return %c0_i32, %c0_i32_0, %c0_i32_1 : i32, i32, i32
  }
  func.func @transform_4(%arg0: i32) -> (i32, i32) {
    %c0_i32 = arith.constant 0 : i32
    %c0_i32_0 = arith.constant 0 : i32
    %c0_i32_1 = arith.constant 0 : i32
    return %c0_i32, %c0_i32_0 : i32, i32
  }
  func.func @transform_5(%arg0: i32) -> (i32, i32) {
    %c0_i32 = arith.constant 0 : i32
    %c0_i32_0 = arith.constant 0 : i32
    %c0_i32_1 = arith.constant 0 : i32
    return %c0_i32, %c0_i32_0 : i32, i32
  }
  func.func @transform_6(%arg0: i32) -> (i32, i32) {
    %c0_i32 = arith.constant 0 : i32
    %c0_i32_0 = arith.constant 0 : i32
    %c0_i32_1 = arith.constant 0 : i32
    return %c0_i32, %c0_i32_0 : i32, i32
  }
  func.func @transform_7(%arg0: i32) -> (i32, i32) {
    %c0_i32 = arith.constant 0 : i32
    %c0_i32_0 = arith.constant 0 : i32
    %c0_i32_1 = arith.constant 0 : i32
    return %c0_i32, %c0_i32_0 : i32, i32
  }
  func.func @transform_8(%arg0: i32) -> (i32, i32) {
    %c0_i32 = arith.constant 0 : i32
    %c0_i32_0 = arith.constant 0 : i32
    %c0_i32_1 = arith.constant 0 : i32
    return %c0_i32, %c0_i32_0 : i32, i32
  }
  func.func @transform_9(%arg0: i32) -> (i32, i32) {
    %c0_i32 = arith.constant 0 : i32
    %c0_i32_0 = arith.constant 0 : i32
    %c0_i32_1 = arith.constant 0 : i32
    return %c0_i32, %c0_i32_0 : i32, i32
  }
  func.func @transform_10(%arg0: i32) -> (i32, i32) {
    %c0_i32 = arith.constant 0 : i32
    %c0_i32_0 = arith.constant 0 : i32
    %c0_i32_1 = arith.constant 0 : i32
    return %c0_i32, %c0_i32_0 : i32, i32
  }
  func.func @transform_11(%arg0: i32) -> (i32, i32) {
    %c0_i32 = arith.constant 0 : i32
    %c0_i32_0 = arith.constant 0 : i32
    %c0_i32_1 = arith.constant 0 : i32
    return %c0_i32, %c0_i32_0 : i32, i32
  }
  func.func @transform_12(%arg0: i32) -> (i32, i32) {
    %c0_i32 = arith.constant 0 : i32
    %c0_i32_0 = arith.constant 0 : i32
    %c0_i32_1 = arith.constant 0 : i32
    return %c0_i32, %c0_i32_0 : i32, i32
  }
  func.func @transform_13(%arg0: i32) -> (i32, i32) {
    %c0_i32 = arith.constant 0 : i32
    %c0_i32_0 = arith.constant 0 : i32
    %c0_i32_1 = arith.constant 0 : i32
    return %c0_i32, %c0_i32_0 : i32, i32
  }
  func.func @transform_14(%arg0: i32) -> (i32, i32) {
    %c0_i32 = arith.constant 0 : i32
    %c0_i32_0 = arith.constant 0 : i32
    %c0_i32_1 = arith.constant 0 : i32
    return %c0_i32, %c0_i32_0 : i32, i32
  }
  func.func @transform_15(%arg0: i32) -> (i32, i32) {
    %c0_i32 = arith.constant 0 : i32
    %c0_i32_0 = arith.constant 0 : i32
    %c0_i32_1 = arith.constant 0 : i32
    return %c0_i32, %c0_i32_0 : i32, i32
  }
  func.func @transform_16(%arg0: i32) -> (i32, i32) {
    %c0_i32 = arith.constant 0 : i32
    %c0_i32_0 = arith.constant 0 : i32
    %c0_i32_1 = arith.constant 0 : i32
    return %c0_i32, %c0_i32_0 : i32, i32
  }
  func.func @transform_17(%arg0: i32) -> (i32, i32) {
    %c0_i32 = arith.constant 0 : i32
    %c0_i32_0 = arith.constant 0 : i32
    %c0_i32_1 = arith.constant 0 : i32
    return %c0_i32, %c0_i32_0 : i32, i32
  }
  func.func @transform_18(%arg0: i32) -> (i32, i32) {
    %c0_i32 = arith.constant 0 : i32
    %c0_i32_0 = arith.constant 0 : i32
    %c0_i32_1 = arith.constant 0 : i32
    return %c0_i32, %c0_i32_0 : i32, i32
  }
  func.func @transform_19(%arg0: i32) -> (i32, i32) {
    %c0_i32 = arith.constant 0 : i32
    %c0_i32_0 = arith.constant 0 : i32
    %c0_i32_1 = arith.constant 0 : i32
    return %c0_i32, %c0_i32_0 : i32, i32
  }
  func.func @transform_20(%arg0: i32) -> (i32, i32) {
    %c0_i32 = arith.constant 0 : i32
    %c0_i32_0 = arith.constant 0 : i32
    %c0_i32_1 = arith.constant 0 : i32
    return %c0_i32, %c0_i32_0 : i32, i32
  }
  func.func @transform_21(%arg0: i32) -> (i32, i32) {
    %c0_i32 = arith.constant 0 : i32
    %c0_i32_0 = arith.constant 0 : i32
    %c0_i32_1 = arith.constant 0 : i32
    return %c0_i32, %c0_i32_0 : i32, i32
  }
  func.func @transform_22(%arg0: i32) -> (i32, i32) {
    %c0_i32 = arith.constant 0 : i32
    %c0_i32_0 = arith.constant 0 : i32
    %c0_i32_1 = arith.constant 0 : i32
    return %c0_i32, %c0_i32_0 : i32, i32
  }
  func.func @transform_23(%arg0: i32) -> (i32, i32) {
    %c0_i32 = arith.constant 0 : i32
    %c0_i32_0 = arith.constant 0 : i32
    %c0_i32_1 = arith.constant 0 : i32
    return %c0_i32, %c0_i32_0 : i32, i32
  }
  func.func @transform_24(%arg0: i32) -> (i32, i32) {
    %c0_i32 = arith.constant 0 : i32
    %c0_i32_0 = arith.constant 0 : i32
    %c0_i32_1 = arith.constant 0 : i32
    return %c0_i32, %c0_i32_0 : i32, i32
  }
  func.func @transform_25(%arg0: i32) -> (i32, i32) {
    %c0_i32 = arith.constant 0 : i32
    %c0_i32_0 = arith.constant 0 : i32
    %c0_i32_1 = arith.constant 0 : i32
    return %c0_i32, %c0_i32_0 : i32, i32
  }
  func.func @transform_26(%arg0: i32) -> (i32, i32) {
    %c0_i32 = arith.constant 0 : i32
    %c0_i32_0 = arith.constant 0 : i32
    %c0_i32_1 = arith.constant 0 : i32
    return %c0_i32, %c0_i32_0 : i32, i32
  }
  func.func @transform_27(%arg0: i32) -> (i32, i32) {
    %c0_i32 = arith.constant 0 : i32
    %c0_i32_0 = arith.constant 0 : i32
    %c0_i32_1 = arith.constant 0 : i32
    return %c0_i32, %c0_i32_0 : i32, i32
  }
  func.func @transform_28(%arg0: i32) -> (i32, i32) {
    %c0_i32 = arith.constant 0 : i32
    %c0_i32_0 = arith.constant 0 : i32
    %c0_i32_1 = arith.constant 0 : i32
    return %c0_i32, %c0_i32_0 : i32, i32
  }
  func.func @transform_29(%arg0: i32) -> (i32, i32) {
    %c0_i32 = arith.constant 0 : i32
    %c0_i32_0 = arith.constant 0 : i32
    %c0_i32_1 = arith.constant 0 : i32
    return %c0_i32, %c0_i32_0 : i32, i32
  }
  func.func @transform_30(%arg0: i32) -> (i32, i32) {
    %c0_i32 = arith.constant 0 : i32
    %c0_i32_0 = arith.constant 0 : i32
    %c0_i32_1 = arith.constant 0 : i32
    return %c0_i32, %c0_i32_0 : i32, i32
  }
  func.func @transform_31(%arg0: i32) -> (i32, i32) {
    %c0_i32 = arith.constant 0 : i32
    %c0_i32_0 = arith.constant 0 : i32
    %c0_i32_1 = arith.constant 0 : i32
    return %c0_i32, %c0_i32_0 : i32, i32
  }
  func.func @transform_32(%arg0: i32) -> (i32, i32, i32) {
    %c0_i32 = arith.constant 0 : i32
    %c0_i32_0 = arith.constant 0 : i32
    %c0_i32_1 = arith.constant 0 : i32
    return %arg0, %c0_i32, %c0_i32_0 : i32, i32, i32
  }
}

</mosaic_0001>

<llo_original>
// kernel: rnsa_image_feature_extractor.1
$region0: #{rnsa_image_feature_extractor.1}
  #allocation0 [shape = 'u32[]', space=smem, size = 0x4, offset = 0x4, fixed_abs, tag = 'smem constant byte address 0x4 - core index']
  #allocation1 [shape = 'u32[72,128]{1,0:T(1,128)}', space=vmem, size = 0x9000, scoped, tag = 'internal scratch']
  #allocation2 [shape = 'f32[17,17,3]{2,1,0:T(8,128)}', space=vmem, size = 0x33000, scoped, tag = 'scratch operand']
  #allocation3 [shape = 'f32[64,8]{1,0:T(8,128)}', space=vmem, size = 0x8000, scoped, tag = 'scratch operand']
  #allocation4 [shape = 'f32[10,10,8]{2,1,0:T(8,128)}', space=vmem, size = 0x14000, scoped, tag = 'scratch operand']
  #allocation5 [shape = 'f32[9,9,32]{2,1,0:T(8,128)}', space=vmem, size = 0x12000, scoped, tag = 'scratch operand']
  #allocation6 [shape = 'f32[16,32]{1,0:T(8,128)}', space=vmem, size = 0x2000, scoped, tag = 'scratch operand']
  %s0 = inlined_call_operand.smem [shape: u32[33], index: -1, kind: input, shape index: {}]
  %s1 = sld [smem:[%s0]]
  %s2 = scalar_lea.smem %s0, 1
  %s3 = sld [smem:[%s2]]
  %s4 = scalar_lea.smem %s0, 2
  %s5 = sld [smem:[%s4]]
  %s6 = scalar_lea.smem %s0, 3
  %s7 = sld [smem:[%s6]]
  %s8 = scalar_lea.smem %s0, 4
  %s9 = sld [smem:[%s8]]
  %s10 = scalar_lea.smem %s0, 5
  %s11 = sld [smem:[%s10]]
  %s12 = scalar_lea.smem %s0, 6
  %s13 = sld [smem:[%s12]]
  %s14 = scalar_lea.smem %s0, 7
  %s15 = sld [smem:[%s14]]
  %s16 = scalar_lea.smem %s0, 8
  %s17 = sld [smem:[%s16]]
  %s18 = scalar_lea.smem %s0, 9
  %s19 = sld [smem:[%s18]]
  %s20 = scalar_lea.smem %s0, 10
  %s21 = sld [smem:[%s20]]
  %s22 = scalar_lea.smem %s0, 11
  %s23 = sld [smem:[%s22]]
  %s24 = scalar_lea.smem %s0, 12
  %s25 = sld [smem:[%s24]]
  %s26 = scalar_lea.smem %s0, 13
  %s27 = sld [smem:[%s26]]
  %s28 = scalar_lea.smem %s0, 14
  %s29 = sld [smem:[%s28]]
  %s30 = scalar_lea.smem %s0, 15
  %s31 = sld [smem:[%s30]]
  %s32 = scalar_lea.smem %s0, 16
  %s33 = sld [smem:[%s32]]
  %s34 = scalar_lea.smem %s0, 17
  %s35 = sld [smem:[%s34]]
  %s36 = scalar_lea.smem %s0, 18
  %s37 = sld [smem:[%s36]]
  %s38 = scalar_lea.smem %s0, 19
  %s39 = sld [smem:[%s38]]
  %s40 = scalar_lea.smem %s0, 20
  %s41 = sld [smem:[%s40]]
  %s42 = scalar_lea.smem %s0, 21
  %s43 = sld [smem:[%s42]]
  %s44 = scalar_lea.smem %s0, 22
  %s45 = sld [smem:[%s44]]
  %s46 = scalar_lea.smem %s0, 23
  %s47 = sld [smem:[%s46]]
  %s48 = scalar_lea.smem %s0, 24
  %s49 = sld [smem:[%s48]]
  %s50 = scalar_lea.smem %s0, 25
  %s51 = sld [smem:[%s50]]
  %s52 = scalar_lea.smem %s0, 26
  %s53 = sld [smem:[%s52]]
  %s54 = scalar_lea.smem %s0, 27
  %s55 = sld [smem:[%s54]]
  %s56 = scalar_lea.smem %s0, 28
  %s57 = sld [smem:[%s56]]
  %s58 = scalar_lea.smem %s0, 29
  %s59 = sld [smem:[%s58]]
  %s60 = scalar_lea.smem %s0, 30
  %s61 = sld [smem:[%s60]]
  %s62 = scalar_lea.smem %s0, 31
  %s63 = sld [smem:[%s62]]
  %s64 = scalar_lea.smem %s0, 32
  %s65 = sld [smem:[%s64]]
  %s66 = sld [smem:[#allocation0]]
  $region161: #{rnsa_image_feature_extractor.1} parent=0
    _
  %s68 = ssub.s32 1, %s66
  %s69 = scalar_select 0, %s68, %s66
  $region1: #{rnsa_image_feature_extractor.1} parent=0
    #allocation7 [shape = 'u8[1024]{0}', space=vmem, size = 0x400, scoped, tag = 'output window, operand 0']
    #allocation8 [shape = 's32[2]{0}', space=sflag, size = 0x8, scoped, tag = 'scoped memory for rnsa_image_feature_extractor.1']
    %70 = vsyncpa [#allocation8], 0
    %s71 = scalar_lea.sflag [#allocation8], 1
    %72 = vsyncpa %s71, 0
    loop: start=0, step=1, limit=4
    $region2: #{rnsa_image_feature_extractor.1} parent=1 // loop_pre_header
      _
    $region3: #{rnsa_image_feature_extractor.1} parent=1 // loop_header
      %s74 = sphi 0, %s78
      %p75 = scmp.ge.s32.totalorder %s74, 4
      %s84 = sphi 0, %s86
      %s87 = sphi 0, %s84
      %s88 = sphi 0, %s87
      %s104 = sphi 0, %s88
      %s108 = sphi 0, %s108
      %s110 = sphi 0, %s108
      %s111 = sphi 0, %s110
      %s125 = sphi 0, %s111
      %s129 = sphi 0, %s129
      %s131 = sphi 0, %s129
      %s132 = sphi 0, %s131
      %s146 = sphi 0, %s132
      %s150 = sphi 0, %s150
      %s152 = sphi 0, %s150
      %s153 = sphi 0, %s152
      %s167 = sphi 0, %s153
      %s171 = sphi 0, %s171
      %s173 = sphi 0, %s171
      %s174 = sphi 0, %s173
      %s188 = sphi 0, %s174
      %s192 = sphi 0, %s192
      %s194 = sphi 0, %s192
      %s195 = sphi 0, %s194
      %s209 = sphi 0, %s195
      %s213 = sphi 0, %s213
      %s215 = sphi 0, %s213
      %s216 = sphi 0, %s215
      %s230 = sphi 0, %s216
      %s234 = sphi 0, %s234
      %s236 = sphi 0, %s234
      %s237 = sphi 0, %s236
      %s251 = sphi 0, %s237
      %s255 = sphi 0, %s255
      %s257 = sphi 0, %s255
      %s258 = sphi 0, %s257
      %s272 = sphi 0, %s258
      %s276 = sphi 0, %s276
      %s278 = sphi 0, %s276
      %s279 = sphi 0, %s278
      %s293 = sphi 0, %s279
      %s297 = sphi 0, %s297
      %s299 = sphi 0, %s297
      %s300 = sphi 0, %s299
      %s314 = sphi 0, %s300
      %s318 = sphi 0, %s318
      %s320 = sphi 0, %s318
      %s321 = sphi 0, %s320
      %s335 = sphi 0, %s321
      %s339 = sphi 0, %s339
      %s341 = sphi 0, %s339
      %s342 = sphi 0, %s341
      %s356 = sphi 0, %s342
      %s360 = sphi 0, %s360
      %s362 = sphi 0, %s360
      %s363 = sphi 0, %s362
      %s377 = sphi 0, %s363
      %s381 = sphi 0, %s381
      %s383 = sphi 0, %s381
      %s384 = sphi 0, %s383
      %s398 = sphi 0, %s384
      %s402 = sphi 0, %s402
      %s404 = sphi 0, %s402
      %s405 = sphi 0, %s404
      %s419 = sphi 0, %s405
      %s423 = sphi 0, %s423
      %s425 = sphi 0, %s423
      %s426 = sphi 0, %s425
      %s440 = sphi 0, %s426
      %s444 = sphi 0, %s444
      %s446 = sphi 0, %s444
      %s447 = sphi 0, %s446
      %s461 = sphi 0, %s447
      %s465 = sphi 0, %s465
      %s467 = sphi 0, %s465
      %s468 = sphi 0, %s467
      %s482 = sphi 0, %s468
      %s486 = sphi 0, %s486
      %s488 = sphi 0, %s486
      %s489 = sphi 0, %s488
      %s503 = sphi 0, %s489
      %s507 = sphi 0, %s507
      %s509 = sphi 0, %s507
      %s510 = sphi 0, %s509
      %s524 = sphi 0, %s510
      %s528 = sphi 0, %s528
      %s530 = sphi 0, %s528
      %s531 = sphi 0, %s530
      %s545 = sphi 0, %s531
      %s549 = sphi 0, %s549
      %s551 = sphi 0, %s549
      %s552 = sphi 0, %s551
      %s566 = sphi 0, %s552
      %s570 = sphi 0, %s570
      %s572 = sphi 0, %s570
      %s573 = sphi 0, %s572
      %s587 = sphi 0, %s573
      %s591 = sphi 0, %s591
      %s593 = sphi 0, %s591
      %s594 = sphi 0, %s593
      %s608 = sphi 0, %s594
      %s612 = sphi 0, %s612
      %s614 = sphi 0, %s612
      %s615 = sphi 0, %s614
      %s629 = sphi 0, %s615
      %s633 = sphi 0, %s633
      %s635 = sphi 0, %s633
      %s636 = sphi 0, %s635
      %s650 = sphi 0, %s636
      %s654 = sphi 0, %s654
      %s656 = sphi 0, %s654
      %s657 = sphi 0, %s656
      %s671 = sphi 0, %s657
      %s675 = sphi 0, %s675
      %s677 = sphi 0, %s675
      %s678 = sphi 0, %s677
      %s692 = sphi 0, %s678
      %s696 = sphi 0, %s696
      %s698 = sphi 0, %s696
      %s699 = sphi 0, %s698
      %s713 = sphi 0, %s699
      %s717 = sphi 0, %s717
      %s719 = sphi 0, %s717
      %s720 = sphi 0, %s719
      %s734 = sphi 0, %s720
      %s738 = sphi 0, %s738
      %s740 = sphi 0, %s738
      %s741 = sphi 0, %s740
      %s755 = sphi 0, %s741
      %s761 = sphi 0, %s763
      %s764 = sphi 0, %s761
      %s765 = sphi 0, %s764
      %s781 = sphi 0, %s765
    $region4: #{rnsa_image_feature_extractor.1} parent=1 // loop_header_branch
      %77 = sbr.rel (%p75) target = $region8
    $region5: #{rnsa_image_feature_extractor.1} parent=1 // loop_body
      %s79 = ssub.s32 %s74, 1
      %s80 = ssub.s32 %s74, 2
      %s81 = sadd.s32 %s74, 1
      %s82 = ssub.s32 %s74, %s81
      %p83 = scmp.eq.s32.totalorder %s82, 0
      %s85 = sadd.s32 %s84, 1
      %s86 = scalar_select %p83, %s84, %s85
      %p89 = pneg %p83
      %p90 = scmp.eq.s32.totalorder %s74, 1
      %p91 = por %p89, %p90
      %p92 = scmp.ne.s32.totalorder %s84, %s87
      %p93 = scmp.eq.s32.totalorder %s74, 0
      %p94 = por %p92, %p93
      %p95 = scmp.ne.s32.totalorder %s84, %s87
      %p96 = scmp.eq.s32.totalorder %s79, 1
      %p97 = por %p95, %p96
      %p98 = scmp.ne.s32.totalorder %s87, %s88
      %p99 = scmp.eq.s32.totalorder %s79, 0
      %p100 = por %p98, %p99
      %p101 = scmp.ne.s32.totalorder %s87, %s88
      %p102 = scmp.eq.s32.totalorder %s80, 1
      %p103 = por %p101, %p102
      %p105 = scmp.ne.s32.totalorder %s88, %s104
      %p106 = scmp.eq.s32.totalorder %s80, 0
      %p107 = por %p105, %p106
      %s109 = sadd.s32 %s108, 1
      %p112 = scmp.eq.s32.totalorder %s74, 1
      %p113 = scmp.ne.s32.totalorder %s108, %s110
      %p114 = scmp.eq.s32.totalorder %s74, 0
      %p115 = por %p113, %p114
      %p116 = scmp.ne.s32.totalorder %s108, %s110
      %p117 = scmp.eq.s32.totalorder %s79, 1
      %p118 = por %p116, %p117
      %p119 = scmp.ne.s32.totalorder %s110, %s111
      %p120 = scmp.eq.s32.totalorder %s79, 0
      %p121 = por %p119, %p120
      %p122 = scmp.ne.s32.totalorder %s110, %s111
      %p123 = scmp.eq.s32.totalorder %s80, 1
      %p124 = por %p122, %p123
      %p126 = scmp.ne.s32.totalorder %s111, %s125
      %p127 = scmp.eq.s32.totalorder %s80, 0
      %p128 = por %p126, %p127
      %s130 = sadd.s32 %s129, 1
      %p133 = scmp.eq.s32.totalorder %s74, 1
      %p134 = scmp.ne.s32.totalorder %s129, %s131
      %p135 = scmp.eq.s32.totalorder %s74, 0
      %p136 = por %p134, %p135
      %p137 = scmp.ne.s32.totalorder %s129, %s131
      %p138 = scmp.eq.s32.totalorder %s79, 1
      %p139 = por %p137, %p138
      %p140 = scmp.ne.s32.totalorder %s131, %s132
      %p141 = scmp.eq.s32.totalorder %s79, 0
      %p142 = por %p140, %p141
      %p143 = scmp.ne.s32.totalorder %s131, %s132
      %p144 = scmp.eq.s32.totalorder %s80, 1
      %p145 = por %p143, %p144
      %p147 = scmp.ne.s32.totalorder %s132, %s146
      %p148 = scmp.eq.s32.totalorder %s80, 0
      %p149 = por %p147, %p148
      %s151 = sadd.s32 %s150, 1
      %p154 = scmp.eq.s32.totalorder %s74, 1
      %p155 = scmp.ne.s32.totalorder %s150, %s152
      %p156 = scmp.eq.s32.totalorder %s74, 0
      %p157 = por %p155, %p156
      %p158 = scmp.ne.s32.totalorder %s150, %s152
      %p159 = scmp.eq.s32.totalorder %s79, 1
      %p160 = por %p158, %p159
      %p161 = scmp.ne.s32.totalorder %s152, %s153
      %p162 = scmp.eq.s32.totalorder %s79, 0
      %p163 = por %p161, %p162
      %p164 = scmp.ne.s32.totalorder %s152, %s153
      %p165 = scmp.eq.s32.totalorder %s80, 1
      %p166 = por %p164, %p165
      %p168 = scmp.ne.s32.totalorder %s153, %s167
      %p169 = scmp.eq.s32.totalorder %s80, 0
      %p170 = por %p168, %p169
      %s172 = sadd.s32 %s171, 1
      %p175 = scmp.eq.s32.totalorder %s74, 1
      %p176 = scmp.ne.s32.totalorder %s171, %s173
      %p177 = scmp.eq.s32.totalorder %s74, 0
      %p178 = por %p176, %p177
      %p179 = scmp.ne.s32.totalorder %s171, %s173
      %p180 = scmp.eq.s32.totalorder %s79, 1
      %p181 = por %p179, %p180
      %p182 = scmp.ne.s32.totalorder %s173, %s174
      %p183 = scmp.eq.s32.totalorder %s79, 0
      %p184 = por %p182, %p183
      %p185 = scmp.ne.s32.totalorder %s173, %s174
      %p186 = scmp.eq.s32.totalorder %s80, 1
      %p187 = por %p185, %p186
      %p189 = scmp.ne.s32.totalorder %s174, %s188
      %p190 = scmp.eq.s32.totalorder %s80, 0
      %p191 = por %p189, %p190
      %s193 = sadd.s32 %s192, 1
      %p196 = scmp.eq.s32.totalorder %s74, 1
      %p197 = scmp.ne.s32.totalorder %s192, %s194
      %p198 = scmp.eq.s32.totalorder %s74, 0
      %p199 = por %p197, %p198
      %p200 = scmp.ne.s32.totalorder %s192, %s194
      %p201 = scmp.eq.s32.totalorder %s79, 1
      %p202 = por %p200, %p201
      %p203 = scmp.ne.s32.totalorder %s194, %s195
      %p204 = scmp.eq.s32.totalorder %s79, 0
      %p205 = por %p203, %p204
      %p206 = scmp.ne.s32.totalorder %s194, %s195
      %p207 = scmp.eq.s32.totalorder %s80, 1
      %p208 = por %p206, %p207
      %p210 = scmp.ne.s32.totalorder %s195, %s209
      %p211 = scmp.eq.s32.totalorder %s80, 0
      %p212 = por %p210, %p211
      %s214 = sadd.s32 %s213, 1
      %p217 = scmp.eq.s32.totalorder %s74, 1
      %p218 = scmp.ne.s32.totalorder %s213, %s215
      %p219 = scmp.eq.s32.totalorder %s74, 0
      %p220 = por %p218, %p219
      %p221 = scmp.ne.s32.totalorder %s213, %s215
      %p222 = scmp.eq.s32.totalorder %s79, 1
      %p223 = por %p221, %p222
      %p224 = scmp.ne.s32.totalorder %s215, %s216
      %p225 = scmp.eq.s32.totalorder %s79, 0
      %p226 = por %p224, %p225
      %p227 = scmp.ne.s32.totalorder %s215, %s216
      %p228 = scmp.eq.s32.totalorder %s80, 1
      %p229 = por %p227, %p228
      %p231 = scmp.ne.s32.totalorder %s216, %s230
      %p232 = scmp.eq.s32.totalorder %s80, 0
      %p233 = por %p231, %p232
      %s235 = sadd.s32 %s234, 1
      %p238 = scmp.eq.s32.totalorder %s74, 1
      %p239 = scmp.ne.s32.totalorder %s234, %s236
      %p240 = scmp.eq.s32.totalorder %s74, 0
      %p241 = por %p239, %p240
      %p242 = scmp.ne.s32.totalorder %s234, %s236
      %p243 = scmp.eq.s32.totalorder %s79, 1
      %p244 = por %p242, %p243
      %p245 = scmp.ne.s32.totalorder %s236, %s237
      %p246 = scmp.eq.s32.totalorder %s79, 0
      %p247 = por %p245, %p246
      %p248 = scmp.ne.s32.totalorder %s236, %s237
      %p249 = scmp.eq.s32.totalorder %s80, 1
      %p250 = por %p248, %p249
      %p252 = scmp.ne.s32.totalorder %s237, %s251
      %p253 = scmp.eq.s32.totalorder %s80, 0
      %p254 = por %p252, %p253
      %s256 = sadd.s32 %s255, 1
      %p259 = scmp.eq.s32.totalorder %s74, 1
      %p260 = scmp.ne.s32.totalorder %s255, %s257
      %p261 = scmp.eq.s32.totalorder %s74, 0
      %p262 = por %p260, %p261
      %p263 = scmp.ne.s32.totalorder %s255, %s257
      %p264 = scmp.eq.s32.totalorder %s79, 1
      %p265 = por %p263, %p264
      %p266 = scmp.ne.s32.totalorder %s257, %s258
      %p267 = scmp.eq.s32.totalorder %s79, 0
      %p268 = por %p266, %p267
      %p269 = scmp.ne.s32.totalorder %s257, %s258
      %p270 = scmp.eq.s32.totalorder %s80, 1
      %p271 = por %p269, %p270
      %p273 = scmp.ne.s32.totalorder %s258, %s272
      %p274 = scmp.eq.s32.totalorder %s80, 0
      %p275 = por %p273, %p274
      %s277 = sadd.s32 %s276, 1
      %p280 = scmp.eq.s32.totalorder %s74, 1
      %p281 = scmp.ne.s32.totalorder %s276, %s278
      %p282 = scmp.eq.s32.totalorder %s74, 0
      %p283 = por %p281, %p282
      %p284 = scmp.ne.s32.totalorder %s276, %s278
      %p285 = scmp.eq.s32.totalorder %s79, 1
      %p286 = por %p284, %p285
      %p287 = scmp.ne.s32.totalorder %s278, %s279
      %p288 = scmp.eq.s32.totalorder %s79, 0
      %p289 = por %p287, %p288
      %p290 = scmp.ne.s32.totalorder %s278, %s279
      %p291 = scmp.eq.s32.totalorder %s80, 1
      %p292 = por %p290, %p291
      %p294 = scmp.ne.s32.totalorder %s279, %s293
      %p295 = scmp.eq.s32.totalorder %s80, 0
      %p296 = por %p294, %p295
      %s298 = sadd.s32 %s297, 1
      %p301 = scmp.eq.s32.totalorder %s74, 1
      %p302 = scmp.ne.s32.totalorder %s297, %s299
      %p303 = scmp.eq.s32.totalorder %s74, 0
      %p304 = por %p302, %p303
      %p305 = scmp.ne.s32.totalorder %s297, %s299
      %p306 = scmp.eq.s32.totalorder %s79, 1
      %p307 = por %p305, %p306
      %p308 = scmp.ne.s32.totalorder %s299, %s300
      %p309 = scmp.eq.s32.totalorder %s79, 0
      %p310 = por %p308, %p309
      %p311 = scmp.ne.s32.totalorder %s299, %s300
      %p312 = scmp.eq.s32.totalorder %s80, 1
      %p313 = por %p311, %p312
      %p315 = scmp.ne.s32.totalorder %s300, %s314
      %p316 = scmp.eq.s32.totalorder %s80, 0
      %p317 = por %p315, %p316
      %s319 = sadd.s32 %s318, 1
      %p322 = scmp.eq.s32.totalorder %s74, 1
      %p323 = scmp.ne.s32.totalorder %s318, %s320
      %p324 = scmp.eq.s32.totalorder %s74, 0
      %p325 = por %p323, %p324
      %p326 = scmp.ne.s32.totalorder %s318, %s320
      %p327 = scmp.eq.s32.totalorder %s79, 1
      %p328 = por %p326, %p327
      %p329 = scmp.ne.s32.totalorder %s320, %s321
      %p330 = scmp.eq.s32.totalorder %s79, 0
      %p331 = por %p329, %p330
      %p332 = scmp.ne.s32.totalorder %s320, %s321
      %p333 = scmp.eq.s32.totalorder %s80, 1
      %p334 = por %p332, %p333
      %p336 = scmp.ne.s32.totalorder %s321, %s335
      %p337 = scmp.eq.s32.totalorder %s80, 0
      %p338 = por %p336, %p337
      %s340 = sadd.s32 %s339, 1
      %p343 = scmp.eq.s32.totalorder %s74, 1
      %p344 = scmp.ne.s32.totalorder %s339, %s341
      %p345 = scmp.eq.s32.totalorder %s74, 0
      %p346 = por %p344, %p345
      %p347 = scmp.ne.s32.totalorder %s339, %s341
      %p348 = scmp.eq.s32.totalorder %s79, 1
      %p349 = por %p347, %p348
      %p350 = scmp.ne.s32.totalorder %s341, %s342
      %p351 = scmp.eq.s32.totalorder %s79, 0
      %p352 = por %p350, %p351
      %p353 = scmp.ne.s32.totalorder %s341, %s342
      %p354 = scmp.eq.s32.totalorder %s80, 1
      %p355 = por %p353, %p354
      %p357 = scmp.ne.s32.totalorder %s342, %s356
      %p358 = scmp.eq.s32.totalorder %s80, 0
      %p359 = por %p357, %p358
      %s361 = sadd.s32 %s360, 1
      %p364 = scmp.eq.s32.totalorder %s74, 1
      %p365 = scmp.ne.s32.totalorder %s360, %s362
      %p366 = scmp.eq.s32.totalorder %s74, 0
      %p367 = por %p365, %p366
      %p368 = scmp.ne.s32.totalorder %s360, %s362
      %p369 = scmp.eq.s32.totalorder %s79, 1
      %p370 = por %p368, %p369
      %p371 = scmp.ne.s32.totalorder %s362, %s363
      %p372 = scmp.eq.s32.totalorder %s79, 0
      %p373 = por %p371, %p372
      %p374 = scmp.ne.s32.totalorder %s362, %s363
      %p375 = scmp.eq.s32.totalorder %s80, 1
      %p376 = por %p374, %p375
      %p378 = scmp.ne.s32.totalorder %s363, %s377
      %p379 = scmp.eq.s32.totalorder %s80, 0
      %p380 = por %p378, %p379
      %s382 = sadd.s32 %s381, 1
      %p385 = scmp.eq.s32.totalorder %s74, 1
      %p386 = scmp.ne.s32.totalorder %s381, %s383
      %p387 = scmp.eq.s32.totalorder %s74, 0
      %p388 = por %p386, %p387
      %p389 = scmp.ne.s32.totalorder %s381, %s383
      %p390 = scmp.eq.s32.totalorder %s79, 1
      %p391 = por %p389, %p390
      %p392 = scmp.ne.s32.totalorder %s383, %s384
      %p393 = scmp.eq.s32.totalorder %s79, 0
      %p394 = por %p392, %p393
      %p395 = scmp.ne.s32.totalorder %s383, %s384
      %p396 = scmp.eq.s32.totalorder %s80, 1
      %p397 = por %p395, %p396
      %p399 = scmp.ne.s32.totalorder %s384, %s398
      %p400 = scmp.eq.s32.totalorder %s80, 0
      %p401 = por %p399, %p400
      %s403 = sadd.s32 %s402, 1
      %p406 = scmp.eq.s32.totalorder %s74, 1
      %p407 = scmp.ne.s32.totalorder %s402, %s404
      %p408 = scmp.eq.s32.totalorder %s74, 0
      %p409 = por %p407, %p408
      %p410 = scmp.ne.s32.totalorder %s402, %s404
      %p411 = scmp.eq.s32.totalorder %s79, 1
      %p412 = por %p410, %p411
      %p413 = scmp.ne.s32.totalorder %s404, %s405
      %p414 = scmp.eq.s32.totalorder %s79, 0
      %p415 = por %p413, %p414
      %p416 = scmp.ne.s32.totalorder %s404, %s405
      %p417 = scmp.eq.s32.totalorder %s80, 1
      %p418 = por %p416, %p417
      %p420 = scmp.ne.s32.totalorder %s405, %s419
      %p421 = scmp.eq.s32.totalorder %s80, 0
      %p422 = por %p420, %p421
      %s424 = sadd.s32 %s423, 1
      %p427 = scmp.eq.s32.totalorder %s74, 1
      %p428 = scmp.ne.s32.totalorder %s423, %s425
      %p429 = scmp.eq.s32.totalorder %s74, 0
      %p430 = por %p428, %p429
      %p431 = scmp.ne.s32.totalorder %s423, %s425
      %p432 = scmp.eq.s32.totalorder %s79, 1
      %p433 = por %p431, %p432
      %p434 = scmp.ne.s32.totalorder %s425, %s426
      %p435 = scmp.eq.s32.totalorder %s79, 0
      %p436 = por %p434, %p435
      %p437 = scmp.ne.s32.totalorder %s425, %s426
      %p438 = scmp.eq.s32.totalorder %s80, 1
      %p439 = por %p437, %p438
      %p441 = scmp.ne.s32.totalorder %s426, %s440
      %p442 = scmp.eq.s32.totalorder %s80, 0
      %p443 = por %p441, %p442
      %s445 = sadd.s32 %s444, 1
      %p448 = scmp.eq.s32.totalorder %s74, 1
      %p449 = scmp.ne.s32.totalorder %s444, %s446
      %p450 = scmp.eq.s32.totalorder %s74, 0
      %p451 = por %p449, %p450
      %p452 = scmp.ne.s32.totalorder %s444, %s446
      %p453 = scmp.eq.s32.totalorder %s79, 1
      %p454 = por %p452, %p453
      %p455 = scmp.ne.s32.totalorder %s446, %s447
      %p456 = scmp.eq.s32.totalorder %s79, 0
      %p457 = por %p455, %p456
      %p458 = scmp.ne.s32.totalorder %s446, %s447
      %p459 = scmp.eq.s32.totalorder %s80, 1
      %p460 = por %p458, %p459
      %p462 = scmp.ne.s32.totalorder %s447, %s461
      %p463 = scmp.eq.s32.totalorder %s80, 0
      %p464 = por %p462, %p463
      %s466 = sadd.s32 %s465, 1
      %p469 = scmp.eq.s32.totalorder %s74, 1
      %p470 = scmp.ne.s32.totalorder %s465, %s467
      %p471 = scmp.eq.s32.totalorder %s74, 0
      %p472 = por %p470, %p471
      %p473 = scmp.ne.s32.totalorder %s465, %s467
      %p474 = scmp.eq.s32.totalorder %s79, 1
      %p475 = por %p473, %p474
      %p476 = scmp.ne.s32.totalorder %s467, %s468
      %p477 = scmp.eq.s32.totalorder %s79, 0
      %p478 = por %p476, %p477
      %p479 = scmp.ne.s32.totalorder %s467, %s468
      %p480 = scmp.eq.s32.totalorder %s80, 1
      %p481 = por %p479, %p480
      %p483 = scmp.ne.s32.totalorder %s468, %s482
      %p484 = scmp.eq.s32.totalorder %s80, 0
      %p485 = por %p483, %p484
      %s487 = sadd.s32 %s486, 1
      %p490 = scmp.eq.s32.totalorder %s74, 1
      %p491 = scmp.ne.s32.totalorder %s486, %s488
      %p492 = scmp.eq.s32.totalorder %s74, 0
      %p493 = por %p491, %p492
      %p494 = scmp.ne.s32.totalorder %s486, %s488
      %p495 = scmp.eq.s32.totalorder %s79, 1
      %p496 = por %p494, %p495
      %p497 = scmp.ne.s32.totalorder %s488, %s489
      %p498 = scmp.eq.s32.totalorder %s79, 0
      %p499 = por %p497, %p498
      %p500 = scmp.ne.s32.totalorder %s488, %s489
      %p501 = scmp.eq.s32.totalorder %s80, 1
      %p502 = por %p500, %p501
      %p504 = scmp.ne.s32.totalorder %s489, %s503
      %p505 = scmp.eq.s32.totalorder %s80, 0
      %p506 = por %p504, %p505
      %s508 = sadd.s32 %s507, 1
      %p511 = scmp.eq.s32.totalorder %s74, 1
      %p512 = scmp.ne.s32.totalorder %s507, %s509
      %p513 = scmp.eq.s32.totalorder %s74, 0
      %p514 = por %p512, %p513
      %p515 = scmp.ne.s32.totalorder %s507, %s509
      %p516 = scmp.eq.s32.totalorder %s79, 1
      %p517 = por %p515, %p516
      %p518 = scmp.ne.s32.totalorder %s509, %s510
      %p519 = scmp.eq.s32.totalorder %s79, 0
      %p520 = por %p518, %p519
      %p521 = scmp.ne.s32.totalorder %s509, %s510
      %p522 = scmp.eq.s32.totalorder %s80, 1
      %p523 = por %p521, %p522
      %p525 = scmp.ne.s32.totalorder %s510, %s524
      %p526 = scmp.eq.s32.totalorder %s80, 0
      %p527 = por %p525, %p526
      %s529 = sadd.s32 %s528, 1
      %p532 = scmp.eq.s32.totalorder %s74, 1
      %p533 = scmp.ne.s32.totalorder %s528, %s530
      %p534 = scmp.eq.s32.totalorder %s74, 0
      %p535 = por %p533, %p534
      %p536 = scmp.ne.s32.totalorder %s528, %s530
      %p537 = scmp.eq.s32.totalorder %s79, 1
      %p538 = por %p536, %p537
      %p539 = scmp.ne.s32.totalorder %s530, %s531
      %p540 = scmp.eq.s32.totalorder %s79, 0
      %p541 = por %p539, %p540
      %p542 = scmp.ne.s32.totalorder %s530, %s531
      %p543 = scmp.eq.s32.totalorder %s80, 1
      %p544 = por %p542, %p543
      %p546 = scmp.ne.s32.totalorder %s531, %s545
      %p547 = scmp.eq.s32.totalorder %s80, 0
      %p548 = por %p546, %p547
      %s550 = sadd.s32 %s549, 1
      %p553 = scmp.eq.s32.totalorder %s74, 1
      %p554 = scmp.ne.s32.totalorder %s549, %s551
      %p555 = scmp.eq.s32.totalorder %s74, 0
      %p556 = por %p554, %p555
      %p557 = scmp.ne.s32.totalorder %s549, %s551
      %p558 = scmp.eq.s32.totalorder %s79, 1
      %p559 = por %p557, %p558
      %p560 = scmp.ne.s32.totalorder %s551, %s552
      %p561 = scmp.eq.s32.totalorder %s79, 0
      %p562 = por %p560, %p561
      %p563 = scmp.ne.s32.totalorder %s551, %s552
      %p564 = scmp.eq.s32.totalorder %s80, 1
      %p565 = por %p563, %p564
      %p567 = scmp.ne.s32.totalorder %s552, %s566
      %p568 = scmp.eq.s32.totalorder %s80, 0
      %p569 = por %p567, %p568
      %s571 = sadd.s32 %s570, 1
      %p574 = scmp.eq.s32.totalorder %s74, 1
      %p575 = scmp.ne.s32.totalorder %s570, %s572
      %p576 = scmp.eq.s32.totalorder %s74, 0
      %p577 = por %p575, %p576
      %p578 = scmp.ne.s32.totalorder %s570, %s572
      %p579 = scmp.eq.s32.totalorder %s79, 1
      %p580 = por %p578, %p579
      %p581 = scmp.ne.s32.totalorder %s572, %s573
      %p582 = scmp.eq.s32.totalorder %s79, 0
      %p583 = por %p581, %p582
      %p584 = scmp.ne.s32.totalorder %s572, %s573
      %p585 = scmp.eq.s32.totalorder %s80, 1
      %p586 = por %p584, %p585
      %p588 = scmp.ne.s32.totalorder %s573, %s587
      %p589 = scmp.eq.s32.totalorder %s80, 0
      %p590 = por %p588, %p589
      %s592 = sadd.s32 %s591, 1
      %p595 = scmp.eq.s32.totalorder %s74, 1
      %p596 = scmp.ne.s32.totalorder %s591, %s593
      %p597 = scmp.eq.s32.totalorder %s74, 0
      %p598 = por %p596, %p597
      %p599 = scmp.ne.s32.totalorder %s591, %s593
      %p600 = scmp.eq.s32.totalorder %s79, 1
      %p601 = por %p599, %p600
      %p602 = scmp.ne.s32.totalorder %s593, %s594
      %p603 = scmp.eq.s32.totalorder %s79, 0
      %p604 = por %p602, %p603
      %p605 = scmp.ne.s32.totalorder %s593, %s594
      %p606 = scmp.eq.s32.totalorder %s80, 1
      %p607 = por %p605, %p606
      %p609 = scmp.ne.s32.totalorder %s594, %s608
      %p610 = scmp.eq.s32.totalorder %s80, 0
      %p611 = por %p609, %p610
      %s613 = sadd.s32 %s612, 1
      %p616 = scmp.eq.s32.totalorder %s74, 1
      %p617 = scmp.ne.s32.totalorder %s612, %s614
      %p618 = scmp.eq.s32.totalorder %s74, 0
      %p619 = por %p617, %p618
      %p620 = scmp.ne.s32.totalorder %s612, %s614
      %p621 = scmp.eq.s32.totalorder %s79, 1
      %p622 = por %p620, %p621
      %p623 = scmp.ne.s32.totalorder %s614, %s615
      %p624 = scmp.eq.s32.totalorder %s79, 0
      %p625 = por %p623, %p624
      %p626 = scmp.ne.s32.totalorder %s614, %s615
      %p627 = scmp.eq.s32.totalorder %s80, 1
      %p628 = por %p626, %p627
      %p630 = scmp.ne.s32.totalorder %s615, %s629
      %p631 = scmp.eq.s32.totalorder %s80, 0
      %p632 = por %p630, %p631
      %s634 = sadd.s32 %s633, 1
      %p637 = scmp.eq.s32.totalorder %s74, 1
      %p638 = scmp.ne.s32.totalorder %s633, %s635
      %p639 = scmp.eq.s32.totalorder %s74, 0
      %p640 = por %p638, %p639
      %p641 = scmp.ne.s32.totalorder %s633, %s635
      %p642 = scmp.eq.s32.totalorder %s79, 1
      %p643 = por %p641, %p642
      %p644 = scmp.ne.s32.totalorder %s635, %s636
      %p645 = scmp.eq.s32.totalorder %s79, 0
      %p646 = por %p644, %p645
      %p647 = scmp.ne.s32.totalorder %s635, %s636
      %p648 = scmp.eq.s32.totalorder %s80, 1
      %p649 = por %p647, %p648
      %p651 = scmp.ne.s32.totalorder %s636, %s650
      %p652 = scmp.eq.s32.totalorder %s80, 0
      %p653 = por %p651, %p652
      %s655 = sadd.s32 %s654, 1
      %p658 = scmp.eq.s32.totalorder %s74, 1
      %p659 = scmp.ne.s32.totalorder %s654, %s656
      %p660 = scmp.eq.s32.totalorder %s74, 0
      %p661 = por %p659, %p660
      %p662 = scmp.ne.s32.totalorder %s654, %s656
      %p663 = scmp.eq.s32.totalorder %s79, 1
      %p664 = por %p662, %p663
      %p665 = scmp.ne.s32.totalorder %s656, %s657
      %p666 = scmp.eq.s32.totalorder %s79, 0
      %p667 = por %p665, %p666
      %p668 = scmp.ne.s32.totalorder %s656, %s657
      %p669 = scmp.eq.s32.totalorder %s80, 1
      %p670 = por %p668, %p669
      %p672 = scmp.ne.s32.totalorder %s657, %s671
      %p673 = scmp.eq.s32.totalorder %s80, 0
      %p674 = por %p672, %p673
      %s676 = sadd.s32 %s675, 1
      %p679 = scmp.eq.s32.totalorder %s74, 1
      %p680 = scmp.ne.s32.totalorder %s675, %s677
      %p681 = scmp.eq.s32.totalorder %s74, 0
      %p682 = por %p680, %p681
      %p683 = scmp.ne.s32.totalorder %s675, %s677
      %p684 = scmp.eq.s32.totalorder %s79, 1
      %p685 = por %p683, %p684
      %p686 = scmp.ne.s32.totalorder %s677, %s678
      %p687 = scmp.eq.s32.totalorder %s79, 0
      %p688 = por %p686, %p687
      %p689 = scmp.ne.s32.totalorder %s677, %s678
      %p690 = scmp.eq.s32.totalorder %s80, 1
      %p691 = por %p689, %p690
      %p693 = scmp.ne.s32.totalorder %s678, %s692
      %p694 = scmp.eq.s32.totalorder %s80, 0
      %p695 = por %p693, %p694
      %s697 = sadd.s32 %s696, 1
      %p700 = scmp.eq.s32.totalorder %s74, 1
      %p701 = scmp.ne.s32.totalorder %s696, %s698
      %p702 = scmp.eq.s32.totalorder %s74, 0
      %p703 = por %p701, %p702
      %p704 = scmp.ne.s32.totalorder %s696, %s698
      %p705 = scmp.eq.s32.totalorder %s79, 1
      %p706 = por %p704, %p705
      %p707 = scmp.ne.s32.totalorder %s698, %s699
      %p708 = scmp.eq.s32.totalorder %s79, 0
      %p709 = por %p707, %p708
      %p710 = scmp.ne.s32.totalorder %s698, %s699
      %p711 = scmp.eq.s32.totalorder %s80, 1
      %p712 = por %p710, %p711
      %p714 = scmp.ne.s32.totalorder %s699, %s713
      %p715 = scmp.eq.s32.totalorder %s80, 0
      %p716 = por %p714, %p715
      %s718 = sadd.s32 %s717, 1
      %p721 = scmp.eq.s32.totalorder %s74, 1
      %p722 = scmp.ne.s32.totalorder %s717, %s719
      %p723 = scmp.eq.s32.totalorder %s74, 0
      %p724 = por %p722, %p723
      %p725 = scmp.ne.s32.totalorder %s717, %s719
      %p726 = scmp.eq.s32.totalorder %s79, 1
      %p727 = por %p725, %p726
      %p728 = scmp.ne.s32.totalorder %s719, %s720
      %p729 = scmp.eq.s32.totalorder %s79, 0
      %p730 = por %p728, %p729
      %p731 = scmp.ne.s32.totalorder %s719, %s720
      %p732 = scmp.eq.s32.totalorder %s80, 1
      %p733 = por %p731, %p732
      %p735 = scmp.ne.s32.totalorder %s720, %s734
      %p736 = scmp.eq.s32.totalorder %s80, 0
      %p737 = por %p735, %p736
      %s739 = sadd.s32 %s738, 1
      %p742 = scmp.eq.s32.totalorder %s74, 1
      %p743 = scmp.ne.s32.totalorder %s738, %s740
      %p744 = scmp.eq.s32.totalorder %s74, 0
      %p745 = por %p743, %p744
      %p746 = scmp.ne.s32.totalorder %s738, %s740
      %p747 = scmp.eq.s32.totalorder %s79, 1
      %p748 = por %p746, %p747
      %p749 = scmp.ne.s32.totalorder %s740, %s741
      %p750 = scmp.eq.s32.totalorder %s79, 0
      %p751 = por %p749, %p750
      %p752 = scmp.ne.s32.totalorder %s740, %s741
      %p753 = scmp.eq.s32.totalorder %s80, 1
      %p754 = por %p752, %p753
      %p756 = scmp.ne.s32.totalorder %s741, %s755
      %p757 = scmp.eq.s32.totalorder %s80, 0
      %p758 = por %p756, %p757
      %s759 = ssub.s32 %s74, %s81
      %p760 = scmp.eq.s32.totalorder %s759, 0
      %s762 = sadd.s32 %s761, 1
      %s763 = scalar_select %p760, %s761, %s762
      %p766 = pneg %p760
      %p767 = scmp.eq.s32.totalorder %s74, 1
      %p768 = por %p766, %p767
      %p769 = scmp.ne.s32.totalorder %s761, %s764
      %p770 = scmp.eq.s32.totalorder %s74, 0
      %p771 = por %p769, %p770
      %p772 = scmp.ne.s32.totalorder %s761, %s764
      %p773 = scmp.eq.s32.totalorder %s79, 1
      %p774 = por %p772, %p773
      %p775 = scmp.ne.s32.totalorder %s764, %s765
      %p776 = scmp.eq.s32.totalorder %s79, 0
      %p777 = por %p775, %p776
      %p778 = scmp.ne.s32.totalorder %s764, %s765
      %p779 = scmp.eq.s32.totalorder %s80, 1
      %p780 = por %p778, %p779
      %p782 = scmp.ne.s32.totalorder %s765, %s781
      %p783 = scmp.eq.s32.totalorder %s80, 0
      %p784 = por %p782, %p783
      %p785 = scmp.le.s32.totalorder 1, %s74
      %p786 = scmp.lt.s32.totalorder %s74, 3
      %p787 = pnand %p785, %p786
      %p788 = pneg %p787
      // Predicated region
      $region9: #{rnsa_image_feature_extractor.1} parent=5 // pred_check
        _
      $region10: #{rnsa_image_feature_extractor.1} parent=5 // pred_check_branch
        %790 = sbr.rel (%p787) target = $region12
      $region11: #{rnsa_image_feature_extractor.1} parent=5 // pred_region
        %s791 = ssub.s32 %s74, 1
        // Predicated region
        $region13: #{rnsa_image_feature_extractor.1} parent=11 // pred_check
          %p792 = pneg %p121
        $region14: #{rnsa_image_feature_extractor.1} parent=11 // pred_check_branch
          %794 = sbr.rel (%p792) target = $region16
        $region15: #{rnsa_image_feature_extractor.1} parent=11 // pred_region
          _
        $region16: #{rnsa_image_feature_extractor.1} parent=11 // pred_fallthru
          _
        // Predicated region
        $region17: #{rnsa_image_feature_extractor.1} parent=11 // pred_check
          %p795 = pneg %p142
        $region18: #{rnsa_image_feature_extractor.1} parent=11 // pred_check_branch
          %797 = sbr.rel (%p795) target = $region20
        $region19: #{rnsa_image_feature_extractor.1} parent=11 // pred_region
          _
        $region20: #{rnsa_image_feature_extractor.1} parent=11 // pred_fallthru
          _
        // Predicated region
        $region21: #{rnsa_image_feature_extractor.1} parent=11 // pred_check
          %p798 = pneg %p163
        $region22: #{rnsa_image_feature_extractor.1} parent=11 // pred_check_branch
          %800 = sbr.rel (%p798) target = $region24
        $region23: #{rnsa_image_feature_extractor.1} parent=11 // pred_region
          _
        $region24: #{rnsa_image_feature_extractor.1} parent=11 // pred_fallthru
          _
        // Predicated region
        $region25: #{rnsa_image_feature_extractor.1} parent=11 // pred_check
          %p801 = pneg %p184
        $region26: #{rnsa_image_feature_extractor.1} parent=11 // pred_check_branch
          %803 = sbr.rel (%p801) target = $region28
        $region27: #{rnsa_image_feature_extractor.1} parent=11 // pred_region
          _
        $region28: #{rnsa_image_feature_extractor.1} parent=11 // pred_fallthru
          _
        // Predicated region
        $region29: #{rnsa_image_feature_extractor.1} parent=11 // pred_check
          %p804 = pneg %p205
        $region30: #{rnsa_image_feature_extractor.1} parent=11 // pred_check_branch
          %806 = sbr.rel (%p804) target = $region32
        $region31: #{rnsa_image_feature_extractor.1} parent=11 // pred_region
          _
        $region32: #{rnsa_image_feature_extractor.1} parent=11 // pred_fallthru
          _
        // Predicated region
        $region33: #{rnsa_image_feature_extractor.1} parent=11 // pred_check
          %p807 = pneg %p226
        $region34: #{rnsa_image_feature_extractor.1} parent=11 // pred_check_branch
          %809 = sbr.rel (%p807) target = $region36
        $region35: #{rnsa_image_feature_extractor.1} parent=11 // pred_region
          _
        $region36: #{rnsa_image_feature_extractor.1} parent=11 // pred_fallthru
          _
        // Predicated region
        $region37: #{rnsa_image_feature_extractor.1} parent=11 // pred_check
          %p810 = pneg %p247
        $region38: #{rnsa_image_feature_extractor.1} parent=11 // pred_check_branch
          %812 = sbr.rel (%p810) target = $region40
        $region39: #{rnsa_image_feature_extractor.1} parent=11 // pred_region
          _
        $region40: #{rnsa_image_feature_extractor.1} parent=11 // pred_fallthru
          _
        // Predicated region
        $region41: #{rnsa_image_feature_extractor.1} parent=11 // pred_check
          %p813 = pneg %p268
        $region42: #{rnsa_image_feature_extractor.1} parent=11 // pred_check_branch
          %815 = sbr.rel (%p813) target = $region44
        $region43: #{rnsa_image_feature_extractor.1} parent=11 // pred_region
          _
        $region44: #{rnsa_image_feature_extractor.1} parent=11 // pred_fallthru
          _
        // Predicated region
        $region45: #{rnsa_image_feature_extractor.1} parent=11 // pred_check
          %p816 = pneg %p289
        $region46: #{rnsa_image_feature_extractor.1} parent=11 // pred_check_branch
          %818 = sbr.rel (%p816) target = $region48
        $region47: #{rnsa_image_feature_extractor.1} parent=11 // pred_region
          _
        $region48: #{rnsa_image_feature_extractor.1} parent=11 // pred_fallthru
          _
        // Predicated region
        $region49: #{rnsa_image_feature_extractor.1} parent=11 // pred_check
          %p819 = pneg %p310
        $region50: #{rnsa_image_feature_extractor.1} parent=11 // pred_check_branch
          %821 = sbr.rel (%p819) target = $region52
        $region51: #{rnsa_image_feature_extractor.1} parent=11 // pred_region
          _
        $region52: #{rnsa_image_feature_extractor.1} parent=11 // pred_fallthru
          _
        // Predicated region
        $region53: #{rnsa_image_feature_extractor.1} parent=11 // pred_check
          %p822 = pneg %p331
        $region54: #{rnsa_image_feature_extractor.1} parent=11 // pred_check_branch
          %824 = sbr.rel (%p822) target = $region56
        $region55: #{rnsa_image_feature_extractor.1} parent=11 // pred_region
          _
        $region56: #{rnsa_image_feature_extractor.1} parent=11 // pred_fallthru
          _
        // Predicated region
        $region57: #{rnsa_image_feature_extractor.1} parent=11 // pred_check
          %p825 = pneg %p352
        $region58: #{rnsa_image_feature_extractor.1} parent=11 // pred_check_branch
          %827 = sbr.rel (%p825) target = $region60
        $region59: #{rnsa_image_feature_extractor.1} parent=11 // pred_region
          _
        $region60: #{rnsa_image_feature_extractor.1} parent=11 // pred_fallthru
          _
        // Predicated region
        $region61: #{rnsa_image_feature_extractor.1} parent=11 // pred_check
          %p828 = pneg %p373
        $region62: #{rnsa_image_feature_extractor.1} parent=11 // pred_check_branch
          %830 = sbr.rel (%p828) target = $region64
        $region63: #{rnsa_image_feature_extractor.1} parent=11 // pred_region
          _
        $region64: #{rnsa_image_feature_extractor.1} parent=11 // pred_fallthru
          _
        // Predicated region
        $region65: #{rnsa_image_feature_extractor.1} parent=11 // pred_check
          %p831 = pneg %p394
        $region66: #{rnsa_image_feature_extractor.1} parent=11 // pred_check_branch
          %833 = sbr.rel (%p831) target = $region68
        $region67: #{rnsa_image_feature_extractor.1} parent=11 // pred_region
          _
        $region68: #{rnsa_image_feature_extractor.1} parent=11 // pred_fallthru
          _
        // Predicated region
        $region69: #{rnsa_image_feature_extractor.1} parent=11 // pred_check
          %p834 = pneg %p415
        $region70: #{rnsa_image_feature_extractor.1} parent=11 // pred_check_branch
          %836 = sbr.rel (%p834) target = $region72
        $region71: #{rnsa_image_feature_extractor.1} parent=11 // pred_region
          _
        $region72: #{rnsa_image_feature_extractor.1} parent=11 // pred_fallthru
          _
        // Predicated region
        $region73: #{rnsa_image_feature_extractor.1} parent=11 // pred_check
          %p837 = pneg %p436
        $region74: #{rnsa_image_feature_extractor.1} parent=11 // pred_check_branch
          %839 = sbr.rel (%p837) target = $region76
        $region75: #{rnsa_image_feature_extractor.1} parent=11 // pred_region
          _
        $region76: #{rnsa_image_feature_extractor.1} parent=11 // pred_fallthru
          _
        // Predicated region
        $region77: #{rnsa_image_feature_extractor.1} parent=11 // pred_check
          %p840 = pneg %p457
        $region78: #{rnsa_image_feature_extractor.1} parent=11 // pred_check_branch
          %842 = sbr.rel (%p840) target = $region80
        $region79: #{rnsa_image_feature_extractor.1} parent=11 // pred_region
          _
        $region80: #{rnsa_image_feature_extractor.1} parent=11 // pred_fallthru
          _
        // Predicated region
        $region81: #{rnsa_image_feature_extractor.1} parent=11 // pred_check
          %p843 = pneg %p478
        $region82: #{rnsa_image_feature_extractor.1} parent=11 // pred_check_branch
          %845 = sbr.rel (%p843) target = $region84
        $region83: #{rnsa_image_feature_extractor.1} parent=11 // pred_region
          _
        $region84: #{rnsa_image_feature_extractor.1} parent=11 // pred_fallthru
          _
        // Predicated region
        $region85: #{rnsa_image_feature_extractor.1} parent=11 // pred_check
          %p846 = pneg %p499
        $region86: #{rnsa_image_feature_extractor.1} parent=11 // pred_check_branch
          %848 = sbr.rel (%p846) target = $region88
        $region87: #{rnsa_image_feature_extractor.1} parent=11 // pred_region
          _
        $region88: #{rnsa_image_feature_extractor.1} parent=11 // pred_fallthru
          _
        // Predicated region
        $region89: #{rnsa_image_feature_extractor.1} parent=11 // pred_check
          %p849 = pneg %p520
        $region90: #{rnsa_image_feature_extractor.1} parent=11 // pred_check_branch
          %851 = sbr.rel (%p849) target = $region92
        $region91: #{rnsa_image_feature_extractor.1} parent=11 // pred_region
          _
        $region92: #{rnsa_image_feature_extractor.1} parent=11 // pred_fallthru
          _
        // Predicated region
        $region93: #{rnsa_image_feature_extractor.1} parent=11 // pred_check
          %p852 = pneg %p541
        $region94: #{rnsa_image_feature_extractor.1} parent=11 // pred_check_branch
          %854 = sbr.rel (%p852) target = $region96
        $region95: #{rnsa_image_feature_extractor.1} parent=11 // pred_region
          _
        $region96: #{rnsa_image_feature_extractor.1} parent=11 // pred_fallthru
          _
        // Predicated region
        $region97: #{rnsa_image_feature_extractor.1} parent=11 // pred_check
          %p855 = pneg %p562
        $region98: #{rnsa_image_feature_extractor.1} parent=11 // pred_check_branch
          %857 = sbr.rel (%p855) target = $region100
        $region99: #{rnsa_image_feature_extractor.1} parent=11 // pred_region
          _
        $region100: #{rnsa_image_feature_extractor.1} parent=11 // pred_fallthru
          _
        // Predicated region
        $region101: #{rnsa_image_feature_extractor.1} parent=11 // pred_check
          %p858 = pneg %p583
        $region102: #{rnsa_image_feature_extractor.1} parent=11 // pred_check_branch
          %860 = sbr.rel (%p858) target = $region104
        $region103: #{rnsa_image_feature_extractor.1} parent=11 // pred_region
          _
        $region104: #{rnsa_image_feature_extractor.1} parent=11 // pred_fallthru
          _
        // Predicated region
        $region105: #{rnsa_image_feature_extractor.1} parent=11 // pred_check
          %p861 = pneg %p604
        $region106: #{rnsa_image_feature_extractor.1} parent=11 // pred_check_branch
          %863 = sbr.rel (%p861) target = $region108
        $region107: #{rnsa_image_feature_extractor.1} parent=11 // pred_region
          _
        $region108: #{rnsa_image_feature_extractor.1} parent=11 // pred_fallthru
          _
        // Predicated region
        $region109: #{rnsa_image_feature_extractor.1} parent=11 // pred_check
          %p864 = pneg %p625
        $region110: #{rnsa_image_feature_extractor.1} parent=11 // pred_check_branch
          %866 = sbr.rel (%p864) target = $region112
        $region111: #{rnsa_image_feature_extractor.1} parent=11 // pred_region
          _
        $region112: #{rnsa_image_feature_extractor.1} parent=11 // pred_fallthru
          _
        // Predicated region
        $region113: #{rnsa_image_feature_extractor.1} parent=11 // pred_check
          %p867 = pneg %p646
        $region114: #{rnsa_image_feature_extractor.1} parent=11 // pred_check_branch
          %869 = sbr.rel (%p867) target = $region116
        $region115: #{rnsa_image_feature_extractor.1} parent=11 // pred_region
          _
        $region116: #{rnsa_image_feature_extractor.1} parent=11 // pred_fallthru
          _
        // Predicated region
        $region117: #{rnsa_image_feature_extractor.1} parent=11 // pred_check
          %p870 = pneg %p667
        $region118: #{rnsa_image_feature_extractor.1} parent=11 // pred_check_branch
          %872 = sbr.rel (%p870) target = $region120
        $region119: #{rnsa_image_feature_extractor.1} parent=11 // pred_region
          _
        $region120: #{rnsa_image_feature_extractor.1} parent=11 // pred_fallthru
          _
        // Predicated region
        $region121: #{rnsa_image_feature_extractor.1} parent=11 // pred_check
          %p873 = pneg %p688
        $region122: #{rnsa_image_feature_extractor.1} parent=11 // pred_check_branch
          %875 = sbr.rel (%p873) target = $region124
        $region123: #{rnsa_image_feature_extractor.1} parent=11 // pred_region
          _
        $region124: #{rnsa_image_feature_extractor.1} parent=11 // pred_fallthru
          _
        // Predicated region
        $region125: #{rnsa_image_feature_extractor.1} parent=11 // pred_check
          %p876 = pneg %p709
        $region126: #{rnsa_image_feature_extractor.1} parent=11 // pred_check_branch
          %878 = sbr.rel (%p876) target = $region128
        $region127: #{rnsa_image_feature_extractor.1} parent=11 // pred_region
          _
        $region128: #{rnsa_image_feature_extractor.1} parent=11 // pred_fallthru
          _
        // Predicated region
        $region129: #{rnsa_image_feature_extractor.1} parent=11 // pred_check
          %p879 = pneg %p730
        $region130: #{rnsa_image_feature_extractor.1} parent=11 // pred_check_branch
          %881 = sbr.rel (%p879) target = $region132
        $region131: #{rnsa_image_feature_extractor.1} parent=11 // pred_region
          _
        $region132: #{rnsa_image_feature_extractor.1} parent=11 // pred_fallthru
          _
        // Predicated region
        $region133: #{rnsa_image_feature_extractor.1} parent=11 // pred_check
          %p882 = pneg %p751
        $region134: #{rnsa_image_feature_extractor.1} parent=11 // pred_check_branch
          %884 = sbr.rel (%p882) target = $region136
        $region135: #{rnsa_image_feature_extractor.1} parent=11 // pred_region
          _
        $region136: #{rnsa_image_feature_extractor.1} parent=11 // pred_fallthru
          _
      $region12: #{rnsa_image_feature_extractor.1} parent=5 // pred_fallthru
        _
      %p885 = scmp.lt.s32.totalorder %s74, 2
      // Predicated region
      $region137: #{rnsa_image_feature_extractor.1} parent=5 // pred_check
        %p886 = pneg %p885
      $region138: #{rnsa_image_feature_extractor.1} parent=5 // pred_check_branch
        %888 = sbr.rel (%p886) target = $region140
      $region139: #{rnsa_image_feature_extractor.1} parent=5 // pred_region
        // Predicated region
        $region141: #{rnsa_image_feature_extractor.1} parent=139 // pred_check
          %p889 = pneg %p94
        $region142: #{rnsa_image_feature_extractor.1} parent=139 // pred_check_branch
          %891 = sbr.rel (%p889) target = $region144
        $region143: #{rnsa_image_feature_extractor.1} parent=139 // pred_region
          %p892 = scmp.lt.s32.totalorder %s74, 1
          %s893 = scalar_select %p892, %s74, 1
          %s894 = smul.addr %s893, 32
          %s895 = smul.addr %s894, 8
          %s896 = scalar_lea.vmem %s1, %s895
        $region144: #{rnsa_image_feature_extractor.1} parent=139 // pred_fallthru
          _
      $region140: #{rnsa_image_feature_extractor.1} parent=5 // pred_fallthru
        _
      %p897 = scmp.le.s32.totalorder 1, %s74
      %p898 = scmp.lt.s32.totalorder %s74, 3
      %p899 = pnand %p897, %p898
      %p900 = pneg %p899
      // Predicated region
      $region145: #{rnsa_image_feature_extractor.1} parent=5 // pred_check
        _
      $region146: #{rnsa_image_feature_extractor.1} parent=5 // pred_check_branch
        %902 = sbr.rel (%p899) target = $region148
      $region147: #{rnsa_image_feature_extractor.1} parent=5 // pred_region
        %s903 = ssub.s32 %s74, 1
        %p904 = scmp.lt.s32.totalorder %s79, 1
        %s905 = scalar_select %p904, %s79, 1
        %s906 = smul.addr %s905, 32
        %s907 = smul.addr %s906, 8
        %s908 = scalar_lea.vmem %s1, %s907
        %p909 = pneg %p100
        %p910 = pneg %p97
        %p911 = pneg %p121
        %p912 = pneg %p118
        %p913 = pneg %p142
        %p914 = pneg %p139
        %p915 = pneg %p163
        %p916 = pneg %p160
        %p917 = pneg %p184
        %p918 = pneg %p181
        %p919 = pneg %p205
        %p920 = pneg %p202
        %p921 = pneg %p226
        %p922 = pneg %p223
        %p923 = pneg %p247
        %p924 = pneg %p244
        %p925 = pneg %p268
        %p926 = pneg %p265
        %p927 = pneg %p289
        %p928 = pneg %p286
        %p929 = pneg %p310
        %p930 = pneg %p307
        %p931 = pneg %p331
        %p932 = pneg %p328
        %p933 = pneg %p352
        %p934 = pneg %p349
        %p935 = pneg %p373
        %p936 = pneg %p370
        %p937 = pneg %p394
        %p938 = pneg %p391
        %p939 = pneg %p415
        %p940 = pneg %p412
        %p941 = pneg %p436
        %p942 = pneg %p433
        %p943 = pneg %p457
        %p944 = pneg %p454
        %p945 = pneg %p478
        %p946 = pneg %p475
        %p947 = pneg %p499
        %p948 = pneg %p496
        %p949 = pneg %p520
        %p950 = pneg %p517
        %p951 = pneg %p541
        %p952 = pneg %p538
        %p953 = pneg %p562
        %p954 = pneg %p559
        %p955 = pneg %p583
        %p956 = pneg %p580
        %p957 = pneg %p604
        %p958 = pneg %p601
        %p959 = pneg %p625
        %p960 = pneg %p622
        %p961 = pneg %p646
        %p962 = pneg %p643
        %p963 = pneg %p667
        %p964 = pneg %p664
        %p965 = pneg %p688
        %p966 = pneg %p685
        %p967 = pneg %p709
        %p968 = pneg %p706
        %p969 = pneg %p730
        %p970 = pneg %p727
        %p971 = pneg %p751
        %p972 = pneg %p748
        %p973 = pneg %p777
        %p974 = pneg %p774
        %s975 = sand.u32 %s764, 1
        %s976 = scalar_lea.sflag [#allocation8], %s975
        %s977 = sand.u32 %s764, 1
        %s978 = scalar_lea.vmem [#allocation7], %s977
        %p979 = scmp.lt.s32.totalorder %s79, 1
        %s980 = scalar_select %p979, %s79, 1
        %s981 = smul.addr %s980, 32
        %s982 = smul.addr %s981, 8
        %s983 = scalar_lea.vmem %s1, %s982
        %vm985 = vcmask 23552
        %986 = vst.msk [vmem:[#allocation2] sm:$0xff] %vm985, 0.0
        %987 = vst.msk [vmem:[#allocation2 + $0x8] sm:$0xff] %vm985, 0.0
        %vm988 = vcmask 16384
        %989 = vst.msk [vmem:[#allocation2 + $0x10] sm:$0x1] %vm988, 0.0
        %990 = vst.msk [vmem:[#allocation2 + $0x18] sm:$0xff] %vm985, 0.0
        %991 = vst.msk [vmem:[#allocation2 + $0x20] sm:$0xff] %vm985, 0.0
        %992 = vst.msk [vmem:[#allocation2 + $0x28] sm:$0x1] %vm988, 0.0
        %993 = vst.msk [vmem:[#allocation2 + $0x30] sm:$0xff] %vm985, 0.0
        %994 = vst.msk [vmem:[#allocation2 + $0x38] sm:$0xff] %vm985, 0.0
        %995 = vst.msk [vmem:[#allocation2 + $0x40] sm:$0x1] %vm988, 0.0
        %996 = vst.msk [vmem:[#allocation2 + $0x48] sm:$0xff] %vm985, 0.0
        %997 = vst.msk [vmem:[#allocation2 + $0x50] sm:$0xff] %vm985, 0.0
        %998 = vst.msk [vmem:[#allocation2 + $0x58] sm:$0x1] %vm988, 0.0
        %999 = vst.msk [vmem:[#allocation2 + $0x60] sm:$0xff] %vm985, 0.0
        %1000 = vst.msk [vmem:[#allocation2 + $0x68] sm:$0xff] %vm985, 0.0
        %1001 = vst.msk [vmem:[#allocation2 + $0x70] sm:$0x1] %vm988, 0.0
        %1002 = vst.msk [vmem:[#allocation2 + $0x78] sm:$0xff] %vm985, 0.0
        %1003 = vst.msk [vmem:[#allocation2 + $0x80] sm:$0xff] %vm985, 0.0
        %1004 = vst.msk [vmem:[#allocation2 + $0x88] sm:$0x1] %vm988, 0.0
        %1005 = vst.msk [vmem:[#allocation2 + $0x90] sm:$0xff] %vm985, 0.0
        %1006 = vst.msk [vmem:[#allocation2 + $0x98] sm:$0xff] %vm985, 0.0
        %1007 = vst.msk [vmem:[#allocation2 + $0xa0] sm:$0x1] %vm988, 0.0
        %1008 = vst.msk [vmem:[#allocation2 + $0xa8] sm:$0xff] %vm985, 0.0
        %1009 = vst.msk [vmem:[#allocation2 + $0xb0] sm:$0xff] %vm985, 0.0
        %1010 = vst.msk [vmem:[#allocation2 + $0xb8] sm:$0x1] %vm988, 0.0
        %1011 = vst.msk [vmem:[#allocation2 + $0xc0] sm:$0xff] %vm985, 0.0
        %1012 = vst.msk [vmem:[#allocation2 + $0xc8] sm:$0xff] %vm985, 0.0
        %1013 = vst.msk [vmem:[#allocation2 + $0xd0] sm:$0x1] %vm988, 0.0
        %1014 = vst.msk [vmem:[#allocation2 + $0xd8] sm:$0xff] %vm985, 0.0
        %1015 = vst.msk [vmem:[#allocation2 + $0xe0] sm:$0xff] %vm985, 0.0
        %1016 = vst.msk [vmem:[#allocation2 + $0xe8] sm:$0x1] %vm988, 0.0
        %1017 = vst.msk [vmem:[#allocation2 + $0xf0] sm:$0xff] %vm985, 0.0
        %1018 = vst.msk [vmem:[#allocation2 + $0xf8] sm:$0xff] %vm985, 0.0
        %1019 = vst.msk [vmem:[#allocation2 + $0x100] sm:$0x1] %vm988, 0.0
        %1020 = vst.msk [vmem:[#allocation2 + $0x108] sm:$0xff] %vm985, 0.0
        %1021 = vst.msk [vmem:[#allocation2 + $0x110] sm:$0xff] %vm985, 0.0
        %1022 = vst.msk [vmem:[#allocation2 + $0x118] sm:$0x1] %vm988, 0.0
        %1023 = vst.msk [vmem:[#allocation2 + $0x120] sm:$0xff] %vm985, 0.0
        %1024 = vst.msk [vmem:[#allocation2 + $0x128] sm:$0xff] %vm985, 0.0
        %1025 = vst.msk [vmem:[#allocation2 + $0x130] sm:$0x1] %vm988, 0.0
        %1026 = vst.msk [vmem:[#allocation2 + $0x138] sm:$0xff] %vm985, 0.0
        %1027 = vst.msk [vmem:[#allocation2 + $0x140] sm:$0xff] %vm985, 0.0
        %1028 = vst.msk [vmem:[#allocation2 + $0x148] sm:$0x1] %vm988, 0.0
        %1029 = vst.msk [vmem:[#allocation2 + $0x150] sm:$0xff] %vm985, 0.0
        %1030 = vst.msk [vmem:[#allocation2 + $0x158] sm:$0xff] %vm985, 0.0
        %1031 = vst.msk [vmem:[#allocation2 + $0x160] sm:$0x1] %vm988, 0.0
        %1032 = vst.msk [vmem:[#allocation2 + $0x168] sm:$0xff] %vm985, 0.0
        %1033 = vst.msk [vmem:[#allocation2 + $0x170] sm:$0xff] %vm985, 0.0
        %1034 = vst.msk [vmem:[#allocation2 + $0x178] sm:$0x1] %vm988, 0.0
        %1035 = vst.msk [vmem:[#allocation2 + $0x180] sm:$0xff] %vm985, 0.0
        %1036 = vst.msk [vmem:[#allocation2 + $0x188] sm:$0xff] %vm985, 0.0
        %1037 = vst.msk [vmem:[#allocation2 + $0x190] sm:$0x1] %vm988, 0.0
        %vm1038 = vcmask 64512
        %1039 = vst.msk [vmem:[#allocation4] sm:$0xff] %vm1038, 0.0
        %vm1040 = vcmask 58368
        %1041 = vst.msk [vmem:[#allocation4 + $0x8] sm:$0x3] %vm1040, 0.0
        %1042 = vst.msk [vmem:[#allocation4 + $0x10] sm:$0xff] %vm1038, 0.0
        %1043 = vst.msk [vmem:[#allocation4 + $0x18] sm:$0x3] %vm1040, 0.0
        %1044 = vst.msk [vmem:[#allocation4 + $0x20] sm:$0xff] %vm1038, 0.0
        %1045 = vst.msk [vmem:[#allocation4 + $0x28] sm:$0x3] %vm1040, 0.0
        %1046 = vst.msk [vmem:[#allocation4 + $0x30] sm:$0xff] %vm1038, 0.0
        %1047 = vst.msk [vmem:[#allocation4 + $0x38] sm:$0x3] %vm1040, 0.0
        %1048 = vst.msk [vmem:[#allocation4 + $0x40] sm:$0xff] %vm1038, 0.0
        %1049 = vst.msk [vmem:[#allocation4 + $0x48] sm:$0x3] %vm1040, 0.0
        %1050 = vst.msk [vmem:[#allocation4 + $0x50] sm:$0xff] %vm1038, 0.0
        %1051 = vst.msk [vmem:[#allocation4 + $0x58] sm:$0x3] %vm1040, 0.0
        %1052 = vst.msk [vmem:[#allocation4 + $0x60] sm:$0xff] %vm1038, 0.0
        %1053 = vst.msk [vmem:[#allocation4 + $0x68] sm:$0x3] %vm1040, 0.0
        %1054 = vst.msk [vmem:[#allocation4 + $0x70] sm:$0xff] %vm1038, 0.0
        %1055 = vst.msk [vmem:[#allocation4 + $0x78] sm:$0x3] %vm1040, 0.0
        %1056 = vst.msk [vmem:[#allocation4 + $0x80] sm:$0xff] %vm1038, 0.0
        %1057 = vst.msk [vmem:[#allocation4 + $0x88] sm:$0x3] %vm1040, 0.0
        %1058 = vst.msk [vmem:[#allocation4 + $0x90] sm:$0xff] %vm1038, 0.0
        %1059 = vst.msk [vmem:[#allocation4 + $0x98] sm:$0x3] %vm1040, 0.0
        %vm1060 = vcmask 261120
        %1061 = vst.msk [vmem:[#allocation5] sm:$0xff] %vm1060, 0.0
        %vm1062 = vcmask 253952
        %1063 = vst.msk [vmem:[#allocation5 + $0x8] sm:$0x1] %vm1062, 0.0
        %1064 = vst.msk [vmem:[#allocation5 + $0x10] sm:$0xff] %vm1060, 0.0
        %1065 = vst.msk [vmem:[#allocation5 + $0x18] sm:$0x1] %vm1062, 0.0
        %1066 = vst.msk [vmem:[#allocation5 + $0x20] sm:$0xff] %vm1060, 0.0
        %1067 = vst.msk [vmem:[#allocation5 + $0x28] sm:$0x1] %vm1062, 0.0
        %1068 = vst.msk [vmem:[#allocation5 + $0x30] sm:$0xff] %vm1060, 0.0
        %1069 = vst.msk [vmem:[#allocation5 + $0x38] sm:$0x1] %vm1062, 0.0
        %1070 = vst.msk [vmem:[#allocation5 + $0x40] sm:$0xff] %vm1060, 0.0
        %1071 = vst.msk [vmem:[#allocation5 + $0x48] sm:$0x1] %vm1062, 0.0
        %1072 = vst.msk [vmem:[#allocation5 + $0x50] sm:$0xff] %vm1060, 0.0
        %1073 = vst.msk [vmem:[#allocation5 + $0x58] sm:$0x1] %vm1062, 0.0
        %1074 = vst.msk [vmem:[#allocation5 + $0x60] sm:$0xff] %vm1060, 0.0
        %1075 = vst.msk [vmem:[#allocation5 + $0x68] sm:$0x1] %vm1062, 0.0
        %1076 = vst.msk [vmem:[#allocation5 + $0x70] sm:$0xff] %vm1060, 0.0
        %1077 = vst.msk [vmem:[#allocation5 + $0x78] sm:$0x1] %vm1062, 0.0
        %1078 = vst.msk [vmem:[#allocation5 + $0x80] sm:$0xff] %vm1060, 0.0
        %1079 = vst.msk [vmem:[#allocation5 + $0x88] sm:$0x1] %vm1062, 0.0
        %v1080 = vld [vmem:[%s983] sm:$0xff]
        %v1081 = vld [vmem:[%s983 + $0x8] sm:$0xff]
        %v1082 = vld [vmem:[%s983 + $0x10] sm:$0xff]
        %v1083 = vld [vmem:[%s983 + $0x18] sm:$0xff]
        %v1084 = vld [vmem:[%s983 + $0x20] sm:$0xff]
        %v1085 = vld [vmem:[%s983 + $0x28] sm:$0xff]
        %v1086 = vld [vmem:[%s983 + $0x30] sm:$0xff]
        %v1087 = vld [vmem:[%s983 + $0x38] sm:$0xff]
        %v1088 = vld [vmem:[%s983 + $0x40] sm:$0xff]
        %v1089 = vld [vmem:[%s983 + $0x48] sm:$0xff]
        %v1090 = vld [vmem:[%s983 + $0x50] sm:$0xff]
        %v1091 = vld [vmem:[%s983 + $0x58] sm:$0xff]
        %v1092 = vld [vmem:[%s983 + $0x60] sm:$0xff]
        %v1093 = vld [vmem:[%s983 + $0x68] sm:$0xff]
        %v1094 = vld [vmem:[%s983 + $0x70] sm:$0xff]
        %v1095 = vld [vmem:[%s983 + $0x78] sm:$0xff]
        %v1096 = vld [vmem:[%s983 + $0x80] sm:$0xff]
        %v1097 = vld [vmem:[%s983 + $0x88] sm:$0xff]
        %v1098 = vld [vmem:[%s983 + $0x90] sm:$0xff]
        %v1099 = vld [vmem:[%s983 + $0x98] sm:$0xff]
        %v1100 = vld [vmem:[%s983 + $0xa0] sm:$0xff]
        %v1101 = vld [vmem:[%s983 + $0xa8] sm:$0xff]
        %v1102 = vld [vmem:[%s983 + $0xb0] sm:$0xff]
        %v1103 = vld [vmem:[%s983 + $0xb8] sm:$0xff]
        %v1104 = vld [vmem:[%s983 + $0xc0] sm:$0xff]
        %v1105 = vld [vmem:[%s983 + $0xc8] sm:$0xff]
        %v1106 = vld [vmem:[%s983 + $0xd0] sm:$0xff]
        %v1107 = vld [vmem:[%s983 + $0xd8] sm:$0xff]
        %v1108 = vld [vmem:[%s983 + $0xe0] sm:$0xff]
        %v1109 = vld [vmem:[%s983 + $0xe8] sm:$0xff]
        %v1110 = vld [vmem:[%s983 + $0xf0] sm:$0xff]
        %v1111 = vld [vmem:[%s983 + $0xf8] sm:$0xff]
        %1112 = vst.msk [vmem:[#allocation2] sm:$0xff] %vm985, %v1080
        %1113 = vst.msk [vmem:[#allocation2 + $0x8] sm:$0xff] %vm985, %v1081
        %1114 = vst.msk [vmem:[#allocation2 + $0x18] sm:$0xff] %vm985, %v1082
        %1115 = vst.msk [vmem:[#allocation2 + $0x20] sm:$0xff] %vm985, %v1083
        %1116 = vst.msk [vmem:[#allocation2 + $0x30] sm:$0xff] %vm985, %v1084
        %1117 = vst.msk [vmem:[#allocation2 + $0x38] sm:$0xff] %vm985, %v1085
        %1118 = vst.msk [vmem:[#allocation2 + $0x48] sm:$0xff] %vm985, %v1086
        %1119 = vst.msk [vmem:[#allocation2 + $0x50] sm:$0xff] %vm985, %v1087
        %1120 = vst.msk [vmem:[#allocation2 + $0x60] sm:$0xff] %vm985, %v1088
        %1121 = vst.msk [vmem:[#allocation2 + $0x68] sm:$0xff] %vm985, %v1089
        %1122 = vst.msk [vmem:[#allocation2 + $0x78] sm:$0xff] %vm985, %v1090
        %1123 = vst.msk [vmem:[#allocation2 + $0x80] sm:$0xff] %vm985, %v1091
        %1124 = vst.msk [vmem:[#allocation2 + $0x90] sm:$0xff] %vm985, %v1092
        %1125 = vst.msk [vmem:[#allocation2 + $0x98] sm:$0xff] %vm985, %v1093
        %1126 = vst.msk [vmem:[#allocation2 + $0xa8] sm:$0xff] %vm985, %v1094
        %1127 = vst.msk [vmem:[#allocation2 + $0xb0] sm:$0xff] %vm985, %v1095
        %1128 = vst.msk [vmem:[#allocation2 + $0xc0] sm:$0xff] %vm985, %v1096
        %1129 = vst.msk [vmem:[#allocation2 + $0xc8] sm:$0xff] %vm985, %v1097
        %1130 = vst.msk [vmem:[#allocation2 + $0xd8] sm:$0xff] %vm985, %v1098
        %1131 = vst.msk [vmem:[#allocation2 + $0xe0] sm:$0xff] %vm985, %v1099
        %1132 = vst.msk [vmem:[#allocation2 + $0xf0] sm:$0xff] %vm985, %v1100
        %1133 = vst.msk [vmem:[#allocation2 + $0xf8] sm:$0xff] %vm985, %v1101
        %1134 = vst.msk [vmem:[#allocation2 + $0x108] sm:$0xff] %vm985, %v1102
        %1135 = vst.msk [vmem:[#allocation2 + $0x110] sm:$0xff] %vm985, %v1103
        %1136 = vst.msk [vmem:[#allocation2 + $0x120] sm:$0xff] %vm985, %v1104
        %1137 = vst.msk [vmem:[#allocation2 + $0x128] sm:$0xff] %vm985, %v1105
        %1138 = vst.msk [vmem:[#allocation2 + $0x138] sm:$0xff] %vm985, %v1106
        %1139 = vst.msk [vmem:[#allocation2 + $0x140] sm:$0xff] %vm985, %v1107
        %1140 = vst.msk [vmem:[#allocation2 + $0x150] sm:$0xff] %vm985, %v1108
        %1141 = vst.msk [vmem:[#allocation2 + $0x158] sm:$0xff] %vm985, %v1109
        %1142 = vst.msk [vmem:[#allocation2 + $0x168] sm:$0xff] %vm985, %v1110
        %1143 = vst.msk [vmem:[#allocation2 + $0x170] sm:$0xff] %vm985, %v1111
        %v1144 = vld [vmem:[%s3] sm:$0xff]
        %v1145 = vld [vmem:[%s5] sm:$0xf]
        %v1146 = vld [vmem:[%s9] sm:$0x1]
        %v1147 = vld [vmem:[%s11] sm:$0x1]
        %v1148 = vld [vmem:[#allocation2] sm:$0xff]
        %v1149 = vld [vmem:[#allocation2 + $0x8] sm:$0x7f]
        %v1150 = vld [vmem:[%s7] sm:$0x7]
        %v1151 = vld [vmem:[#allocation2 + $0x1] sm:$0xff]
        %v1152 = vld [vmem:[#allocation2 + $0x9] sm:$0x7f]
        %s1153 = scalar_lea.vmem %s7, 4
        %v1154 = vld [vmem:[%s1153] sm:$0x7]
        %v1156 = vsel %vm985, %v1151, 0
        %v1159 = vsel %vm985, %v1152, 0
        %vm1161 = vcmask 1042432
        %v1163 = vsel %vm1161, %v1154, 0
        %1165 = vmatpush.msra.mxu0 0.0
        %1166 = vmatpush.msra.mxu0 0.0
        %1167 = vmatpush.msra.mxu0 0.0
        %1168 = vmatpush.msra.mxu0 0.0
        %1169 = vmatpush.msra.mxu0 0.0
        %1170 = vmatpush.msra.mxu0 0.0
        %1171 = vmatpush.msra.mxu0 0.0
        %1172 = vmatpush.msra.mxu0 0.0
        %1173 = vmatpush.msra.mxu0 0.0
        %1174 = vmatpush.msra.mxu0 0.0
        %1175 = vmatpush.msra.mxu0 0.0
        %1176 = vmatpush.msra.mxu0 0.0
        %1177 = vmatpush.msra.mxu0 0.0
        %1178 = vmatpush.msra.mxu0 0.0
        %1179 = vmatpush.msra.mxu0 0.0
        %1180 = vmatpush.msra.mxu0 %v1163
        %1181 = vmatmul.f32.gmra.mxu0 %v1156
        %v1182 = vpop.f32.mrf.mxu0
        %v1183 = vadd.f32 0.0, %v1182
        %1184 = vmatmul.f32.gmra.mxu0 %v1159
        %v1185 = vpop.f32.mrf.mxu0
        %v1186 = vadd.f32 0.0, %v1185
        %1187 = vdwg.mxu0
        %v1189 = vsel %vm985, %v1148, 0
        %v1192 = vsel %vm985, %v1149, 0
        %v1195 = vsel %vm1161, %v1150, 0
        %1197 = vmatpush.msra.mxu0 0.0
        %1198 = vmatpush.msra.mxu0 0.0
        %1199 = vmatpush.msra.mxu0 0.0
        %1200 = vmatpush.msra.mxu0 0.0
        %1201 = vmatpush.msra.mxu0 0.0
        %1202 = vmatpush.msra.mxu0 0.0
        %1203 = vmatpush.msra.mxu0 0.0
        %1204 = vmatpush.msra.mxu0 0.0
        %1205 = vmatpush.msra.mxu0 0.0
        %1206 = vmatpush.msra.mxu0 0.0
        %1207 = vmatpush.msra.mxu0 0.0
        %1208 = vmatpush.msra.mxu0 0.0
        %1209 = vmatpush.msra.mxu0 0.0
        %1210 = vmatpush.msra.mxu0 0.0
        %1211 = vmatpush.msra.mxu0 0.0
        %1212 = vmatpush.msra.mxu0 %v1195
        %1213 = vmatmul.f32.gmra.mxu0 %v1189
        %v1214 = vpop.f32.mrf.mxu0
        %v1215 = vadd.f32 %v1183, %v1214
        %1216 = vmatmul.f32.gmra.mxu0 %v1192
        %v1217 = vpop.f32.mrf.mxu0
        %v1218 = vadd.f32 %v1186, %v1217
        %1219 = vdwg.mxu0
        %v1220 = vld [vmem:[#allocation2 + $0x2] sm:$0xff]
        %v1221 = vld [vmem:[#allocation2 + $0xa] sm:$0x7f]
        %s1222 = scalar_lea.vmem %s7, 8
        %v1223 = vld [vmem:[%s1222] sm:$0x7]
        %v1225 = vsel %vm985, %v1220, 0
        %v1228 = vsel %vm985, %v1221, 0
        %v1231 = vsel %vm1161, %v1223, 0
        %1233 = vmatpush.msra.mxu0 0.0
        %1234 = vmatpush.msra.mxu0 0.0
        %1235 = vmatpush.msra.mxu0 0.0
        %1236 = vmatpush.msra.mxu0 0.0
        %1237 = vmatpush.msra.mxu0 0.0
        %1238 = vmatpush.msra.mxu0 0.0
        %1239 = vmatpush.msra.mxu0 0.0
        %1240 = vmatpush.msra.mxu0 0.0
        %1241 = vmatpush.msra.mxu0 0.0
        %1242 = vmatpush.msra.mxu0 0.0
        %1243 = vmatpush.msra.mxu0 0.0
        %1244 = vmatpush.msra.mxu0 0.0
        %1245 = vmatpush.msra.mxu0 0.0
        %1246 = vmatpush.msra.mxu0 0.0
        %1247 = vmatpush.msra.mxu0 0.0
        %1248 = vmatpush.msra.mxu0 %v1231
        %1249 = vmatmul.f32.gmra.mxu0 %v1225
        %v1250 = vpop.f32.mrf.mxu0
        %v1251 = vadd.f32 0.0, %v1250
        %1252 = vmatmul.f32.gmra.mxu0 %v1228
        %v1253 = vpop.f32.mrf.mxu0
        %v1254 = vadd.f32 0.0, %v1253
        %1255 = vdwg.mxu0
        %v1256 = vadd.f32 %v1215, %v1251
        %v1257 = vadd.f32 %v1218, %v1254
        %s1258 = scalar_lea.vmem [#allocation2], 24
        %v1259 = vld [vmem:[%s1258] sm:$0xff]
        %v1260 = vld [vmem:[%s1258 + $0x8] sm:$0x7f]
        %s1261 = scalar_lea.vmem %s7, 12
        %v1262 = vld [vmem:[%s1261] sm:$0x7]
        %v1264 = vsel %vm985, %v1259, 0
        %v1267 = vsel %vm985, %v1260, 0
        %v1270 = vsel %vm1161, %v1262, 0
        %1272 = vmatpush.msra.mxu0 0.0
        %1273 = vmatpush.msra.mxu0 0.0
        %1274 = vmatpush.msra.mxu0 0.0
        %1275 = vmatpush.msra.mxu0 0.0
        %1276 = vmatpush.msra.mxu0 0.0
        %1277 = vmatpush.msra.mxu0 0.0
        %1278 = vmatpush.msra.mxu0 0.0
        %1279 = vmatpush.msra.mxu0 0.0
        %1280 = vmatpush.msra.mxu0 0.0
        %1281 = vmatpush.msra.mxu0 0.0
        %1282 = vmatpush.msra.mxu0 0.0
        %1283 = vmatpush.msra.mxu0 0.0
        %1284 = vmatpush.msra.mxu0 0.0
        %1285 = vmatpush.msra.mxu0 0.0
        %1286 = vmatpush.msra.mxu0 0.0
        %1287 = vmatpush.msra.mxu0 %v1270
        %1288 = vmatmul.f32.gmra.mxu0 %v1264
        %v1289 = vpop.f32.mrf.mxu0
        %v1290 = vadd.f32 0.0, %v1289
        %1291 = vmatmul.f32.gmra.mxu0 %v1267
        %v1292 = vpop.f32.mrf.mxu0
        %v1293 = vadd.f32 0.0, %v1292
        %1294 = vdwg.mxu0
        %v1295 = vadd.f32 %v1256, %v1290
        %v1296 = vadd.f32 %v1257, %v1293
        %v1297 = vld [vmem:[%s1258 + $0x1] sm:$0xff]
        %v1298 = vld [vmem:[%s1258 + $0x9] sm:$0x7f]
        %s1299 = scalar_lea.vmem %s7, 16
        %v1300 = vld [vmem:[%s1299] sm:$0x7]
        %v1302 = vsel %vm985, %v1297, 0
        %v1305 = vsel %vm985, %v1298, 0
        %v1308 = vsel %vm1161, %v1300, 0
        %1310 = vmatpush.msra.mxu0 0.0
        %1311 = vmatpush.msra.mxu0 0.0
        %1312 = vmatpush.msra.mxu0 0.0
        %1313 = vmatpush.msra.mxu0 0.0
        %1314 = vmatpush.msra.mxu0 0.0
        %1315 = vmatpush.msra.mxu0 0.0
        %1316 = vmatpush.msra.mxu0 0.0
        %1317 = vmatpush.msra.mxu0 0.0
        %1318 = vmatpush.msra.mxu0 0.0
        %1319 = vmatpush.msra.mxu0 0.0
        %1320 = vmatpush.msra.mxu0 0.0
        %1321 = vmatpush.msra.mxu0 0.0
        %1322 = vmatpush.msra.mxu0 0.0
        %1323 = vmatpush.msra.mxu0 0.0
        %1324 = vmatpush.msra.mxu0 0.0
        %1325 = vmatpush.msra.mxu0 %v1308
        %1326 = vmatmul.f32.gmra.mxu0 %v1302
        %v1327 = vpop.f32.mrf.mxu0
        %v1328 = vadd.f32 0.0, %v1327
        %1329 = vmatmul.f32.gmra.mxu0 %v1305
        %v1330 = vpop.f32.mrf.mxu0
        %v1331 = vadd.f32 0.0, %v1330
        %1332 = vdwg.mxu0
        %v1333 = vadd.f32 %v1295, %v1328
        %v1334 = vadd.f32 %v1296, %v1331
        %v1335 = vld [vmem:[%s1258 + $0x2] sm:$0xff]
        %v1336 = vld [vmem:[%s1258 + $0xa] sm:$0x7f]
        %s1337 = scalar_lea.vmem %s7, 20
        %v1338 = vld [vmem:[%s1337] sm:$0x7]
        %v1340 = vsel %vm985, %v1335, 0
        %v1343 = vsel %vm985, %v1336, 0
        %v1346 = vsel %vm1161, %v1338, 0
        %1348 = vmatpush.msra.mxu0 0.0
        %1349 = vmatpush.msra.mxu0 0.0
        %1350 = vmatpush.msra.mxu0 0.0
        %1351 = vmatpush.msra.mxu0 0.0
        %1352 = vmatpush.msra.mxu0 0.0
        %1353 = vmatpush.msra.mxu0 0.0
        %1354 = vmatpush.msra.mxu0 0.0
        %1355 = vmatpush.msra.mxu0 0.0
        %1356 = vmatpush.msra.mxu0 0.0
        %1357 = vmatpush.msra.mxu0 0.0
        %1358 = vmatpush.msra.mxu0 0.0
        %1359 = vmatpush.msra.mxu0 0.0
        %1360 = vmatpush.msra.mxu0 0.0
        %1361 = vmatpush.msra.mxu0 0.0
        %1362 = vmatpush.msra.mxu0 0.0
        %1363 = vmatpush.msra.mxu0 %v1346
        %1364 = vmatmul.f32.gmra.mxu0 %v1340
        %v1365 = vpop.f32.mrf.mxu0
        %v1366 = vadd.f32 0.0, %v1365
        %1367 = vmatmul.f32.gmra.mxu0 %v1343
        %v1368 = vpop.f32.mrf.mxu0
        %v1369 = vadd.f32 0.0, %v1368
        %1370 = vdwg.mxu0
        %v1371 = vadd.f32 %v1333, %v1366
        %v1372 = vadd.f32 %v1334, %v1369
        %s1373 = scalar_lea.vmem [#allocation2], 48
        %v1374 = vld [vmem:[%s1373] sm:$0xff]
        %v1375 = vld [vmem:[%s1373 + $0x8] sm:$0x7f]
        %s1376 = scalar_lea.vmem %s7, 24
        %v1377 = vld [vmem:[%s1376] sm:$0x7]
        %v1379 = vsel %vm985, %v1374, 0
        %v1382 = vsel %vm985, %v1375, 0
        %v1385 = vsel %vm1161, %v1377, 0
        %1387 = vmatpush.msra.mxu0 0.0
        %1388 = vmatpush.msra.mxu0 0.0
        %1389 = vmatpush.msra.mxu0 0.0
        %1390 = vmatpush.msra.mxu0 0.0
        %1391 = vmatpush.msra.mxu0 0.0
        %1392 = vmatpush.msra.mxu0 0.0
        %1393 = vmatpush.msra.mxu0 0.0
        %1394 = vmatpush.msra.mxu0 0.0
        %1395 = vmatpush.msra.mxu0 0.0
        %1396 = vmatpush.msra.mxu0 0.0
        %1397 = vmatpush.msra.mxu0 0.0
        %1398 = vmatpush.msra.mxu0 0.0
        %1399 = vmatpush.msra.mxu0 0.0
        %1400 = vmatpush.msra.mxu0 0.0
        %1401 = vmatpush.msra.mxu0 0.0
        %1402 = vmatpush.msra.mxu0 %v1385
        %1403 = vmatmul.f32.gmra.mxu0 %v1379
        %v1404 = vpop.f32.mrf.mxu0
        %v1405 = vadd.f32 0.0, %v1404
        %1406 = vmatmul.f32.gmra.mxu0 %v1382
        %v1407 = vpop.f32.mrf.mxu0
        %v1408 = vadd.f32 0.0, %v1407
        %1409 = vdwg.mxu0
        %v1410 = vadd.f32 %v1371, %v1405
        %v1411 = vadd.f32 %v1372, %v1408
        %v1412 = vld [vmem:[%s1373 + $0x1] sm:$0xff]
        %v1413 = vld [vmem:[%s1373 + $0x9] sm:$0x7f]
        %s1414 = scalar_lea.vmem %s7, 28
        %v1415 = vld [vmem:[%s1414] sm:$0x7]
        %v1417 = vsel %vm985, %v1412, 0
        %v1420 = vsel %vm985, %v1413, 0
        %v1423 = vsel %vm1161, %v1415, 0
        %1425 = vmatpush.msra.mxu0 0.0
        %1426 = vmatpush.msra.mxu0 0.0
        %1427 = vmatpush.msra.mxu0 0.0
        %1428 = vmatpush.msra.mxu0 0.0
        %1429 = vmatpush.msra.mxu0 0.0
        %1430 = vmatpush.msra.mxu0 0.0
        %1431 = vmatpush.msra.mxu0 0.0
        %1432 = vmatpush.msra.mxu0 0.0
        %1433 = vmatpush.msra.mxu0 0.0
        %1434 = vmatpush.msra.mxu0 0.0
        %1435 = vmatpush.msra.mxu0 0.0
        %1436 = vmatpush.msra.mxu0 0.0
        %1437 = vmatpush.msra.mxu0 0.0
        %1438 = vmatpush.msra.mxu0 0.0
        %1439 = vmatpush.msra.mxu0 0.0
        %1440 = vmatpush.msra.mxu0 %v1423
        %1441 = vmatmul.f32.gmra.mxu0 %v1417
        %v1442 = vpop.f32.mrf.mxu0
        %v1443 = vadd.f32 0.0, %v1442
        %1444 = vmatmul.f32.gmra.mxu0 %v1420
        %v1445 = vpop.f32.mrf.mxu0
        %v1446 = vadd.f32 0.0, %v1445
        %1447 = vdwg.mxu0
        %v1448 = vadd.f32 %v1410, %v1443
        %v1449 = vadd.f32 %v1411, %v1446
        %v1450 = vld [vmem:[%s1373 + $0x2] sm:$0xff]
        %v1451 = vld [vmem:[%s1373 + $0xa] sm:$0x7f]
        %s1452 = scalar_lea.vmem %s7, 32
        %v1453 = vld [vmem:[%s1452] sm:$0x7]
        %v1455 = vsel %vm985, %v1450, 0
        %v1458 = vsel %vm985, %v1451, 0
        %v1461 = vsel %vm1161, %v1453, 0
        %1463 = vmatpush.msra.mxu0 0.0
        %1464 = vmatpush.msra.mxu0 0.0
        %1465 = vmatpush.msra.mxu0 0.0
        %1466 = vmatpush.msra.mxu0 0.0
        %1467 = vmatpush.msra.mxu0 0.0
        %1468 = vmatpush.msra.mxu0 0.0
        %1469 = vmatpush.msra.mxu0 0.0
        %1470 = vmatpush.msra.mxu0 0.0
        %1471 = vmatpush.msra.mxu0 0.0
        %1472 = vmatpush.msra.mxu0 0.0
        %1473 = vmatpush.msra.mxu0 0.0
        %1474 = vmatpush.msra.mxu0 0.0
        %1475 = vmatpush.msra.mxu0 0.0
        %1476 = vmatpush.msra.mxu0 0.0
        %1477 = vmatpush.msra.mxu0 0.0
        %1478 = vmatpush.msra.mxu0 %v1461
        %1479 = vmatmul.f32.gmra.mxu0 %v1455
        %v1480 = vpop.f32.mrf.mxu0
        %v1481 = vadd.f32 0.0, %v1480
        %1482 = vmatmul.f32.gmra.mxu0 %v1458
        %v1483 = vpop.f32.mrf.mxu0
        %v1484 = vadd.f32 0.0, %v1483
        %1485 = vdwg.mxu0
        %v1486 = vadd.f32 %v1448, %v1481
        %v1487 = vadd.f32 %v1449, %v1484
        %vm1488 = vcmask 121856
        %v1490 = vsel %vm1488, %v1144, 0
        %vm1492 = vcmask 1046528
        %v1494 = vsel %vm1492, %v1487, 0
        %1496 = vmatpush.msra.mxu0 0.0
        %1497 = vmatpush.msra.mxu0 0.0
        %1498 = vmatpush.msra.mxu0 0.0
        %1499 = vmatpush.msra.mxu0 0.0
        %1500 = vmatpush.msra.mxu0 0.0
        %1501 = vmatpush.msra.mxu0 0.0
        %1502 = vmatpush.msra.mxu0 0.0
        %1503 = vmatpush.msra.mxu0 0.0
        %1504 = vmatpush.msra.mxu0 0.0
        %1505 = vmatpush.msra.mxu0 0.0
        %1506 = vmatpush.msra.mxu0 0.0
        %1507 = vmatpush.msra.mxu0 0.0
        %1508 = vmatpush.msra.mxu0 0.0
        %1509 = vmatpush.msra.mxu0 0.0
        %1510 = vmatpush.msra.mxu0 %v1494
        %1511 = vmatpush.msra.mxu0 %v1486
        %1512 = vmatmul.f32.gmra.mxu0 %v1490
        %v1513 = vpop.f32.mrf.mxu0
        %v1514 = vadd.f32 0.0, %v1513
        %1515 = vdwg.mxu0
        %v1517 = vperm.slane %v1146, 0
        %v1519 = vmul.f32 %v1514, %v1517
        %v1521 = vperm.slane %v1147, 0
        %v1523 = vadd.f32 %v1519, %v1521
        %v1524 = vxor.u32 %v1523, 2147483648
        %v1525 = vmul.f32 %v1524, 1.442695
        %v1526 = vpow.pop %v1525
        %v1527 = vadd.f32 %v1526, 1.0
        %v1528 = vrcp.pop %v1527
        %v1529 = vmul.f32 %v1527, %v1528
        %v1530 = vsub.f32 1.0, %v1529
        %v1531 = vmul.f32 %v1528, %v1530
        %v1532 = vadd.f32 %v1528, %v1531
        %vm1533 = vweird.f32 %v1527
        %vm1534 = vweird.f32 %v1528
        %vm1535 = vmor %vm1533, %vm1534
        %v1536 = vsel %vm1535, %v1528, %v1532
        %v1537 = vand.u32 2147483647, %v1527
        %vm1538 = vcmp.eq.f32.partialorder %v1537, 8.507059e+37
        %v1539 = vand.u32 %v1527, 2147483648
        %v1540 = vor.u32 1.1754944e-38, %v1539
        %v1541 = vsel %vm1538, %v1540, %v1536
        %v1542 = vmul.f32 1.0, %v1541
        %v1543 = vmul.f32 %v1523, %v1542
        %1544 = vst.msk [vmem:[#allocation3] sm:$0xff] %vm1038, %v1543
        %s1545 = scalar_lea.vmem [#allocation4], 16
        %1546 = vst.msk [vmem:[%s1545 + $0x1] sm:$0xff] %vm1038, %v1543
        %v1547 = vld [vmem:[%s1373] sm:$0xff]
        %v1548 = vld [vmem:[%s1373 + $0x8] sm:$0x7f]
        %v1549 = vld [vmem:[%s7] sm:$0x7]
        %v1550 = vld [vmem:[%s1373 + $0x1] sm:$0xff]
        %v1551 = vld [vmem:[%s1373 + $0x9] sm:$0x7f]
        %v1552 = vld [vmem:[%s1153] sm:$0x7]
        %v1554 = vsel %vm985, %v1550, 0
        %v1557 = vsel %vm985, %v1551, 0
        %v1560 = vsel %vm1161, %v1552, 0
        %1562 = vmatpush.msra.mxu0 0.0
        %1563 = vmatpush.msra.mxu0 0.0
        %1564 = vmatpush.msra.mxu0 0.0
        %1565 = vmatpush.msra.mxu0 0.0
        %1566 = vmatpush.msra.mxu0 0.0
        %1567 = vmatpush.msra.mxu0 0.0
        %1568 = vmatpush.msra.mxu0 0.0
        %1569 = vmatpush.msra.mxu0 0.0
        %1570 = vmatpush.msra.mxu0 0.0
        %1571 = vmatpush.msra.mxu0 0.0
        %1572 = vmatpush.msra.mxu0 0.0
        %1573 = vmatpush.msra.mxu0 0.0
        %1574 = vmatpush.msra.mxu0 0.0
        %1575 = vmatpush.msra.mxu0 0.0
        %1576 = vmatpush.msra.mxu0 0.0
        %1577 = vmatpush.msra.mxu0 %v1560
        %1578 = vmatmul.f32.gmra.mxu0 %v1554
        %v1579 = vpop.f32.mrf.mxu0
        %v1580 = vadd.f32 0.0, %v1579
        %1581 = vmatmul.f32.gmra.mxu0 %v1557
        %v1582 = vpop.f32.mrf.mxu0
        %v1583 = vadd.f32 0.0, %v1582
        %1584 = vdwg.mxu0
        %v1586 = vsel %vm985, %v1547, 0
        %v1589 = vsel %vm985, %v1548, 0
        %v1592 = vsel %vm1161, %v1549, 0
        %1594 = vmatpush.msra.mxu0 0.0
        %1595 = vmatpush.msra.mxu0 0.0
        %1596 = vmatpush.msra.mxu0 0.0
        %1597 = vmatpush.msra.mxu0 0.0
        %1598 = vmatpush.msra.mxu0 0.0
        %1599 = vmatpush.msra.mxu0 0.0
        %1600 = vmatpush.msra.mxu0 0.0
        %1601 = vmatpush.msra.mxu0 0.0
        %1602 = vmatpush.msra.mxu0 0.0
        %1603 = vmatpush.msra.mxu0 0.0
        %1604 = vmatpush.msra.mxu0 0.0
        %1605 = vmatpush.msra.mxu0 0.0
        %1606 = vmatpush.msra.mxu0 0.0
        %1607 = vmatpush.msra.mxu0 0.0
        %1608 = vmatpush.msra.mxu0 0.0
        %1609 = vmatpush.msra.mxu0 %v1592
        %1610 = vmatmul.f32.gmra.mxu0 %v1586
        %v1611 = vpop.f32.mrf.mxu0
        %v1612 = vadd.f32 %v1580, %v1611
        %1613 = vmatmul.f32.gmra.mxu0 %v1589
        %v1614 = vpop.f32.mrf.mxu0
        %v1615 = vadd.f32 %v1583, %v1614
        %1616 = vdwg.mxu0
        %v1617 = vld [vmem:[%s1373 + $0x2] sm:$0xff]
        %v1618 = vld [vmem:[%s1373 + $0xa] sm:$0x7f]
        %v1619 = vld [vmem:[%s1222] sm:$0x7]
        %v1621 = vsel %vm985, %v1617, 0
        %v1624 = vsel %vm985, %v1618, 0
        %v1627 = vsel %vm1161, %v1619, 0
        %1629 = vmatpush.msra.mxu0 0.0
        %1630 = vmatpush.msra.mxu0 0.0
        %1631 = vmatpush.msra.mxu0 0.0
        %1632 = vmatpush.msra.mxu0 0.0
        %1633 = vmatpush.msra.mxu0 0.0
        %1634 = vmatpush.msra.mxu0 0.0
        %1635 = vmatpush.msra.mxu0 0.0
        %1636 = vmatpush.msra.mxu0 0.0
        %1637 = vmatpush.msra.mxu0 0.0
        %1638 = vmatpush.msra.mxu0 0.0
        %1639 = vmatpush.msra.mxu0 0.0
        %1640 = vmatpush.msra.mxu0 0.0
        %1641 = vmatpush.msra.mxu0 0.0
        %1642 = vmatpush.msra.mxu0 0.0
        %1643 = vmatpush.msra.mxu0 0.0
        %1644 = vmatpush.msra.mxu0 %v1627
        %1645 = vmatmul.f32.gmra.mxu0 %v1621
        %v1646 = vpop.f32.mrf.mxu0
        %v1647 = vadd.f32 0.0, %v1646
        %1648 = vmatmul.f32.gmra.mxu0 %v1624
        %v1649 = vpop.f32.mrf.mxu0
        %v1650 = vadd.f32 0.0, %v1649
        %1651 = vdwg.mxu0
        %v1652 = vadd.f32 %v1612, %v1647
        %v1653 = vadd.f32 %v1615, %v1650
        %s1654 = scalar_lea.vmem [#allocation2], 72
        %v1655 = vld [vmem:[%s1654] sm:$0xff]
        %v1656 = vld [vmem:[%s1654 + $0x8] sm:$0x7f]
        %v1657 = vld [vmem:[%s1261] sm:$0x7]
        %v1659 = vsel %vm985, %v1655, 0
        %v1662 = vsel %vm985, %v1656, 0
        %v1665 = vsel %vm1161, %v1657, 0
        %1667 = vmatpush.msra.mxu0 0.0
        %1668 = vmatpush.msra.mxu0 0.0
        %1669 = vmatpush.msra.mxu0 0.0
        %1670 = vmatpush.msra.mxu0 0.0
        %1671 = vmatpush.msra.mxu0 0.0
        %1672 = vmatpush.msra.mxu0 0.0
        %1673 = vmatpush.msra.mxu0 0.0
        %1674 = vmatpush.msra.mxu0 0.0
        %1675 = vmatpush.msra.mxu0 0.0
        %1676 = vmatpush.msra.mxu0 0.0
        %1677 = vmatpush.msra.mxu0 0.0
        %1678 = vmatpush.msra.mxu0 0.0
        %1679 = vmatpush.msra.mxu0 0.0
        %1680 = vmatpush.msra.mxu0 0.0
        %1681 = vmatpush.msra.mxu0 0.0
        %1682 = vmatpush.msra.mxu0 %v1665
        %1683 = vmatmul.f32.gmra.mxu0 %v1659
        %v1684 = vpop.f32.mrf.mxu0
        %v1685 = vadd.f32 0.0, %v1684
        %1686 = vmatmul.f32.gmra.mxu0 %v1662
        %v1687 = vpop.f32.mrf.mxu0
        %v1688 = vadd.f32 0.0, %v1687
        %1689 = vdwg.mxu0
        %v1690 = vadd.f32 %v1652, %v1685
        %v1691 = vadd.f32 %v1653, %v1688
        %v1692 = vld [vmem:[%s1654 + $0x1] sm:$0xff]
        %v1693 = vld [vmem:[%s1654 + $0x9] sm:$0x7f]
        %v1694 = vld [vmem:[%s1299] sm:$0x7]
        %v1696 = vsel %vm985, %v1692, 0
        %v1699 = vsel %vm985, %v1693, 0
        %v1702 = vsel %vm1161, %v1694, 0
        %1704 = vmatpush.msra.mxu0 0.0
        %1705 = vmatpush.msra.mxu0 0.0
        %1706 = vmatpush.msra.mxu0 0.0
        %1707 = vmatpush.msra.mxu0 0.0
        %1708 = vmatpush.msra.mxu0 0.0
        %1709 = vmatpush.msra.mxu0 0.0
        %1710 = vmatpush.msra.mxu0 0.0
        %1711 = vmatpush.msra.mxu0 0.0
        %1712 = vmatpush.msra.mxu0 0.0
        %1713 = vmatpush.msra.mxu0 0.0
        %1714 = vmatpush.msra.mxu0 0.0
        %1715 = vmatpush.msra.mxu0 0.0
        %1716 = vmatpush.msra.mxu0 0.0
        %1717 = vmatpush.msra.mxu0 0.0
        %1718 = vmatpush.msra.mxu0 0.0
        %1719 = vmatpush.msra.mxu0 %v1702
        %1720 = vmatmul.f32.gmra.mxu0 %v1696
        %v1721 = vpop.f32.mrf.mxu0
        %v1722 = vadd.f32 0.0, %v1721
        %1723 = vmatmul.f32.gmra.mxu0 %v1699
        %v1724 = vpop.f32.mrf.mxu0
        %v1725 = vadd.f32 0.0, %v1724
        %1726 = vdwg.mxu0
        %v1727 = vadd.f32 %v1690, %v1722
        %v1728 = vadd.f32 %v1691, %v1725
        %v1729 = vld [vmem:[%s1654 + $0x2] sm:$0xff]
        %v1730 = vld [vmem:[%s1654 + $0xa] sm:$0x7f]
        %v1731 = vld [vmem:[%s1337] sm:$0x7]
        %v1733 = vsel %vm985, %v1729, 0
        %v1736 = vsel %vm985, %v1730, 0
        %v1739 = vsel %vm1161, %v1731, 0
        %1741 = vmatpush.msra.mxu0 0.0
        %1742 = vmatpush.msra.mxu0 0.0
        %1743 = vmatpush.msra.mxu0 0.0
        %1744 = vmatpush.msra.mxu0 0.0
        %1745 = vmatpush.msra.mxu0 0.0
        %1746 = vmatpush.msra.mxu0 0.0
        %1747 = vmatpush.msra.mxu0 0.0
        %1748 = vmatpush.msra.mxu0 0.0
        %1749 = vmatpush.msra.mxu0 0.0
        %1750 = vmatpush.msra.mxu0 0.0
        %1751 = vmatpush.msra.mxu0 0.0
        %1752 = vmatpush.msra.mxu0 0.0
        %1753 = vmatpush.msra.mxu0 0.0
        %1754 = vmatpush.msra.mxu0 0.0
        %1755 = vmatpush.msra.mxu0 0.0
        %1756 = vmatpush.msra.mxu0 %v1739
        %1757 = vmatmul.f32.gmra.mxu0 %v1733
        %v1758 = vpop.f32.mrf.mxu0
        %v1759 = vadd.f32 0.0, %v1758
        %1760 = vmatmul.f32.gmra.mxu0 %v1736
        %v1761 = vpop.f32.mrf.mxu0
        %v1762 = vadd.f32 0.0, %v1761
        %1763 = vdwg.mxu0
        %v1764 = vadd.f32 %v1727, %v1759
        %v1765 = vadd.f32 %v1728, %v1762
        %s1766 = scalar_lea.vmem [#allocation2], 96
        %v1767 = vld [vmem:[%s1766] sm:$0xff]
        %v1768 = vld [vmem:[%s1766 + $0x8] sm:$0x7f]
        %v1769 = vld [vmem:[%s1376] sm:$0x7]
        %v1771 = vsel %vm985, %v1767, 0
        %v1774 = vsel %vm985, %v1768, 0
        %v1777 = vsel %vm1161, %v1769, 0
        %1779 = vmatpush.msra.mxu0 0.0
        %1780 = vmatpush.msra.mxu0 0.0
        %1781 = vmatpush.msra.mxu0 0.0
        %1782 = vmatpush.msra.mxu0 0.0
        %1783 = vmatpush.msra.mxu0 0.0
        %1784 = vmatpush.msra.mxu0 0.0
        %1785 = vmatpush.msra.mxu0 0.0
        %1786 = vmatpush.msra.mxu0 0.0
        %1787 = vmatpush.msra.mxu0 0.0
        %1788 = vmatpush.msra.mxu0 0.0
        %1789 = vmatpush.msra.mxu0 0.0
        %1790 = vmatpush.msra.mxu0 0.0
        %1791 = vmatpush.msra.mxu0 0.0
        %1792 = vmatpush.msra.mxu0 0.0
        %1793 = vmatpush.msra.mxu0 0.0
        %1794 = vmatpush.msra.mxu0 %v1777
        %1795 = vmatmul.f32.gmra.mxu0 %v1771
        %v1796 = vpop.f32.mrf.mxu0
        %v1797 = vadd.f32 0.0, %v1796
        %1798 = vmatmul.f32.gmra.mxu0 %v1774
        %v1799 = vpop.f32.mrf.mxu0
        %v1800 = vadd.f32 0.0, %v1799
        %1801 = vdwg.mxu0
        %v1802 = vadd.f32 %v1764, %v1797
        %v1803 = vadd.f32 %v1765, %v1800
        %v1804 = vld [vmem:[%s1766 + $0x1] sm:$0xff]
        %v1805 = vld [vmem:[%s1766 + $0x9] sm:$0x7f]
        %v1806 = vld [vmem:[%s1414] sm:$0x7]
        %v1808 = vsel %vm985, %v1804, 0
        %v1811 = vsel %vm985, %v1805, 0
        %v1814 = vsel %vm1161, %v1806, 0
        %1816 = vmatpush.msra.mxu0 0.0
        %1817 = vmatpush.msra.mxu0 0.0
        %1818 = vmatpush.msra.mxu0 0.0
        %1819 = vmatpush.msra.mxu0 0.0
        %1820 = vmatpush.msra.mxu0 0.0
        %1821 = vmatpush.msra.mxu0 0.0
        %1822 = vmatpush.msra.mxu0 0.0
        %1823 = vmatpush.msra.mxu0 0.0
        %1824 = vmatpush.msra.mxu0 0.0
        %1825 = vmatpush.msra.mxu0 0.0
        %1826 = vmatpush.msra.mxu0 0.0
        %1827 = vmatpush.msra.mxu0 0.0
        %1828 = vmatpush.msra.mxu0 0.0
        %1829 = vmatpush.msra.mxu0 0.0
        %1830 = vmatpush.msra.mxu0 0.0
        %1831 = vmatpush.msra.mxu0 %v1814
        %1832 = vmatmul.f32.gmra.mxu0 %v1808
        %v1833 = vpop.f32.mrf.mxu0
        %v1834 = vadd.f32 0.0, %v1833
        %1835 = vmatmul.f32.gmra.mxu0 %v1811
        %v1836 = vpop.f32.mrf.mxu0
        %v1837 = vadd.f32 0.0, %v1836
        %1838 = vdwg.mxu0
        %v1839 = vadd.f32 %v1802, %v1834
        %v1840 = vadd.f32 %v1803, %v1837
        %v1841 = vld [vmem:[%s1766 + $0x2] sm:$0xff]
        %v1842 = vld [vmem:[%s1766 + $0xa] sm:$0x7f]
        %v1843 = vld [vmem:[%s1452] sm:$0x7]
        %v1845 = vsel %vm985, %v1841, 0
        %v1848 = vsel %vm985, %v1842, 0
        %v1851 = vsel %vm1161, %v1843, 0
        %1853 = vmatpush.msra.mxu0 0.0
        %1854 = vmatpush.msra.mxu0 0.0
        %1855 = vmatpush.msra.mxu0 0.0
        %1856 = vmatpush.msra.mxu0 0.0
        %1857 = vmatpush.msra.mxu0 0.0
        %1858 = vmatpush.msra.mxu0 0.0
        %1859 = vmatpush.msra.mxu0 0.0
        %1860 = vmatpush.msra.mxu0 0.0
        %1861 = vmatpush.msra.mxu0 0.0
        %1862 = vmatpush.msra.mxu0 0.0
        %1863 = vmatpush.msra.mxu0 0.0
        %1864 = vmatpush.msra.mxu0 0.0
        %1865 = vmatpush.msra.mxu0 0.0
        %1866 = vmatpush.msra.mxu0 0.0
        %1867 = vmatpush.msra.mxu0 0.0
        %1868 = vmatpush.msra.mxu0 %v1851
        %1869 = vmatmul.f32.gmra.mxu0 %v1845
        %v1870 = vpop.f32.mrf.mxu0
        %v1871 = vadd.f32 0.0, %v1870
        %1872 = vmatmul.f32.gmra.mxu0 %v1848
        %v1873 = vpop.f32.mrf.mxu0
        %v1874 = vadd.f32 0.0, %v1873
        %1875 = vdwg.mxu0
        %v1876 = vadd.f32 %v1839, %v1871
        %v1877 = vadd.f32 %v1840, %v1874
        %v1879 = vsel %vm1492, %v1877, 0
        %1881 = vmatpush.msra.mxu0 0.0
        %1882 = vmatpush.msra.mxu0 0.0
        %1883 = vmatpush.msra.mxu0 0.0
        %1884 = vmatpush.msra.mxu0 0.0
        %1885 = vmatpush.msra.mxu0 0.0
        %1886 = vmatpush.msra.mxu0 0.0
        %1887 = vmatpush.msra.mxu0 0.0
        %1888 = vmatpush.msra.mxu0 0.0
        %1889 = vmatpush.msra.mxu0 0.0
        %1890 = vmatpush.msra.mxu0 0.0
        %1891 = vmatpush.msra.mxu0 0.0
        %1892 = vmatpush.msra.mxu0 0.0
        %1893 = vmatpush.msra.mxu0 0.0
        %1894 = vmatpush.msra.mxu0 0.0
        %1895 = vmatpush.msra.mxu0 %v1879
        %1896 = vmatpush.msra.mxu0 %v1876
        %1897 = vmatmul.f32.gmra.mxu0 %v1490
        %v1898 = vpop.f32.mrf.mxu0
        %v1899 = vadd.f32 0.0, %v1898
        %1900 = vdwg.mxu0
        %v1901 = vmul.f32 %v1899, %v1517
        %v1902 = vadd.f32 %v1901, %v1521
        %v1903 = vxor.u32 %v1902, 2147483648
        %v1904 = vmul.f32 %v1903, 1.442695
        %v1905 = vpow.pop %v1904
        %v1906 = vadd.f32 %v1905, 1.0
        %v1907 = vrcp.pop %v1906
        %v1908 = vmul.f32 %v1906, %v1907
        %v1909 = vsub.f32 1.0, %v1908
        %v1910 = vmul.f32 %v1907, %v1909
        %v1911 = vadd.f32 %v1907, %v1910
        %vm1912 = vweird.f32 %v1906
        %vm1913 = vweird.f32 %v1907
        %vm1914 = vmor %vm1912, %vm1913
        %v1915 = vsel %vm1914, %v1907, %v1911
        %v1916 = vand.u32 2147483647, %v1906
        %vm1917 = vcmp.eq.f32.partialorder %v1916, 8.507059e+37
        %v1918 = vand.u32 %v1906, 2147483648
        %v1919 = vor.u32 1.1754944e-38, %v1918
        %v1920 = vsel %vm1917, %v1919, %v1915
        %v1921 = vmul.f32 1.0, %v1920
        %v1922 = vmul.f32 %v1902, %v1921
        %1923 = vst.msk [vmem:[#allocation3 + $0x8] sm:$0xff] %vm1038, %v1922
        %s1924 = scalar_lea.vmem [#allocation4], 32
        %1925 = vst.msk [vmem:[%s1924 + $0x1] sm:$0xff] %vm1038, %v1922
        %v1926 = vld [vmem:[%s1766] sm:$0xff]
        %v1927 = vld [vmem:[%s1766 + $0x8] sm:$0x7f]
        %v1928 = vld [vmem:[%s7] sm:$0x7]
        %v1929 = vld [vmem:[%s1766 + $0x1] sm:$0xff]
        %v1930 = vld [vmem:[%s1766 + $0x9] sm:$0x7f]
        %v1931 = vld [vmem:[%s1153] sm:$0x7]
        %v1933 = vsel %vm985, %v1929, 0
        %v1936 = vsel %vm985, %v1930, 0
        %v1939 = vsel %vm1161, %v1931, 0
        %1941 = vmatpush.msra.mxu0 0.0
        %1942 = vmatpush.msra.mxu0 0.0
        %1943 = vmatpush.msra.mxu0 0.0
        %1944 = vmatpush.msra.mxu0 0.0
        %1945 = vmatpush.msra.mxu0 0.0
        %1946 = vmatpush.msra.mxu0 0.0
        %1947 = vmatpush.msra.mxu0 0.0
        %1948 = vmatpush.msra.mxu0 0.0
        %1949 = vmatpush.msra.mxu0 0.0
        %1950 = vmatpush.msra.mxu0 0.0
        %1951 = vmatpush.msra.mxu0 0.0
        %1952 = vmatpush.msra.mxu0 0.0
        %1953 = vmatpush.msra.mxu0 0.0
        %1954 = vmatpush.msra.mxu0 0.0
        %1955 = vmatpush.msra.mxu0 0.0
        %1956 = vmatpush.msra.mxu0 %v1939
        %1957 = vmatmul.f32.gmra.mxu0 %v1933
        %v1958 = vpop.f32.mrf.mxu0
        %v1959 = vadd.f32 0.0, %v1958
        %1960 = vmatmul.f32.gmra.mxu0 %v1936
        %v1961 = vpop.f32.mrf.mxu0
        %v1962 = vadd.f32 0.0, %v1961
        %1963 = vdwg.mxu0
        %v1965 = vsel %vm985, %v1926, 0
        %v1968 = vsel %vm985, %v1927, 0
        %v1971 = vsel %vm1161, %v1928, 0
        %1973 = vmatpush.msra.mxu0 0.0
        %1974 = vmatpush.msra.mxu0 0.0
        %1975 = vmatpush.msra.mxu0 0.0
        %1976 = vmatpush.msra.mxu0 0.0
        %1977 = vmatpush.msra.mxu0 0.0
        %1978 = vmatpush.msra.mxu0 0.0
        %1979 = vmatpush.msra.mxu0 0.0
        %1980 = vmatpush.msra.mxu0 0.0
        %1981 = vmatpush.msra.mxu0 0.0
        %1982 = vmatpush.msra.mxu0 0.0
        %1983 = vmatpush.msra.mxu0 0.0
        %1984 = vmatpush.msra.mxu0 0.0
        %1985 = vmatpush.msra.mxu0 0.0
        %1986 = vmatpush.msra.mxu0 0.0
        %1987 = vmatpush.msra.mxu0 0.0
        %1988 = vmatpush.msra.mxu0 %v1971
        %1989 = vmatmul.f32.gmra.mxu0 %v1965
        %v1990 = vpop.f32.mrf.mxu0
        %v1991 = vadd.f32 %v1959, %v1990
        %1992 = vmatmul.f32.gmra.mxu0 %v1968
        %v1993 = vpop.f32.mrf.mxu0
        %v1994 = vadd.f32 %v1962, %v1993
        %1995 = vdwg.mxu0
        %v1996 = vld [vmem:[%s1766 + $0x2] sm:$0xff]
        %v1997 = vld [vmem:[%s1766 + $0xa] sm:$0x7f]
        %v1998 = vld [vmem:[%s1222] sm:$0x7]
        %v2000 = vsel %vm985, %v1996, 0
        %v2003 = vsel %vm985, %v1997, 0
        %v2006 = vsel %vm1161, %v1998, 0
        %2008 = vmatpush.msra.mxu0 0.0
        %2009 = vmatpush.msra.mxu0 0.0
        %2010 = vmatpush.msra.mxu0 0.0
        %2011 = vmatpush.msra.mxu0 0.0
        %2012 = vmatpush.msra.mxu0 0.0
        %2013 = vmatpush.msra.mxu0 0.0
        %2014 = vmatpush.msra.mxu0 0.0
        %2015 = vmatpush.msra.mxu0 0.0
        %2016 = vmatpush.msra.mxu0 0.0
        %2017 = vmatpush.msra.mxu0 0.0
        %2018 = vmatpush.msra.mxu0 0.0
        %2019 = vmatpush.msra.mxu0 0.0
        %2020 = vmatpush.msra.mxu0 0.0
        %2021 = vmatpush.msra.mxu0 0.0
        %2022 = vmatpush.msra.mxu0 0.0
        %2023 = vmatpush.msra.mxu0 %v2006
        %2024 = vmatmul.f32.gmra.mxu0 %v2000
        %v2025 = vpop.f32.mrf.mxu0
        %v2026 = vadd.f32 0.0, %v2025
        %2027 = vmatmul.f32.gmra.mxu0 %v2003
        %v2028 = vpop.f32.mrf.mxu0
        %v2029 = vadd.f32 0.0, %v2028
        %2030 = vdwg.mxu0
        %v2031 = vadd.f32 %v1991, %v2026
        %v2032 = vadd.f32 %v1994, %v2029
        %s2033 = scalar_lea.vmem [#allocation2], 120
        %v2034 = vld [vmem:[%s2033] sm:$0xff]
        %v2035 = vld [vmem:[%s2033 + $0x8] sm:$0x7f]
        %v2036 = vld [vmem:[%s1261] sm:$0x7]
        %v2038 = vsel %vm985, %v2034, 0
        %v2041 = vsel %vm985, %v2035, 0
        %v2044 = vsel %vm1161, %v2036, 0
        %2046 = vmatpush.msra.mxu0 0.0
        %2047 = vmatpush.msra.mxu0 0.0
        %2048 = vmatpush.msra.mxu0 0.0
        %2049 = vmatpush.msra.mxu0 0.0
        %2050 = vmatpush.msra.mxu0 0.0
        %2051 = vmatpush.msra.mxu0 0.0
        %2052 = vmatpush.msra.mxu0 0.0
        %2053 = vmatpush.msra.mxu0 0.0
        %2054 = vmatpush.msra.mxu0 0.0
        %2055 = vmatpush.msra.mxu0 0.0
        %2056 = vmatpush.msra.mxu0 0.0
        %2057 = vmatpush.msra.mxu0 0.0
        %2058 = vmatpush.msra.mxu0 0.0
        %2059 = vmatpush.msra.mxu0 0.0
        %2060 = vmatpush.msra.mxu0 0.0
        %2061 = vmatpush.msra.mxu0 %v2044
        %2062 = vmatmul.f32.gmra.mxu0 %v2038
        %v2063 = vpop.f32.mrf.mxu0
        %v2064 = vadd.f32 0.0, %v2063
        %2065 = vmatmul.f32.gmra.mxu0 %v2041
        %v2066 = vpop.f32.mrf.mxu0
        %v2067 = vadd.f32 0.0, %v2066
        %2068 = vdwg.mxu0
        %v2069 = vadd.f32 %v2031, %v2064
        %v2070 = vadd.f32 %v2032, %v2067
        %v2071 = vld [vmem:[%s2033 + $0x1] sm:$0xff]
        %v2072 = vld [vmem:[%s2033 + $0x9] sm:$0x7f]
        %v2073 = vld [vmem:[%s1299] sm:$0x7]
        %v2075 = vsel %vm985, %v2071, 0
        %v2078 = vsel %vm985, %v2072, 0
        %v2081 = vsel %vm1161, %v2073, 0
        %2083 = vmatpush.msra.mxu0 0.0
        %2084 = vmatpush.msra.mxu0 0.0
        %2085 = vmatpush.msra.mxu0 0.0
        %2086 = vmatpush.msra.mxu0 0.0
        %2087 = vmatpush.msra.mxu0 0.0
        %2088 = vmatpush.msra.mxu0 0.0
        %2089 = vmatpush.msra.mxu0 0.0
        %2090 = vmatpush.msra.mxu0 0.0
        %2091 = vmatpush.msra.mxu0 0.0
        %2092 = vmatpush.msra.mxu0 0.0
        %2093 = vmatpush.msra.mxu0 0.0
        %2094 = vmatpush.msra.mxu0 0.0
        %2095 = vmatpush.msra.mxu0 0.0
        %2096 = vmatpush.msra.mxu0 0.0
        %2097 = vmatpush.msra.mxu0 0.0
        %2098 = vmatpush.msra.mxu0 %v2081
        %2099 = vmatmul.f32.gmra.mxu0 %v2075
        %v2100 = vpop.f32.mrf.mxu0
        %v2101 = vadd.f32 0.0, %v2100
        %2102 = vmatmul.f32.gmra.mxu0 %v2078
        %v2103 = vpop.f32.mrf.mxu0
        %v2104 = vadd.f32 0.0, %v2103
        %2105 = vdwg.mxu0
        %v2106 = vadd.f32 %v2069, %v2101
        %v2107 = vadd.f32 %v2070, %v2104
        %v2108 = vld [vmem:[%s2033 + $0x2] sm:$0xff]
        %v2109 = vld [vmem:[%s2033 + $0xa] sm:$0x7f]
        %v2110 = vld [vmem:[%s1337] sm:$0x7]
        %v2112 = vsel %vm985, %v2108, 0
        %v2115 = vsel %vm985, %v2109, 0
        %v2118 = vsel %vm1161, %v2110, 0
        %2120 = vmatpush.msra.mxu0 0.0
        %2121 = vmatpush.msra.mxu0 0.0
        %2122 = vmatpush.msra.mxu0 0.0
        %2123 = vmatpush.msra.mxu0 0.0
        %2124 = vmatpush.msra.mxu0 0.0
        %2125 = vmatpush.msra.mxu0 0.0
        %2126 = vmatpush.msra.mxu0 0.0
        %2127 = vmatpush.msra.mxu0 0.0
        %2128 = vmatpush.msra.mxu0 0.0
        %2129 = vmatpush.msra.mxu0 0.0
        %2130 = vmatpush.msra.mxu0 0.0
        %2131 = vmatpush.msra.mxu0 0.0
        %2132 = vmatpush.msra.mxu0 0.0
        %2133 = vmatpush.msra.mxu0 0.0
        %2134 = vmatpush.msra.mxu0 0.0
        %2135 = vmatpush.msra.mxu0 %v2118
        %2136 = vmatmul.f32.gmra.mxu0 %v2112
        %v2137 = vpop.f32.mrf.mxu0
        %v2138 = vadd.f32 0.0, %v2137
        %2139 = vmatmul.f32.gmra.mxu0 %v2115
        %v2140 = vpop.f32.mrf.mxu0
        %v2141 = vadd.f32 0.0, %v2140
        %2142 = vdwg.mxu0
        %v2143 = vadd.f32 %v2106, %v2138
        %v2144 = vadd.f32 %v2107, %v2141
        %s2145 = scalar_lea.vmem [#allocation2], 144
        %v2146 = vld [vmem:[%s2145] sm:$0xff]
        %v2147 = vld [vmem:[%s2145 + $0x8] sm:$0x7f]
        %v2148 = vld [vmem:[%s1376] sm:$0x7]
        %v2150 = vsel %vm985, %v2146, 0
        %v2153 = vsel %vm985, %v2147, 0
        %v2156 = vsel %vm1161, %v2148, 0
        %2158 = vmatpush.msra.mxu0 0.0
        %2159 = vmatpush.msra.mxu0 0.0
        %2160 = vmatpush.msra.mxu0 0.0
        %2161 = vmatpush.msra.mxu0 0.0
        %2162 = vmatpush.msra.mxu0 0.0
        %2163 = vmatpush.msra.mxu0 0.0
        %2164 = vmatpush.msra.mxu0 0.0
        %2165 = vmatpush.msra.mxu0 0.0
        %2166 = vmatpush.msra.mxu0 0.0
        %2167 = vmatpush.msra.mxu0 0.0
        %2168 = vmatpush.msra.mxu0 0.0
        %2169 = vmatpush.msra.mxu0 0.0
        %2170 = vmatpush.msra.mxu0 0.0
        %2171 = vmatpush.msra.mxu0 0.0
        %2172 = vmatpush.msra.mxu0 0.0
        %2173 = vmatpush.msra.mxu0 %v2156
        %2174 = vmatmul.f32.gmra.mxu0 %v2150
        %v2175 = vpop.f32.mrf.mxu0
        %v2176 = vadd.f32 0.0, %v2175
        %2177 = vmatmul.f32.gmra.mxu0 %v2153
        %v2178 = vpop.f32.mrf.mxu0
        %v2179 = vadd.f32 0.0, %v2178
        %2180 = vdwg.mxu0
        %v2181 = vadd.f32 %v2143, %v2176
        %v2182 = vadd.f32 %v2144, %v2179
        %v2183 = vld [vmem:[%s2145 + $0x1] sm:$0xff]
        %v2184 = vld [vmem:[%s2145 + $0x9] sm:$0x7f]
        %v2185 = vld [vmem:[%s1414] sm:$0x7]
        %v2187 = vsel %vm985, %v2183, 0
        %v2190 = vsel %vm985, %v2184, 0
        %v2193 = vsel %vm1161, %v2185, 0
        %2195 = vmatpush.msra.mxu0 0.0
        %2196 = vmatpush.msra.mxu0 0.0
        %2197 = vmatpush.msra.mxu0 0.0
        %2198 = vmatpush.msra.mxu0 0.0
        %2199 = vmatpush.msra.mxu0 0.0
        %2200 = vmatpush.msra.mxu0 0.0
        %2201 = vmatpush.msra.mxu0 0.0
        %2202 = vmatpush.msra.mxu0 0.0
        %2203 = vmatpush.msra.mxu0 0.0
        %2204 = vmatpush.msra.mxu0 0.0
        %2205 = vmatpush.msra.mxu0 0.0
        %2206 = vmatpush.msra.mxu0 0.0
        %2207 = vmatpush.msra.mxu0 0.0
        %2208 = vmatpush.msra.mxu0 0.0
        %2209 = vmatpush.msra.mxu0 0.0
        %2210 = vmatpush.msra.mxu0 %v2193
        %2211 = vmatmul.f32.gmra.mxu0 %v2187
        %v2212 = vpop.f32.mrf.mxu0
        %v2213 = vadd.f32 0.0, %v2212
        %2214 = vmatmul.f32.gmra.mxu0 %v2190
        %v2215 = vpop.f32.mrf.mxu0
        %v2216 = vadd.f32 0.0, %v2215
        %2217 = vdwg.mxu0
        %v2218 = vadd.f32 %v2181, %v2213
        %v2219 = vadd.f32 %v2182, %v2216
        %v2220 = vld [vmem:[%s2145 + $0x2] sm:$0xff]
        %v2221 = vld [vmem:[%s2145 + $0xa] sm:$0x7f]
        %v2222 = vld [vmem:[%s1452] sm:$0x7]
        %v2224 = vsel %vm985, %v2220, 0
        %v2227 = vsel %vm985, %v2221, 0
        %v2230 = vsel %vm1161, %v2222, 0
        %2232 = vmatpush.msra.mxu0 0.0
        %2233 = vmatpush.msra.mxu0 0.0
        %2234 = vmatpush.msra.mxu0 0.0
        %2235 = vmatpush.msra.mxu0 0.0
        %2236 = vmatpush.msra.mxu0 0.0
        %2237 = vmatpush.msra.mxu0 0.0
        %2238 = vmatpush.msra.mxu0 0.0
        %2239 = vmatpush.msra.mxu0 0.0
        %2240 = vmatpush.msra.mxu0 0.0
        %2241 = vmatpush.msra.mxu0 0.0
        %2242 = vmatpush.msra.mxu0 0.0
        %2243 = vmatpush.msra.mxu0 0.0
        %2244 = vmatpush.msra.mxu0 0.0
        %2245 = vmatpush.msra.mxu0 0.0
        %2246 = vmatpush.msra.mxu0 0.0
        %2247 = vmatpush.msra.mxu0 %v2230
        %2248 = vmatmul.f32.gmra.mxu0 %v2224
        %v2249 = vpop.f32.mrf.mxu0
        %v2250 = vadd.f32 0.0, %v2249
        %2251 = vmatmul.f32.gmra.mxu0 %v2227
        %v2252 = vpop.f32.mrf.mxu0
        %v2253 = vadd.f32 0.0, %v2252
        %2254 = vdwg.mxu0
        %v2255 = vadd.f32 %v2218, %v2250
        %v2256 = vadd.f32 %v2219, %v2253
        %v2258 = vsel %vm1492, %v2256, 0
        %2260 = vmatpush.msra.mxu0 0.0
        %2261 = vmatpush.msra.mxu0 0.0
        %2262 = vmatpush.msra.mxu0 0.0
        %2263 = vmatpush.msra.mxu0 0.0
        %2264 = vmatpush.msra.mxu0 0.0
        %2265 = vmatpush.msra.mxu0 0.0
        %2266 = vmatpush.msra.mxu0 0.0
        %2267 = vmatpush.msra.mxu0 0.0
        %2268 = vmatpush.msra.mxu0 0.0
        %2269 = vmatpush.msra.mxu0 0.0
        %2270 = vmatpush.msra.mxu0 0.0
        %2271 = vmatpush.msra.mxu0 0.0
        %2272 = vmatpush.msra.mxu0 0.0
        %2273 = vmatpush.msra.mxu0 0.0
        %2274 = vmatpush.msra.mxu0 %v2258
        %2275 = vmatpush.msra.mxu0 %v2255
        %2276 = vmatmul.f32.gmra.mxu0 %v1490
        %v2277 = vpop.f32.mrf.mxu0
        %v2278 = vadd.f32 0.0, %v2277
        %2279 = vdwg.mxu0
        %v2280 = vmul.f32 %v2278, %v1517
        %v2281 = vadd.f32 %v2280, %v1521
        %v2282 = vxor.u32 %v2281, 2147483648
        %v2283 = vmul.f32 %v2282, 1.442695
        %v2284 = vpow.pop %v2283
        %v2285 = vadd.f32 %v2284, 1.0
        %v2286 = vrcp.pop %v2285
        %v2287 = vmul.f32 %v2285, %v2286
        %v2288 = vsub.f32 1.0, %v2287
        %v2289 = vmul.f32 %v2286, %v2288
        %v2290 = vadd.f32 %v2286, %v2289
        %vm2291 = vweird.f32 %v2285
        %vm2292 = vweird.f32 %v2286
        %vm2293 = vmor %vm2291, %vm2292
        %v2294 = vsel %vm2293, %v2286, %v2290
        %v2295 = vand.u32 2147483647, %v2285
        %vm2296 = vcmp.eq.f32.partialorder %v2295, 8.507059e+37
        %v2297 = vand.u32 %v2285, 2147483648
        %v2298 = vor.u32 1.1754944e-38, %v2297
        %v2299 = vsel %vm2296, %v2298, %v2294
        %v2300 = vmul.f32 1.0, %v2299
        %v2301 = vmul.f32 %v2281, %v2300
        %2302 = vst.msk [vmem:[#allocation3 + $0x10] sm:$0xff] %vm1038, %v2301
        %s2303 = scalar_lea.vmem [#allocation4], 48
        %2304 = vst.msk [vmem:[%s2303 + $0x1] sm:$0xff] %vm1038, %v2301
        %v2305 = vld [vmem:[%s2145] sm:$0xff]
        %v2306 = vld [vmem:[%s2145 + $0x8] sm:$0x7f]
        %v2307 = vld [vmem:[%s7] sm:$0x7]
        %v2308 = vld [vmem:[%s2145 + $0x1] sm:$0xff]
        %v2309 = vld [vmem:[%s2145 + $0x9] sm:$0x7f]
        %v2310 = vld [vmem:[%s1153] sm:$0x7]
        %v2312 = vsel %vm985, %v2308, 0
        %v2315 = vsel %vm985, %v2309, 0
        %v2318 = vsel %vm1161, %v2310, 0
        %2320 = vmatpush.msra.mxu0 0.0
        %2321 = vmatpush.msra.mxu0 0.0
        %2322 = vmatpush.msra.mxu0 0.0
        %2323 = vmatpush.msra.mxu0 0.0
        %2324 = vmatpush.msra.mxu0 0.0
        %2325 = vmatpush.msra.mxu0 0.0
        %2326 = vmatpush.msra.mxu0 0.0
        %2327 = vmatpush.msra.mxu0 0.0
        %2328 = vmatpush.msra.mxu0 0.0
        %2329 = vmatpush.msra.mxu0 0.0
        %2330 = vmatpush.msra.mxu0 0.0
        %2331 = vmatpush.msra.mxu0 0.0
        %2332 = vmatpush.msra.mxu0 0.0
        %2333 = vmatpush.msra.mxu0 0.0
        %2334 = vmatpush.msra.mxu0 0.0
        %2335 = vmatpush.msra.mxu0 %v2318
        %2336 = vmatmul.f32.gmra.mxu0 %v2312
        %v2337 = vpop.f32.mrf.mxu0
        %v2338 = vadd.f32 0.0, %v2337
        %2339 = vmatmul.f32.gmra.mxu0 %v2315
        %v2340 = vpop.f32.mrf.mxu0
        %v2341 = vadd.f32 0.0, %v2340
        %2342 = vdwg.mxu0
        %v2344 = vsel %vm985, %v2305, 0
        %v2347 = vsel %vm985, %v2306, 0
        %v2350 = vsel %vm1161, %v2307, 0
        %2352 = vmatpush.msra.mxu0 0.0
        %2353 = vmatpush.msra.mxu0 0.0
        %2354 = vmatpush.msra.mxu0 0.0
        %2355 = vmatpush.msra.mxu0 0.0
        %2356 = vmatpush.msra.mxu0 0.0
        %2357 = vmatpush.msra.mxu0 0.0
        %2358 = vmatpush.msra.mxu0 0.0
        %2359 = vmatpush.msra.mxu0 0.0
        %2360 = vmatpush.msra.mxu0 0.0
        %2361 = vmatpush.msra.mxu0 0.0
        %2362 = vmatpush.msra.mxu0 0.0
        %2363 = vmatpush.msra.mxu0 0.0
        %2364 = vmatpush.msra.mxu0 0.0
        %2365 = vmatpush.msra.mxu0 0.0
        %2366 = vmatpush.msra.mxu0 0.0
        %2367 = vmatpush.msra.mxu0 %v2350
        %2368 = vmatmul.f32.gmra.mxu0 %v2344
        %v2369 = vpop.f32.mrf.mxu0
        %v2370 = vadd.f32 %v2338, %v2369
        %2371 = vmatmul.f32.gmra.mxu0 %v2347
        %v2372 = vpop.f32.mrf.mxu0
        %v2373 = vadd.f32 %v2341, %v2372
        %2374 = vdwg.mxu0
        %v2375 = vld [vmem:[%s2145 + $0x2] sm:$0xff]
        %v2376 = vld [vmem:[%s2145 + $0xa] sm:$0x7f]
        %v2377 = vld [vmem:[%s1222] sm:$0x7]
        %v2379 = vsel %vm985, %v2375, 0
        %v2382 = vsel %vm985, %v2376, 0
        %v2385 = vsel %vm1161, %v2377, 0
        %2387 = vmatpush.msra.mxu0 0.0
        %2388 = vmatpush.msra.mxu0 0.0
        %2389 = vmatpush.msra.mxu0 0.0
        %2390 = vmatpush.msra.mxu0 0.0
        %2391 = vmatpush.msra.mxu0 0.0
        %2392 = vmatpush.msra.mxu0 0.0
        %2393 = vmatpush.msra.mxu0 0.0
        %2394 = vmatpush.msra.mxu0 0.0
        %2395 = vmatpush.msra.mxu0 0.0
        %2396 = vmatpush.msra.mxu0 0.0
        %2397 = vmatpush.msra.mxu0 0.0
        %2398 = vmatpush.msra.mxu0 0.0
        %2399 = vmatpush.msra.mxu0 0.0
        %2400 = vmatpush.msra.mxu0 0.0
        %2401 = vmatpush.msra.mxu0 0.0
        %2402 = vmatpush.msra.mxu0 %v2385
        %2403 = vmatmul.f32.gmra.mxu0 %v2379
        %v2404 = vpop.f32.mrf.mxu0
        %v2405 = vadd.f32 0.0, %v2404
        %2406 = vmatmul.f32.gmra.mxu0 %v2382
        %v2407 = vpop.f32.mrf.mxu0
        %v2408 = vadd.f32 0.0, %v2407
        %2409 = vdwg.mxu0
        %v2410 = vadd.f32 %v2370, %v2405
        %v2411 = vadd.f32 %v2373, %v2408
        %s2412 = scalar_lea.vmem [#allocation2], 168
        %v2413 = vld [vmem:[%s2412] sm:$0xff]
        %v2414 = vld [vmem:[%s2412 + $0x8] sm:$0x7f]
        %v2415 = vld [vmem:[%s1261] sm:$0x7]
        %v2417 = vsel %vm985, %v2413, 0
        %v2420 = vsel %vm985, %v2414, 0
        %v2423 = vsel %vm1161, %v2415, 0
        %2425 = vmatpush.msra.mxu0 0.0
        %2426 = vmatpush.msra.mxu0 0.0
        %2427 = vmatpush.msra.mxu0 0.0
        %2428 = vmatpush.msra.mxu0 0.0
        %2429 = vmatpush.msra.mxu0 0.0
        %2430 = vmatpush.msra.mxu0 0.0
        %2431 = vmatpush.msra.mxu0 0.0
        %2432 = vmatpush.msra.mxu0 0.0
        %2433 = vmatpush.msra.mxu0 0.0
        %2434 = vmatpush.msra.mxu0 0.0
        %2435 = vmatpush.msra.mxu0 0.0
        %2436 = vmatpush.msra.mxu0 0.0
        %2437 = vmatpush.msra.mxu0 0.0
        %2438 = vmatpush.msra.mxu0 0.0
        %2439 = vmatpush.msra.mxu0 0.0
        %2440 = vmatpush.msra.mxu0 %v2423
        %2441 = vmatmul.f32.gmra.mxu0 %v2417
        %v2442 = vpop.f32.mrf.mxu0
        %v2443 = vadd.f32 0.0, %v2442
        %2444 = vmatmul.f32.gmra.mxu0 %v2420
        %v2445 = vpop.f32.mrf.mxu0
        %v2446 = vadd.f32 0.0, %v2445
        %2447 = vdwg.mxu0
        %v2448 = vadd.f32 %v2410, %v2443
        %v2449 = vadd.f32 %v2411, %v2446
        %v2450 = vld [vmem:[%s2412 + $0x1] sm:$0xff]
        %v2451 = vld [vmem:[%s2412 + $0x9] sm:$0x7f]
        %v2452 = vld [vmem:[%s1299] sm:$0x7]
        %v2454 = vsel %vm985, %v2450, 0
        %v2457 = vsel %vm985, %v2451, 0
        %v2460 = vsel %vm1161, %v2452, 0
        %2462 = vmatpush.msra.mxu0 0.0
        %2463 = vmatpush.msra.mxu0 0.0
        %2464 = vmatpush.msra.mxu0 0.0
        %2465 = vmatpush.msra.mxu0 0.0
        %2466 = vmatpush.msra.mxu0 0.0
        %2467 = vmatpush.msra.mxu0 0.0
        %2468 = vmatpush.msra.mxu0 0.0
        %2469 = vmatpush.msra.mxu0 0.0
        %2470 = vmatpush.msra.mxu0 0.0
        %2471 = vmatpush.msra.mxu0 0.0
        %2472 = vmatpush.msra.mxu0 0.0
        %2473 = vmatpush.msra.mxu0 0.0
        %2474 = vmatpush.msra.mxu0 0.0
        %2475 = vmatpush.msra.mxu0 0.0
        %2476 = vmatpush.msra.mxu0 0.0
        %2477 = vmatpush.msra.mxu0 %v2460
        %2478 = vmatmul.f32.gmra.mxu0 %v2454
        %v2479 = vpop.f32.mrf.mxu0
        %v2480 = vadd.f32 0.0, %v2479
        %2481 = vmatmul.f32.gmra.mxu0 %v2457
        %v2482 = vpop.f32.mrf.mxu0
        %v2483 = vadd.f32 0.0, %v2482
        %2484 = vdwg.mxu0
        %v2485 = vadd.f32 %v2448, %v2480
        %v2486 = vadd.f32 %v2449, %v2483
        %v2487 = vld [vmem:[%s2412 + $0x2] sm:$0xff]
        %v2488 = vld [vmem:[%s2412 + $0xa] sm:$0x7f]
        %v2489 = vld [vmem:[%s1337] sm:$0x7]
        %v2491 = vsel %vm985, %v2487, 0
        %v2494 = vsel %vm985, %v2488, 0
        %v2497 = vsel %vm1161, %v2489, 0
        %2499 = vmatpush.msra.mxu0 0.0
        %2500 = vmatpush.msra.mxu0 0.0
        %2501 = vmatpush.msra.mxu0 0.0
        %2502 = vmatpush.msra.mxu0 0.0
        %2503 = vmatpush.msra.mxu0 0.0
        %2504 = vmatpush.msra.mxu0 0.0
        %2505 = vmatpush.msra.mxu0 0.0
        %2506 = vmatpush.msra.mxu0 0.0
        %2507 = vmatpush.msra.mxu0 0.0
        %2508 = vmatpush.msra.mxu0 0.0
        %2509 = vmatpush.msra.mxu0 0.0
        %2510 = vmatpush.msra.mxu0 0.0
        %2511 = vmatpush.msra.mxu0 0.0
        %2512 = vmatpush.msra.mxu0 0.0
        %2513 = vmatpush.msra.mxu0 0.0
        %2514 = vmatpush.msra.mxu0 %v2497
        %2515 = vmatmul.f32.gmra.mxu0 %v2491
        %v2516 = vpop.f32.mrf.mxu0
        %v2517 = vadd.f32 0.0, %v2516
        %2518 = vmatmul.f32.gmra.mxu0 %v2494
        %v2519 = vpop.f32.mrf.mxu0
        %v2520 = vadd.f32 0.0, %v2519
        %2521 = vdwg.mxu0
        %v2522 = vadd.f32 %v2485, %v2517
        %v2523 = vadd.f32 %v2486, %v2520
        %s2524 = scalar_lea.vmem [#allocation2], 192
        %v2525 = vld [vmem:[%s2524] sm:$0xff]
        %v2526 = vld [vmem:[%s2524 + $0x8] sm:$0x7f]
        %v2527 = vld [vmem:[%s1376] sm:$0x7]
        %v2529 = vsel %vm985, %v2525, 0
        %v2532 = vsel %vm985, %v2526, 0
        %v2535 = vsel %vm1161, %v2527, 0
        %2537 = vmatpush.msra.mxu0 0.0
        %2538 = vmatpush.msra.mxu0 0.0
        %2539 = vmatpush.msra.mxu0 0.0
        %2540 = vmatpush.msra.mxu0 0.0
        %2541 = vmatpush.msra.mxu0 0.0
        %2542 = vmatpush.msra.mxu0 0.0
        %2543 = vmatpush.msra.mxu0 0.0
        %2544 = vmatpush.msra.mxu0 0.0
        %2545 = vmatpush.msra.mxu0 0.0
        %2546 = vmatpush.msra.mxu0 0.0
        %2547 = vmatpush.msra.mxu0 0.0
        %2548 = vmatpush.msra.mxu0 0.0
        %2549 = vmatpush.msra.mxu0 0.0
        %2550 = vmatpush.msra.mxu0 0.0
        %2551 = vmatpush.msra.mxu0 0.0
        %2552 = vmatpush.msra.mxu0 %v2535
        %2553 = vmatmul.f32.gmra.mxu0 %v2529
        %v2554 = vpop.f32.mrf.mxu0
        %v2555 = vadd.f32 0.0, %v2554
        %2556 = vmatmul.f32.gmra.mxu0 %v2532
        %v2557 = vpop.f32.mrf.mxu0
        %v2558 = vadd.f32 0.0, %v2557
        %2559 = vdwg.mxu0
        %v2560 = vadd.f32 %v2522, %v2555
        %v2561 = vadd.f32 %v2523, %v2558
        %v2562 = vld [vmem:[%s2524 + $0x1] sm:$0xff]
        %v2563 = vld [vmem:[%s2524 + $0x9] sm:$0x7f]
        %v2564 = vld [vmem:[%s1414] sm:$0x7]
        %v2566 = vsel %vm985, %v2562, 0
        %v2569 = vsel %vm985, %v2563, 0
        %v2572 = vsel %vm1161, %v2564, 0
        %2574 = vmatpush.msra.mxu0 0.0
        %2575 = vmatpush.msra.mxu0 0.0
        %2576 = vmatpush.msra.mxu0 0.0
        %2577 = vmatpush.msra.mxu0 0.0
        %2578 = vmatpush.msra.mxu0 0.0
        %2579 = vmatpush.msra.mxu0 0.0
        %2580 = vmatpush.msra.mxu0 0.0
        %2581 = vmatpush.msra.mxu0 0.0
        %2582 = vmatpush.msra.mxu0 0.0
        %2583 = vmatpush.msra.mxu0 0.0
        %2584 = vmatpush.msra.mxu0 0.0
        %2585 = vmatpush.msra.mxu0 0.0
        %2586 = vmatpush.msra.mxu0 0.0
        %2587 = vmatpush.msra.mxu0 0.0
        %2588 = vmatpush.msra.mxu0 0.0
        %2589 = vmatpush.msra.mxu0 %v2572
        %2590 = vmatmul.f32.gmra.mxu0 %v2566
        %v2591 = vpop.f32.mrf.mxu0
        %v2592 = vadd.f32 0.0, %v2591
        %2593 = vmatmul.f32.gmra.mxu0 %v2569
        %v2594 = vpop.f32.mrf.mxu0
        %v2595 = vadd.f32 0.0, %v2594
        %2596 = vdwg.mxu0
        %v2597 = vadd.f32 %v2560, %v2592
        %v2598 = vadd.f32 %v2561, %v2595
        %v2599 = vld [vmem:[%s2524 + $0x2] sm:$0xff]
        %v2600 = vld [vmem:[%s2524 + $0xa] sm:$0x7f]
        %v2601 = vld [vmem:[%s1452] sm:$0x7]
        %v2603 = vsel %vm985, %v2599, 0
        %v2606 = vsel %vm985, %v2600, 0
        %v2609 = vsel %vm1161, %v2601, 0
        %2611 = vmatpush.msra.mxu0 0.0
        %2612 = vmatpush.msra.mxu0 0.0
        %2613 = vmatpush.msra.mxu0 0.0
        %2614 = vmatpush.msra.mxu0 0.0
        %2615 = vmatpush.msra.mxu0 0.0
        %2616 = vmatpush.msra.mxu0 0.0
        %2617 = vmatpush.msra.mxu0 0.0
        %2618 = vmatpush.msra.mxu0 0.0
        %2619 = vmatpush.msra.mxu0 0.0
        %2620 = vmatpush.msra.mxu0 0.0
        %2621 = vmatpush.msra.mxu0 0.0
        %2622 = vmatpush.msra.mxu0 0.0
        %2623 = vmatpush.msra.mxu0 0.0
        %2624 = vmatpush.msra.mxu0 0.0
        %2625 = vmatpush.msra.mxu0 0.0
        %2626 = vmatpush.msra.mxu0 %v2609
        %2627 = vmatmul.f32.gmra.mxu0 %v2603
        %v2628 = vpop.f32.mrf.mxu0
        %v2629 = vadd.f32 0.0, %v2628
        %2630 = vmatmul.f32.gmra.mxu0 %v2606
        %v2631 = vpop.f32.mrf.mxu0
        %v2632 = vadd.f32 0.0, %v2631
        %2633 = vdwg.mxu0
        %v2634 = vadd.f32 %v2597, %v2629
        %v2635 = vadd.f32 %v2598, %v2632
        %v2637 = vsel %vm1492, %v2635, 0
        %2639 = vmatpush.msra.mxu0 0.0
        %2640 = vmatpush.msra.mxu0 0.0
        %2641 = vmatpush.msra.mxu0 0.0
        %2642 = vmatpush.msra.mxu0 0.0
        %2643 = vmatpush.msra.mxu0 0.0
        %2644 = vmatpush.msra.mxu0 0.0
        %2645 = vmatpush.msra.mxu0 0.0
        %2646 = vmatpush.msra.mxu0 0.0
        %2647 = vmatpush.msra.mxu0 0.0
        %2648 = vmatpush.msra.mxu0 0.0
        %2649 = vmatpush.msra.mxu0 0.0
        %2650 = vmatpush.msra.mxu0 0.0
        %2651 = vmatpush.msra.mxu0 0.0
        %2652 = vmatpush.msra.mxu0 0.0
        %2653 = vmatpush.msra.mxu0 %v2637
        %2654 = vmatpush.msra.mxu0 %v2634
        %2655 = vmatmul.f32.gmra.mxu0 %v1490
        %v2656 = vpop.f32.mrf.mxu0
        %v2657 = vadd.f32 0.0, %v2656
        %2658 = vdwg.mxu0
        %v2659 = vmul.f32 %v2657, %v1517
        %v2660 = vadd.f32 %v2659, %v1521
        %v2661 = vxor.u32 %v2660, 2147483648
        %v2662 = vmul.f32 %v2661, 1.442695
        %v2663 = vpow.pop %v2662
        %v2664 = vadd.f32 %v2663, 1.0
        %v2665 = vrcp.pop %v2664
        %v2666 = vmul.f32 %v2664, %v2665
        %v2667 = vsub.f32 1.0, %v2666
        %v2668 = vmul.f32 %v2665, %v2667
        %v2669 = vadd.f32 %v2665, %v2668
        %vm2670 = vweird.f32 %v2664
        %vm2671 = vweird.f32 %v2665
        %vm2672 = vmor %vm2670, %vm2671
        %v2673 = vsel %vm2672, %v2665, %v2669
        %v2674 = vand.u32 2147483647, %v2664
        %vm2675 = vcmp.eq.f32.partialorder %v2674, 8.507059e+37
        %v2676 = vand.u32 %v2664, 2147483648
        %v2677 = vor.u32 1.1754944e-38, %v2676
        %v2678 = vsel %vm2675, %v2677, %v2673
        %v2679 = vmul.f32 1.0, %v2678
        %v2680 = vmul.f32 %v2660, %v2679
        %2681 = vst.msk [vmem:[#allocation3 + $0x18] sm:$0xff] %vm1038, %v2680
        %s2682 = scalar_lea.vmem [#allocation4], 64
        %2683 = vst.msk [vmem:[%s2682 + $0x1] sm:$0xff] %vm1038, %v2680
        %v2684 = vld [vmem:[%s2524] sm:$0xff]
        %v2685 = vld [vmem:[%s2524 + $0x8] sm:$0x7f]
        %v2686 = vld [vmem:[%s7] sm:$0x7]
        %v2687 = vld [vmem:[%s2524 + $0x1] sm:$0xff]
        %v2688 = vld [vmem:[%s2524 + $0x9] sm:$0x7f]
        %v2689 = vld [vmem:[%s1153] sm:$0x7]
        %v2691 = vsel %vm985, %v2687, 0
        %v2694 = vsel %vm985, %v2688, 0
        %v2697 = vsel %vm1161, %v2689, 0
        %2699 = vmatpush.msra.mxu0 0.0
        %2700 = vmatpush.msra.mxu0 0.0
        %2701 = vmatpush.msra.mxu0 0.0
        %2702 = vmatpush.msra.mxu0 0.0
        %2703 = vmatpush.msra.mxu0 0.0
        %2704 = vmatpush.msra.mxu0 0.0
        %2705 = vmatpush.msra.mxu0 0.0
        %2706 = vmatpush.msra.mxu0 0.0
        %2707 = vmatpush.msra.mxu0 0.0
        %2708 = vmatpush.msra.mxu0 0.0
        %2709 = vmatpush.msra.mxu0 0.0
        %2710 = vmatpush.msra.mxu0 0.0
        %2711 = vmatpush.msra.mxu0 0.0
        %2712 = vmatpush.msra.mxu0 0.0
        %2713 = vmatpush.msra.mxu0 0.0
        %2714 = vmatpush.msra.mxu0 %v2697
        %2715 = vmatmul.f32.gmra.mxu0 %v2691
        %v2716 = vpop.f32.mrf.mxu0
        %v2717 = vadd.f32 0.0, %v2716
        %2718 = vmatmul.f32.gmra.mxu0 %v2694
        %v2719 = vpop.f32.mrf.mxu0
        %v2720 = vadd.f32 0.0, %v2719
        %2721 = vdwg.mxu0
        %v2723 = vsel %vm985, %v2684, 0
        %v2726 = vsel %vm985, %v2685, 0
        %v2729 = vsel %vm1161, %v2686, 0
        %2731 = vmatpush.msra.mxu0 0.0
        %2732 = vmatpush.msra.mxu0 0.0
        %2733 = vmatpush.msra.mxu0 0.0
        %2734 = vmatpush.msra.mxu0 0.0
        %2735 = vmatpush.msra.mxu0 0.0
        %2736 = vmatpush.msra.mxu0 0.0
        %2737 = vmatpush.msra.mxu0 0.0
        %2738 = vmatpush.msra.mxu0 0.0
        %2739 = vmatpush.msra.mxu0 0.0
        %2740 = vmatpush.msra.mxu0 0.0
        %2741 = vmatpush.msra.mxu0 0.0
        %2742 = vmatpush.msra.mxu0 0.0
        %2743 = vmatpush.msra.mxu0 0.0
        %2744 = vmatpush.msra.mxu0 0.0
        %2745 = vmatpush.msra.mxu0 0.0
        %2746 = vmatpush.msra.mxu0 %v2729
        %2747 = vmatmul.f32.gmra.mxu0 %v2723
        %v2748 = vpop.f32.mrf.mxu0
        %v2749 = vadd.f32 %v2717, %v2748
        %2750 = vmatmul.f32.gmra.mxu0 %v2726
        %v2751 = vpop.f32.mrf.mxu0
        %v2752 = vadd.f32 %v2720, %v2751
        %2753 = vdwg.mxu0
        %v2754 = vld [vmem:[%s2524 + $0x2] sm:$0xff]
        %v2755 = vld [vmem:[%s2524 + $0xa] sm:$0x7f]
        %v2756 = vld [vmem:[%s1222] sm:$0x7]
        %v2758 = vsel %vm985, %v2754, 0
        %v2761 = vsel %vm985, %v2755, 0
        %v2764 = vsel %vm1161, %v2756, 0
        %2766 = vmatpush.msra.mxu0 0.0
        %2767 = vmatpush.msra.mxu0 0.0
        %2768 = vmatpush.msra.mxu0 0.0
        %2769 = vmatpush.msra.mxu0 0.0
        %2770 = vmatpush.msra.mxu0 0.0
        %2771 = vmatpush.msra.mxu0 0.0
        %2772 = vmatpush.msra.mxu0 0.0
        %2773 = vmatpush.msra.mxu0 0.0
        %2774 = vmatpush.msra.mxu0 0.0
        %2775 = vmatpush.msra.mxu0 0.0
        %2776 = vmatpush.msra.mxu0 0.0
        %2777 = vmatpush.msra.mxu0 0.0
        %2778 = vmatpush.msra.mxu0 0.0
        %2779 = vmatpush.msra.mxu0 0.0
        %2780 = vmatpush.msra.mxu0 0.0
        %2781 = vmatpush.msra.mxu0 %v2764
        %2782 = vmatmul.f32.gmra.mxu0 %v2758
        %v2783 = vpop.f32.mrf.mxu0
        %v2784 = vadd.f32 0.0, %v2783
        %2785 = vmatmul.f32.gmra.mxu0 %v2761
        %v2786 = vpop.f32.mrf.mxu0
        %v2787 = vadd.f32 0.0, %v2786
        %2788 = vdwg.mxu0
        %v2789 = vadd.f32 %v2749, %v2784
        %v2790 = vadd.f32 %v2752, %v2787
        %s2791 = scalar_lea.vmem [#allocation2], 216
        %v2792 = vld [vmem:[%s2791] sm:$0xff]
        %v2793 = vld [vmem:[%s2791 + $0x8] sm:$0x7f]
        %v2794 = vld [vmem:[%s1261] sm:$0x7]
        %v2796 = vsel %vm985, %v2792, 0
        %v2799 = vsel %vm985, %v2793, 0
        %v2802 = vsel %vm1161, %v2794, 0
        %2804 = vmatpush.msra.mxu0 0.0
        %2805 = vmatpush.msra.mxu0 0.0
        %2806 = vmatpush.msra.mxu0 0.0
        %2807 = vmatpush.msra.mxu0 0.0
        %2808 = vmatpush.msra.mxu0 0.0
        %2809 = vmatpush.msra.mxu0 0.0
        %2810 = vmatpush.msra.mxu0 0.0
        %2811 = vmatpush.msra.mxu0 0.0
        %2812 = vmatpush.msra.mxu0 0.0
        %2813 = vmatpush.msra.mxu0 0.0
        %2814 = vmatpush.msra.mxu0 0.0
        %2815 = vmatpush.msra.mxu0 0.0
        %2816 = vmatpush.msra.mxu0 0.0
        %2817 = vmatpush.msra.mxu0 0.0
        %2818 = vmatpush.msra.mxu0 0.0
        %2819 = vmatpush.msra.mxu0 %v2802
        %2820 = vmatmul.f32.gmra.mxu0 %v2796
        %v2821 = vpop.f32.mrf.mxu0
        %v2822 = vadd.f32 0.0, %v2821
        %2823 = vmatmul.f32.gmra.mxu0 %v2799
        %v2824 = vpop.f32.mrf.mxu0
        %v2825 = vadd.f32 0.0, %v2824
        %2826 = vdwg.mxu0
        %v2827 = vadd.f32 %v2789, %v2822
        %v2828 = vadd.f32 %v2790, %v2825
        %v2829 = vld [vmem:[%s2791 + $0x1] sm:$0xff]
        %v2830 = vld [vmem:[%s2791 + $0x9] sm:$0x7f]
        %v2831 = vld [vmem:[%s1299] sm:$0x7]
        %v2833 = vsel %vm985, %v2829, 0
        %v2836 = vsel %vm985, %v2830, 0
        %v2839 = vsel %vm1161, %v2831, 0
        %2841 = vmatpush.msra.mxu0 0.0
        %2842 = vmatpush.msra.mxu0 0.0
        %2843 = vmatpush.msra.mxu0 0.0
        %2844 = vmatpush.msra.mxu0 0.0
        %2845 = vmatpush.msra.mxu0 0.0
        %2846 = vmatpush.msra.mxu0 0.0
        %2847 = vmatpush.msra.mxu0 0.0
        %2848 = vmatpush.msra.mxu0 0.0
        %2849 = vmatpush.msra.mxu0 0.0
        %2850 = vmatpush.msra.mxu0 0.0
        %2851 = vmatpush.msra.mxu0 0.0
        %2852 = vmatpush.msra.mxu0 0.0
        %2853 = vmatpush.msra.mxu0 0.0
        %2854 = vmatpush.msra.mxu0 0.0
        %2855 = vmatpush.msra.mxu0 0.0
        %2856 = vmatpush.msra.mxu0 %v2839
        %2857 = vmatmul.f32.gmra.mxu0 %v2833
        %v2858 = vpop.f32.mrf.mxu0
        %v2859 = vadd.f32 0.0, %v2858
        %2860 = vmatmul.f32.gmra.mxu0 %v2836
        %v2861 = vpop.f32.mrf.mxu0
        %v2862 = vadd.f32 0.0, %v2861
        %2863 = vdwg.mxu0
        %v2864 = vadd.f32 %v2827, %v2859
        %v2865 = vadd.f32 %v2828, %v2862
        %v2866 = vld [vmem:[%s2791 + $0x2] sm:$0xff]
        %v2867 = vld [vmem:[%s2791 + $0xa] sm:$0x7f]
        %v2868 = vld [vmem:[%s1337] sm:$0x7]
        %v2870 = vsel %vm985, %v2866, 0
        %v2873 = vsel %vm985, %v2867, 0
        %v2876 = vsel %vm1161, %v2868, 0
        %2878 = vmatpush.msra.mxu0 0.0
        %2879 = vmatpush.msra.mxu0 0.0
        %2880 = vmatpush.msra.mxu0 0.0
        %2881 = vmatpush.msra.mxu0 0.0
        %2882 = vmatpush.msra.mxu0 0.0
        %2883 = vmatpush.msra.mxu0 0.0
        %2884 = vmatpush.msra.mxu0 0.0
        %2885 = vmatpush.msra.mxu0 0.0
        %2886 = vmatpush.msra.mxu0 0.0
        %2887 = vmatpush.msra.mxu0 0.0
        %2888 = vmatpush.msra.mxu0 0.0
        %2889 = vmatpush.msra.mxu0 0.0
        %2890 = vmatpush.msra.mxu0 0.0
        %2891 = vmatpush.msra.mxu0 0.0
        %2892 = vmatpush.msra.mxu0 0.0
        %2893 = vmatpush.msra.mxu0 %v2876
        %2894 = vmatmul.f32.gmra.mxu0 %v2870
        %v2895 = vpop.f32.mrf.mxu0
        %v2896 = vadd.f32 0.0, %v2895
        %2897 = vmatmul.f32.gmra.mxu0 %v2873
        %v2898 = vpop.f32.mrf.mxu0
        %v2899 = vadd.f32 0.0, %v2898
        %2900 = vdwg.mxu0
        %v2901 = vadd.f32 %v2864, %v2896
        %v2902 = vadd.f32 %v2865, %v2899
        %s2903 = scalar_lea.vmem [#allocation2], 240
        %v2904 = vld [vmem:[%s2903] sm:$0xff]
        %v2905 = vld [vmem:[%s2903 + $0x8] sm:$0x7f]
        %v2906 = vld [vmem:[%s1376] sm:$0x7]
        %v2908 = vsel %vm985, %v2904, 0
        %v2911 = vsel %vm985, %v2905, 0
        %v2914 = vsel %vm1161, %v2906, 0
        %2916 = vmatpush.msra.mxu0 0.0
        %2917 = vmatpush.msra.mxu0 0.0
        %2918 = vmatpush.msra.mxu0 0.0
        %2919 = vmatpush.msra.mxu0 0.0
        %2920 = vmatpush.msra.mxu0 0.0
        %2921 = vmatpush.msra.mxu0 0.0
        %2922 = vmatpush.msra.mxu0 0.0
        %2923 = vmatpush.msra.mxu0 0.0
        %2924 = vmatpush.msra.mxu0 0.0
        %2925 = vmatpush.msra.mxu0 0.0
        %2926 = vmatpush.msra.mxu0 0.0
        %2927 = vmatpush.msra.mxu0 0.0
        %2928 = vmatpush.msra.mxu0 0.0
        %2929 = vmatpush.msra.mxu0 0.0
        %2930 = vmatpush.msra.mxu0 0.0
        %2931 = vmatpush.msra.mxu0 %v2914
        %2932 = vmatmul.f32.gmra.mxu0 %v2908
        %v2933 = vpop.f32.mrf.mxu0
        %v2934 = vadd.f32 0.0, %v2933
        %2935 = vmatmul.f32.gmra.mxu0 %v2911
        %v2936 = vpop.f32.mrf.mxu0
        %v2937 = vadd.f32 0.0, %v2936
        %2938 = vdwg.mxu0
        %v2939 = vadd.f32 %v2901, %v2934
        %v2940 = vadd.f32 %v2902, %v2937
        %v2941 = vld [vmem:[%s2903 + $0x1] sm:$0xff]
        %v2942 = vld [vmem:[%s2903 + $0x9] sm:$0x7f]
        %v2943 = vld [vmem:[%s1414] sm:$0x7]
        %v2945 = vsel %vm985, %v2941, 0
        %v2948 = vsel %vm985, %v2942, 0
        %v2951 = vsel %vm1161, %v2943, 0
        %2953 = vmatpush.msra.mxu0 0.0
        %2954 = vmatpush.msra.mxu0 0.0
        %2955 = vmatpush.msra.mxu0 0.0
        %2956 = vmatpush.msra.mxu0 0.0
        %2957 = vmatpush.msra.mxu0 0.0
        %2958 = vmatpush.msra.mxu0 0.0
        %2959 = vmatpush.msra.mxu0 0.0
        %2960 = vmatpush.msra.mxu0 0.0
        %2961 = vmatpush.msra.mxu0 0.0
        %2962 = vmatpush.msra.mxu0 0.0
        %2963 = vmatpush.msra.mxu0 0.0
        %2964 = vmatpush.msra.mxu0 0.0
        %2965 = vmatpush.msra.mxu0 0.0
        %2966 = vmatpush.msra.mxu0 0.0
        %2967 = vmatpush.msra.mxu0 0.0
        %2968 = vmatpush.msra.mxu0 %v2951
        %2969 = vmatmul.f32.gmra.mxu0 %v2945
        %v2970 = vpop.f32.mrf.mxu0
        %v2971 = vadd.f32 0.0, %v2970
        %2972 = vmatmul.f32.gmra.mxu0 %v2948
        %v2973 = vpop.f32.mrf.mxu0
        %v2974 = vadd.f32 0.0, %v2973
        %2975 = vdwg.mxu0
        %v2976 = vadd.f32 %v2939, %v2971
        %v2977 = vadd.f32 %v2940, %v2974
        %v2978 = vld [vmem:[%s2903 + $0x2] sm:$0xff]
        %v2979 = vld [vmem:[%s2903 + $0xa] sm:$0x7f]
        %v2980 = vld [vmem:[%s1452] sm:$0x7]
        %v2982 = vsel %vm985, %v2978, 0
        %v2985 = vsel %vm985, %v2979, 0
        %v2988 = vsel %vm1161, %v2980, 0
        %2990 = vmatpush.msra.mxu0 0.0
        %2991 = vmatpush.msra.mxu0 0.0
        %2992 = vmatpush.msra.mxu0 0.0
        %2993 = vmatpush.msra.mxu0 0.0
        %2994 = vmatpush.msra.mxu0 0.0
        %2995 = vmatpush.msra.mxu0 0.0
        %2996 = vmatpush.msra.mxu0 0.0
        %2997 = vmatpush.msra.mxu0 0.0
        %2998 = vmatpush.msra.mxu0 0.0
        %2999 = vmatpush.msra.mxu0 0.0
        %3000 = vmatpush.msra.mxu0 0.0
        %3001 = vmatpush.msra.mxu0 0.0
        %3002 = vmatpush.msra.mxu0 0.0
        %3003 = vmatpush.msra.mxu0 0.0
        %3004 = vmatpush.msra.mxu0 0.0
        %3005 = vmatpush.msra.mxu0 %v2988
        %3006 = vmatmul.f32.gmra.mxu0 %v2982
        %v3007 = vpop.f32.mrf.mxu0
        %v3008 = vadd.f32 0.0, %v3007
        %3009 = vmatmul.f32.gmra.mxu0 %v2985
        %v3010 = vpop.f32.mrf.mxu0
        %v3011 = vadd.f32 0.0, %v3010
        %3012 = vdwg.mxu0
        %v3013 = vadd.f32 %v2976, %v3008
        %v3014 = vadd.f32 %v2977, %v3011
        %v3016 = vsel %vm1492, %v3014, 0
        %3018 = vmatpush.msra.mxu0 0.0
        %3019 = vmatpush.msra.mxu0 0.0
        %3020 = vmatpush.msra.mxu0 0.0
        %3021 = vmatpush.msra.mxu0 0.0
        %3022 = vmatpush.msra.mxu0 0.0
        %3023 = vmatpush.msra.mxu0 0.0
        %3024 = vmatpush.msra.mxu0 0.0
        %3025 = vmatpush.msra.mxu0 0.0
        %3026 = vmatpush.msra.mxu0 0.0
        %3027 = vmatpush.msra.mxu0 0.0
        %3028 = vmatpush.msra.mxu0 0.0
        %3029 = vmatpush.msra.mxu0 0.0
        %3030 = vmatpush.msra.mxu0 0.0
        %3031 = vmatpush.msra.mxu0 0.0
        %3032 = vmatpush.msra.mxu0 %v3016
        %3033 = vmatpush.msra.mxu0 %v3013
        %3034 = vmatmul.f32.gmra.mxu0 %v1490
        %v3035 = vpop.f32.mrf.mxu0
        %v3036 = vadd.f32 0.0, %v3035
        %3037 = vdwg.mxu0
        %v3038 = vmul.f32 %v3036, %v1517
        %v3039 = vadd.f32 %v3038, %v1521
        %v3040 = vxor.u32 %v3039, 2147483648
        %v3041 = vmul.f32 %v3040, 1.442695
        %v3042 = vpow.pop %v3041
        %v3043 = vadd.f32 %v3042, 1.0
        %v3044 = vrcp.pop %v3043
        %v3045 = vmul.f32 %v3043, %v3044
        %v3046 = vsub.f32 1.0, %v3045
        %v3047 = vmul.f32 %v3044, %v3046
        %v3048 = vadd.f32 %v3044, %v3047
        %vm3049 = vweird.f32 %v3043
        %vm3050 = vweird.f32 %v3044
        %vm3051 = vmor %vm3049, %vm3050
        %v3052 = vsel %vm3051, %v3044, %v3048
        %v3053 = vand.u32 2147483647, %v3043
        %vm3054 = vcmp.eq.f32.partialorder %v3053, 8.507059e+37
        %v3055 = vand.u32 %v3043, 2147483648
        %v3056 = vor.u32 1.1754944e-38, %v3055
        %v3057 = vsel %vm3054, %v3056, %v3052
        %v3058 = vmul.f32 1.0, %v3057
        %v3059 = vmul.f32 %v3039, %v3058
        %3060 = vst.msk [vmem:[#allocation3 + $0x20] sm:$0xff] %vm1038, %v3059
        %s3061 = scalar_lea.vmem [#allocation4], 80
        %3062 = vst.msk [vmem:[%s3061 + $0x1] sm:$0xff] %vm1038, %v3059
        %v3063 = vld [vmem:[%s2903] sm:$0xff]
        %v3064 = vld [vmem:[%s2903 + $0x8] sm:$0x7f]
        %v3065 = vld [vmem:[%s7] sm:$0x7]
        %v3066 = vld [vmem:[%s2903 + $0x1] sm:$0xff]
        %v3067 = vld [vmem:[%s2903 + $0x9] sm:$0x7f]
        %v3068 = vld [vmem:[%s1153] sm:$0x7]
        %v3070 = vsel %vm985, %v3066, 0
        %v3073 = vsel %vm985, %v3067, 0
        %v3076 = vsel %vm1161, %v3068, 0
        %3078 = vmatpush.msra.mxu0 0.0
        %3079 = vmatpush.msra.mxu0 0.0
        %3080 = vmatpush.msra.mxu0 0.0
        %3081 = vmatpush.msra.mxu0 0.0
        %3082 = vmatpush.msra.mxu0 0.0
        %3083 = vmatpush.msra.mxu0 0.0
        %3084 = vmatpush.msra.mxu0 0.0
        %3085 = vmatpush.msra.mxu0 0.0
        %3086 = vmatpush.msra.mxu0 0.0
        %3087 = vmatpush.msra.mxu0 0.0
        %3088 = vmatpush.msra.mxu0 0.0
        %3089 = vmatpush.msra.mxu0 0.0
        %3090 = vmatpush.msra.mxu0 0.0
        %3091 = vmatpush.msra.mxu0 0.0
        %3092 = vmatpush.msra.mxu0 0.0
        %3093 = vmatpush.msra.mxu0 %v3076
        %3094 = vmatmul.f32.gmra.mxu0 %v3070
        %v3095 = vpop.f32.mrf.mxu0
        %v3096 = vadd.f32 0.0, %v3095
        %3097 = vmatmul.f32.gmra.mxu0 %v3073
        %v3098 = vpop.f32.mrf.mxu0
        %v3099 = vadd.f32 0.0, %v3098
        %3100 = vdwg.mxu0
        %v3102 = vsel %vm985, %v3063, 0
        %v3105 = vsel %vm985, %v3064, 0
        %v3108 = vsel %vm1161, %v3065, 0
        %3110 = vmatpush.msra.mxu0 0.0
        %3111 = vmatpush.msra.mxu0 0.0
        %3112 = vmatpush.msra.mxu0 0.0
        %3113 = vmatpush.msra.mxu0 0.0
        %3114 = vmatpush.msra.mxu0 0.0
        %3115 = vmatpush.msra.mxu0 0.0
        %3116 = vmatpush.msra.mxu0 0.0
        %3117 = vmatpush.msra.mxu0 0.0
        %3118 = vmatpush.msra.mxu0 0.0
        %3119 = vmatpush.msra.mxu0 0.0
        %3120 = vmatpush.msra.mxu0 0.0
        %3121 = vmatpush.msra.mxu0 0.0
        %3122 = vmatpush.msra.mxu0 0.0
        %3123 = vmatpush.msra.mxu0 0.0
        %3124 = vmatpush.msra.mxu0 0.0
        %3125 = vmatpush.msra.mxu0 %v3108
        %3126 = vmatmul.f32.gmra.mxu0 %v3102
        %v3127 = vpop.f32.mrf.mxu0
        %v3128 = vadd.f32 %v3096, %v3127
        %3129 = vmatmul.f32.gmra.mxu0 %v3105
        %v3130 = vpop.f32.mrf.mxu0
        %v3131 = vadd.f32 %v3099, %v3130
        %3132 = vdwg.mxu0
        %v3133 = vld [vmem:[%s2903 + $0x2] sm:$0xff]
        %v3134 = vld [vmem:[%s2903 + $0xa] sm:$0x7f]
        %v3135 = vld [vmem:[%s1222] sm:$0x7]
        %v3137 = vsel %vm985, %v3133, 0
        %v3140 = vsel %vm985, %v3134, 0
        %v3143 = vsel %vm1161, %v3135, 0
        %3145 = vmatpush.msra.mxu0 0.0
        %3146 = vmatpush.msra.mxu0 0.0
        %3147 = vmatpush.msra.mxu0 0.0
        %3148 = vmatpush.msra.mxu0 0.0
        %3149 = vmatpush.msra.mxu0 0.0
        %3150 = vmatpush.msra.mxu0 0.0
        %3151 = vmatpush.msra.mxu0 0.0
        %3152 = vmatpush.msra.mxu0 0.0
        %3153 = vmatpush.msra.mxu0 0.0
        %3154 = vmatpush.msra.mxu0 0.0
        %3155 = vmatpush.msra.mxu0 0.0
        %3156 = vmatpush.msra.mxu0 0.0
        %3157 = vmatpush.msra.mxu0 0.0
        %3158 = vmatpush.msra.mxu0 0.0
        %3159 = vmatpush.msra.mxu0 0.0
        %3160 = vmatpush.msra.mxu0 %v3143
        %3161 = vmatmul.f32.gmra.mxu0 %v3137
        %v3162 = vpop.f32.mrf.mxu0
        %v3163 = vadd.f32 0.0, %v3162
        %3164 = vmatmul.f32.gmra.mxu0 %v3140
        %v3165 = vpop.f32.mrf.mxu0
        %v3166 = vadd.f32 0.0, %v3165
        %3167 = vdwg.mxu0
        %v3168 = vadd.f32 %v3128, %v3163
        %v3169 = vadd.f32 %v3131, %v3166
        %s3170 = scalar_lea.vmem [#allocation2], 264
        %v3171 = vld [vmem:[%s3170] sm:$0xff]
        %v3172 = vld [vmem:[%s3170 + $0x8] sm:$0x7f]
        %v3173 = vld [vmem:[%s1261] sm:$0x7]
        %v3175 = vsel %vm985, %v3171, 0
        %v3178 = vsel %vm985, %v3172, 0
        %v3181 = vsel %vm1161, %v3173, 0
        %3183 = vmatpush.msra.mxu0 0.0
        %3184 = vmatpush.msra.mxu0 0.0
        %3185 = vmatpush.msra.mxu0 0.0
        %3186 = vmatpush.msra.mxu0 0.0
        %3187 = vmatpush.msra.mxu0 0.0
        %3188 = vmatpush.msra.mxu0 0.0
        %3189 = vmatpush.msra.mxu0 0.0
        %3190 = vmatpush.msra.mxu0 0.0
        %3191 = vmatpush.msra.mxu0 0.0
        %3192 = vmatpush.msra.mxu0 0.0
        %3193 = vmatpush.msra.mxu0 0.0
        %3194 = vmatpush.msra.mxu0 0.0
        %3195 = vmatpush.msra.mxu0 0.0
        %3196 = vmatpush.msra.mxu0 0.0
        %3197 = vmatpush.msra.mxu0 0.0
        %3198 = vmatpush.msra.mxu0 %v3181
        %3199 = vmatmul.f32.gmra.mxu0 %v3175
        %v3200 = vpop.f32.mrf.mxu0
        %v3201 = vadd.f32 0.0, %v3200
        %3202 = vmatmul.f32.gmra.mxu0 %v3178
        %v3203 = vpop.f32.mrf.mxu0
        %v3204 = vadd.f32 0.0, %v3203
        %3205 = vdwg.mxu0
        %v3206 = vadd.f32 %v3168, %v3201
        %v3207 = vadd.f32 %v3169, %v3204
        %v3208 = vld [vmem:[%s3170 + $0x1] sm:$0xff]
        %v3209 = vld [vmem:[%s3170 + $0x9] sm:$0x7f]
        %v3210 = vld [vmem:[%s1299] sm:$0x7]
        %v3212 = vsel %vm985, %v3208, 0
        %v3215 = vsel %vm985, %v3209, 0
        %v3218 = vsel %vm1161, %v3210, 0
        %3220 = vmatpush.msra.mxu0 0.0
        %3221 = vmatpush.msra.mxu0 0.0
        %3222 = vmatpush.msra.mxu0 0.0
        %3223 = vmatpush.msra.mxu0 0.0
        %3224 = vmatpush.msra.mxu0 0.0
        %3225 = vmatpush.msra.mxu0 0.0
        %3226 = vmatpush.msra.mxu0 0.0
        %3227 = vmatpush.msra.mxu0 0.0
        %3228 = vmatpush.msra.mxu0 0.0
        %3229 = vmatpush.msra.mxu0 0.0
        %3230 = vmatpush.msra.mxu0 0.0
        %3231 = vmatpush.msra.mxu0 0.0
        %3232 = vmatpush.msra.mxu0 0.0
        %3233 = vmatpush.msra.mxu0 0.0
        %3234 = vmatpush.msra.mxu0 0.0
        %3235 = vmatpush.msra.mxu0 %v3218
        %3236 = vmatmul.f32.gmra.mxu0 %v3212
        %v3237 = vpop.f32.mrf.mxu0
        %v3238 = vadd.f32 0.0, %v3237
        %3239 = vmatmul.f32.gmra.mxu0 %v3215
        %v3240 = vpop.f32.mrf.mxu0
        %v3241 = vadd.f32 0.0, %v3240
        %3242 = vdwg.mxu0
        %v3243 = vadd.f32 %v3206, %v3238
        %v3244 = vadd.f32 %v3207, %v3241
        %v3245 = vld [vmem:[%s3170 + $0x2] sm:$0xff]
        %v3246 = vld [vmem:[%s3170 + $0xa] sm:$0x7f]
        %v3247 = vld [vmem:[%s1337] sm:$0x7]
        %v3249 = vsel %vm985, %v3245, 0
        %v3252 = vsel %vm985, %v3246, 0
        %v3255 = vsel %vm1161, %v3247, 0
        %3257 = vmatpush.msra.mxu0 0.0
        %3258 = vmatpush.msra.mxu0 0.0
        %3259 = vmatpush.msra.mxu0 0.0
        %3260 = vmatpush.msra.mxu0 0.0
        %3261 = vmatpush.msra.mxu0 0.0
        %3262 = vmatpush.msra.mxu0 0.0
        %3263 = vmatpush.msra.mxu0 0.0
        %3264 = vmatpush.msra.mxu0 0.0
        %3265 = vmatpush.msra.mxu0 0.0
        %3266 = vmatpush.msra.mxu0 0.0
        %3267 = vmatpush.msra.mxu0 0.0
        %3268 = vmatpush.msra.mxu0 0.0
        %3269 = vmatpush.msra.mxu0 0.0
        %3270 = vmatpush.msra.mxu0 0.0
        %3271 = vmatpush.msra.mxu0 0.0
        %3272 = vmatpush.msra.mxu0 %v3255
        %3273 = vmatmul.f32.gmra.mxu0 %v3249
        %v3274 = vpop.f32.mrf.mxu0
        %v3275 = vadd.f32 0.0, %v3274
        %3276 = vmatmul.f32.gmra.mxu0 %v3252
        %v3277 = vpop.f32.mrf.mxu0
        %v3278 = vadd.f32 0.0, %v3277
        %3279 = vdwg.mxu0
        %v3280 = vadd.f32 %v3243, %v3275
        %v3281 = vadd.f32 %v3244, %v3278
        %s3282 = scalar_lea.vmem [#allocation2], 288
        %v3283 = vld [vmem:[%s3282] sm:$0xff]
        %v3284 = vld [vmem:[%s3282 + $0x8] sm:$0x7f]
        %v3285 = vld [vmem:[%s1376] sm:$0x7]
        %v3287 = vsel %vm985, %v3283, 0
        %v3290 = vsel %vm985, %v3284, 0
        %v3293 = vsel %vm1161, %v3285, 0
        %3295 = vmatpush.msra.mxu0 0.0
        %3296 = vmatpush.msra.mxu0 0.0
        %3297 = vmatpush.msra.mxu0 0.0
        %3298 = vmatpush.msra.mxu0 0.0
        %3299 = vmatpush.msra.mxu0 0.0
        %3300 = vmatpush.msra.mxu0 0.0
        %3301 = vmatpush.msra.mxu0 0.0
        %3302 = vmatpush.msra.mxu0 0.0
        %3303 = vmatpush.msra.mxu0 0.0
        %3304 = vmatpush.msra.mxu0 0.0
        %3305 = vmatpush.msra.mxu0 0.0
        %3306 = vmatpush.msra.mxu0 0.0
        %3307 = vmatpush.msra.mxu0 0.0
        %3308 = vmatpush.msra.mxu0 0.0
        %3309 = vmatpush.msra.mxu0 0.0
        %3310 = vmatpush.msra.mxu0 %v3293
        %3311 = vmatmul.f32.gmra.mxu0 %v3287
        %v3312 = vpop.f32.mrf.mxu0
        %v3313 = vadd.f32 0.0, %v3312
        %3314 = vmatmul.f32.gmra.mxu0 %v3290
        %v3315 = vpop.f32.mrf.mxu0
        %v3316 = vadd.f32 0.0, %v3315
        %3317 = vdwg.mxu0
        %v3318 = vadd.f32 %v3280, %v3313
        %v3319 = vadd.f32 %v3281, %v3316
        %v3320 = vld [vmem:[%s3282 + $0x1] sm:$0xff]
        %v3321 = vld [vmem:[%s3282 + $0x9] sm:$0x7f]
        %v3322 = vld [vmem:[%s1414] sm:$0x7]
        %v3324 = vsel %vm985, %v3320, 0
        %v3327 = vsel %vm985, %v3321, 0
        %v3330 = vsel %vm1161, %v3322, 0
        %3332 = vmatpush.msra.mxu0 0.0
        %3333 = vmatpush.msra.mxu0 0.0
        %3334 = vmatpush.msra.mxu0 0.0
        %3335 = vmatpush.msra.mxu0 0.0
        %3336 = vmatpush.msra.mxu0 0.0
        %3337 = vmatpush.msra.mxu0 0.0
        %3338 = vmatpush.msra.mxu0 0.0
        %3339 = vmatpush.msra.mxu0 0.0
        %3340 = vmatpush.msra.mxu0 0.0
        %3341 = vmatpush.msra.mxu0 0.0
        %3342 = vmatpush.msra.mxu0 0.0
        %3343 = vmatpush.msra.mxu0 0.0
        %3344 = vmatpush.msra.mxu0 0.0
        %3345 = vmatpush.msra.mxu0 0.0
        %3346 = vmatpush.msra.mxu0 0.0
        %3347 = vmatpush.msra.mxu0 %v3330
        %3348 = vmatmul.f32.gmra.mxu0 %v3324
        %v3349 = vpop.f32.mrf.mxu0
        %v3350 = vadd.f32 0.0, %v3349
        %3351 = vmatmul.f32.gmra.mxu0 %v3327
        %v3352 = vpop.f32.mrf.mxu0
        %v3353 = vadd.f32 0.0, %v3352
        %3354 = vdwg.mxu0
        %v3355 = vadd.f32 %v3318, %v3350
        %v3356 = vadd.f32 %v3319, %v3353
        %v3357 = vld [vmem:[%s3282 + $0x2] sm:$0xff]
        %v3358 = vld [vmem:[%s3282 + $0xa] sm:$0x7f]
        %v3359 = vld [vmem:[%s1452] sm:$0x7]
        %v3361 = vsel %vm985, %v3357, 0
        %v3364 = vsel %vm985, %v3358, 0
        %v3367 = vsel %vm1161, %v3359, 0
        %3369 = vmatpush.msra.mxu0 0.0
        %3370 = vmatpush.msra.mxu0 0.0
        %3371 = vmatpush.msra.mxu0 0.0
        %3372 = vmatpush.msra.mxu0 0.0
        %3373 = vmatpush.msra.mxu0 0.0
        %3374 = vmatpush.msra.mxu0 0.0
        %3375 = vmatpush.msra.mxu0 0.0
        %3376 = vmatpush.msra.mxu0 0.0
        %3377 = vmatpush.msra.mxu0 0.0
        %3378 = vmatpush.msra.mxu0 0.0
        %3379 = vmatpush.msra.mxu0 0.0
        %3380 = vmatpush.msra.mxu0 0.0
        %3381 = vmatpush.msra.mxu0 0.0
        %3382 = vmatpush.msra.mxu0 0.0
        %3383 = vmatpush.msra.mxu0 0.0
        %3384 = vmatpush.msra.mxu0 %v3367
        %3385 = vmatmul.f32.gmra.mxu0 %v3361
        %v3386 = vpop.f32.mrf.mxu0
        %v3387 = vadd.f32 0.0, %v3386
        %3388 = vmatmul.f32.gmra.mxu0 %v3364
        %v3389 = vpop.f32.mrf.mxu0
        %v3390 = vadd.f32 0.0, %v3389
        %3391 = vdwg.mxu0
        %v3392 = vadd.f32 %v3355, %v3387
        %v3393 = vadd.f32 %v3356, %v3390
        %v3395 = vsel %vm1492, %v3393, 0
        %3397 = vmatpush.msra.mxu0 0.0
        %3398 = vmatpush.msra.mxu0 0.0
        %3399 = vmatpush.msra.mxu0 0.0
        %3400 = vmatpush.msra.mxu0 0.0
        %3401 = vmatpush.msra.mxu0 0.0
        %3402 = vmatpush.msra.mxu0 0.0
        %3403 = vmatpush.msra.mxu0 0.0
        %3404 = vmatpush.msra.mxu0 0.0
        %3405 = vmatpush.msra.mxu0 0.0
        %3406 = vmatpush.msra.mxu0 0.0
        %3407 = vmatpush.msra.mxu0 0.0
        %3408 = vmatpush.msra.mxu0 0.0
        %3409 = vmatpush.msra.mxu0 0.0
        %3410 = vmatpush.msra.mxu0 0.0
        %3411 = vmatpush.msra.mxu0 %v3395
        %3412 = vmatpush.msra.mxu0 %v3392
        %3413 = vmatmul.f32.gmra.mxu0 %v1490
        %v3414 = vpop.f32.mrf.mxu0
        %v3415 = vadd.f32 0.0, %v3414
        %3416 = vdwg.mxu0
        %v3417 = vmul.f32 %v3415, %v1517
        %v3418 = vadd.f32 %v3417, %v1521
        %v3419 = vxor.u32 %v3418, 2147483648
        %v3420 = vmul.f32 %v3419, 1.442695
        %v3421 = vpow.pop %v3420
        %v3422 = vadd.f32 %v3421, 1.0
        %v3423 = vrcp.pop %v3422
        %v3424 = vmul.f32 %v3422, %v3423
        %v3425 = vsub.f32 1.0, %v3424
        %v3426 = vmul.f32 %v3423, %v3425
        %v3427 = vadd.f32 %v3423, %v3426
        %vm3428 = vweird.f32 %v3422
        %vm3429 = vweird.f32 %v3423
        %vm3430 = vmor %vm3428, %vm3429
        %v3431 = vsel %vm3430, %v3423, %v3427
        %v3432 = vand.u32 2147483647, %v3422
        %vm3433 = vcmp.eq.f32.partialorder %v3432, 8.507059e+37
        %v3434 = vand.u32 %v3422, 2147483648
        %v3435 = vor.u32 1.1754944e-38, %v3434
        %v3436 = vsel %vm3433, %v3435, %v3431
        %v3437 = vmul.f32 1.0, %v3436
        %v3438 = vmul.f32 %v3418, %v3437
        %3439 = vst.msk [vmem:[#allocation3 + $0x28] sm:$0xff] %vm1038, %v3438
        %s3440 = scalar_lea.vmem [#allocation4], 96
        %3441 = vst.msk [vmem:[%s3440 + $0x1] sm:$0xff] %vm1038, %v3438
        %v3442 = vld [vmem:[%s3282] sm:$0xff]
        %v3443 = vld [vmem:[%s3282 + $0x8] sm:$0x7f]
        %v3444 = vld [vmem:[%s7] sm:$0x7]
        %v3445 = vld [vmem:[%s3282 + $0x1] sm:$0xff]
        %v3446 = vld [vmem:[%s3282 + $0x9] sm:$0x7f]
        %v3447 = vld [vmem:[%s1153] sm:$0x7]
        %v3449 = vsel %vm985, %v3445, 0
        %v3452 = vsel %vm985, %v3446, 0
        %v3455 = vsel %vm1161, %v3447, 0
        %3457 = vmatpush.msra.mxu0 0.0
        %3458 = vmatpush.msra.mxu0 0.0
        %3459 = vmatpush.msra.mxu0 0.0
        %3460 = vmatpush.msra.mxu0 0.0
        %3461 = vmatpush.msra.mxu0 0.0
        %3462 = vmatpush.msra.mxu0 0.0
        %3463 = vmatpush.msra.mxu0 0.0
        %3464 = vmatpush.msra.mxu0 0.0
        %3465 = vmatpush.msra.mxu0 0.0
        %3466 = vmatpush.msra.mxu0 0.0
        %3467 = vmatpush.msra.mxu0 0.0
        %3468 = vmatpush.msra.mxu0 0.0
        %3469 = vmatpush.msra.mxu0 0.0
        %3470 = vmatpush.msra.mxu0 0.0
        %3471 = vmatpush.msra.mxu0 0.0
        %3472 = vmatpush.msra.mxu0 %v3455
        %3473 = vmatmul.f32.gmra.mxu0 %v3449
        %v3474 = vpop.f32.mrf.mxu0
        %v3475 = vadd.f32 0.0, %v3474
        %3476 = vmatmul.f32.gmra.mxu0 %v3452
        %v3477 = vpop.f32.mrf.mxu0
        %v3478 = vadd.f32 0.0, %v3477
        %3479 = vdwg.mxu0
        %v3481 = vsel %vm985, %v3442, 0
        %v3484 = vsel %vm985, %v3443, 0
        %v3487 = vsel %vm1161, %v3444, 0
        %3489 = vmatpush.msra.mxu0 0.0
        %3490 = vmatpush.msra.mxu0 0.0
        %3491 = vmatpush.msra.mxu0 0.0
        %3492 = vmatpush.msra.mxu0 0.0
        %3493 = vmatpush.msra.mxu0 0.0
        %3494 = vmatpush.msra.mxu0 0.0
        %3495 = vmatpush.msra.mxu0 0.0
        %3496 = vmatpush.msra.mxu0 0.0
        %3497 = vmatpush.msra.mxu0 0.0
        %3498 = vmatpush.msra.mxu0 0.0
        %3499 = vmatpush.msra.mxu0 0.0
        %3500 = vmatpush.msra.mxu0 0.0
        %3501 = vmatpush.msra.mxu0 0.0
        %3502 = vmatpush.msra.mxu0 0.0
        %3503 = vmatpush.msra.mxu0 0.0
        %3504 = vmatpush.msra.mxu0 %v3487
        %3505 = vmatmul.f32.gmra.mxu0 %v3481
        %v3506 = vpop.f32.mrf.mxu0
        %v3507 = vadd.f32 %v3475, %v3506
        %3508 = vmatmul.f32.gmra.mxu0 %v3484
        %v3509 = vpop.f32.mrf.mxu0
        %v3510 = vadd.f32 %v3478, %v3509
        %3511 = vdwg.mxu0
        %v3512 = vld [vmem:[%s3282 + $0x2] sm:$0xff]
        %v3513 = vld [vmem:[%s3282 + $0xa] sm:$0x7f]
        %v3514 = vld [vmem:[%s1222] sm:$0x7]
        %v3516 = vsel %vm985, %v3512, 0
        %v3519 = vsel %vm985, %v3513, 0
        %v3522 = vsel %vm1161, %v3514, 0
        %3524 = vmatpush.msra.mxu0 0.0
        %3525 = vmatpush.msra.mxu0 0.0
        %3526 = vmatpush.msra.mxu0 0.0
        %3527 = vmatpush.msra.mxu0 0.0
        %3528 = vmatpush.msra.mxu0 0.0
        %3529 = vmatpush.msra.mxu0 0.0
        %3530 = vmatpush.msra.mxu0 0.0
        %3531 = vmatpush.msra.mxu0 0.0
        %3532 = vmatpush.msra.mxu0 0.0
        %3533 = vmatpush.msra.mxu0 0.0
        %3534 = vmatpush.msra.mxu0 0.0
        %3535 = vmatpush.msra.mxu0 0.0
        %3536 = vmatpush.msra.mxu0 0.0
        %3537 = vmatpush.msra.mxu0 0.0
        %3538 = vmatpush.msra.mxu0 0.0
        %3539 = vmatpush.msra.mxu0 %v3522
        %3540 = vmatmul.f32.gmra.mxu0 %v3516
        %v3541 = vpop.f32.mrf.mxu0
        %v3542 = vadd.f32 0.0, %v3541
        %3543 = vmatmul.f32.gmra.mxu0 %v3519
        %v3544 = vpop.f32.mrf.mxu0
        %v3545 = vadd.f32 0.0, %v3544
        %3546 = vdwg.mxu0
        %v3547 = vadd.f32 %v3507, %v3542
        %v3548 = vadd.f32 %v3510, %v3545
        %s3549 = scalar_lea.vmem [#allocation2], 312
        %v3550 = vld [vmem:[%s3549] sm:$0xff]
        %v3551 = vld [vmem:[%s3549 + $0x8] sm:$0x7f]
        %v3552 = vld [vmem:[%s1261] sm:$0x7]
        %v3554 = vsel %vm985, %v3550, 0
        %v3557 = vsel %vm985, %v3551, 0
        %v3560 = vsel %vm1161, %v3552, 0
        %3562 = vmatpush.msra.mxu0 0.0
        %3563 = vmatpush.msra.mxu0 0.0
        %3564 = vmatpush.msra.mxu0 0.0
        %3565 = vmatpush.msra.mxu0 0.0
        %3566 = vmatpush.msra.mxu0 0.0
        %3567 = vmatpush.msra.mxu0 0.0
        %3568 = vmatpush.msra.mxu0 0.0
        %3569 = vmatpush.msra.mxu0 0.0
        %3570 = vmatpush.msra.mxu0 0.0
        %3571 = vmatpush.msra.mxu0 0.0
        %3572 = vmatpush.msra.mxu0 0.0
        %3573 = vmatpush.msra.mxu0 0.0
        %3574 = vmatpush.msra.mxu0 0.0
        %3575 = vmatpush.msra.mxu0 0.0
        %3576 = vmatpush.msra.mxu0 0.0
        %3577 = vmatpush.msra.mxu0 %v3560
        %3578 = vmatmul.f32.gmra.mxu0 %v3554
        %v3579 = vpop.f32.mrf.mxu0
        %v3580 = vadd.f32 0.0, %v3579
        %3581 = vmatmul.f32.gmra.mxu0 %v3557
        %v3582 = vpop.f32.mrf.mxu0
        %v3583 = vadd.f32 0.0, %v3582
        %3584 = vdwg.mxu0
        %v3585 = vadd.f32 %v3547, %v3580
        %v3586 = vadd.f32 %v3548, %v3583
        %v3587 = vld [vmem:[%s3549 + $0x1] sm:$0xff]
        %v3588 = vld [vmem:[%s3549 + $0x9] sm:$0x7f]
        %v3589 = vld [vmem:[%s1299] sm:$0x7]
        %v3591 = vsel %vm985, %v3587, 0
        %v3594 = vsel %vm985, %v3588, 0
        %v3597 = vsel %vm1161, %v3589, 0
        %3599 = vmatpush.msra.mxu0 0.0
        %3600 = vmatpush.msra.mxu0 0.0
        %3601 = vmatpush.msra.mxu0 0.0
        %3602 = vmatpush.msra.mxu0 0.0
        %3603 = vmatpush.msra.mxu0 0.0
        %3604 = vmatpush.msra.mxu0 0.0
        %3605 = vmatpush.msra.mxu0 0.0
        %3606 = vmatpush.msra.mxu0 0.0
        %3607 = vmatpush.msra.mxu0 0.0
        %3608 = vmatpush.msra.mxu0 0.0
        %3609 = vmatpush.msra.mxu0 0.0
        %3610 = vmatpush.msra.mxu0 0.0
        %3611 = vmatpush.msra.mxu0 0.0
        %3612 = vmatpush.msra.mxu0 0.0
        %3613 = vmatpush.msra.mxu0 0.0
        %3614 = vmatpush.msra.mxu0 %v3597
        %3615 = vmatmul.f32.gmra.mxu0 %v3591
        %v3616 = vpop.f32.mrf.mxu0
        %v3617 = vadd.f32 0.0, %v3616
        %3618 = vmatmul.f32.gmra.mxu0 %v3594
        %v3619 = vpop.f32.mrf.mxu0
        %v3620 = vadd.f32 0.0, %v3619
        %3621 = vdwg.mxu0
        %v3622 = vadd.f32 %v3585, %v3617
        %v3623 = vadd.f32 %v3586, %v3620
        %v3624 = vld [vmem:[%s3549 + $0x2] sm:$0xff]
        %v3625 = vld [vmem:[%s3549 + $0xa] sm:$0x7f]
        %v3626 = vld [vmem:[%s1337] sm:$0x7]
        %v3628 = vsel %vm985, %v3624, 0
        %v3631 = vsel %vm985, %v3625, 0
        %v3634 = vsel %vm1161, %v3626, 0
        %3636 = vmatpush.msra.mxu0 0.0
        %3637 = vmatpush.msra.mxu0 0.0
        %3638 = vmatpush.msra.mxu0 0.0
        %3639 = vmatpush.msra.mxu0 0.0
        %3640 = vmatpush.msra.mxu0 0.0
        %3641 = vmatpush.msra.mxu0 0.0
        %3642 = vmatpush.msra.mxu0 0.0
        %3643 = vmatpush.msra.mxu0 0.0
        %3644 = vmatpush.msra.mxu0 0.0
        %3645 = vmatpush.msra.mxu0 0.0
        %3646 = vmatpush.msra.mxu0 0.0
        %3647 = vmatpush.msra.mxu0 0.0
        %3648 = vmatpush.msra.mxu0 0.0
        %3649 = vmatpush.msra.mxu0 0.0
        %3650 = vmatpush.msra.mxu0 0.0
        %3651 = vmatpush.msra.mxu0 %v3634
        %3652 = vmatmul.f32.gmra.mxu0 %v3628
        %v3653 = vpop.f32.mrf.mxu0
        %v3654 = vadd.f32 0.0, %v3653
        %3655 = vmatmul.f32.gmra.mxu0 %v3631
        %v3656 = vpop.f32.mrf.mxu0
        %v3657 = vadd.f32 0.0, %v3656
        %3658 = vdwg.mxu0
        %v3659 = vadd.f32 %v3622, %v3654
        %v3660 = vadd.f32 %v3623, %v3657
        %s3661 = scalar_lea.vmem [#allocation2], 336
        %v3662 = vld [vmem:[%s3661] sm:$0xff]
        %v3663 = vld [vmem:[%s3661 + $0x8] sm:$0x7f]
        %v3664 = vld [vmem:[%s1376] sm:$0x7]
        %v3666 = vsel %vm985, %v3662, 0
        %v3669 = vsel %vm985, %v3663, 0
        %v3672 = vsel %vm1161, %v3664, 0
        %3674 = vmatpush.msra.mxu0 0.0
        %3675 = vmatpush.msra.mxu0 0.0
        %3676 = vmatpush.msra.mxu0 0.0
        %3677 = vmatpush.msra.mxu0 0.0
        %3678 = vmatpush.msra.mxu0 0.0
        %3679 = vmatpush.msra.mxu0 0.0
        %3680 = vmatpush.msra.mxu0 0.0
        %3681 = vmatpush.msra.mxu0 0.0
        %3682 = vmatpush.msra.mxu0 0.0
        %3683 = vmatpush.msra.mxu0 0.0
        %3684 = vmatpush.msra.mxu0 0.0
        %3685 = vmatpush.msra.mxu0 0.0
        %3686 = vmatpush.msra.mxu0 0.0
        %3687 = vmatpush.msra.mxu0 0.0
        %3688 = vmatpush.msra.mxu0 0.0
        %3689 = vmatpush.msra.mxu0 %v3672
        %3690 = vmatmul.f32.gmra.mxu0 %v3666
        %v3691 = vpop.f32.mrf.mxu0
        %v3692 = vadd.f32 0.0, %v3691
        %3693 = vmatmul.f32.gmra.mxu0 %v3669
        %v3694 = vpop.f32.mrf.mxu0
        %v3695 = vadd.f32 0.0, %v3694
        %3696 = vdwg.mxu0
        %v3697 = vadd.f32 %v3659, %v3692
        %v3698 = vadd.f32 %v3660, %v3695
        %v3699 = vld [vmem:[%s3661 + $0x1] sm:$0xff]
        %v3700 = vld [vmem:[%s3661 + $0x9] sm:$0x7f]
        %v3701 = vld [vmem:[%s1414] sm:$0x7]
        %v3703 = vsel %vm985, %v3699, 0
        %v3706 = vsel %vm985, %v3700, 0
        %v3709 = vsel %vm1161, %v3701, 0
        %3711 = vmatpush.msra.mxu0 0.0
        %3712 = vmatpush.msra.mxu0 0.0
        %3713 = vmatpush.msra.mxu0 0.0
        %3714 = vmatpush.msra.mxu0 0.0
        %3715 = vmatpush.msra.mxu0 0.0
        %3716 = vmatpush.msra.mxu0 0.0
        %3717 = vmatpush.msra.mxu0 0.0
        %3718 = vmatpush.msra.mxu0 0.0
        %3719 = vmatpush.msra.mxu0 0.0
        %3720 = vmatpush.msra.mxu0 0.0
        %3721 = vmatpush.msra.mxu0 0.0
        %3722 = vmatpush.msra.mxu0 0.0
        %3723 = vmatpush.msra.mxu0 0.0
        %3724 = vmatpush.msra.mxu0 0.0
        %3725 = vmatpush.msra.mxu0 0.0
        %3726 = vmatpush.msra.mxu0 %v3709
        %3727 = vmatmul.f32.gmra.mxu0 %v3703
        %v3728 = vpop.f32.mrf.mxu0
        %v3729 = vadd.f32 0.0, %v3728
        %3730 = vmatmul.f32.gmra.mxu0 %v3706
        %v3731 = vpop.f32.mrf.mxu0
        %v3732 = vadd.f32 0.0, %v3731
        %3733 = vdwg.mxu0
        %v3734 = vadd.f32 %v3697, %v3729
        %v3735 = vadd.f32 %v3698, %v3732
        %v3736 = vld [vmem:[%s3661 + $0x2] sm:$0xff]
        %v3737 = vld [vmem:[%s3661 + $0xa] sm:$0x7f]
        %v3738 = vld [vmem:[%s1452] sm:$0x7]
        %v3740 = vsel %vm985, %v3736, 0
        %v3743 = vsel %vm985, %v3737, 0
        %v3746 = vsel %vm1161, %v3738, 0
        %3748 = vmatpush.msra.mxu0 0.0
        %3749 = vmatpush.msra.mxu0 0.0
        %3750 = vmatpush.msra.mxu0 0.0
        %3751 = vmatpush.msra.mxu0 0.0
        %3752 = vmatpush.msra.mxu0 0.0
        %3753 = vmatpush.msra.mxu0 0.0
        %3754 = vmatpush.msra.mxu0 0.0
        %3755 = vmatpush.msra.mxu0 0.0
        %3756 = vmatpush.msra.mxu0 0.0
        %3757 = vmatpush.msra.mxu0 0.0
        %3758 = vmatpush.msra.mxu0 0.0
        %3759 = vmatpush.msra.mxu0 0.0
        %3760 = vmatpush.msra.mxu0 0.0
        %3761 = vmatpush.msra.mxu0 0.0
        %3762 = vmatpush.msra.mxu0 0.0
        %3763 = vmatpush.msra.mxu0 %v3746
        %3764 = vmatmul.f32.gmra.mxu0 %v3740
        %v3765 = vpop.f32.mrf.mxu0
        %v3766 = vadd.f32 0.0, %v3765
        %3767 = vmatmul.f32.gmra.mxu0 %v3743
        %v3768 = vpop.f32.mrf.mxu0
        %v3769 = vadd.f32 0.0, %v3768
        %3770 = vdwg.mxu0
        %v3771 = vadd.f32 %v3734, %v3766
        %v3772 = vadd.f32 %v3735, %v3769
        %v3774 = vsel %vm1492, %v3772, 0
        %3776 = vmatpush.msra.mxu0 0.0
        %3777 = vmatpush.msra.mxu0 0.0
        %3778 = vmatpush.msra.mxu0 0.0
        %3779 = vmatpush.msra.mxu0 0.0
        %3780 = vmatpush.msra.mxu0 0.0
        %3781 = vmatpush.msra.mxu0 0.0
        %3782 = vmatpush.msra.mxu0 0.0
        %3783 = vmatpush.msra.mxu0 0.0
        %3784 = vmatpush.msra.mxu0 0.0
        %3785 = vmatpush.msra.mxu0 0.0
        %3786 = vmatpush.msra.mxu0 0.0
        %3787 = vmatpush.msra.mxu0 0.0
        %3788 = vmatpush.msra.mxu0 0.0
        %3789 = vmatpush.msra.mxu0 0.0
        %3790 = vmatpush.msra.mxu0 %v3774
        %3791 = vmatpush.msra.mxu0 %v3771
        %3792 = vmatmul.f32.gmra.mxu0 %v1490
        %v3793 = vpop.f32.mrf.mxu0
        %v3794 = vadd.f32 0.0, %v3793
        %3795 = vdwg.mxu0
        %v3796 = vmul.f32 %v3794, %v1517
        %v3797 = vadd.f32 %v3796, %v1521
        %v3798 = vxor.u32 %v3797, 2147483648
        %v3799 = vmul.f32 %v3798, 1.442695
        %v3800 = vpow.pop %v3799
        %v3801 = vadd.f32 %v3800, 1.0
        %v3802 = vrcp.pop %v3801
        %v3803 = vmul.f32 %v3801, %v3802
        %v3804 = vsub.f32 1.0, %v3803
        %v3805 = vmul.f32 %v3802, %v3804
        %v3806 = vadd.f32 %v3802, %v3805
        %vm3807 = vweird.f32 %v3801
        %vm3808 = vweird.f32 %v3802
        %vm3809 = vmor %vm3807, %vm3808
        %v3810 = vsel %vm3809, %v3802, %v3806
        %v3811 = vand.u32 2147483647, %v3801
        %vm3812 = vcmp.eq.f32.partialorder %v3811, 8.507059e+37
        %v3813 = vand.u32 %v3801, 2147483648
        %v3814 = vor.u32 1.1754944e-38, %v3813
        %v3815 = vsel %vm3812, %v3814, %v3810
        %v3816 = vmul.f32 1.0, %v3815
        %v3817 = vmul.f32 %v3797, %v3816
        %3818 = vst.msk [vmem:[#allocation3 + $0x30] sm:$0xff] %vm1038, %v3817
        %s3819 = scalar_lea.vmem [#allocation4], 112
        %3820 = vst.msk [vmem:[%s3819 + $0x1] sm:$0xff] %vm1038, %v3817
        %v3821 = vld [vmem:[%s3661] sm:$0xff]
        %v3822 = vld [vmem:[%s3661 + $0x8] sm:$0x7f]
        %v3823 = vld [vmem:[%s7] sm:$0x7]
        %v3824 = vld [vmem:[%s3661 + $0x1] sm:$0xff]
        %v3825 = vld [vmem:[%s3661 + $0x9] sm:$0x7f]
        %v3826 = vld [vmem:[%s1153] sm:$0x7]
        %v3828 = vsel %vm985, %v3824, 0
        %v3831 = vsel %vm985, %v3825, 0
        %v3834 = vsel %vm1161, %v3826, 0
        %3836 = vmatpush.msra.mxu0 0.0
        %3837 = vmatpush.msra.mxu0 0.0
        %3838 = vmatpush.msra.mxu0 0.0
        %3839 = vmatpush.msra.mxu0 0.0
        %3840 = vmatpush.msra.mxu0 0.0
        %3841 = vmatpush.msra.mxu0 0.0
        %3842 = vmatpush.msra.mxu0 0.0
        %3843 = vmatpush.msra.mxu0 0.0
        %3844 = vmatpush.msra.mxu0 0.0
        %3845 = vmatpush.msra.mxu0 0.0
        %3846 = vmatpush.msra.mxu0 0.0
        %3847 = vmatpush.msra.mxu0 0.0
        %3848 = vmatpush.msra.mxu0 0.0
        %3849 = vmatpush.msra.mxu0 0.0
        %3850 = vmatpush.msra.mxu0 0.0
        %3851 = vmatpush.msra.mxu0 %v3834
        %3852 = vmatmul.f32.gmra.mxu0 %v3828
        %v3853 = vpop.f32.mrf.mxu0
        %v3854 = vadd.f32 0.0, %v3853
        %3855 = vmatmul.f32.gmra.mxu0 %v3831
        %v3856 = vpop.f32.mrf.mxu0
        %v3857 = vadd.f32 0.0, %v3856
        %3858 = vdwg.mxu0
        %v3860 = vsel %vm985, %v3821, 0
        %v3863 = vsel %vm985, %v3822, 0
        %v3866 = vsel %vm1161, %v3823, 0
        %3868 = vmatpush.msra.mxu0 0.0
        %3869 = vmatpush.msra.mxu0 0.0
        %3870 = vmatpush.msra.mxu0 0.0
        %3871 = vmatpush.msra.mxu0 0.0
        %3872 = vmatpush.msra.mxu0 0.0
        %3873 = vmatpush.msra.mxu0 0.0
        %3874 = vmatpush.msra.mxu0 0.0
        %3875 = vmatpush.msra.mxu0 0.0
        %3876 = vmatpush.msra.mxu0 0.0
        %3877 = vmatpush.msra.mxu0 0.0
        %3878 = vmatpush.msra.mxu0 0.0
        %3879 = vmatpush.msra.mxu0 0.0
        %3880 = vmatpush.msra.mxu0 0.0
        %3881 = vmatpush.msra.mxu0 0.0
        %3882 = vmatpush.msra.mxu0 0.0
        %3883 = vmatpush.msra.mxu0 %v3866
        %3884 = vmatmul.f32.gmra.mxu0 %v3860
        %v3885 = vpop.f32.mrf.mxu0
        %v3886 = vadd.f32 %v3854, %v3885
        %3887 = vmatmul.f32.gmra.mxu0 %v3863
        %v3888 = vpop.f32.mrf.mxu0
        %v3889 = vadd.f32 %v3857, %v3888
        %3890 = vdwg.mxu0
        %v3891 = vld [vmem:[%s3661 + $0x2] sm:$0xff]
        %v3892 = vld [vmem:[%s3661 + $0xa] sm:$0x7f]
        %v3893 = vld [vmem:[%s1222] sm:$0x7]
        %v3895 = vsel %vm985, %v3891, 0
        %v3898 = vsel %vm985, %v3892, 0
        %v3901 = vsel %vm1161, %v3893, 0
        %3903 = vmatpush.msra.mxu0 0.0
        %3904 = vmatpush.msra.mxu0 0.0
        %3905 = vmatpush.msra.mxu0 0.0
        %3906 = vmatpush.msra.mxu0 0.0
        %3907 = vmatpush.msra.mxu0 0.0
        %3908 = vmatpush.msra.mxu0 0.0
        %3909 = vmatpush.msra.mxu0 0.0
        %3910 = vmatpush.msra.mxu0 0.0
        %3911 = vmatpush.msra.mxu0 0.0
        %3912 = vmatpush.msra.mxu0 0.0
        %3913 = vmatpush.msra.mxu0 0.0
        %3914 = vmatpush.msra.mxu0 0.0
        %3915 = vmatpush.msra.mxu0 0.0
        %3916 = vmatpush.msra.mxu0 0.0
        %3917 = vmatpush.msra.mxu0 0.0
        %3918 = vmatpush.msra.mxu0 %v3901
        %3919 = vmatmul.f32.gmra.mxu0 %v3895
        %v3920 = vpop.f32.mrf.mxu0
        %v3921 = vadd.f32 0.0, %v3920
        %3922 = vmatmul.f32.gmra.mxu0 %v3898
        %v3923 = vpop.f32.mrf.mxu0
        %v3924 = vadd.f32 0.0, %v3923
        %3925 = vdwg.mxu0
        %v3926 = vadd.f32 %v3886, %v3921
        %v3927 = vadd.f32 %v3889, %v3924
        %s3928 = scalar_lea.vmem [#allocation2], 360
        %v3929 = vld [vmem:[%s3928] sm:$0xff]
        %v3930 = vld [vmem:[%s3928 + $0x8] sm:$0x7f]
        %v3931 = vld [vmem:[%s1261] sm:$0x7]
        %v3933 = vsel %vm985, %v3929, 0
        %v3936 = vsel %vm985, %v3930, 0
        %v3939 = vsel %vm1161, %v3931, 0
        %3941 = vmatpush.msra.mxu0 0.0
        %3942 = vmatpush.msra.mxu0 0.0
        %3943 = vmatpush.msra.mxu0 0.0
        %3944 = vmatpush.msra.mxu0 0.0
        %3945 = vmatpush.msra.mxu0 0.0
        %3946 = vmatpush.msra.mxu0 0.0
        %3947 = vmatpush.msra.mxu0 0.0
        %3948 = vmatpush.msra.mxu0 0.0
        %3949 = vmatpush.msra.mxu0 0.0
        %3950 = vmatpush.msra.mxu0 0.0
        %3951 = vmatpush.msra.mxu0 0.0
        %3952 = vmatpush.msra.mxu0 0.0
        %3953 = vmatpush.msra.mxu0 0.0
        %3954 = vmatpush.msra.mxu0 0.0
        %3955 = vmatpush.msra.mxu0 0.0
        %3956 = vmatpush.msra.mxu0 %v3939
        %3957 = vmatmul.f32.gmra.mxu0 %v3933
        %v3958 = vpop.f32.mrf.mxu0
        %v3959 = vadd.f32 0.0, %v3958
        %3960 = vmatmul.f32.gmra.mxu0 %v3936
        %v3961 = vpop.f32.mrf.mxu0
        %v3962 = vadd.f32 0.0, %v3961
        %3963 = vdwg.mxu0
        %v3964 = vadd.f32 %v3926, %v3959
        %v3965 = vadd.f32 %v3927, %v3962
        %v3966 = vld [vmem:[%s3928 + $0x1] sm:$0xff]
        %v3967 = vld [vmem:[%s3928 + $0x9] sm:$0x7f]
        %v3968 = vld [vmem:[%s1299] sm:$0x7]
        %v3970 = vsel %vm985, %v3966, 0
        %v3973 = vsel %vm985, %v3967, 0
        %v3976 = vsel %vm1161, %v3968, 0
        %3978 = vmatpush.msra.mxu0 0.0
        %3979 = vmatpush.msra.mxu0 0.0
        %3980 = vmatpush.msra.mxu0 0.0
        %3981 = vmatpush.msra.mxu0 0.0
        %3982 = vmatpush.msra.mxu0 0.0
        %3983 = vmatpush.msra.mxu0 0.0
        %3984 = vmatpush.msra.mxu0 0.0
        %3985 = vmatpush.msra.mxu0 0.0
        %3986 = vmatpush.msra.mxu0 0.0
        %3987 = vmatpush.msra.mxu0 0.0
        %3988 = vmatpush.msra.mxu0 0.0
        %3989 = vmatpush.msra.mxu0 0.0
        %3990 = vmatpush.msra.mxu0 0.0
        %3991 = vmatpush.msra.mxu0 0.0
        %3992 = vmatpush.msra.mxu0 0.0
        %3993 = vmatpush.msra.mxu0 %v3976
        %3994 = vmatmul.f32.gmra.mxu0 %v3970
        %v3995 = vpop.f32.mrf.mxu0
        %v3996 = vadd.f32 0.0, %v3995
        %3997 = vmatmul.f32.gmra.mxu0 %v3973
        %v3998 = vpop.f32.mrf.mxu0
        %v3999 = vadd.f32 0.0, %v3998
        %4000 = vdwg.mxu0
        %v4001 = vadd.f32 %v3964, %v3996
        %v4002 = vadd.f32 %v3965, %v3999
        %v4003 = vld [vmem:[%s3928 + $0x2] sm:$0xff]
        %v4004 = vld [vmem:[%s3928 + $0xa] sm:$0x7f]
        %v4005 = vld [vmem:[%s1337] sm:$0x7]
        %v4007 = vsel %vm985, %v4003, 0
        %v4010 = vsel %vm985, %v4004, 0
        %v4013 = vsel %vm1161, %v4005, 0
        %4015 = vmatpush.msra.mxu0 0.0
        %4016 = vmatpush.msra.mxu0 0.0
        %4017 = vmatpush.msra.mxu0 0.0
        %4018 = vmatpush.msra.mxu0 0.0
        %4019 = vmatpush.msra.mxu0 0.0
        %4020 = vmatpush.msra.mxu0 0.0
        %4021 = vmatpush.msra.mxu0 0.0
        %4022 = vmatpush.msra.mxu0 0.0
        %4023 = vmatpush.msra.mxu0 0.0
        %4024 = vmatpush.msra.mxu0 0.0
        %4025 = vmatpush.msra.mxu0 0.0
        %4026 = vmatpush.msra.mxu0 0.0
        %4027 = vmatpush.msra.mxu0 0.0
        %4028 = vmatpush.msra.mxu0 0.0
        %4029 = vmatpush.msra.mxu0 0.0
        %4030 = vmatpush.msra.mxu0 %v4013
        %4031 = vmatmul.f32.gmra.mxu0 %v4007
        %v4032 = vpop.f32.mrf.mxu0
        %v4033 = vadd.f32 0.0, %v4032
        %4034 = vmatmul.f32.gmra.mxu0 %v4010
        %v4035 = vpop.f32.mrf.mxu0
        %v4036 = vadd.f32 0.0, %v4035
        %4037 = vdwg.mxu0
        %v4038 = vadd.f32 %v4001, %v4033
        %v4039 = vadd.f32 %v4002, %v4036
        %s4040 = scalar_lea.vmem [#allocation2], 384
        %v4041 = vld [vmem:[%s4040] sm:$0xff]
        %v4042 = vld [vmem:[%s4040 + $0x8] sm:$0x7f]
        %v4043 = vld [vmem:[%s1376] sm:$0x7]
        %v4045 = vsel %vm985, %v4041, 0
        %v4048 = vsel %vm985, %v4042, 0
        %v4051 = vsel %vm1161, %v4043, 0
        %4053 = vmatpush.msra.mxu0 0.0
        %4054 = vmatpush.msra.mxu0 0.0
        %4055 = vmatpush.msra.mxu0 0.0
        %4056 = vmatpush.msra.mxu0 0.0
        %4057 = vmatpush.msra.mxu0 0.0
        %4058 = vmatpush.msra.mxu0 0.0
        %4059 = vmatpush.msra.mxu0 0.0
        %4060 = vmatpush.msra.mxu0 0.0
        %4061 = vmatpush.msra.mxu0 0.0
        %4062 = vmatpush.msra.mxu0 0.0
        %4063 = vmatpush.msra.mxu0 0.0
        %4064 = vmatpush.msra.mxu0 0.0
        %4065 = vmatpush.msra.mxu0 0.0
        %4066 = vmatpush.msra.mxu0 0.0
        %4067 = vmatpush.msra.mxu0 0.0
        %4068 = vmatpush.msra.mxu0 %v4051
        %4069 = vmatmul.f32.gmra.mxu0 %v4045
        %v4070 = vpop.f32.mrf.mxu0
        %v4071 = vadd.f32 0.0, %v4070
        %4072 = vmatmul.f32.gmra.mxu0 %v4048
        %v4073 = vpop.f32.mrf.mxu0
        %v4074 = vadd.f32 0.0, %v4073
        %4075 = vdwg.mxu0
        %v4076 = vadd.f32 %v4038, %v4071
        %v4077 = vadd.f32 %v4039, %v4074
        %v4078 = vld [vmem:[%s4040 + $0x1] sm:$0xff]
        %v4079 = vld [vmem:[%s4040 + $0x9] sm:$0x7f]
        %v4080 = vld [vmem:[%s1414] sm:$0x7]
        %v4082 = vsel %vm985, %v4078, 0
        %v4085 = vsel %vm985, %v4079, 0
        %v4088 = vsel %vm1161, %v4080, 0
        %4090 = vmatpush.msra.mxu0 0.0
        %4091 = vmatpush.msra.mxu0 0.0
        %4092 = vmatpush.msra.mxu0 0.0
        %4093 = vmatpush.msra.mxu0 0.0
        %4094 = vmatpush.msra.mxu0 0.0
        %4095 = vmatpush.msra.mxu0 0.0
        %4096 = vmatpush.msra.mxu0 0.0
        %4097 = vmatpush.msra.mxu0 0.0
        %4098 = vmatpush.msra.mxu0 0.0
        %4099 = vmatpush.msra.mxu0 0.0
        %4100 = vmatpush.msra.mxu0 0.0
        %4101 = vmatpush.msra.mxu0 0.0
        %4102 = vmatpush.msra.mxu0 0.0
        %4103 = vmatpush.msra.mxu0 0.0
        %4104 = vmatpush.msra.mxu0 0.0
        %4105 = vmatpush.msra.mxu0 %v4088
        %4106 = vmatmul.f32.gmra.mxu0 %v4082
        %v4107 = vpop.f32.mrf.mxu0
        %v4108 = vadd.f32 0.0, %v4107
        %4109 = vmatmul.f32.gmra.mxu0 %v4085
        %v4110 = vpop.f32.mrf.mxu0
        %v4111 = vadd.f32 0.0, %v4110
        %4112 = vdwg.mxu0
        %v4113 = vadd.f32 %v4076, %v4108
        %v4114 = vadd.f32 %v4077, %v4111
        %v4115 = vld [vmem:[%s4040 + $0x2] sm:$0xff]
        %v4116 = vld [vmem:[%s4040 + $0xa] sm:$0x7f]
        %v4117 = vld [vmem:[%s1452] sm:$0x7]
        %v4119 = vsel %vm985, %v4115, 0
        %v4122 = vsel %vm985, %v4116, 0
        %v4125 = vsel %vm1161, %v4117, 0
        %4127 = vmatpush.msra.mxu0 0.0
        %4128 = vmatpush.msra.mxu0 0.0
        %4129 = vmatpush.msra.mxu0 0.0
        %4130 = vmatpush.msra.mxu0 0.0
        %4131 = vmatpush.msra.mxu0 0.0
        %4132 = vmatpush.msra.mxu0 0.0
        %4133 = vmatpush.msra.mxu0 0.0
        %4134 = vmatpush.msra.mxu0 0.0
        %4135 = vmatpush.msra.mxu0 0.0
        %4136 = vmatpush.msra.mxu0 0.0
        %4137 = vmatpush.msra.mxu0 0.0
        %4138 = vmatpush.msra.mxu0 0.0
        %4139 = vmatpush.msra.mxu0 0.0
        %4140 = vmatpush.msra.mxu0 0.0
        %4141 = vmatpush.msra.mxu0 0.0
        %4142 = vmatpush.msra.mxu0 %v4125
        %4143 = vmatmul.f32.gmra.mxu0 %v4119
        %v4144 = vpop.f32.mrf.mxu0
        %v4145 = vadd.f32 0.0, %v4144
        %4146 = vmatmul.f32.gmra.mxu0 %v4122
        %v4147 = vpop.f32.mrf.mxu0
        %v4148 = vadd.f32 0.0, %v4147
        %4149 = vdwg.mxu0
        %v4150 = vadd.f32 %v4113, %v4145
        %v4151 = vadd.f32 %v4114, %v4148
        %v4153 = vsel %vm1492, %v4151, 0
        %4155 = vmatpush.msra.mxu0 0.0
        %4156 = vmatpush.msra.mxu0 0.0
        %4157 = vmatpush.msra.mxu0 0.0
        %4158 = vmatpush.msra.mxu0 0.0
        %4159 = vmatpush.msra.mxu0 0.0
        %4160 = vmatpush.msra.mxu0 0.0
        %4161 = vmatpush.msra.mxu0 0.0
        %4162 = vmatpush.msra.mxu0 0.0
        %4163 = vmatpush.msra.mxu0 0.0
        %4164 = vmatpush.msra.mxu0 0.0
        %4165 = vmatpush.msra.mxu0 0.0
        %4166 = vmatpush.msra.mxu0 0.0
        %4167 = vmatpush.msra.mxu0 0.0
        %4168 = vmatpush.msra.mxu0 0.0
        %4169 = vmatpush.msra.mxu0 %v4153
        %4170 = vmatpush.msra.mxu0 %v4150
        %4171 = vmatmul.f32.gmra.mxu0 %v1490
        %v4172 = vpop.f32.mrf.mxu0
        %v4173 = vadd.f32 0.0, %v4172
        %4174 = vdwg.mxu0
        %v4175 = vmul.f32 %v4173, %v1517
        %v4176 = vadd.f32 %v4175, %v1521
        %v4177 = vxor.u32 %v4176, 2147483648
        %v4178 = vmul.f32 %v4177, 1.442695
        %v4179 = vpow.pop %v4178
        %v4180 = vadd.f32 %v4179, 1.0
        %v4181 = vrcp.pop %v4180
        %v4182 = vmul.f32 %v4180, %v4181
        %v4183 = vsub.f32 1.0, %v4182
        %v4184 = vmul.f32 %v4181, %v4183
        %v4185 = vadd.f32 %v4181, %v4184
        %vm4186 = vweird.f32 %v4180
        %vm4187 = vweird.f32 %v4181
        %vm4188 = vmor %vm4186, %vm4187
        %v4189 = vsel %vm4188, %v4181, %v4185
        %v4190 = vand.u32 2147483647, %v4180
        %vm4191 = vcmp.eq.f32.partialorder %v4190, 8.507059e+37
        %v4192 = vand.u32 %v4180, 2147483648
        %v4193 = vor.u32 1.1754944e-38, %v4192
        %v4194 = vsel %vm4191, %v4193, %v4189
        %v4195 = vmul.f32 1.0, %v4194
        %v4196 = vmul.f32 %v4176, %v4195
        %4197 = vst.msk [vmem:[#allocation3 + $0x38] sm:$0xff] %vm1038, %v4196
        %s4198 = scalar_lea.vmem [#allocation4], 128
        %4199 = vst.msk [vmem:[%s4198 + $0x1] sm:$0xff] %vm1038, %v4196
        %v4200 = vld [vmem:[%s13] sm:$0x1]
        %v4201 = vld [vmem:[#allocation4] sm:$0xff]
        %v4202 = vld [vmem:[#allocation4 + $0x10] sm:$0xff]
        %v4203 = vld [vmem:[#allocation4 + $0x20] sm:$0xff]
        %v4204 = vld [vmem:[#allocation4 + $0x30] sm:$0xff]
        %v4205 = vld [vmem:[#allocation4 + $0x40] sm:$0xff]
        %v4206 = vld [vmem:[#allocation4 + $0x50] sm:$0xff]
        %v4207 = vld [vmem:[#allocation4 + $0x60] sm:$0xff]
        %v4208 = vld [vmem:[#allocation4 + $0x70] sm:$0xff]
        %v4209 = vperm.slane %v4200, 0
        %v4210 = vmul.f32 %v4201, %v4209
        %v4211 = vmul.f32 %v4202, %v4209
        %v4212 = vmul.f32 %v4203, %v4209
        %v4213 = vmul.f32 %v4204, %v4209
        %v4214 = vmul.f32 %v4205, %v4209
        %v4215 = vmul.f32 %v4206, %v4209
        %v4216 = vmul.f32 %v4207, %v4209
        %v4217 = vmul.f32 %v4208, %v4209
        %v4218 = vadd.f32 %v4210, 0.0
        %v4219 = vadd.f32 %v4211, 0.0
        %v4220 = vadd.f32 %v4212, 0.0
        %v4221 = vadd.f32 %v4213, 0.0
        %v4222 = vadd.f32 %v4214, 0.0
        %v4223 = vadd.f32 %v4215, 0.0
        %v4224 = vadd.f32 %v4216, 0.0
        %v4225 = vadd.f32 %v4217, 0.0
        %v4226 = vld [vmem:[%s13 + $0x1] sm:$0x1]
        %v4227 = vld [vmem:[#allocation4 + $0x1] sm:$0xff]
        %v4228 = vld [vmem:[#allocation4 + $0x11] sm:$0xff]
        %v4229 = vld [vmem:[#allocation4 + $0x21] sm:$0xff]
        %v4230 = vld [vmem:[#allocation4 + $0x31] sm:$0xff]
        %v4231 = vld [vmem:[#allocation4 + $0x41] sm:$0xff]
        %v4232 = vld [vmem:[#allocation4 + $0x51] sm:$0xff]
        %v4233 = vld [vmem:[#allocation4 + $0x61] sm:$0xff]
        %v4234 = vld [vmem:[#allocation4 + $0x71] sm:$0xff]
        %v4235 = vperm.slane %v4226, 0
        %v4236 = vmul.f32 %v4227, %v4235
        %v4237 = vmul.f32 %v4228, %v4235
        %v4238 = vmul.f32 %v4229, %v4235
        %v4239 = vmul.f32 %v4230, %v4235
        %v4240 = vmul.f32 %v4231, %v4235
        %v4241 = vmul.f32 %v4232, %v4235
        %v4242 = vmul.f32 %v4233, %v4235
        %v4243 = vmul.f32 %v4234, %v4235
        %v4244 = vadd.f32 %v4218, %v4236
        %v4245 = vadd.f32 %v4219, %v4237
        %v4246 = vadd.f32 %v4220, %v4238
        %v4247 = vadd.f32 %v4221, %v4239
        %v4248 = vadd.f32 %v4222, %v4240
        %v4249 = vadd.f32 %v4223, %v4241
        %v4250 = vadd.f32 %v4224, %v4242
        %v4251 = vadd.f32 %v4225, %v4243
        %v4252 = vld [vmem:[%s13 + $0x2] sm:$0x1]
        %v4253 = vld [vmem:[#allocation4 + $0x2] sm:$0xff]
        %v4254 = vld [vmem:[#allocation4 + $0x12] sm:$0xff]
        %v4255 = vld [vmem:[#allocation4 + $0x22] sm:$0xff]
        %v4256 = vld [vmem:[#allocation4 + $0x32] sm:$0xff]
        %v4257 = vld [vmem:[#allocation4 + $0x42] sm:$0xff]
        %v4258 = vld [vmem:[#allocation4 + $0x52] sm:$0xff]
        %v4259 = vld [vmem:[#allocation4 + $0x62] sm:$0xff]
        %v4260 = vld [vmem:[#allocation4 + $0x72] sm:$0xff]
        %v4261 = vperm.slane %v4252, 0
        %v4262 = vmul.f32 %v4253, %v4261
        %v4263 = vmul.f32 %v4254, %v4261
        %v4264 = vmul.f32 %v4255, %v4261
        %v4265 = vmul.f32 %v4256, %v4261
        %v4266 = vmul.f32 %v4257, %v4261
        %v4267 = vmul.f32 %v4258, %v4261
        %v4268 = vmul.f32 %v4259, %v4261
        %v4269 = vmul.f32 %v4260, %v4261
        %v4270 = vadd.f32 %v4244, %v4262
        %v4271 = vadd.f32 %v4245, %v4263
        %v4272 = vadd.f32 %v4246, %v4264
        %v4273 = vadd.f32 %v4247, %v4265
        %v4274 = vadd.f32 %v4248, %v4266
        %v4275 = vadd.f32 %v4249, %v4267
        %v4276 = vadd.f32 %v4250, %v4268
        %v4277 = vadd.f32 %v4251, %v4269
        %v4278 = vld [vmem:[%s13 + $0x3] sm:$0x1]
        %v4279 = vld [vmem:[%s1545] sm:$0xff]
        %v4280 = vld [vmem:[%s1545 + $0x10] sm:$0xff]
        %v4281 = vld [vmem:[%s1545 + $0x20] sm:$0xff]
        %v4282 = vld [vmem:[%s1545 + $0x30] sm:$0xff]
        %v4283 = vld [vmem:[%s1545 + $0x40] sm:$0xff]
        %v4284 = vld [vmem:[%s1545 + $0x50] sm:$0xff]
        %v4285 = vld [vmem:[%s1545 + $0x60] sm:$0xff]
        %v4286 = vld [vmem:[%s1545 + $0x70] sm:$0xff]
        %v4287 = vperm.slane %v4278, 0
        %v4288 = vmul.f32 %v4279, %v4287
        %v4289 = vmul.f32 %v4280, %v4287
        %v4290 = vmul.f32 %v4281, %v4287
        %v4291 = vmul.f32 %v4282, %v4287
        %v4292 = vmul.f32 %v4283, %v4287
        %v4293 = vmul.f32 %v4284, %v4287
        %v4294 = vmul.f32 %v4285, %v4287
        %v4295 = vmul.f32 %v4286, %v4287
        %v4296 = vadd.f32 %v4270, %v4288
        %v4297 = vadd.f32 %v4271, %v4289
        %v4298 = vadd.f32 %v4272, %v4290
        %v4299 = vadd.f32 %v4273, %v4291
        %v4300 = vadd.f32 %v4274, %v4292
        %v4301 = vadd.f32 %v4275, %v4293
        %v4302 = vadd.f32 %v4276, %v4294
        %v4303 = vadd.f32 %v4277, %v4295
        %v4304 = vld [vmem:[%s13 + $0x4] sm:$0x1]
        %v4305 = vld [vmem:[%s1545 + $0x1] sm:$0xff]
        %v4306 = vld [vmem:[%s1545 + $0x11] sm:$0xff]
        %v4307 = vld [vmem:[%s1545 + $0x21] sm:$0xff]
        %v4308 = vld [vmem:[%s1545 + $0x31] sm:$0xff]
        %v4309 = vld [vmem:[%s1545 + $0x41] sm:$0xff]
        %v4310 = vld [vmem:[%s1545 + $0x51] sm:$0xff]
        %v4311 = vld [vmem:[%s1545 + $0x61] sm:$0xff]
        %v4312 = vld [vmem:[%s1545 + $0x71] sm:$0xff]
        %v4313 = vperm.slane %v4304, 0
        %v4314 = vmul.f32 %v4305, %v4313
        %v4315 = vmul.f32 %v4306, %v4313
        %v4316 = vmul.f32 %v4307, %v4313
        %v4317 = vmul.f32 %v4308, %v4313
        %v4318 = vmul.f32 %v4309, %v4313
        %v4319 = vmul.f32 %v4310, %v4313
        %v4320 = vmul.f32 %v4311, %v4313
        %v4321 = vmul.f32 %v4312, %v4313
        %v4322 = vadd.f32 %v4296, %v4314
        %v4323 = vadd.f32 %v4297, %v4315
        %v4324 = vadd.f32 %v4298, %v4316
        %v4325 = vadd.f32 %v4299, %v4317
        %v4326 = vadd.f32 %v4300, %v4318
        %v4327 = vadd.f32 %v4301, %v4319
        %v4328 = vadd.f32 %v4302, %v4320
        %v4329 = vadd.f32 %v4303, %v4321
        %v4330 = vld [vmem:[%s13 + $0x5] sm:$0x1]
        %v4331 = vld [vmem:[%s1545 + $0x2] sm:$0xff]
        %v4332 = vld [vmem:[%s1545 + $0x12] sm:$0xff]
        %v4333 = vld [vmem:[%s1545 + $0x22] sm:$0xff]
        %v4334 = vld [vmem:[%s1545 + $0x32] sm:$0xff]
        %v4335 = vld [vmem:[%s1545 + $0x42] sm:$0xff]
        %v4336 = vld [vmem:[%s1545 + $0x52] sm:$0xff]
        %v4337 = vld [vmem:[%s1545 + $0x62] sm:$0xff]
        %v4338 = vld [vmem:[%s1545 + $0x72] sm:$0xff]
        %v4339 = vperm.slane %v4330, 0
        %v4340 = vmul.f32 %v4331, %v4339
        %v4341 = vmul.f32 %v4332, %v4339
        %v4342 = vmul.f32 %v4333, %v4339
        %v4343 = vmul.f32 %v4334, %v4339
        %v4344 = vmul.f32 %v4335, %v4339
        %v4345 = vmul.f32 %v4336, %v4339
        %v4346 = vmul.f32 %v4337, %v4339
        %v4347 = vmul.f32 %v4338, %v4339
        %v4348 = vadd.f32 %v4322, %v4340
        %v4349 = vadd.f32 %v4323, %v4341
        %v4350 = vadd.f32 %v4324, %v4342
        %v4351 = vadd.f32 %v4325, %v4343
        %v4352 = vadd.f32 %v4326, %v4344
        %v4353 = vadd.f32 %v4327, %v4345
        %v4354 = vadd.f32 %v4328, %v4346
        %v4355 = vadd.f32 %v4329, %v4347
        %v4356 = vld [vmem:[%s13 + $0x6] sm:$0x1]
        %v4357 = vld [vmem:[%s1924] sm:$0xff]
        %v4358 = vld [vmem:[%s1924 + $0x10] sm:$0xff]
        %v4359 = vld [vmem:[%s1924 + $0x20] sm:$0xff]
        %v4360 = vld [vmem:[%s1924 + $0x30] sm:$0xff]
        %v4361 = vld [vmem:[%s1924 + $0x40] sm:$0xff]
        %v4362 = vld [vmem:[%s1924 + $0x50] sm:$0xff]
        %v4363 = vld [vmem:[%s1924 + $0x60] sm:$0xff]
        %v4364 = vld [vmem:[%s1924 + $0x70] sm:$0xff]
        %v4365 = vperm.slane %v4356, 0
        %v4366 = vmul.f32 %v4357, %v4365
        %v4367 = vmul.f32 %v4358, %v4365
        %v4368 = vmul.f32 %v4359, %v4365
        %v4369 = vmul.f32 %v4360, %v4365
        %v4370 = vmul.f32 %v4361, %v4365
        %v4371 = vmul.f32 %v4362, %v4365
        %v4372 = vmul.f32 %v4363, %v4365
        %v4373 = vmul.f32 %v4364, %v4365
        %v4374 = vadd.f32 %v4348, %v4366
        %v4375 = vadd.f32 %v4349, %v4367
        %v4376 = vadd.f32 %v4350, %v4368
        %v4377 = vadd.f32 %v4351, %v4369
        %v4378 = vadd.f32 %v4352, %v4370
        %v4379 = vadd.f32 %v4353, %v4371
        %v4380 = vadd.f32 %v4354, %v4372
        %v4381 = vadd.f32 %v4355, %v4373
        %v4382 = vld [vmem:[%s13 + $0x7] sm:$0x1]
        %v4383 = vld [vmem:[%s1924 + $0x1] sm:$0xff]
        %v4384 = vld [vmem:[%s1924 + $0x11] sm:$0xff]
        %v4385 = vld [vmem:[%s1924 + $0x21] sm:$0xff]
        %v4386 = vld [vmem:[%s1924 + $0x31] sm:$0xff]
        %v4387 = vld [vmem:[%s1924 + $0x41] sm:$0xff]
        %v4388 = vld [vmem:[%s1924 + $0x51] sm:$0xff]
        %v4389 = vld [vmem:[%s1924 + $0x61] sm:$0xff]
        %v4390 = vld [vmem:[%s1924 + $0x71] sm:$0xff]
        %v4391 = vperm.slane %v4382, 0
        %v4392 = vmul.f32 %v4383, %v4391
        %v4393 = vmul.f32 %v4384, %v4391
        %v4394 = vmul.f32 %v4385, %v4391
        %v4395 = vmul.f32 %v4386, %v4391
        %v4396 = vmul.f32 %v4387, %v4391
        %v4397 = vmul.f32 %v4388, %v4391
        %v4398 = vmul.f32 %v4389, %v4391
        %v4399 = vmul.f32 %v4390, %v4391
        %v4400 = vadd.f32 %v4374, %v4392
        %v4401 = vadd.f32 %v4375, %v4393
        %v4402 = vadd.f32 %v4376, %v4394
        %v4403 = vadd.f32 %v4377, %v4395
        %v4404 = vadd.f32 %v4378, %v4396
        %v4405 = vadd.f32 %v4379, %v4397
        %v4406 = vadd.f32 %v4380, %v4398
        %v4407 = vadd.f32 %v4381, %v4399
        %v4408 = vld [vmem:[%s13 + $0x8] sm:$0x1]
        %v4409 = vld [vmem:[%s1924 + $0x2] sm:$0xff]
        %v4410 = vld [vmem:[%s1924 + $0x12] sm:$0xff]
        %v4411 = vld [vmem:[%s1924 + $0x22] sm:$0xff]
        %v4412 = vld [vmem:[%s1924 + $0x32] sm:$0xff]
        %v4413 = vld [vmem:[%s1924 + $0x42] sm:$0xff]
        %v4414 = vld [vmem:[%s1924 + $0x52] sm:$0xff]
        %v4415 = vld [vmem:[%s1924 + $0x62] sm:$0xff]
        %v4416 = vld [vmem:[%s1924 + $0x72] sm:$0xff]
        %v4417 = vperm.slane %v4408, 0
        %v4418 = vmul.f32 %v4409, %v4417
        %v4419 = vmul.f32 %v4410, %v4417
        %v4420 = vmul.f32 %v4411, %v4417
        %v4421 = vmul.f32 %v4412, %v4417
        %v4422 = vmul.f32 %v4413, %v4417
        %v4423 = vmul.f32 %v4414, %v4417
        %v4424 = vmul.f32 %v4415, %v4417
        %v4425 = vmul.f32 %v4416, %v4417
        %v4426 = vadd.f32 %v4400, %v4418
        %v4427 = vadd.f32 %v4401, %v4419
        %v4428 = vadd.f32 %v4402, %v4420
        %v4429 = vadd.f32 %v4403, %v4421
        %v4430 = vadd.f32 %v4404, %v4422
        %v4431 = vadd.f32 %v4405, %v4423
        %v4432 = vadd.f32 %v4406, %v4424
        %v4433 = vadd.f32 %v4407, %v4425
        %v4434 = vld [vmem:[%s15] sm:$0x1]
        %v4436 = vperm.slane %v4434, 0
        %v4438 = vmul.f32 %v4426, %v4436
        %v4439 = vmul.f32 %v4427, %v4436
        %v4440 = vmul.f32 %v4428, %v4436
        %v4441 = vmul.f32 %v4429, %v4436
        %v4442 = vmul.f32 %v4430, %v4436
        %v4443 = vmul.f32 %v4431, %v4436
        %v4444 = vmul.f32 %v4432, %v4436
        %v4445 = vmul.f32 %v4433, %v4436
        %v4446 = vld [vmem:[%s17] sm:$0x1]
        %v4448 = vperm.slane %v4446, 0
        %v4450 = vadd.f32 %v4438, %v4448
        %v4451 = vadd.f32 %v4439, %v4448
        %v4452 = vadd.f32 %v4440, %v4448
        %v4453 = vadd.f32 %v4441, %v4448
        %v4454 = vadd.f32 %v4442, %v4448
        %v4455 = vadd.f32 %v4443, %v4448
        %v4456 = vadd.f32 %v4444, %v4448
        %v4457 = vadd.f32 %v4445, %v4448
        %v4458 = vxor.u32 %v4450, 2147483648
        %v4459 = vxor.u32 %v4451, 2147483648
        %v4460 = vxor.u32 %v4452, 2147483648
        %v4461 = vxor.u32 %v4453, 2147483648
        %v4462 = vxor.u32 %v4454, 2147483648
        %v4463 = vxor.u32 %v4455, 2147483648
        %v4464 = vxor.u32 %v4456, 2147483648
        %v4465 = vxor.u32 %v4457, 2147483648
        %v4466 = vmul.f32 %v4458, 1.442695
        %v4467 = vpow.pop %v4466
        %v4468 = vmul.f32 %v4459, 1.442695
        %v4469 = vpow.pop %v4468
        %v4470 = vmul.f32 %v4460, 1.442695
        %v4471 = vpow.pop %v4470
        %v4472 = vmul.f32 %v4461, 1.442695
        %v4473 = vpow.pop %v4472
        %v4474 = vmul.f32 %v4462, 1.442695
        %v4475 = vpow.pop %v4474
        %v4476 = vmul.f32 %v4463, 1.442695
        %v4477 = vpow.pop %v4476
        %v4478 = vmul.f32 %v4464, 1.442695
        %v4479 = vpow.pop %v4478
        %v4480 = vmul.f32 %v4465, 1.442695
        %v4481 = vpow.pop %v4480
        %v4482 = vadd.f32 %v4467, 1.0
        %v4483 = vadd.f32 %v4469, 1.0
        %v4484 = vadd.f32 %v4471, 1.0
        %v4485 = vadd.f32 %v4473, 1.0
        %v4486 = vadd.f32 %v4475, 1.0
        %v4487 = vadd.f32 %v4477, 1.0
        %v4488 = vadd.f32 %v4479, 1.0
        %v4489 = vadd.f32 %v4481, 1.0
        %v4490 = vrcp.pop %v4482
        %v4491 = vmul.f32 %v4482, %v4490
        %v4492 = vsub.f32 1.0, %v4491
        %v4493 = vmul.f32 %v4490, %v4492
        %v4494 = vadd.f32 %v4490, %v4493
        %vm4495 = vweird.f32 %v4482
        %vm4496 = vweird.f32 %v4490
        %vm4497 = vmor %vm4495, %vm4496
        %v4498 = vsel %vm4497, %v4490, %v4494
        %v4499 = vand.u32 2147483647, %v4482
        %vm4500 = vcmp.eq.f32.partialorder %v4499, 8.507059e+37
        %v4501 = vand.u32 %v4482, 2147483648
        %v4502 = vor.u32 1.1754944e-38, %v4501
        %v4503 = vsel %vm4500, %v4502, %v4498
        %v4504 = vmul.f32 1.0, %v4503
        %v4505 = vrcp.pop %v4483
        %v4506 = vmul.f32 %v4483, %v4505
        %v4507 = vsub.f32 1.0, %v4506
        %v4508 = vmul.f32 %v4505, %v4507
        %v4509 = vadd.f32 %v4505, %v4508
        %vm4510 = vweird.f32 %v4483
        %vm4511 = vweird.f32 %v4505
        %vm4512 = vmor %vm4510, %vm4511
        %v4513 = vsel %vm4512, %v4505, %v4509
        %v4514 = vand.u32 2147483647, %v4483
        %vm4515 = vcmp.eq.f32.partialorder %v4514, 8.507059e+37
        %v4516 = vand.u32 %v4483, 2147483648
        %v4517 = vor.u32 1.1754944e-38, %v4516
        %v4518 = vsel %vm4515, %v4517, %v4513
        %v4519 = vmul.f32 1.0, %v4518
        %v4520 = vrcp.pop %v4484
        %v4521 = vmul.f32 %v4484, %v4520
        %v4522 = vsub.f32 1.0, %v4521
        %v4523 = vmul.f32 %v4520, %v4522
        %v4524 = vadd.f32 %v4520, %v4523
        %vm4525 = vweird.f32 %v4484
        %vm4526 = vweird.f32 %v4520
        %vm4527 = vmor %vm4525, %vm4526
        %v4528 = vsel %vm4527, %v4520, %v4524
        %v4529 = vand.u32 2147483647, %v4484
        %vm4530 = vcmp.eq.f32.partialorder %v4529, 8.507059e+37
        %v4531 = vand.u32 %v4484, 2147483648
        %v4532 = vor.u32 1.1754944e-38, %v4531
        %v4533 = vsel %vm4530, %v4532, %v4528
        %v4534 = vmul.f32 1.0, %v4533
        %v4535 = vrcp.pop %v4485
        %v4536 = vmul.f32 %v4485, %v4535
        %v4537 = vsub.f32 1.0, %v4536
        %v4538 = vmul.f32 %v4535, %v4537
        %v4539 = vadd.f32 %v4535, %v4538
        %vm4540 = vweird.f32 %v4485
        %vm4541 = vweird.f32 %v4535
        %vm4542 = vmor %vm4540, %vm4541
        %v4543 = vsel %vm4542, %v4535, %v4539
        %v4544 = vand.u32 2147483647, %v4485
        %vm4545 = vcmp.eq.f32.partialorder %v4544, 8.507059e+37
        %v4546 = vand.u32 %v4485, 2147483648
        %v4547 = vor.u32 1.1754944e-38, %v4546
        %v4548 = vsel %vm4545, %v4547, %v4543
        %v4549 = vmul.f32 1.0, %v4548
        %v4550 = vrcp.pop %v4486
        %v4551 = vmul.f32 %v4486, %v4550
        %v4552 = vsub.f32 1.0, %v4551
        %v4553 = vmul.f32 %v4550, %v4552
        %v4554 = vadd.f32 %v4550, %v4553
        %vm4555 = vweird.f32 %v4486
        %vm4556 = vweird.f32 %v4550
        %vm4557 = vmor %vm4555, %vm4556
        %v4558 = vsel %vm4557, %v4550, %v4554
        %v4559 = vand.u32 2147483647, %v4486
        %vm4560 = vcmp.eq.f32.partialorder %v4559, 8.507059e+37
        %v4561 = vand.u32 %v4486, 2147483648
        %v4562 = vor.u32 1.1754944e-38, %v4561
        %v4563 = vsel %vm4560, %v4562, %v4558
        %v4564 = vmul.f32 1.0, %v4563
        %v4565 = vrcp.pop %v4487
        %v4566 = vmul.f32 %v4487, %v4565
        %v4567 = vsub.f32 1.0, %v4566
        %v4568 = vmul.f32 %v4565, %v4567
        %v4569 = vadd.f32 %v4565, %v4568
        %vm4570 = vweird.f32 %v4487
        %vm4571 = vweird.f32 %v4565
        %vm4572 = vmor %vm4570, %vm4571
        %v4573 = vsel %vm4572, %v4565, %v4569
        %v4574 = vand.u32 2147483647, %v4487
        %vm4575 = vcmp.eq.f32.partialorder %v4574, 8.507059e+37
        %v4576 = vand.u32 %v4487, 2147483648
        %v4577 = vor.u32 1.1754944e-38, %v4576
        %v4578 = vsel %vm4575, %v4577, %v4573
        %v4579 = vmul.f32 1.0, %v4578
        %v4580 = vrcp.pop %v4488
        %v4581 = vmul.f32 %v4488, %v4580
        %v4582 = vsub.f32 1.0, %v4581
        %v4583 = vmul.f32 %v4580, %v4582
        %v4584 = vadd.f32 %v4580, %v4583
        %vm4585 = vweird.f32 %v4488
        %vm4586 = vweird.f32 %v4580
        %vm4587 = vmor %vm4585, %vm4586
        %v4588 = vsel %vm4587, %v4580, %v4584
        %v4589 = vand.u32 2147483647, %v4488
        %vm4590 = vcmp.eq.f32.partialorder %v4589, 8.507059e+37
        %v4591 = vand.u32 %v4488, 2147483648
        %v4592 = vor.u32 1.1754944e-38, %v4591
        %v4593 = vsel %vm4590, %v4592, %v4588
        %v4594 = vmul.f32 1.0, %v4593
        %v4595 = vrcp.pop %v4489
        %v4596 = vmul.f32 %v4489, %v4595
        %v4597 = vsub.f32 1.0, %v4596
        %v4598 = vmul.f32 %v4595, %v4597
        %v4599 = vadd.f32 %v4595, %v4598
        %vm4600 = vweird.f32 %v4489
        %vm4601 = vweird.f32 %v4595
        %vm4602 = vmor %vm4600, %vm4601
        %v4603 = vsel %vm4602, %v4595, %v4599
        %v4604 = vand.u32 2147483647, %v4489
        %vm4605 = vcmp.eq.f32.partialorder %v4604, 8.507059e+37
        %v4606 = vand.u32 %v4489, 2147483648
        %v4607 = vor.u32 1.1754944e-38, %v4606
        %v4608 = vsel %vm4605, %v4607, %v4603
        %v4609 = vmul.f32 1.0, %v4608
        %v4610 = vmul.f32 %v4450, %v4504
        %v4611 = vmul.f32 %v4451, %v4519
        %v4612 = vmul.f32 %v4452, %v4534
        %v4613 = vmul.f32 %v4453, %v4549
        %v4614 = vmul.f32 %v4454, %v4564
        %v4615 = vmul.f32 %v4455, %v4579
        %v4616 = vmul.f32 %v4456, %v4594
        %v4617 = vmul.f32 %v4457, %v4609
        %v4618 = vsel %vm1038, %v4610, 0.0
        %v4619 = vsel %vm1038, %v4611, 0.0
        %v4620 = vadd.f32 %v4618, %v4619
        %v4621 = vsel %vm1038, %v4612, 0.0
        %v4622 = vadd.f32 %v4620, %v4621
        %v4623 = vsel %vm1038, %v4613, 0.0
        %v4624 = vadd.f32 %v4622, %v4623
        %v4625 = vsel %vm1038, %v4614, 0.0
        %v4626 = vadd.f32 %v4624, %v4625
        %v4627 = vsel %vm1038, %v4615, 0.0
        %v4628 = vadd.f32 %v4626, %v4627
        %v4629 = vsel %vm1038, %v4616, 0.0
        %v4630 = vadd.f32 %v4628, %v4629
        %v4631 = vsel %vm1038, %v4617, 0.0
        %v4632 = vadd.f32 %v4630, %v4631
        %v4633 = vrot.slane %v4632, 4
        %v4634 = vadd.f32 %v4632, %v4633
        %v4635 = vrot.slane %v4634, 2
        %v4636 = vadd.f32 %v4634, %v4635
        %v4637 = vrot.slane %v4636, 1
        %v4638 = vadd.f32 %v4636, %v4637
        %v4639 = vrcp.pop 64.0
        %v4640 = vmul.f32 64.0, %v4639
        %v4641 = vsub.f32 1.0, %v4640
        %v4642 = vmul.f32 %v4639, %v4641
        %v4643 = vadd.f32 %v4639, %v4642
        %vm4644 = vweird.f32 %v4639
        %v4645 = vsel %vm4644, %v4639, %v4643
        %v4646 = vmul.f32 %v4638, %v4645
        %v4647 = vld [vmem:[%s19] sm:$0xff]
        %v4648 = vld [vmem:[%s21] sm:$0x1]
        %v4650 = vsel %vm1038, %v4646, 0
        %4652 = vmatpush.msra.mxu0 0.0
        %4653 = vmatpush.msra.mxu0 0.0
        %4654 = vmatpush.msra.mxu0 0.0
        %4655 = vmatpush.msra.mxu0 0.0
        %4656 = vmatpush.msra.mxu0 0.0
        %4657 = vmatpush.msra.mxu0 0.0
        %4658 = vmatpush.msra.mxu0 0.0
        %4659 = vmatpush.msra.mxu0 0.0
        %4660 = vmatpush.msra.mxu0 0.0
        %4661 = vmatpush.msra.mxu0 0.0
        %4662 = vmatpush.msra.mxu0 0.0
        %4663 = vmatpush.msra.mxu0 0.0
        %4664 = vmatpush.msra.mxu0 0.0
        %4665 = vmatpush.msra.mxu0 0.0
        %4666 = vmatpush.msra.mxu0 0.0
        %4667 = vmatpush.msra.mxu0 %v4647
        %4668 = vmatmul.f32.gmra.mxu0 %v4650
        %v4669 = vpop.f32.mrf.mxu0
        %v4670 = vadd.f32 %v4648, %v4669
        %4671 = vdwg.mxu0
        %v4672 = vxor.u32 %v4670, 2147483648
        %v4673 = vmul.f32 %v4672, 1.442695
        %v4674 = vpow.pop %v4673
        %v4675 = vadd.f32 %v4674, 1.0
        %v4676 = vrcp.pop %v4675
        %v4677 = vmul.f32 %v4675, %v4676
        %v4678 = vsub.f32 1.0, %v4677
        %v4679 = vmul.f32 %v4676, %v4678
        %v4680 = vadd.f32 %v4676, %v4679
        %vm4681 = vweird.f32 %v4675
        %vm4682 = vweird.f32 %v4676
        %vm4683 = vmor %vm4681, %vm4682
        %v4684 = vsel %vm4683, %v4676, %v4680
        %v4685 = vand.u32 2147483647, %v4675
        %vm4686 = vcmp.eq.f32.partialorder %v4685, 8.507059e+37
        %v4687 = vand.u32 %v4675, 2147483648
        %v4688 = vor.u32 1.1754944e-38, %v4687
        %v4689 = vsel %vm4686, %v4688, %v4684
        %v4690 = vmul.f32 1.0, %v4689
        %v4691 = vmul.f32 %v4670, %v4690
        %v4692 = vld [vmem:[%s23] sm:$0xff]
        %v4693 = vld [vmem:[%s25] sm:$0x1]
        %v4695 = vsel %vm1038, %v4691, 0
        %4697 = vmatpush.msra.mxu0 0.0
        %4698 = vmatpush.msra.mxu0 0.0
        %4699 = vmatpush.msra.mxu0 0.0
        %4700 = vmatpush.msra.mxu0 0.0
        %4701 = vmatpush.msra.mxu0 0.0
        %4702 = vmatpush.msra.mxu0 0.0
        %4703 = vmatpush.msra.mxu0 0.0
        %4704 = vmatpush.msra.mxu0 0.0
        %4705 = vmatpush.msra.mxu0 0.0
        %4706 = vmatpush.msra.mxu0 0.0
        %4707 = vmatpush.msra.mxu0 0.0
        %4708 = vmatpush.msra.mxu0 0.0
        %4709 = vmatpush.msra.mxu0 0.0
        %4710 = vmatpush.msra.mxu0 0.0
        %4711 = vmatpush.msra.mxu0 0.0
        %4712 = vmatpush.msra.mxu0 %v4692
        %4713 = vmatmul.f32.gmra.mxu0 %v4695
        %v4714 = vpop.f32.mrf.mxu0
        %v4715 = vadd.f32 %v4693, %v4714
        %4716 = vdwg.mxu0
        %v4717 = vxor.u32 %v4715, 2147483648
        %v4718 = vmul.f32 %v4717, 1.442695
        %v4719 = vpow.pop %v4718
        %v4720 = vadd.f32 %v4719, 1.0
        %v4721 = vrcp.pop %v4720
        %v4722 = vmul.f32 %v4720, %v4721
        %v4723 = vsub.f32 1.0, %v4722
        %v4724 = vmul.f32 %v4721, %v4723
        %v4725 = vadd.f32 %v4721, %v4724
        %vm4726 = vweird.f32 %v4720
        %vm4727 = vweird.f32 %v4721
        %vm4728 = vmor %vm4726, %vm4727
        %v4729 = vsel %vm4728, %v4721, %v4725
        %v4730 = vand.u32 2147483647, %v4720
        %vm4731 = vcmp.eq.f32.partialorder %v4730, 8.507059e+37
        %v4732 = vand.u32 %v4720, 2147483648
        %v4733 = vor.u32 1.1754944e-38, %v4732
        %v4734 = vsel %vm4731, %v4733, %v4729
        %v4735 = vmul.f32 1.0, %v4734
        %v4736 = vperm.slane %v4735, 0
        %v4737 = vmul.f32 %v4610, %v4736
        %v4738 = vmul.f32 %v4611, %v4736
        %v4739 = vmul.f32 %v4612, %v4736
        %v4740 = vmul.f32 %v4613, %v4736
        %v4741 = vmul.f32 %v4614, %v4736
        %v4742 = vmul.f32 %v4615, %v4736
        %v4743 = vmul.f32 %v4616, %v4736
        %v4744 = vmul.f32 %v4617, %v4736
        %v4745 = vpack.c.bf16 %v4738, %v4737
        %v4746 = vpack.c.bf16 %v4740, %v4739
        %v4747 = vpack.c.bf16 %v4742, %v4741
        %v4748 = vpack.c.bf16 %v4744, %v4743
        %v4749 = vld [vmem:[%s27] sm:$0xf]
        %v4751 = vsel %vm1038, %v4745, 0
        %v4754 = vsel %vm1038, %v4746, 0
        %v4757 = vsel %vm1038, %v4747, 0
        %v4760 = vsel %vm1038, %v4748, 0
        %vm4762 = vcmask 1043456
        %v4764 = vsel %vm4762, %v4749, 0
        %4766 = vmatpush.bf16.msra.mxu0 0
        %4767 = vmatpush.bf16.msra.mxu0 0
        %4768 = vmatpush.bf16.msra.mxu0 0
        %4769 = vmatpush.bf16.msra.mxu0 0
        %4770 = vmatpush.bf16.msra.mxu0 0
        %4771 = vmatpush.bf16.msra.mxu0 0
        %4772 = vmatpush.bf16.msra.mxu0 0
        %4773 = vmatpush.bf16.msra.mxu0 %v4764
        %4774 = vmatmul.bf16.gmra.mxu0 %v4751
        %v4775 = vpop.f32.mrf.mxu0
        %v4776 = vadd.f32 0.0, %v4775
        %v4777 = vpop.f32.mrf.mxu0
        %v4778 = vadd.f32 0.0, %v4777
        %4779 = vmatmul.bf16.gmra.mxu0 %v4754
        %v4780 = vpop.f32.mrf.mxu0
        %v4781 = vadd.f32 0.0, %v4780
        %v4782 = vpop.f32.mrf.mxu0
        %v4783 = vadd.f32 0.0, %v4782
        %4784 = vmatmul.bf16.gmra.mxu0 %v4757
        %v4785 = vpop.f32.mrf.mxu0
        %v4786 = vadd.f32 0.0, %v4785
        %v4787 = vpop.f32.mrf.mxu0
        %v4788 = vadd.f32 0.0, %v4787
        %4789 = vmatmul.bf16.gmra.mxu0 %v4760
        %v4790 = vpop.f32.mrf.mxu0
        %v4791 = vadd.f32 0.0, %v4790
        %v4792 = vpop.f32.mrf.mxu0
        %v4793 = vadd.f32 0.0, %v4792
        %4794 = vdwg.mxu0
        %v4795 = vld [vmem:[%s29] sm:$0x1]
        %v4797 = vperm.slane %v4795, 0
        %v4799 = vmul.f32 %v4776, %v4797
        %v4800 = vmul.f32 %v4778, %v4797
        %v4801 = vmul.f32 %v4781, %v4797
        %v4802 = vmul.f32 %v4783, %v4797
        %v4803 = vmul.f32 %v4786, %v4797
        %v4804 = vmul.f32 %v4788, %v4797
        %v4805 = vmul.f32 %v4791, %v4797
        %v4806 = vmul.f32 %v4793, %v4797
        %v4807 = vld [vmem:[%s31] sm:$0x1]
        %v4809 = vperm.slane %v4807, 0
        %v4811 = vadd.f32 %v4799, %v4809
        %v4812 = vadd.f32 %v4800, %v4809
        %v4813 = vadd.f32 %v4801, %v4809
        %v4814 = vadd.f32 %v4802, %v4809
        %v4815 = vadd.f32 %v4803, %v4809
        %v4816 = vadd.f32 %v4804, %v4809
        %v4817 = vadd.f32 %v4805, %v4809
        %v4818 = vadd.f32 %v4806, %v4809
        %v4819 = vld [vmem:[#allocation3] sm:$0xff]
        %v4820 = vld [vmem:[#allocation3 + $0x8] sm:$0xff]
        %v4821 = vld [vmem:[#allocation3 + $0x10] sm:$0xff]
        %v4822 = vld [vmem:[#allocation3 + $0x18] sm:$0xff]
        %v4823 = vld [vmem:[#allocation3 + $0x20] sm:$0xff]
        %v4824 = vld [vmem:[#allocation3 + $0x28] sm:$0xff]
        %v4825 = vld [vmem:[#allocation3 + $0x30] sm:$0xff]
        %v4826 = vld [vmem:[#allocation3 + $0x38] sm:$0xff]
        %v4827 = vadd.f32 %v4811, %v4819
        %v4828 = vadd.f32 %v4812, %v4820
        %v4829 = vadd.f32 %v4813, %v4821
        %v4830 = vadd.f32 %v4814, %v4822
        %v4831 = vadd.f32 %v4815, %v4823
        %v4832 = vadd.f32 %v4816, %v4824
        %v4833 = vadd.f32 %v4817, %v4825
        %v4834 = vadd.f32 %v4818, %v4826
        %v4835 = vpack.c.bf16 %v4828, %v4827
        %v4836 = vpack.c.bf16 %v4830, %v4829
        %v4837 = vpack.c.bf16 %v4832, %v4831
        %v4838 = vpack.c.bf16 %v4834, %v4833
        %v4839 = vld [vmem:[%s33] sm:$0xf]
        %v4841 = vsel %vm1038, %v4835, 0
        %v4844 = vsel %vm1038, %v4836, 0
        %v4847 = vsel %vm1038, %v4837, 0
        %v4850 = vsel %vm1038, %v4838, 0
        %v4853 = vsel %vm4762, %v4839, 0
        %4855 = vmatpush.bf16.msra.mxu0 0
        %4856 = vmatpush.bf16.msra.mxu0 0
        %4857 = vmatpush.bf16.msra.mxu0 0
        %4858 = vmatpush.bf16.msra.mxu0 0
        %4859 = vmatpush.bf16.msra.mxu0 0
        %4860 = vmatpush.bf16.msra.mxu0 0
        %4861 = vmatpush.bf16.msra.mxu0 0
        %4862 = vmatpush.bf16.msra.mxu0 %v4853
        %4863 = vmatmul.bf16.gmra.mxu0 %v4841
        %v4864 = vpop.f32.mrf.mxu0
        %v4865 = vadd.f32 0.0, %v4864
        %v4866 = vpop.f32.mrf.mxu0
        %v4867 = vadd.f32 0.0, %v4866
        %4868 = vmatmul.bf16.gmra.mxu0 %v4844
        %v4869 = vpop.f32.mrf.mxu0
        %v4870 = vadd.f32 0.0, %v4869
        %v4871 = vpop.f32.mrf.mxu0
        %v4872 = vadd.f32 0.0, %v4871
        %4873 = vmatmul.bf16.gmra.mxu0 %v4847
        %v4874 = vpop.f32.mrf.mxu0
        %v4875 = vadd.f32 0.0, %v4874
        %v4876 = vpop.f32.mrf.mxu0
        %v4877 = vadd.f32 0.0, %v4876
        %4878 = vmatmul.bf16.gmra.mxu0 %v4850
        %v4879 = vpop.f32.mrf.mxu0
        %v4880 = vadd.f32 0.0, %v4879
        %v4881 = vpop.f32.mrf.mxu0
        %v4882 = vadd.f32 0.0, %v4881
        %4883 = vdwg.mxu0
        %v4884 = vld [vmem:[%s35] sm:$0x1]
        %v4886 = vperm.slane %v4884, 0
        %v4888 = vmul.f32 %v4865, %v4886
        %v4889 = vmul.f32 %v4867, %v4886
        %v4890 = vmul.f32 %v4870, %v4886
        %v4891 = vmul.f32 %v4872, %v4886
        %v4892 = vmul.f32 %v4875, %v4886
        %v4893 = vmul.f32 %v4877, %v4886
        %v4894 = vmul.f32 %v4880, %v4886
        %v4895 = vmul.f32 %v4882, %v4886
        %v4896 = vld [vmem:[%s37] sm:$0x1]
        %v4898 = vperm.slane %v4896, 0
        %v4900 = vadd.f32 %v4888, %v4898
        %v4901 = vadd.f32 %v4889, %v4898
        %v4902 = vadd.f32 %v4890, %v4898
        %v4903 = vadd.f32 %v4891, %v4898
        %v4904 = vadd.f32 %v4892, %v4898
        %v4905 = vadd.f32 %v4893, %v4898
        %v4906 = vadd.f32 %v4894, %v4898
        %v4907 = vadd.f32 %v4895, %v4898
        %v4908 = vxor.u32 %v4900, 2147483648
        %v4909 = vxor.u32 %v4901, 2147483648
        %v4910 = vxor.u32 %v4902, 2147483648
        %v4911 = vxor.u32 %v4903, 2147483648
        %v4912 = vxor.u32 %v4904, 2147483648
        %v4913 = vxor.u32 %v4905, 2147483648
        %v4914 = vxor.u32 %v4906, 2147483648
        %v4915 = vxor.u32 %v4907, 2147483648
        %v4916 = vmul.f32 %v4908, 1.442695
        %v4917 = vpow.pop %v4916
        %v4918 = vmul.f32 %v4909, 1.442695
        %v4919 = vpow.pop %v4918
        %v4920 = vmul.f32 %v4910, 1.442695
        %v4921 = vpow.pop %v4920
        %v4922 = vmul.f32 %v4911, 1.442695
        %v4923 = vpow.pop %v4922
        %v4924 = vmul.f32 %v4912, 1.442695
        %v4925 = vpow.pop %v4924
        %v4926 = vmul.f32 %v4913, 1.442695
        %v4927 = vpow.pop %v4926
        %v4928 = vmul.f32 %v4914, 1.442695
        %v4929 = vpow.pop %v4928
        %v4930 = vmul.f32 %v4915, 1.442695
        %v4931 = vpow.pop %v4930
        %v4932 = vadd.f32 %v4917, 1.0
        %v4933 = vadd.f32 %v4919, 1.0
        %v4934 = vadd.f32 %v4921, 1.0
        %v4935 = vadd.f32 %v4923, 1.0
        %v4936 = vadd.f32 %v4925, 1.0
        %v4937 = vadd.f32 %v4927, 1.0
        %v4938 = vadd.f32 %v4929, 1.0
        %v4939 = vadd.f32 %v4931, 1.0
        %v4940 = vrcp.pop %v4932
        %v4941 = vmul.f32 %v4932, %v4940
        %v4942 = vsub.f32 1.0, %v4941
        %v4943 = vmul.f32 %v4940, %v4942
        %v4944 = vadd.f32 %v4940, %v4943
        %vm4945 = vweird.f32 %v4932
        %vm4946 = vweird.f32 %v4940
        %vm4947 = vmor %vm4945, %vm4946
        %v4948 = vsel %vm4947, %v4940, %v4944
        %v4949 = vand.u32 2147483647, %v4932
        %vm4950 = vcmp.eq.f32.partialorder %v4949, 8.507059e+37
        %v4951 = vand.u32 %v4932, 2147483648
        %v4952 = vor.u32 1.1754944e-38, %v4951
        %v4953 = vsel %vm4950, %v4952, %v4948
        %v4954 = vmul.f32 1.0, %v4953
        %v4955 = vrcp.pop %v4933
        %v4956 = vmul.f32 %v4933, %v4955
        %v4957 = vsub.f32 1.0, %v4956
        %v4958 = vmul.f32 %v4955, %v4957
        %v4959 = vadd.f32 %v4955, %v4958
        %vm4960 = vweird.f32 %v4933
        %vm4961 = vweird.f32 %v4955
        %vm4962 = vmor %vm4960, %vm4961
        %v4963 = vsel %vm4962, %v4955, %v4959
        %v4964 = vand.u32 2147483647, %v4933
        %vm4965 = vcmp.eq.f32.partialorder %v4964, 8.507059e+37
        %v4966 = vand.u32 %v4933, 2147483648
        %v4967 = vor.u32 1.1754944e-38, %v4966
        %v4968 = vsel %vm4965, %v4967, %v4963
        %v4969 = vmul.f32 1.0, %v4968
        %v4970 = vrcp.pop %v4934
        %v4971 = vmul.f32 %v4934, %v4970
        %v4972 = vsub.f32 1.0, %v4971
        %v4973 = vmul.f32 %v4970, %v4972
        %v4974 = vadd.f32 %v4970, %v4973
        %vm4975 = vweird.f32 %v4934
        %vm4976 = vweird.f32 %v4970
        %vm4977 = vmor %vm4975, %vm4976
        %v4978 = vsel %vm4977, %v4970, %v4974
        %v4979 = vand.u32 2147483647, %v4934
        %vm4980 = vcmp.eq.f32.partialorder %v4979, 8.507059e+37
        %v4981 = vand.u32 %v4934, 2147483648
        %v4982 = vor.u32 1.1754944e-38, %v4981
        %v4983 = vsel %vm4980, %v4982, %v4978
        %v4984 = vmul.f32 1.0, %v4983
        %v4985 = vrcp.pop %v4935
        %v4986 = vmul.f32 %v4935, %v4985
        %v4987 = vsub.f32 1.0, %v4986
        %v4988 = vmul.f32 %v4985, %v4987
        %v4989 = vadd.f32 %v4985, %v4988
        %vm4990 = vweird.f32 %v4935
        %vm4991 = vweird.f32 %v4985
        %vm4992 = vmor %vm4990, %vm4991
        %v4993 = vsel %vm4992, %v4985, %v4989
        %v4994 = vand.u32 2147483647, %v4935
        %vm4995 = vcmp.eq.f32.partialorder %v4994, 8.507059e+37
        %v4996 = vand.u32 %v4935, 2147483648
        %v4997 = vor.u32 1.1754944e-38, %v4996
        %v4998 = vsel %vm4995, %v4997, %v4993
        %v4999 = vmul.f32 1.0, %v4998
        %v5000 = vrcp.pop %v4936
        %v5001 = vmul.f32 %v4936, %v5000
        %v5002 = vsub.f32 1.0, %v5001
        %v5003 = vmul.f32 %v5000, %v5002
        %v5004 = vadd.f32 %v5000, %v5003
        %vm5005 = vweird.f32 %v4936
        %vm5006 = vweird.f32 %v5000
        %vm5007 = vmor %vm5005, %vm5006
        %v5008 = vsel %vm5007, %v5000, %v5004
        %v5009 = vand.u32 2147483647, %v4936
        %vm5010 = vcmp.eq.f32.partialorder %v5009, 8.507059e+37
        %v5011 = vand.u32 %v4936, 2147483648
        %v5012 = vor.u32 1.1754944e-38, %v5011
        %v5013 = vsel %vm5010, %v5012, %v5008
        %v5014 = vmul.f32 1.0, %v5013
        %v5015 = vrcp.pop %v4937
        %v5016 = vmul.f32 %v4937, %v5015
        %v5017 = vsub.f32 1.0, %v5016
        %v5018 = vmul.f32 %v5015, %v5017
        %v5019 = vadd.f32 %v5015, %v5018
        %vm5020 = vweird.f32 %v4937
        %vm5021 = vweird.f32 %v5015
        %vm5022 = vmor %vm5020, %vm5021
        %v5023 = vsel %vm5022, %v5015, %v5019
        %v5024 = vand.u32 2147483647, %v4937
        %vm5025 = vcmp.eq.f32.partialorder %v5024, 8.507059e+37
        %v5026 = vand.u32 %v4937, 2147483648
        %v5027 = vor.u32 1.1754944e-38, %v5026
        %v5028 = vsel %vm5025, %v5027, %v5023
        %v5029 = vmul.f32 1.0, %v5028
        %v5030 = vrcp.pop %v4938
        %v5031 = vmul.f32 %v4938, %v5030
        %v5032 = vsub.f32 1.0, %v5031
        %v5033 = vmul.f32 %v5030, %v5032
        %v5034 = vadd.f32 %v5030, %v5033
        %vm5035 = vweird.f32 %v4938
        %vm5036 = vweird.f32 %v5030
        %vm5037 = vmor %vm5035, %vm5036
        %v5038 = vsel %vm5037, %v5030, %v5034
        %v5039 = vand.u32 2147483647, %v4938
        %vm5040 = vcmp.eq.f32.partialorder %v5039, 8.507059e+37
        %v5041 = vand.u32 %v4938, 2147483648
        %v5042 = vor.u32 1.1754944e-38, %v5041
        %v5043 = vsel %vm5040, %v5042, %v5038
        %v5044 = vmul.f32 1.0, %v5043
        %v5045 = vrcp.pop %v4939
        %v5046 = vmul.f32 %v4939, %v5045
        %v5047 = vsub.f32 1.0, %v5046
        %v5048 = vmul.f32 %v5045, %v5047
        %v5049 = vadd.f32 %v5045, %v5048
        %vm5050 = vweird.f32 %v4939
        %vm5051 = vweird.f32 %v5045
        %vm5052 = vmor %vm5050, %vm5051
        %v5053 = vsel %vm5052, %v5045, %v5049
        %v5054 = vand.u32 2147483647, %v4939
        %vm5055 = vcmp.eq.f32.partialorder %v5054, 8.507059e+37
        %v5056 = vand.u32 %v4939, 2147483648
        %v5057 = vor.u32 1.1754944e-38, %v5056
        %v5058 = vsel %vm5055, %v5057, %v5053
        %v5059 = vmul.f32 1.0, %v5058
        %v5060 = vmul.f32 %v4900, %v4954
        %v5061 = vmul.f32 %v4901, %v4969
        %v5062 = vmul.f32 %v4902, %v4984
        %v5063 = vmul.f32 %v4903, %v4999
        %v5064 = vmul.f32 %v4904, %v5014
        %v5065 = vmul.f32 %v4905, %v5029
        %v5066 = vmul.f32 %v4906, %v5044
        %v5067 = vmul.f32 %v4907, %v5059
        %5068 = vst.msk [vmem:[#allocation5] sm:$0xff] %vm1060, %v5060
        %5069 = vst.msk [vmem:[#allocation5 + $0x10] sm:$0xff] %vm1060, %v5061
        %5070 = vst.msk [vmem:[#allocation5 + $0x20] sm:$0xff] %vm1060, %v5062
        %5071 = vst.msk [vmem:[#allocation5 + $0x30] sm:$0xff] %vm1060, %v5063
        %5072 = vst.msk [vmem:[#allocation5 + $0x40] sm:$0xff] %vm1060, %v5064
        %5073 = vst.msk [vmem:[#allocation5 + $0x50] sm:$0xff] %vm1060, %v5065
        %5074 = vst.msk [vmem:[#allocation5 + $0x60] sm:$0xff] %vm1060, %v5066
        %5075 = vst.msk [vmem:[#allocation5 + $0x70] sm:$0xff] %vm1060, %v5067
        %v5076 = vld [vmem:[%s39] sm:$0x1]
        %v5077 = vld [vmem:[#allocation5] sm:$0x7f]
        %v5078 = vld [vmem:[#allocation5 + $0x20] sm:$0x7f]
        %v5079 = vld [vmem:[#allocation5 + $0x40] sm:$0x7f]
        %v5080 = vld [vmem:[#allocation5 + $0x60] sm:$0x7f]
        %v5081 = vperm.slane %v5076, 0
        %v5082 = vmul.f32 %v5077, %v5081
        %v5083 = vmul.f32 %v5078, %v5081
        %v5084 = vmul.f32 %v5079, %v5081
        %v5085 = vmul.f32 %v5080, %v5081
        %v5086 = vadd.f32 %v5082, 0.0
        %v5087 = vadd.f32 %v5083, 0.0
        %v5088 = vadd.f32 %v5084, 0.0
        %v5089 = vadd.f32 %v5085, 0.0
        %v5090 = vld [vmem:[%s39 + $0x1] sm:$0x1]
        %v5091 = vld [vmem:[#allocation5 + $0x1] sm:$0x7f]
        %v5092 = vld [vmem:[#allocation5 + $0x21] sm:$0x7f]
        %v5093 = vld [vmem:[#allocation5 + $0x41] sm:$0x7f]
        %v5094 = vld [vmem:[#allocation5 + $0x61] sm:$0x7f]
        %v5095 = vperm.slane %v5090, 0
        %v5096 = vmul.f32 %v5091, %v5095
        %v5097 = vmul.f32 %v5092, %v5095
        %v5098 = vmul.f32 %v5093, %v5095
        %v5099 = vmul.f32 %v5094, %v5095
        %v5100 = vadd.f32 %v5086, %v5096
        %v5101 = vadd.f32 %v5087, %v5097
        %v5102 = vadd.f32 %v5088, %v5098
        %v5103 = vadd.f32 %v5089, %v5099
        %v5104 = vld [vmem:[%s39 + $0x2] sm:$0x1]
        %v5105 = vld [vmem:[#allocation5 + $0x2] sm:$0x7f]
        %v5106 = vld [vmem:[#allocation5 + $0x22] sm:$0x7f]
        %v5107 = vld [vmem:[#allocation5 + $0x42] sm:$0x7f]
        %v5108 = vld [vmem:[#allocation5 + $0x62] sm:$0x7f]
        %v5109 = vperm.slane %v5104, 0
        %v5110 = vmul.f32 %v5105, %v5109
        %v5111 = vmul.f32 %v5106, %v5109
        %v5112 = vmul.f32 %v5107, %v5109
        %v5113 = vmul.f32 %v5108, %v5109
        %v5114 = vadd.f32 %v5100, %v5110
        %v5115 = vadd.f32 %v5101, %v5111
        %v5116 = vadd.f32 %v5102, %v5112
        %v5117 = vadd.f32 %v5103, %v5113
        %v5118 = vld [vmem:[%s39 + $0x3] sm:$0x1]
        %s5119 = scalar_lea.vmem [#allocation5], 16
        %v5120 = vld [vmem:[%s5119] sm:$0x7f]
        %v5121 = vld [vmem:[%s5119 + $0x20] sm:$0x7f]
        %v5122 = vld [vmem:[%s5119 + $0x40] sm:$0x7f]
        %v5123 = vld [vmem:[%s5119 + $0x60] sm:$0x7f]
        %v5124 = vperm.slane %v5118, 0
        %v5125 = vmul.f32 %v5120, %v5124
        %v5126 = vmul.f32 %v5121, %v5124
        %v5127 = vmul.f32 %v5122, %v5124
        %v5128 = vmul.f32 %v5123, %v5124
        %v5129 = vadd.f32 %v5114, %v5125
        %v5130 = vadd.f32 %v5115, %v5126
        %v5131 = vadd.f32 %v5116, %v5127
        %v5132 = vadd.f32 %v5117, %v5128
        %v5133 = vld [vmem:[%s39 + $0x4] sm:$0x1]
        %v5134 = vld [vmem:[%s5119 + $0x1] sm:$0x7f]
        %v5135 = vld [vmem:[%s5119 + $0x21] sm:$0x7f]
        %v5136 = vld [vmem:[%s5119 + $0x41] sm:$0x7f]
        %v5137 = vld [vmem:[%s5119 + $0x61] sm:$0x7f]
        %v5138 = vperm.slane %v5133, 0
        %v5139 = vmul.f32 %v5134, %v5138
        %v5140 = vmul.f32 %v5135, %v5138
        %v5141 = vmul.f32 %v5136, %v5138
        %v5142 = vmul.f32 %v5137, %v5138
        %v5143 = vadd.f32 %v5129, %v5139
        %v5144 = vadd.f32 %v5130, %v5140
        %v5145 = vadd.f32 %v5131, %v5141
        %v5146 = vadd.f32 %v5132, %v5142
        %v5147 = vld [vmem:[%s39 + $0x5] sm:$0x1]
        %v5148 = vld [vmem:[%s5119 + $0x2] sm:$0x7f]
        %v5149 = vld [vmem:[%s5119 + $0x22] sm:$0x7f]
        %v5150 = vld [vmem:[%s5119 + $0x42] sm:$0x7f]
        %v5151 = vld [vmem:[%s5119 + $0x62] sm:$0x7f]
        %v5152 = vperm.slane %v5147, 0
        %v5153 = vmul.f32 %v5148, %v5152
        %v5154 = vmul.f32 %v5149, %v5152
        %v5155 = vmul.f32 %v5150, %v5152
        %v5156 = vmul.f32 %v5151, %v5152
        %v5157 = vadd.f32 %v5143, %v5153
        %v5158 = vadd.f32 %v5144, %v5154
        %v5159 = vadd.f32 %v5145, %v5155
        %v5160 = vadd.f32 %v5146, %v5156
        %v5161 = vld [vmem:[%s39 + $0x6] sm:$0x1]
        %s5162 = scalar_lea.vmem [#allocation5], 32
        %v5163 = vld [vmem:[%s5162] sm:$0x7f]
        %v5164 = vld [vmem:[%s5162 + $0x20] sm:$0x7f]
        %v5165 = vld [vmem:[%s5162 + $0x40] sm:$0x7f]
        %v5166 = vld [vmem:[%s5162 + $0x60] sm:$0x7f]
        %v5167 = vperm.slane %v5161, 0
        %v5168 = vmul.f32 %v5163, %v5167
        %v5169 = vmul.f32 %v5164, %v5167
        %v5170 = vmul.f32 %v5165, %v5167
        %v5171 = vmul.f32 %v5166, %v5167
        %v5172 = vadd.f32 %v5157, %v5168
        %v5173 = vadd.f32 %v5158, %v5169
        %v5174 = vadd.f32 %v5159, %v5170
        %v5175 = vadd.f32 %v5160, %v5171
        %v5176 = vld [vmem:[%s39 + $0x7] sm:$0x1]
        %v5177 = vld [vmem:[%s5162 + $0x1] sm:$0x7f]
        %v5178 = vld [vmem:[%s5162 + $0x21] sm:$0x7f]
        %v5179 = vld [vmem:[%s5162 + $0x41] sm:$0x7f]
        %v5180 = vld [vmem:[%s5162 + $0x61] sm:$0x7f]
        %v5181 = vperm.slane %v5176, 0
        %v5182 = vmul.f32 %v5177, %v5181
        %v5183 = vmul.f32 %v5178, %v5181
        %v5184 = vmul.f32 %v5179, %v5181
        %v5185 = vmul.f32 %v5180, %v5181
        %v5186 = vadd.f32 %v5172, %v5182
        %v5187 = vadd.f32 %v5173, %v5183
        %v5188 = vadd.f32 %v5174, %v5184
        %v5189 = vadd.f32 %v5175, %v5185
        %v5190 = vld [vmem:[%s39 + $0x8] sm:$0x1]
        %v5191 = vld [vmem:[%s5162 + $0x2] sm:$0x7f]
        %v5192 = vld [vmem:[%s5162 + $0x22] sm:$0x7f]
        %v5193 = vld [vmem:[%s5162 + $0x42] sm:$0x7f]
        %v5194 = vld [vmem:[%s5162 + $0x62] sm:$0x7f]
        %v5195 = vperm.slane %v5190, 0
        %v5196 = vmul.f32 %v5191, %v5195
        %v5197 = vmul.f32 %v5192, %v5195
        %v5198 = vmul.f32 %v5193, %v5195
        %v5199 = vmul.f32 %v5194, %v5195
        %v5200 = vadd.f32 %v5186, %v5196
        %v5201 = vadd.f32 %v5187, %v5197
        %v5202 = vadd.f32 %v5188, %v5198
        %v5203 = vadd.f32 %v5189, %v5199
        %v5204 = vld [vmem:[%s41] sm:$0x1]
        %v5205 = vld [vmem:[%s43] sm:$0x1]
        %vm5206 = vcmask 56320
        %v5208 = vsel %vm5206, %v1145, 0
        %v5211 = vsel %vm1492, %v5200, 0
        %5213 = vmatpush.msra.mxu0 0.0
        %5214 = vmatpush.msra.mxu0 0.0
        %5215 = vmatpush.msra.mxu0 0.0
        %5216 = vmatpush.msra.mxu0 0.0
        %5217 = vmatpush.msra.mxu0 0.0
        %5218 = vmatpush.msra.mxu0 0.0
        %5219 = vmatpush.msra.mxu0 0.0
        %5220 = vmatpush.msra.mxu0 0.0
        %5221 = vmatpush.msra.mxu0 0.0
        %5222 = vmatpush.msra.mxu0 0.0
        %5223 = vmatpush.msra.mxu0 0.0
        %5224 = vmatpush.msra.mxu0 0.0
        %5225 = vmatpush.msra.mxu0 0.0
        %5226 = vmatpush.msra.mxu0 0.0
        %5227 = vmatpush.msra.mxu0 0.0
        %5228 = vmatpush.msra.mxu0 %v5211
        %5229 = vmatmul.f32.gmra.mxu0 %v5208
        %v5230 = vpop.f32.mrf.mxu0
        %v5231 = vadd.f32 0.0, %v5230
        %5232 = vdwg.mxu0
        %v5234 = vperm.slane %v5204, 0
        %v5236 = vmul.f32 %v5231, %v5234
        %v5238 = vperm.slane %v5205, 0
        %v5240 = vadd.f32 %v5236, %v5238
        %v5241 = vxor.u32 %v5240, 2147483648
        %v5242 = vmul.f32 %v5241, 1.442695
        %v5243 = vpow.pop %v5242
        %v5244 = vadd.f32 %v5243, 1.0
        %v5245 = vrcp.pop %v5244
        %v5246 = vmul.f32 %v5244, %v5245
        %v5247 = vsub.f32 1.0, %v5246
        %v5248 = vmul.f32 %v5245, %v5247
        %v5249 = vadd.f32 %v5245, %v5248
        %vm5250 = vweird.f32 %v5244
        %vm5251 = vweird.f32 %v5245
        %vm5252 = vmor %vm5250, %vm5251
        %v5253 = vsel %vm5252, %v5245, %v5249
        %v5254 = vand.u32 2147483647, %v5244
        %vm5255 = vcmp.eq.f32.partialorder %v5254, 8.507059e+37
        %v5256 = vand.u32 %v5244, 2147483648
        %v5257 = vor.u32 1.1754944e-38, %v5256
        %v5258 = vsel %vm5255, %v5257, %v5253
        %v5259 = vmul.f32 1.0, %v5258
        %v5260 = vmul.f32 %v5240, %v5259
        %vm5261 = vcmask 257024
        %5262 = vst.msk [vmem:[#allocation6] sm:$0xf] %vm5261, %v5260
        %v5264 = vsel %vm1492, %v5201, 0
        %5266 = vmatpush.msra.mxu0 0.0
        %5267 = vmatpush.msra.mxu0 0.0
        %5268 = vmatpush.msra.mxu0 0.0
        %5269 = vmatpush.msra.mxu0 0.0
        %5270 = vmatpush.msra.mxu0 0.0
        %5271 = vmatpush.msra.mxu0 0.0
        %5272 = vmatpush.msra.mxu0 0.0
        %5273 = vmatpush.msra.mxu0 0.0
        %5274 = vmatpush.msra.mxu0 0.0
        %5275 = vmatpush.msra.mxu0 0.0
        %5276 = vmatpush.msra.mxu0 0.0
        %5277 = vmatpush.msra.mxu0 0.0
        %5278 = vmatpush.msra.mxu0 0.0
        %5279 = vmatpush.msra.mxu0 0.0
        %5280 = vmatpush.msra.mxu0 0.0
        %5281 = vmatpush.msra.mxu0 %v5264
        %5282 = vmatmul.f32.gmra.mxu0 %v5208
        %v5283 = vpop.f32.mrf.mxu0
        %v5284 = vadd.f32 0.0, %v5283
        %5285 = vdwg.mxu0
        %v5286 = vmul.f32 %v5284, %v5234
        %v5287 = vadd.f32 %v5286, %v5238
        %v5288 = vxor.u32 %v5287, 2147483648
        %v5289 = vmul.f32 %v5288, 1.442695
        %v5290 = vpow.pop %v5289
        %v5291 = vadd.f32 %v5290, 1.0
        %v5292 = vrcp.pop %v5291
        %v5293 = vmul.f32 %v5291, %v5292
        %v5294 = vsub.f32 1.0, %v5293
        %v5295 = vmul.f32 %v5292, %v5294
        %v5296 = vadd.f32 %v5292, %v5295
        %vm5297 = vweird.f32 %v5291
        %vm5298 = vweird.f32 %v5292
        %vm5299 = vmor %vm5297, %vm5298
        %v5300 = vsel %vm5299, %v5292, %v5296
        %v5301 = vand.u32 2147483647, %v5291
        %vm5302 = vcmp.eq.f32.partialorder %v5301, 8.507059e+37
        %v5303 = vand.u32 %v5291, 2147483648
        %v5304 = vor.u32 1.1754944e-38, %v5303
        %v5305 = vsel %vm5302, %v5304, %v5300
        %v5306 = vmul.f32 1.0, %v5305
        %v5307 = vmul.f32 %v5287, %v5306
        %5308 = vst.msk [vmem:[#allocation6 + $0x4] sm:$0xf] %vm5261, %v5307
        %v5310 = vsel %vm1492, %v5202, 0
        %5312 = vmatpush.msra.mxu0 0.0
        %5313 = vmatpush.msra.mxu0 0.0
        %5314 = vmatpush.msra.mxu0 0.0
        %5315 = vmatpush.msra.mxu0 0.0
        %5316 = vmatpush.msra.mxu0 0.0
        %5317 = vmatpush.msra.mxu0 0.0
        %5318 = vmatpush.msra.mxu0 0.0
        %5319 = vmatpush.msra.mxu0 0.0
        %5320 = vmatpush.msra.mxu0 0.0
        %5321 = vmatpush.msra.mxu0 0.0
        %5322 = vmatpush.msra.mxu0 0.0
        %5323 = vmatpush.msra.mxu0 0.0
        %5324 = vmatpush.msra.mxu0 0.0
        %5325 = vmatpush.msra.mxu0 0.0
        %5326 = vmatpush.msra.mxu0 0.0
        %5327 = vmatpush.msra.mxu0 %v5310
        %5328 = vmatmul.f32.gmra.mxu0 %v5208
        %v5329 = vpop.f32.mrf.mxu0
        %v5330 = vadd.f32 0.0, %v5329
        %5331 = vdwg.mxu0
        %v5332 = vmul.f32 %v5330, %v5234
        %v5333 = vadd.f32 %v5332, %v5238
        %v5334 = vxor.u32 %v5333, 2147483648
        %v5335 = vmul.f32 %v5334, 1.442695
        %v5336 = vpow.pop %v5335
        %v5337 = vadd.f32 %v5336, 1.0
        %v5338 = vrcp.pop %v5337
        %v5339 = vmul.f32 %v5337, %v5338
        %v5340 = vsub.f32 1.0, %v5339
        %v5341 = vmul.f32 %v5338, %v5340
        %v5342 = vadd.f32 %v5338, %v5341
        %vm5343 = vweird.f32 %v5337
        %vm5344 = vweird.f32 %v5338
        %vm5345 = vmor %vm5343, %vm5344
        %v5346 = vsel %vm5345, %v5338, %v5342
        %v5347 = vand.u32 2147483647, %v5337
        %vm5348 = vcmp.eq.f32.partialorder %v5347, 8.507059e+37
        %v5349 = vand.u32 %v5337, 2147483648
        %v5350 = vor.u32 1.1754944e-38, %v5349
        %v5351 = vsel %vm5348, %v5350, %v5346
        %v5352 = vmul.f32 1.0, %v5351
        %v5353 = vmul.f32 %v5333, %v5352
        %5354 = vst.msk [vmem:[#allocation6 + $0x8] sm:$0xf] %vm5261, %v5353
        %v5356 = vsel %vm1492, %v5203, 0
        %5358 = vmatpush.msra.mxu0 0.0
        %5359 = vmatpush.msra.mxu0 0.0
        %5360 = vmatpush.msra.mxu0 0.0
        %5361 = vmatpush.msra.mxu0 0.0
        %5362 = vmatpush.msra.mxu0 0.0
        %5363 = vmatpush.msra.mxu0 0.0
        %5364 = vmatpush.msra.mxu0 0.0
        %5365 = vmatpush.msra.mxu0 0.0
        %5366 = vmatpush.msra.mxu0 0.0
        %5367 = vmatpush.msra.mxu0 0.0
        %5368 = vmatpush.msra.mxu0 0.0
        %5369 = vmatpush.msra.mxu0 0.0
        %5370 = vmatpush.msra.mxu0 0.0
        %5371 = vmatpush.msra.mxu0 0.0
        %5372 = vmatpush.msra.mxu0 0.0
        %5373 = vmatpush.msra.mxu0 %v5356
        %5374 = vmatmul.f32.gmra.mxu0 %v5208
        %v5375 = vpop.f32.mrf.mxu0
        %v5376 = vadd.f32 0.0, %v5375
        %5377 = vdwg.mxu0
        %v5378 = vmul.f32 %v5376, %v5234
        %v5379 = vadd.f32 %v5378, %v5238
        %v5380 = vxor.u32 %v5379, 2147483648
        %v5381 = vmul.f32 %v5380, 1.442695
        %v5382 = vpow.pop %v5381
        %v5383 = vadd.f32 %v5382, 1.0
        %v5384 = vrcp.pop %v5383
        %v5385 = vmul.f32 %v5383, %v5384
        %v5386 = vsub.f32 1.0, %v5385
        %v5387 = vmul.f32 %v5384, %v5386
        %v5388 = vadd.f32 %v5384, %v5387
        %vm5389 = vweird.f32 %v5383
        %vm5390 = vweird.f32 %v5384
        %vm5391 = vmor %vm5389, %vm5390
        %v5392 = vsel %vm5391, %v5384, %v5388
        %v5393 = vand.u32 2147483647, %v5383
        %vm5394 = vcmp.eq.f32.partialorder %v5393, 8.507059e+37
        %v5395 = vand.u32 %v5383, 2147483648
        %v5396 = vor.u32 1.1754944e-38, %v5395
        %v5397 = vsel %vm5394, %v5396, %v5392
        %v5398 = vmul.f32 1.0, %v5397
        %v5399 = vmul.f32 %v5379, %v5398
        %5400 = vst.msk [vmem:[#allocation6 + $0xc] sm:$0xf] %vm5261, %v5399
        %v5401 = vld [vmem:[#allocation6] sm:$0xff]
        %v5402 = vld [vmem:[#allocation6 + $0x8] sm:$0xff]
        %v5403 = vsel %vm1060, %v5401, 0.0
        %v5404 = vsel %vm1060, %v5402, 0.0
        %v5405 = vadd.f32 %v5403, %v5404
        %v5406 = vrot.slane %v5405, 4
        %v5407 = vadd.f32 %v5405, %v5406
        %v5408 = vrot.slane %v5407, 2
        %v5409 = vadd.f32 %v5407, %v5408
        %v5410 = vrot.slane %v5409, 1
        %v5411 = vadd.f32 %v5409, %v5410
        %v5412 = vrcp.pop 16.0
        %v5413 = vmul.f32 16.0, %v5412
        %v5414 = vsub.f32 1.0, %v5413
        %v5415 = vmul.f32 %v5412, %v5414
        %v5416 = vadd.f32 %v5412, %v5415
        %vm5417 = vweird.f32 %v5412
        %v5418 = vsel %vm5417, %v5412, %v5416
        %v5419 = vmul.f32 %v5411, %v5418
        %v5420 = vld [vmem:[%s45] sm:$0xff]
        %v5421 = vld [vmem:[%s45 + $0x8] sm:$0xff]
        %v5422 = vld [vmem:[%s45 + $0x10] sm:$0xff]
        %v5423 = vld [vmem:[%s45 + $0x18] sm:$0xff]
        %v5424 = vld [vmem:[%s47] sm:$0x1]
        %v5426 = vsel %vm1060, %v5419, 0
        %5428 = vmatpush.msra.mxu0 0.0
        %5429 = vmatpush.msra.mxu0 0.0
        %5430 = vmatpush.msra.mxu0 0.0
        %5431 = vmatpush.msra.mxu0 0.0
        %5432 = vmatpush.msra.mxu0 0.0
        %5433 = vmatpush.msra.mxu0 0.0
        %5434 = vmatpush.msra.mxu0 0.0
        %5435 = vmatpush.msra.mxu0 0.0
        %5436 = vmatpush.msra.mxu0 0.0
        %5437 = vmatpush.msra.mxu0 0.0
        %5438 = vmatpush.msra.mxu0 0.0
        %5439 = vmatpush.msra.mxu0 0.0
        %5440 = vmatpush.msra.mxu0 %v5423
        %5441 = vmatpush.msra.mxu0 %v5422
        %5442 = vmatpush.msra.mxu0 %v5421
        %5443 = vmatpush.msra.mxu0 %v5420
        %5444 = vmatmul.f32.gmra.mxu0 %v5426
        %v5445 = vpop.f32.mrf.mxu0
        %v5446 = vadd.f32 %v5424, %v5445
        %5447 = vdwg.mxu0
        %v5448 = vxor.u32 %v5446, 2147483648
        %v5449 = vmul.f32 %v5448, 1.442695
        %v5450 = vpow.pop %v5449
        %v5451 = vadd.f32 %v5450, 1.0
        %v5452 = vrcp.pop %v5451
        %v5453 = vmul.f32 %v5451, %v5452
        %v5454 = vsub.f32 1.0, %v5453
        %v5455 = vmul.f32 %v5452, %v5454
        %v5456 = vadd.f32 %v5452, %v5455
        %vm5457 = vweird.f32 %v5451
        %vm5458 = vweird.f32 %v5452
        %vm5459 = vmor %vm5457, %vm5458
        %v5460 = vsel %vm5459, %v5452, %v5456
        %v5461 = vand.u32 2147483647, %v5451
        %vm5462 = vcmp.eq.f32.partialorder %v5461, 8.507059e+37
        %v5463 = vand.u32 %v5451, 2147483648
        %v5464 = vor.u32 1.1754944e-38, %v5463
        %v5465 = vsel %vm5462, %v5464, %v5460
        %v5466 = vmul.f32 1.0, %v5465
        %v5467 = vmul.f32 %v5446, %v5466
        %v5468 = vld [vmem:[%s49] sm:$0xff]
        %v5469 = vld [vmem:[%s51] sm:$0x1]
        %v5471 = vsel %vm1038, %v5467, 0
        %5473 = vmatpush.msra.mxu0 0.0
        %5474 = vmatpush.msra.mxu0 0.0
        %5475 = vmatpush.msra.mxu0 0.0
        %5476 = vmatpush.msra.mxu0 0.0
        %5477 = vmatpush.msra.mxu0 0.0
        %5478 = vmatpush.msra.mxu0 0.0
        %5479 = vmatpush.msra.mxu0 0.0
        %5480 = vmatpush.msra.mxu0 0.0
        %5481 = vmatpush.msra.mxu0 0.0
        %5482 = vmatpush.msra.mxu0 0.0
        %5483 = vmatpush.msra.mxu0 0.0
        %5484 = vmatpush.msra.mxu0 0.0
        %5485 = vmatpush.msra.mxu0 0.0
        %5486 = vmatpush.msra.mxu0 0.0
        %5487 = vmatpush.msra.mxu0 0.0
        %5488 = vmatpush.msra.mxu0 %v5468
        %5489 = vmatmul.f32.gmra.mxu0 %v5471
        %v5490 = vpop.f32.mrf.mxu0
        %v5491 = vadd.f32 %v5469, %v5490
        %5492 = vdwg.mxu0
        %v5493 = vxor.u32 %v5491, 2147483648
        %v5494 = vmul.f32 %v5493, 1.442695
        %v5495 = vpow.pop %v5494
        %v5496 = vadd.f32 %v5495, 1.0
        %v5497 = vrcp.pop %v5496
        %v5498 = vmul.f32 %v5496, %v5497
        %v5499 = vsub.f32 1.0, %v5498
        %v5500 = vmul.f32 %v5497, %v5499
        %v5501 = vadd.f32 %v5497, %v5500
        %vm5502 = vweird.f32 %v5496
        %vm5503 = vweird.f32 %v5497
        %vm5504 = vmor %vm5502, %vm5503
        %v5505 = vsel %vm5504, %v5497, %v5501
        %v5506 = vand.u32 2147483647, %v5496
        %vm5507 = vcmp.eq.f32.partialorder %v5506, 8.507059e+37
        %v5508 = vand.u32 %v5496, 2147483648
        %v5509 = vor.u32 1.1754944e-38, %v5508
        %v5510 = vsel %vm5507, %v5509, %v5505
        %v5511 = vmul.f32 1.0, %v5510
        %v5512 = vperm.slane %v5511, 0
        %v5513 = vmul.f32 %v5401, %v5512
        %v5514 = vmul.f32 %v5402, %v5512
        %v5515 = vpack.c.bf16 %v5514, %v5513
        %v5516 = vld [vmem:[%s53] sm:$0xf]
        %v5517 = vld [vmem:[%s53 + $0x4] sm:$0xf]
        %v5518 = vld [vmem:[%s53 + $0x8] sm:$0xf]
        %v5519 = vld [vmem:[%s53 + $0xc] sm:$0xf]
        %v5524 = vunpack.c.l.b16 %v5516
        %v5525 = vunpack.c.l.b16 %v5517
        %v5526 = vunpack.c.l.b16 %v5518
        %v5527 = vunpack.c.l.b16 %v5519
        %v5528 = vpack.c.b16 %v5525, %v5524
        %v5529 = vpack.c.b16 %v5527, %v5526
        %v5533 = vsel %vm1060, %v5515, 0
        %5535 = vmatpush.bf16.msra.mxu0 0
        %5536 = vmatpush.bf16.msra.mxu0 0
        %5537 = vmatpush.bf16.msra.mxu0 0
        %5538 = vmatpush.bf16.msra.mxu0 0
        %5539 = vmatpush.bf16.msra.mxu0 0
        %5540 = vmatpush.bf16.msra.mxu0 0
        %5541 = vmatpush.bf16.msra.mxu0 %v5529
        %5542 = vmatpush.bf16.msra.mxu0 %v5528
        %5543 = vmatmul.bf16.gmra.mxu0 %v5533
        %v5544 = vpop.f32.mrf.mxu0
        %v5545 = vadd.f32 0.0, %v5544
        %v5546 = vpop.f32.mrf.mxu0
        %v5547 = vadd.f32 0.0, %v5546
        %5548 = vdwg.mxu0
        %v5549 = vld [vmem:[%s55] sm:$0x1]
        %v5551 = vperm.slane %v5549, 0
        %v5553 = vmul.f32 %v5545, %v5551
        %v5554 = vmul.f32 %v5547, %v5551
        %v5555 = vld [vmem:[%s57] sm:$0x1]
        %v5557 = vperm.slane %v5555, 0
        %v5559 = vadd.f32 %v5553, %v5557
        %v5560 = vadd.f32 %v5554, %v5557
        %v5561 = vpack.c.bf16 %v5560, %v5559
        %v5562 = vld [vmem:[%s59] sm:$0xf]
        %v5563 = vld [vmem:[%s59 + $0x4] sm:$0xf]
        %v5566 = vunpack.c.l.b16 %v5562
        %v5567 = vunpack.c.l.b16 %v5563
        %v5568 = vpack.c.b16 %v5567, %v5566
        %vm5570 = vcmask 130048
        %v5572 = vsel %vm5570, %v5561, 0
        %5574 = vmatpush.bf16.msra.mxu0 0
        %5575 = vmatpush.bf16.msra.mxu0 0
        %5576 = vmatpush.bf16.msra.mxu0 0
        %5577 = vmatpush.bf16.msra.mxu0 0
        %5578 = vmatpush.bf16.msra.mxu0 0
        %5579 = vmatpush.bf16.msra.mxu0 0
        %5580 = vmatpush.bf16.msra.mxu0 0
        %5581 = vmatpush.bf16.msra.mxu0 %v5568
        %5582 = vmatmul.bf16.gmra.mxu0 %v5572
        %v5583 = vpop.f32.mrf.mxu0
        %v5584 = vadd.f32 0.0, %v5583
        %v5585 = vpop.f32.mrf.mxu0
        %v5586 = vadd.f32 0.0, %v5585
        %5587 = vdwg.mxu0
        %v5588 = vld [vmem:[%s61] sm:$0x1]
        %v5590 = vperm.slane %v5588, 0
        %v5592 = vmul.f32 %v5584, %v5590
        %v5593 = vmul.f32 %v5586, %v5590
        %v5594 = vld [vmem:[%s63] sm:$0x1]
        %v5596 = vperm.slane %v5594, 0
        %v5598 = vadd.f32 %v5592, %v5596
        %v5599 = vadd.f32 %v5593, %v5596
        %v5600 = vxor.u32 %v5598, 2147483648
        %v5601 = vxor.u32 %v5599, 2147483648
        %v5602 = vmul.f32 %v5600, 1.442695
        %v5603 = vpow.pop %v5602
        %v5604 = vmul.f32 %v5601, 1.442695
        %v5605 = vpow.pop %v5604
        %v5606 = vadd.f32 %v5603, 1.0
        %v5607 = vadd.f32 %v5605, 1.0
        %v5608 = vrcp.pop %v5606
        %v5609 = vmul.f32 %v5606, %v5608
        %v5610 = vsub.f32 1.0, %v5609
        %v5611 = vmul.f32 %v5608, %v5610
        %v5612 = vadd.f32 %v5608, %v5611
        %vm5613 = vweird.f32 %v5606
        %vm5614 = vweird.f32 %v5608
        %vm5615 = vmor %vm5613, %vm5614
        %v5616 = vsel %vm5615, %v5608, %v5612
        %v5617 = vand.u32 2147483647, %v5606
        %vm5618 = vcmp.eq.f32.partialorder %v5617, 8.507059e+37
        %v5619 = vand.u32 %v5606, 2147483648
        %v5620 = vor.u32 1.1754944e-38, %v5619
        %v5621 = vsel %vm5618, %v5620, %v5616
        %v5622 = vmul.f32 1.0, %v5621
        %v5623 = vrcp.pop %v5607
        %v5624 = vmul.f32 %v5607, %v5623
        %v5625 = vsub.f32 1.0, %v5624
        %v5626 = vmul.f32 %v5623, %v5625
        %v5627 = vadd.f32 %v5623, %v5626
        %vm5628 = vweird.f32 %v5607
        %vm5629 = vweird.f32 %v5623
        %vm5630 = vmor %vm5628, %vm5629
        %v5631 = vsel %vm5630, %v5623, %v5627
        %v5632 = vand.u32 2147483647, %v5607
        %vm5633 = vcmp.eq.f32.partialorder %v5632, 8.507059e+37
        %v5634 = vand.u32 %v5607, 2147483648
        %v5635 = vor.u32 1.1754944e-38, %v5634
        %v5636 = vsel %vm5633, %v5635, %v5631
        %v5637 = vmul.f32 1.0, %v5636
        %v5638 = vmul.f32 %v5598, %v5622
        %v5639 = vmul.f32 %v5599, %v5637
        %v5640 = vadd.f32 %v5638, %v5639
        %v5641 = vrot.slane %v5640, 4
        %v5642 = vadd.f32 %v5640, %v5641
        %v5643 = vrot.slane %v5642, 2
        %v5644 = vadd.f32 %v5642, %v5643
        %v5645 = vrot.slane %v5644, 1
        %v5646 = vadd.f32 %v5644, %v5645
        %v5647 = vmul.f32 %v5646, %v5418
        %5648 = vst [vmem:[%s978] sm:$0x1] %v5647
        %s5649 = sand.u32 %s764, 1
        %s5650 = scalar_lea.sflag [#allocation8], %s5649
        %s5651 = sand.u32 %s764, 1
        %s5652 = scalar_lea.vmem [#allocation7], %s5651
        // Predicated region
        $region149: #{rnsa_image_feature_extractor.1} parent=147 // pred_check
          %p5653 = pneg %p774
        $region150: #{rnsa_image_feature_extractor.1} parent=147 // pred_check_branch
          %5655 = sbr.rel (%p5653) target = $region152
        $region151: #{rnsa_image_feature_extractor.1} parent=147 // pred_region
          %5657 = vsyncadd %s5650, 0
          %s5658 = scalar_lea.hbm %s65, %s79
          %s5660 = sshll.u32 %s5652, 4
          %s5661 = int_to_ptr.vmem [resolvable:$true] %s5660
          %s5662 = sshll.u32 %s5658, 4
          %s5663 = int_to_ptr.hbm [resolvable:$true] %s5662
          %5665 = dma.vmem_to_hbm [thread:$0]  %s5661, 16, %s5663, %s5650
        $region152: #{rnsa_image_feature_extractor.1} parent=147 // pred_fallthru
          _
      $region148: #{rnsa_image_feature_extractor.1} parent=5 // pred_fallthru
        _
      %p5666 = scmp.le.s32.totalorder 2, %s74
      // Predicated region
      $region153: #{rnsa_image_feature_extractor.1} parent=5 // pred_check
        %p5667 = pneg %p5666
      $region154: #{rnsa_image_feature_extractor.1} parent=5 // pred_check_branch
        %5669 = sbr.rel (%p5667) target = $region156
      $region155: #{rnsa_image_feature_extractor.1} parent=5 // pred_region
        %s5670 = ssub.s32 %s74, 2
        // Predicated region
        $region157: #{rnsa_image_feature_extractor.1} parent=155 // pred_check
          %p5671 = pneg %p780
        $region158: #{rnsa_image_feature_extractor.1} parent=155 // pred_check_branch
          %5673 = sbr.rel (%p5671) target = $region160
        $region159: #{rnsa_image_feature_extractor.1} parent=155 // pred_region
          %s5674 = sand.u32 %s765, 1
          %s5675 = scalar_lea.sflag [#allocation8], %s5674
          %s5676 = sand.u32 %s765, 1
          %s5677 = scalar_lea.vmem [#allocation7], %s5676
          %5679 = dma.done %s5675, 16
        $region160: #{rnsa_image_feature_extractor.1} parent=155 // pred_fallthru
          _
      $region156: #{rnsa_image_feature_extractor.1} parent=5 // pred_fallthru
        _
    $region6: #{rnsa_image_feature_extractor.1} parent=1 // loop_footer
      %s78 = sadd.s32 1, %s74
    $region7: #{rnsa_image_feature_extractor.1} parent=1 // loop_footer_branch
      %73 = sbr.rel target = $region3
    $region8: #{rnsa_image_feature_extractor.1} parent=1 // loop_exit
      _
    %5680 = vsyncpa [#allocation8], 1
    %s5681 = scalar_lea.sflag [#allocation8], 1
    %5682 = vsyncpa %s5681, 1

</llo_original>
